<compile_context>
chip_gen: v7x
topology: tpu7x:2x2x1
jax: 0.10.0
libtpu: 0.0.40
codegen_flags: <defaults>
</compile_context>

<pallas_src>
import jax
import jax.numpy as jnp
from jax.experimental import pallas as pl
from jax.experimental.pallas import tpu as pltpu


TB_MAX = 256                       # max batch tile (matmul M dim / sublanes)

XDIM_RAW, XDIM_PAD = 28 * 28, 896      # flattened image (784 -> 7*128 lanes)
P1_RAW, P1_PAD = 15 * 15, 256          # pooled conv1 features (15x15 -> 256 lanes)
P2_RAW, P2_PAD = 7 * 7, 64             # pooled conv2 features (7x7 -> 64 lanes)
F1_RAW, F1_PAD = 1500, 1536
F2_RAW, F2_PAD = 1000, 1024
F3_RAW, F3_PAD = 10, 128


# ---------------------------------------------------------------------------
# Lowering helper (runs in the JAX wrapper, once per weight set):
# builds the (n_in, n_out) matrix mapping a flattened (in_h, in_w) image to
# conv(w, padding=pad) sampled at rows 2u+di, cols 2v+dj (the 2x2-pool shift).
# ---------------------------------------------------------------------------
def _conv_pool_matrix(w, in_h, in_w, pad, pool_h, pool_w, di, dj, n_in, n_out):
    kh, kw = w.shape
    A = jnp.zeros((n_in, n_out), jnp.float32)
    uu, vv = jnp.meshgrid(jnp.arange(pool_h), jnp.arange(pool_w), indexing="ij")
    cols = (uu * pool_w + vv).reshape(-1)
    for ki in range(kh):
        for kj in range(kw):
            a = 2 * uu + di + ki - pad
            b = 2 * vv + dj + kj - pad
            ok = ((a >= 0) & (a < in_h) & (b >= 0) & (b < in_w)).reshape(-1)
            rows = (jnp.clip(a, 0, in_h - 1) * in_w
                    + jnp.clip(b, 0, in_w - 1)).reshape(-1)
            A = A.at[rows, cols].add(jnp.where(ok, w[ki, kj], 0.0))
    return A


# ---------------------------------------------------------------------------
# Fused kernel: conv1+pool -> conv2+pool -> fc1 -> fc2 -> fc3 for one batch tile
# ---------------------------------------------------------------------------
def _lenet_kernel(x_ref, a1_ref, b1_ref, a2_ref, b2_ref,
                  w1_ref, c1_ref, w2_ref, c2_ref, w3_ref, c3_ref, o_ref):
    x = x_ref[...]                                                # (tb, 896) bf16

    # conv1 + relu + 2x2 maxpool: ONE GEMM over the 4 concatenated shift
    # matrices, then a max over four static 256-lane slices.
    t = jnp.dot(x, a1_ref[...], preferred_element_type=jnp.float32)   # (tb, 1024)
    t = jnp.maximum(
        jnp.maximum(t[:, 0 * P1_PAD:1 * P1_PAD], t[:, 1 * P1_PAD:2 * P1_PAD]),
        jnp.maximum(t[:, 2 * P1_PAD:3 * P1_PAD], t[:, 3 * P1_PAD:4 * P1_PAD]))
    h1 = jnp.maximum(t + b1_ref[...], 0.0).astype(jnp.bfloat16)       # (tb, 256)

    # conv2 + relu + 2x2 maxpool (floor mode): ONE GEMM (N=256), max over
    # four static 64-lane slices.
    u = jnp.dot(h1, a2_ref[...], preferred_element_type=jnp.float32)  # (tb, 256)
    u = jnp.maximum(
        jnp.maximum(u[:, 0 * P2_PAD:1 * P2_PAD], u[:, 1 * P2_PAD:2 * P2_PAD]),
        jnp.maximum(u[:, 2 * P2_PAD:3 * P2_PAD], u[:, 3 * P2_PAD:4 * P2_PAD]))
    h2 = jnp.maximum(u + b2_ref[...], 0.0).astype(jnp.bfloat16)       # (tb, 64)

    # fc1 -> relu -> fc2 -> relu -> fc3 (padded to 1536 / 1024 / 128 lanes)
    h3 = jnp.maximum(jnp.dot(h2, w1_ref[...],
                             preferred_element_type=jnp.float32)
                     + c1_ref[...], 0.0).astype(jnp.bfloat16)
    h4 = jnp.maximum(jnp.dot(h3, w2_ref[...],
                             preferred_element_type=jnp.float32)
                     + c2_ref[...], 0.0).astype(jnp.bfloat16)
    o_ref[...] = (jnp.dot(h4, w3_ref[...],
                          preferred_element_type=jnp.float32) + c3_ref[...])


def _round_up(v, m):
    return ((v + m - 1) // m) * m


def _pick_tile(n):
    # Small batch: one sublane-aligned tile.
    if n <= 8:
        return 8
    # Otherwise aim for >= 2 grid steps (v7x has 2 TensorCores) while capping
    # the tile at TB_MAX rows.
    return min(TB_MAX, _round_up((n + 1) // 2, 8))


def lenet_forward(x, kp):
    # x: (N, 1, 28, 28) float32 (NCHW, like PyTorch); C == 1
    n = x.shape[0]
    xf = x.reshape(n, -1).astype(jnp.bfloat16)                    # (N, 784) bf16
    tb = _pick_tile(n)
    n_pad = _round_up(n, tb)
    xf = jnp.pad(xf, ((0, n_pad - n), (0, XDIM_PAD - XDIM_RAW)))  # (n_pad, 896)

    def wspec(arr):
        # Constant block index -> stays resident; single-buffered (no point
        # double-buffering an operand whose block never changes).
        return pl.BlockSpec(arr.shape, lambda i: (0, 0),
                            pipeline_mode=pl.Buffered(1))

    out = pl.pallas_call(
        _lenet_kernel,
        out_shape=jax.ShapeDtypeStruct((n_pad, F3_PAD), jnp.float32),
        grid=(n_pad // tb,),
        in_specs=[
            pl.BlockSpec((tb, XDIM_PAD), lambda i: (i, 0)),       # batch tile
            wspec(kp["a1"]), wspec(kp["b1"]),                     # conv1+pool
            wspec(kp["a2"]), wspec(kp["b2"]),                     # conv2+pool
            wspec(kp["w1"]), wspec(kp["c1"]),                     # fc1
            wspec(kp["w2"]), wspec(kp["c2"]),                     # fc2
            wspec(kp["w3"]), wspec(kp["c3"]),                     # fc3
        ],
        out_specs=pl.BlockSpec((tb, F3_PAD), lambda i: (i, 0)),
        compiler_params=pltpu.CompilerParams(
            dimension_semantics=("parallel",),                    # megacore
            vmem_limit_bytes=28 * 1024 * 1024),                   # < v7x 64 MiB
    )(xf, kp["a1"], kp["b1"], kp["a2"], kp["b2"],
      kp["w1"], kp["c1"], kp["w2"], kp["c2"], kp["w3"], kp["c3"])
    return out[:n, :F3_RAW]


# ---------------------------------------------------------------------------
# Parameters: raw PyTorch-like params, and the lowered/padded kernel params
# ---------------------------------------------------------------------------
def init_raw_params(key):
    ks = jax.random.split(key, 10)
    rnd = lambda k, s, sc: jax.random.normal(k, s, jnp.float32) * sc
    raw = {
        "conv1_w": rnd(ks[0], (3, 3), 0.2), "conv1_b": rnd(ks[1], (1,), 0.05),
        "conv2_w": rnd(ks[2], (5, 5), 0.1), "conv2_b": rnd(ks[3], (1,), 0.05),
        # Linear weights stored (in, out) == transposed PyTorch (out, in).
        "fc1_w": rnd(ks[4], (49, 1500), 0.05), "fc1_b": rnd(ks[5], (1500,), 0.05),
        "fc2_w": rnd(ks[6], (1500, 1000), 0.02), "fc2_b": rnd(ks[7], (1000,), 0.05),
        "fc3_w": rnd(ks[8], (1000, 10), 0.02), "fc3_b": rnd(ks[9], (10,), 0.05),
    }
    # Round weights to bf16 values so kernel (bf16) and reference (f32) agree.
    for k in ("conv1_w", "conv2_w", "fc1_w", "fc2_w", "fc3_w"):
        raw[k] = raw[k].astype(jnp.bfloat16).astype(jnp.float32)
    return raw


def build_kernel_params(raw):
    shifts = [(0, 0), (0, 1), (1, 0), (1, 1)]
    # Four shift matrices concatenated along the output axis -> ONE GEMM each.
    a1 = jnp.concatenate(
        [_conv_pool_matrix(raw["conv1_w"], 28, 28, 2, 15, 15, di, dj,
                           XDIM_RAW, P1_PAD) for di, dj in shifts], axis=1)
    a1 = jnp.pad(a1, ((0, XDIM_PAD - XDIM_RAW), (0, 0)))          # (896, 1024)
    a2 = jnp.concatenate(
        [_conv_pool_matrix(raw["conv2_w"], 15, 15, 2, 7, 7, di, dj,
                           P1_PAD, P2_PAD) for di, dj in shifts], axis=1)
    # a2: (256, 256)

    def pad2(m, r, c):
        return jnp.zeros((r, c), m.dtype).at[:m.shape[0], :m.shape[1]].set(m)

    def pad_bias(b, n_raw, n_pad):
        return jnp.zeros((1, n_pad), jnp.float32).at[0, :n_raw].set(b)

    return {
        "a1": a1.astype(jnp.bfloat16),
        "a2": a2.astype(jnp.bfloat16),
        "b1": pad_bias(raw["conv1_b"][0], P1_RAW, P1_PAD),
        "b2": pad_bias(raw["conv2_b"][0], P2_RAW, P2_PAD),
        "w1": pad2(raw["fc1_w"], P2_PAD, F1_PAD).astype(jnp.bfloat16),
        "w2": pad2(raw["fc2_w"], F1_PAD, F2_PAD).astype(jnp.bfloat16),
        "w3": pad2(raw["fc3_w"], F2_PAD, F3_PAD).astype(jnp.bfloat16),
        "c1": pad_bias(raw["fc1_b"], F1_RAW, F1_PAD),
        "c2": pad_bias(raw["fc2_b"], F2_RAW, F2_PAD),
        "c3": pad_bias(raw["fc3_b"], F3_RAW, F3_PAD),
    }


# ---------------------------------------------------------------------------
# Pure-JAX reference (mirrors the PyTorch forward) for a sanity check
# ---------------------------------------------------------------------------
def lenet_reference(x, raw):
    n = x.shape[0]
    xp = jnp.pad(x[:, 0].astype(jnp.float32), ((0, 0), (2, 2), (2, 2)))
    c1 = jnp.zeros((n, 30, 30), jnp.float32)
    for ki in range(3):
        for kj in range(3):
            c1 = c1 + raw["conv1_w"][ki, kj] * xp[:, ki:ki + 30, kj:kj + 30]
    c1 = jnp.maximum(c1 + raw["conv1_b"][0], 0.0)
    p1 = c1.reshape(n, 15, 2, 15, 2).max(axis=(2, 4))
    p1p = jnp.pad(p1, ((0, 0), (2, 2), (2, 2)))
    c2 = jnp.zeros((n, 15, 15), jnp.float32)
    for ki in range(5):
        for kj in range(5):
            c2 = c2 + raw["conv2_w"][ki, kj] * p1p[:, ki:ki + 15, kj:kj + 15]
    c2 = jnp.maximum(c2 + raw["conv2_b"][0], 0.0)
    p2 = c2[:, :14, :14].reshape(n, 7, 2, 7, 2).max(axis=(2, 4))
    h = p2.reshape(n, 49)
    h = jnp.maximum(h @ raw["fc1_w"] + raw["fc1_b"], 0.0)
    h = jnp.maximum(h @ raw["fc2_w"] + raw["fc2_b"], 0.0)
    return h @ raw["fc3_w"] + raw["fc3_b"]


if __name__ == "__main__":
    key = jax.random.PRNGKey(0)
    pkey, xkey = jax.random.split(key)
    raw = init_raw_params(pkey)
    kp = build_kernel_params(raw)
    # 28x28 input required by the module (fc1 expects 49 = 7*7 features).
    x = jax.random.normal(xkey, (2, 1, 28, 28), jnp.float32)

    out = jax.block_until_ready(lenet_forward(x, kp))
    ref = jax.block_until_ready(lenet_reference(x, raw))

    assert out.shape == (2, 10)
    assert bool(jnp.all(jnp.isfinite(out)))
    err = float(jnp.max(jnp.abs(out - ref)))
    scale = 1.0 + float(jnp.max(jnp.abs(ref)))
    assert err <= 0.05 * scale, f"mismatch: max abs err {err} (scale {scale})"
    print("KERNEL_OK")
</pallas_src>

<mosaic_0001>
module attributes {stable_mosaic.version = 11 : i64} {
  func.func @_lenet_kernel(%arg0: i32, %arg1: memref<8x896xbf16, #tpu.memory_space<vmem>>, %arg2: memref<896x1024xbf16, #tpu.memory_space<vmem>>, %arg3: memref<1x256xf32, #tpu.memory_space<vmem>>, %arg4: memref<256x256xbf16, #tpu.memory_space<vmem>>, %arg5: memref<1x64xf32, #tpu.memory_space<vmem>>, %arg6: memref<64x1536xbf16, #tpu.memory_space<vmem>>, %arg7: memref<1x1536xf32, #tpu.memory_space<vmem>>, %arg8: memref<1536x1024xbf16, #tpu.memory_space<vmem>>, %arg9: memref<1x1024xf32, #tpu.memory_space<vmem>>, %arg10: memref<1024x128xbf16, #tpu.memory_space<vmem>>, %arg11: memref<1x128xf32, #tpu.memory_space<vmem>>, %arg12: memref<8x128xf32, #tpu.memory_space<vmem>>) attributes {dimension_semantics = [#tpu.dimension_semantics<parallel>], iteration_bounds = array<i64: 1>, scalar_prefetch = 0 : i64, scratch_operands = 0 : i64, tpu.core_type = #tpu.core_type<tc>, window_params = [{transform_indices = @transform_0, window_bounds = array<i64: 8, 896>}, {pipeline_mode = #tpu.pipeline_mode<synchronous>, transform_indices = @transform_1, window_bounds = array<i64: 896, 1024>}, {pipeline_mode = #tpu.pipeline_mode<synchronous>, transform_indices = @transform_2, window_bounds = array<i64: 1, 256>}, {pipeline_mode = #tpu.pipeline_mode<synchronous>, transform_indices = @transform_3, window_bounds = array<i64: 256, 256>}, {pipeline_mode = #tpu.pipeline_mode<synchronous>, transform_indices = @transform_4, window_bounds = array<i64: 1, 64>}, {pipeline_mode = #tpu.pipeline_mode<synchronous>, transform_indices = @transform_5, window_bounds = array<i64: 64, 1536>}, {pipeline_mode = #tpu.pipeline_mode<synchronous>, transform_indices = @transform_6, window_bounds = array<i64: 1, 1536>}, {pipeline_mode = #tpu.pipeline_mode<synchronous>, transform_indices = @transform_7, window_bounds = array<i64: 1536, 1024>}, {pipeline_mode = #tpu.pipeline_mode<synchronous>, transform_indices = @transform_8, window_bounds = array<i64: 1, 1024>}, {pipeline_mode = #tpu.pipeline_mode<synchronous>, transform_indices = @transform_9, window_bounds = array<i64: 1024, 128>}, {pipeline_mode = #tpu.pipeline_mode<synchronous>, transform_indices = @transform_10, window_bounds = array<i64: 1, 128>}, {transform_indices = @transform_11, window_bounds = array<i64: 8, 128>}]} {
    %c0 = arith.constant 0 : index
    %c0_0 = arith.constant 0 : index
    %0 = vector.load %arg1[%c0, %c0_0] : memref<8x896xbf16, #tpu.memory_space<vmem>>, vector<8x896xbf16>
    %c0_1 = arith.constant 0 : index
    %c0_2 = arith.constant 0 : index
    %1 = vector.load %arg2[%c0_1, %c0_2] : memref<896x1024xbf16, #tpu.memory_space<vmem>>, vector<896x1024xbf16>
    %cst = arith.constant dense<0.000000e+00> : vector<8x1024xf32>
    %2 = tpu.matmul %0, %1, %cst {dimension_numbers = #tpu.dot_dimension_numbers<[1], [0], [0], [1], [0, 0, 1, 1], [], []>} : vector<8x896xbf16>, vector<896x1024xbf16>, vector<8x1024xf32> -> vector<8x1024xf32>
    %3 = vector.extract_strided_slice %2 {offsets = [0, 0], sizes = [8, 256], strides = [1, 1]} : vector<8x1024xf32> to vector<8x256xf32>
    %4 = vector.extract_strided_slice %2 {offsets = [0, 256], sizes = [8, 256], strides = [1, 1]} : vector<8x1024xf32> to vector<8x256xf32>
    %5 = arith.maximumf %3, %4 : vector<8x256xf32>
    %6 = vector.extract_strided_slice %2 {offsets = [0, 512], sizes = [8, 256], strides = [1, 1]} : vector<8x1024xf32> to vector<8x256xf32>
    %7 = vector.extract_strided_slice %2 {offsets = [0, 768], sizes = [8, 256], strides = [1, 1]} : vector<8x1024xf32> to vector<8x256xf32>
    %8 = arith.maximumf %6, %7 : vector<8x256xf32>
    %9 = arith.maximumf %5, %8 : vector<8x256xf32>
    %c0_3 = arith.constant 0 : index
    %c0_4 = arith.constant 0 : index
    %10 = vector.load %arg3[%c0_3, %c0_4] : memref<1x256xf32, #tpu.memory_space<vmem>>, vector<1x256xf32>
    %11 = vector.broadcast %10 : vector<1x256xf32> to vector<8x256xf32>
    %12 = arith.addf %9, %11 : vector<8x256xf32>
    %cst_5 = arith.constant 0.000000e+00 : f32
    %13 = vector.broadcast %cst_5 : f32 to vector<8x256xf32>
    %14 = arith.maximumf %12, %13 : vector<8x256xf32>
    %15 = arith.truncf %14 : vector<8x256xf32> to vector<8x256xbf16>
    %c0_6 = arith.constant 0 : index
    %c0_7 = arith.constant 0 : index
    %16 = vector.load %arg4[%c0_6, %c0_7] : memref<256x256xbf16, #tpu.memory_space<vmem>>, vector<256x256xbf16>
    %cst_8 = arith.constant dense<0.000000e+00> : vector<8x256xf32>
    %17 = tpu.matmul %15, %16, %cst_8 {dimension_numbers = #tpu.dot_dimension_numbers<[1], [0], [0], [1], [0, 0, 1, 1], [], []>} : vector<8x256xbf16>, vector<256x256xbf16>, vector<8x256xf32> -> vector<8x256xf32>
    %18 = vector.extract_strided_slice %17 {offsets = [0, 0], sizes = [8, 64], strides = [1, 1]} : vector<8x256xf32> to vector<8x64xf32>
    %19 = vector.extract_strided_slice %17 {offsets = [0, 64], sizes = [8, 64], strides = [1, 1]} : vector<8x256xf32> to vector<8x64xf32>
    %20 = arith.maximumf %18, %19 : vector<8x64xf32>
    %21 = vector.extract_strided_slice %17 {offsets = [0, 128], sizes = [8, 64], strides = [1, 1]} : vector<8x256xf32> to vector<8x64xf32>
    %22 = vector.extract_strided_slice %17 {offsets = [0, 192], sizes = [8, 64], strides = [1, 1]} : vector<8x256xf32> to vector<8x64xf32>
    %23 = arith.maximumf %21, %22 : vector<8x64xf32>
    %24 = arith.maximumf %20, %23 : vector<8x64xf32>
    %c0_9 = arith.constant 0 : index
    %c0_10 = arith.constant 0 : index
    %25 = vector.load %arg5[%c0_9, %c0_10] : memref<1x64xf32, #tpu.memory_space<vmem>>, vector<1x64xf32>
    %26 = vector.broadcast %25 : vector<1x64xf32> to vector<8x64xf32>
    %27 = arith.addf %24, %26 : vector<8x64xf32>
    %cst_11 = arith.constant 0.000000e+00 : f32
    %28 = vector.broadcast %cst_11 : f32 to vector<8x64xf32>
    %29 = arith.maximumf %27, %28 : vector<8x64xf32>
    %30 = arith.truncf %29 : vector<8x64xf32> to vector<8x64xbf16>
    %c0_12 = arith.constant 0 : index
    %c0_13 = arith.constant 0 : index
    %31 = vector.load %arg6[%c0_12, %c0_13] : memref<64x1536xbf16, #tpu.memory_space<vmem>>, vector<64x1536xbf16>
    %cst_14 = arith.constant dense<0.000000e+00> : vector<8x1536xf32>
    %32 = tpu.matmul %30, %31, %cst_14 {dimension_numbers = #tpu.dot_dimension_numbers<[1], [0], [0], [1], [0, 0, 1, 1], [], []>} : vector<8x64xbf16>, vector<64x1536xbf16>, vector<8x1536xf32> -> vector<8x1536xf32>
    %c0_15 = arith.constant 0 : index
    %c0_16 = arith.constant 0 : index
    %33 = vector.load %arg7[%c0_15, %c0_16] : memref<1x1536xf32, #tpu.memory_space<vmem>>, vector<1x1536xf32>
    %34 = vector.broadcast %33 : vector<1x1536xf32> to vector<8x1536xf32>
    %35 = arith.addf %32, %34 : vector<8x1536xf32>
    %cst_17 = arith.constant 0.000000e+00 : f32
    %36 = vector.broadcast %cst_17 : f32 to vector<8x1536xf32>
    %37 = arith.maximumf %35, %36 : vector<8x1536xf32>
    %38 = arith.truncf %37 : vector<8x1536xf32> to vector<8x1536xbf16>
    %c0_18 = arith.constant 0 : index
    %c0_19 = arith.constant 0 : index
    %39 = vector.load %arg8[%c0_18, %c0_19] : memref<1536x1024xbf16, #tpu.memory_space<vmem>>, vector<1536x1024xbf16>
    %cst_20 = arith.constant dense<0.000000e+00> : vector<8x1024xf32>
    %40 = tpu.matmul %38, %39, %cst_20 {dimension_numbers = #tpu.dot_dimension_numbers<[1], [0], [0], [1], [0, 0, 1, 1], [], []>} : vector<8x1536xbf16>, vector<1536x1024xbf16>, vector<8x1024xf32> -> vector<8x1024xf32>
    %c0_21 = arith.constant 0 : index
    %c0_22 = arith.constant 0 : index
    %41 = vector.load %arg9[%c0_21, %c0_22] : memref<1x1024xf32, #tpu.memory_space<vmem>>, vector<1x1024xf32>
    %42 = vector.broadcast %41 : vector<1x1024xf32> to vector<8x1024xf32>
    %43 = arith.addf %40, %42 : vector<8x1024xf32>
    %cst_23 = arith.constant 0.000000e+00 : f32
    %44 = vector.broadcast %cst_23 : f32 to vector<8x1024xf32>
    %45 = arith.maximumf %43, %44 : vector<8x1024xf32>
    %46 = arith.truncf %45 : vector<8x1024xf32> to vector<8x1024xbf16>
    %c0_24 = arith.constant 0 : index
    %c0_25 = arith.constant 0 : index
    %47 = vector.load %arg10[%c0_24, %c0_25] : memref<1024x128xbf16, #tpu.memory_space<vmem>>, vector<1024x128xbf16>
    %cst_26 = arith.constant dense<0.000000e+00> : vector<8x128xf32>
    %48 = tpu.matmul %46, %47, %cst_26 {dimension_numbers = #tpu.dot_dimension_numbers<[1], [0], [0], [1], [0, 0, 1, 1], [], []>} : vector<8x1024xbf16>, vector<1024x128xbf16>, vector<8x128xf32> -> vector<8x128xf32>
    %c0_27 = arith.constant 0 : index
    %c0_28 = arith.constant 0 : index
    %49 = vector.load %arg11[%c0_27, %c0_28] : memref<1x128xf32, #tpu.memory_space<vmem>>, vector<1x128xf32>
    %50 = vector.broadcast %49 : vector<1x128xf32> to vector<8x128xf32>
    %51 = arith.addf %48, %50 : vector<8x128xf32>
    %c0_29 = arith.constant 0 : index
    %c0_30 = arith.constant 0 : index
    %52 = vector.load %arg12[%c0_29, %c0_30] : memref<8x128xf32, #tpu.memory_space<vmem>>, vector<8x128xf32>
    tpu.vector_store %arg12[%c0_29, %c0_30], %51 {strides = array<i32>} : memref<8x128xf32, #tpu.memory_space<vmem>>, vector<8x128xf32>,
    return
  }
  func.func @transform_0(%arg0: i32) -> (i32, i32) {
    %c0_i32 = arith.constant 0 : i32
    %c0_i32_0 = arith.constant 0 : i32
    return %arg0, %c0_i32 : i32, i32
  }
  func.func @transform_1(%arg0: i32) -> (i32, i32) {
    %c0_i32 = arith.constant 0 : i32
    %c0_i32_0 = arith.constant 0 : i32
    %c0_i32_1 = arith.constant 0 : i32
    return %c0_i32, %c0_i32_0 : i32, i32
  }
  func.func @transform_2(%arg0: i32) -> (i32, i32) {
    %c0_i32 = arith.constant 0 : i32
    %c0_i32_0 = arith.constant 0 : i32
    %c0_i32_1 = arith.constant 0 : i32
    return %c0_i32, %c0_i32_0 : i32, i32
  }
  func.func @transform_3(%arg0: i32) -> (i32, i32) {
    %c0_i32 = arith.constant 0 : i32
    %c0_i32_0 = arith.constant 0 : i32
    %c0_i32_1 = arith.constant 0 : i32
    return %c0_i32, %c0_i32_0 : i32, i32
  }
  func.func @transform_4(%arg0: i32) -> (i32, i32) {
    %c0_i32 = arith.constant 0 : i32
    %c0_i32_0 = arith.constant 0 : i32
    %c0_i32_1 = arith.constant 0 : i32
    return %c0_i32, %c0_i32_0 : i32, i32
  }
  func.func @transform_5(%arg0: i32) -> (i32, i32) {
    %c0_i32 = arith.constant 0 : i32
    %c0_i32_0 = arith.constant 0 : i32
    %c0_i32_1 = arith.constant 0 : i32
    return %c0_i32, %c0_i32_0 : i32, i32
  }
  func.func @transform_6(%arg0: i32) -> (i32, i32) {
    %c0_i32 = arith.constant 0 : i32
    %c0_i32_0 = arith.constant 0 : i32
    %c0_i32_1 = arith.constant 0 : i32
    return %c0_i32, %c0_i32_0 : i32, i32
  }
  func.func @transform_7(%arg0: i32) -> (i32, i32) {
    %c0_i32 = arith.constant 0 : i32
    %c0_i32_0 = arith.constant 0 : i32
    %c0_i32_1 = arith.constant 0 : i32
    return %c0_i32, %c0_i32_0 : i32, i32
  }
  func.func @transform_8(%arg0: i32) -> (i32, i32) {
    %c0_i32 = arith.constant 0 : i32
    %c0_i32_0 = arith.constant 0 : i32
    %c0_i32_1 = arith.constant 0 : i32
    return %c0_i32, %c0_i32_0 : i32, i32
  }
  func.func @transform_9(%arg0: i32) -> (i32, i32) {
    %c0_i32 = arith.constant 0 : i32
    %c0_i32_0 = arith.constant 0 : i32
    %c0_i32_1 = arith.constant 0 : i32
    return %c0_i32, %c0_i32_0 : i32, i32
  }
  func.func @transform_10(%arg0: i32) -> (i32, i32) {
    %c0_i32 = arith.constant 0 : i32
    %c0_i32_0 = arith.constant 0 : i32
    %c0_i32_1 = arith.constant 0 : i32
    return %c0_i32, %c0_i32_0 : i32, i32
  }
  func.func @transform_11(%arg0: i32) -> (i32, i32) {
    %c0_i32 = arith.constant 0 : i32
    %c0_i32_0 = arith.constant 0 : i32
    return %arg0, %c0_i32 : i32, i32
  }
}

</mosaic_0001>

<llo_original>
// kernel: tpu_custom_call.1
$region0: #{tpu_custom_call.1}
  #allocation0 [shape = 'u32[]', space=smem, size = 0x4, offset = 0x4, fixed_abs, tag = 'smem constant byte address 0x4 - core index']
  #allocation1 [shape = 'u32[144,128]{1,0:T(1,128)}', space=vmem, size = 0x12000, scoped, tag = 'internal scratch']
  %s0 = inlined_call_operand.hbm [shape: bf16[8,896], index: 0, kind: input, shape index: {}]
  %s1 = inlined_call_operand.hbm [shape: bf16[896,1024], index: 1, kind: input, shape index: {}]
  %s2 = inlined_call_operand.hbm [shape: f32[1,256], index: 2, kind: input, shape index: {}]
  %s3 = inlined_call_operand.hbm [shape: bf16[256,256], index: 3, kind: input, shape index: {}]
  %s4 = inlined_call_operand.hbm [shape: f32[1,64], index: 4, kind: input, shape index: {}]
  %s5 = inlined_call_operand.hbm [shape: bf16[64,1536], index: 5, kind: input, shape index: {}]
  %s6 = inlined_call_operand.hbm [shape: f32[1,1536], index: 6, kind: input, shape index: {}]
  %s7 = inlined_call_operand.hbm [shape: bf16[1536,1024], index: 7, kind: input, shape index: {}]
  %s8 = inlined_call_operand.hbm [shape: f32[1,1024], index: 8, kind: input, shape index: {}]
  %s9 = inlined_call_operand.hbm [shape: bf16[1024,128], index: 9, kind: input, shape index: {}]
  %s10 = inlined_call_operand.hbm [shape: f32[1,128], index: 10, kind: input, shape index: {}]
  %s11 = inlined_call_operand.hbm [shape: f32[8,128], index: 11, kind: output, shape index: {}]
  %s12 = sld [smem:[#allocation0]]
  $region98: #{tpu_custom_call.1} parent=0
    _
  %s14 = ssub.s32 1, %s12
  %s15 = scalar_select 0, %s14, %s12
  $region1: #{tpu_custom_call.1} parent=0
    #allocation2 [shape = 'u8[14336]{0}', space=vmem, size = 0x3800, scoped, tag = 'input window, operand 0, single buffered']
    #allocation3 [shape = 's32[1]{0}', space=sflag, size = 0x4, scoped, tag = 'scoped memory for tpu_custom_call.1']
    #allocation4 [shape = 's32[1]{0}', space=sflag, size = 0x4, scoped, tag = 'scoped memory for tpu_custom_call.1']
    #allocation5 [shape = 'u8[1835008]{0}', space=vmem, size = 0x1c0000, scoped, tag = 'input window, operand 1, single buffered']
    #allocation6 [shape = 's32[1]{0}', space=sflag, size = 0x4, scoped, tag = 'scoped memory for tpu_custom_call.1']
    #allocation7 [shape = 'u8[1024]{0}', space=vmem, size = 0x400, scoped, tag = 'input window, operand 2, single buffered']
    #allocation8 [shape = 'u8[131072]{0}', space=vmem, size = 0x20000, scoped, tag = 'input window, operand 3, single buffered']
    #allocation9 [shape = 's32[1]{0}', space=sflag, size = 0x4, scoped, tag = 'scoped memory for tpu_custom_call.1']
    #allocation10 [shape = 'u8[512]{0}', space=vmem, size = 0x400, scoped, tag = 'input window, operand 4, single buffered']
    #allocation11 [shape = 'u8[196608]{0}', space=vmem, size = 0x30000, scoped, tag = 'input window, operand 5, single buffered']
    #allocation12 [shape = 's32[1]{0}', space=sflag, size = 0x4, scoped, tag = 'scoped memory for tpu_custom_call.1']
    #allocation13 [shape = 'u8[6144]{0}', space=vmem, size = 0x1800, scoped, tag = 'input window, operand 6, single buffered']
    #allocation14 [shape = 'u8[3145728]{0}', space=vmem, size = 0x300000, scoped, tag = 'input window, operand 7, single buffered']
    #allocation15 [shape = 's32[1]{0}', space=sflag, size = 0x4, scoped, tag = 'scoped memory for tpu_custom_call.1']
    #allocation16 [shape = 'u8[4096]{0}', space=vmem, size = 0x1000, scoped, tag = 'input window, operand 8, single buffered']
    #allocation17 [shape = 'u8[262144]{0}', space=vmem, size = 0x40000, scoped, tag = 'input window, operand 9, single buffered']
    #allocation18 [shape = 's32[1]{0}', space=sflag, size = 0x4, scoped, tag = 'scoped memory for tpu_custom_call.1']
    #allocation19 [shape = 'u8[512]{0}', space=vmem, size = 0x400, scoped, tag = 'input window, operand 10, single buffered']
    #allocation20 [shape = 'u8[4096]{0}', space=vmem, size = 0x1000, scoped, tag = 'output window, operand 0, single buffered']
    %16 = vsyncpa [#allocation3], 0
    %17 = vsyncpa [#allocation6], 0
    %18 = vsyncpa [#allocation9], 0
    %19 = vsyncpa [#allocation12], 0
    %20 = vsyncpa [#allocation15], 0
    %21 = vsyncpa [#allocation18], 0
    %22 = vsyncpa [#allocation4], 0
    // Predicated region
    $region2: #{tpu_custom_call.1} parent=1 // pred_check
      _
    $region3: #{tpu_custom_call.1} parent=1 // pred_check_branch
      %24 = sbr.rel (0) target = $region5
    $region4: #{tpu_custom_call.1} parent=1 // pred_region
      %s26 = ssub.s32 448, 448
      %27 = vsyncadd [#allocation3], %s26
      %s29 = sshll.u32 [#allocation2], 4
      %s30 = int_to_ptr.vmem [resolvable:$true] %s29
      %32 = dma.hbm_to_vmem [thread:$0]  %s0, 448, %s30, [#allocation3]
    $region5: #{tpu_custom_call.1} parent=1 // pred_fallthru
      _
    // Predicated region
    $region6: #{tpu_custom_call.1} parent=1 // pred_check
      _
    $region7: #{tpu_custom_call.1} parent=1 // pred_check_branch
      %34 = sbr.rel (0) target = $region9
    $region8: #{tpu_custom_call.1} parent=1 // pred_region
      %s36 = ssub.s32 57344, 57344
      %37 = vsyncadd [#allocation6], %s36
      %s38 = sshll.u32 [#allocation5], 4
      %s39 = int_to_ptr.vmem [resolvable:$true] %s38
      %44 = dma.hbm_to_vmem [thread:$0]  %s1, 57344, %s39, [#allocation6], 512, 512, 32
    $region9: #{tpu_custom_call.1} parent=1 // pred_fallthru
      _
    // Predicated region
    $region10: #{tpu_custom_call.1} parent=1 // pred_check
      _
    $region11: #{tpu_custom_call.1} parent=1 // pred_check_branch
      %46 = sbr.rel (0) target = $region13
    $region12: #{tpu_custom_call.1} parent=1 // pred_region
      %s48 = ssub.s32 32, 32
      %49 = vsyncadd [#allocation6], %s48
      %s51 = sshll.u32 [#allocation7], 4
      %s52 = int_to_ptr.vmem [resolvable:$true] %s51
      %54 = dma.hbm_to_vmem [thread:$0]  %s2, 32, %s52, [#allocation6]
    $region13: #{tpu_custom_call.1} parent=1 // pred_fallthru
      _
    // Predicated region
    $region14: #{tpu_custom_call.1} parent=1 // pred_check
      _
    $region15: #{tpu_custom_call.1} parent=1 // pred_check_branch
      %56 = sbr.rel (0) target = $region17
    $region16: #{tpu_custom_call.1} parent=1 // pred_region
      %s58 = ssub.s32 4096, 4096
      %59 = vsyncadd [#allocation9], %s58
      %s60 = sshll.u32 [#allocation8], 4
      %s61 = int_to_ptr.vmem [resolvable:$true] %s60
      %66 = dma.hbm_to_vmem [thread:$0]  %s3, 4096, %s61, [#allocation9], 128, 128, 8
    $region17: #{tpu_custom_call.1} parent=1 // pred_fallthru
      _
    // Predicated region
    $region18: #{tpu_custom_call.1} parent=1 // pred_check
      _
    $region19: #{tpu_custom_call.1} parent=1 // pred_check_branch
      %68 = sbr.rel (0) target = $region21
    $region20: #{tpu_custom_call.1} parent=1 // pred_region
      %s70 = ssub.s32 16, 16
      %71 = vsyncadd [#allocation9], %s70
      %s73 = sshll.u32 [#allocation10], 4
      %s74 = int_to_ptr.vmem [resolvable:$true] %s73
      %76 = dma.hbm_to_vmem [thread:$0]  %s4, 16, %s74, [#allocation9]
    $region21: #{tpu_custom_call.1} parent=1 // pred_fallthru
      _
    // Predicated region
    $region22: #{tpu_custom_call.1} parent=1 // pred_check
      _
    $region23: #{tpu_custom_call.1} parent=1 // pred_check_branch
      %78 = sbr.rel (0) target = $region25
    $region24: #{tpu_custom_call.1} parent=1 // pred_region
      %s80 = ssub.s32 6144, 6144
      %81 = vsyncadd [#allocation12], %s80
      %s82 = sshll.u32 [#allocation11], 4
      %s83 = int_to_ptr.vmem [resolvable:$true] %s82
      %88 = dma.hbm_to_vmem [thread:$0]  %s5, 6144, %s83, [#allocation12], 768, 768, 48
    $region25: #{tpu_custom_call.1} parent=1 // pred_fallthru
      _
    // Predicated region
    $region26: #{tpu_custom_call.1} parent=1 // pred_check
      _
    $region27: #{tpu_custom_call.1} parent=1 // pred_check_branch
      %90 = sbr.rel (0) target = $region29
    $region28: #{tpu_custom_call.1} parent=1 // pred_region
      %s92 = ssub.s32 192, 192
      %93 = vsyncadd [#allocation12], %s92
      %s95 = sshll.u32 [#allocation13], 4
      %s96 = int_to_ptr.vmem [resolvable:$true] %s95
      %98 = dma.hbm_to_vmem [thread:$0]  %s6, 192, %s96, [#allocation12]
    $region29: #{tpu_custom_call.1} parent=1 // pred_fallthru
      _
    // Predicated region
    $region30: #{tpu_custom_call.1} parent=1 // pred_check
      _
    $region31: #{tpu_custom_call.1} parent=1 // pred_check_branch
      %100 = sbr.rel (0) target = $region33
    $region32: #{tpu_custom_call.1} parent=1 // pred_region
      %s102 = ssub.s32 98304, 98304
      %103 = vsyncadd [#allocation15], %s102
      %s104 = sshll.u32 [#allocation14], 4
      %s105 = int_to_ptr.vmem [resolvable:$true] %s104
      %110 = dma.hbm_to_vmem [thread:$0]  %s7, 98304, %s105, [#allocation15], 512, 512, 32
    $region33: #{tpu_custom_call.1} parent=1 // pred_fallthru
      _
    // Predicated region
    $region34: #{tpu_custom_call.1} parent=1 // pred_check
      _
    $region35: #{tpu_custom_call.1} parent=1 // pred_check_branch
      %112 = sbr.rel (0) target = $region37
    $region36: #{tpu_custom_call.1} parent=1 // pred_region
      %s114 = ssub.s32 128, 128
      %115 = vsyncadd [#allocation15], %s114
      %s117 = sshll.u32 [#allocation16], 4
      %s118 = int_to_ptr.vmem [resolvable:$true] %s117
      %120 = dma.hbm_to_vmem [thread:$0]  %s8, 128, %s118, [#allocation15]
    $region37: #{tpu_custom_call.1} parent=1 // pred_fallthru
      _
    // Predicated region
    $region38: #{tpu_custom_call.1} parent=1 // pred_check
      _
    $region39: #{tpu_custom_call.1} parent=1 // pred_check_branch
      %122 = sbr.rel (0) target = $region41
    $region40: #{tpu_custom_call.1} parent=1 // pred_region
      %s124 = ssub.s32 8192, 8192
      %125 = vsyncadd [#allocation18], %s124
      %s126 = sshll.u32 [#allocation17], 4
      %s127 = int_to_ptr.vmem [resolvable:$true] %s126
      %132 = dma.hbm_to_vmem [thread:$0]  %s9, 8192, %s127, [#allocation18], 64, 64, 4
    $region41: #{tpu_custom_call.1} parent=1 // pred_fallthru
      _
    // Predicated region
    $region42: #{tpu_custom_call.1} parent=1 // pred_check
      _
    $region43: #{tpu_custom_call.1} parent=1 // pred_check_branch
      %134 = sbr.rel (0) target = $region45
    $region44: #{tpu_custom_call.1} parent=1 // pred_region
      %s136 = ssub.s32 16, 16
      %137 = vsyncadd [#allocation18], %s136
      %s139 = sshll.u32 [#allocation19], 4
      %s140 = int_to_ptr.vmem [resolvable:$true] %s139
      %142 = dma.hbm_to_vmem [thread:$0]  %s10, 16, %s140, [#allocation18]
    $region45: #{tpu_custom_call.1} parent=1 // pred_fallthru
      _
    // Predicated region
    $region46: #{tpu_custom_call.1} parent=1 // pred_check
      _
    $region47: #{tpu_custom_call.1} parent=1 // pred_check_branch
      %144 = sbr.rel (0) target = $region49
    $region48: #{tpu_custom_call.1} parent=1 // pred_region
      %145 = dma.done [#allocation3], 448
    $region49: #{tpu_custom_call.1} parent=1 // pred_fallthru
      _
    // Predicated region
    $region50: #{tpu_custom_call.1} parent=1 // pred_check
      _
    $region51: #{tpu_custom_call.1} parent=1 // pred_check_branch
      %147 = sbr.rel (0) target = $region53
    $region52: #{tpu_custom_call.1} parent=1 // pred_region
      %148 = dma.done [#allocation6], 57344
    $region53: #{tpu_custom_call.1} parent=1 // pred_fallthru
      _
    // Predicated region
    $region54: #{tpu_custom_call.1} parent=1 // pred_check
      _
    $region55: #{tpu_custom_call.1} parent=1 // pred_check_branch
      %150 = sbr.rel (0) target = $region57
    $region56: #{tpu_custom_call.1} parent=1 // pred_region
      %151 = dma.done [#allocation6], 32
    $region57: #{tpu_custom_call.1} parent=1 // pred_fallthru
      _
    // Predicated region
    $region58: #{tpu_custom_call.1} parent=1 // pred_check
      _
    $region59: #{tpu_custom_call.1} parent=1 // pred_check_branch
      %153 = sbr.rel (0) target = $region61
    $region60: #{tpu_custom_call.1} parent=1 // pred_region
      %154 = dma.done [#allocation9], 4096
    $region61: #{tpu_custom_call.1} parent=1 // pred_fallthru
      _
    // Predicated region
    $region62: #{tpu_custom_call.1} parent=1 // pred_check
      _
    $region63: #{tpu_custom_call.1} parent=1 // pred_check_branch
      %156 = sbr.rel (0) target = $region65
    $region64: #{tpu_custom_call.1} parent=1 // pred_region
      %157 = dma.done [#allocation9], 16
    $region65: #{tpu_custom_call.1} parent=1 // pred_fallthru
      _
    // Predicated region
    $region66: #{tpu_custom_call.1} parent=1 // pred_check
      _
    $region67: #{tpu_custom_call.1} parent=1 // pred_check_branch
      %159 = sbr.rel (0) target = $region69
    $region68: #{tpu_custom_call.1} parent=1 // pred_region
      %160 = dma.done [#allocation12], 6144
    $region69: #{tpu_custom_call.1} parent=1 // pred_fallthru
      _
    // Predicated region
    $region70: #{tpu_custom_call.1} parent=1 // pred_check
      _
    $region71: #{tpu_custom_call.1} parent=1 // pred_check_branch
      %162 = sbr.rel (0) target = $region73
    $region72: #{tpu_custom_call.1} parent=1 // pred_region
      %163 = dma.done [#allocation12], 192
    $region73: #{tpu_custom_call.1} parent=1 // pred_fallthru
      _
    // Predicated region
    $region74: #{tpu_custom_call.1} parent=1 // pred_check
      _
    $region75: #{tpu_custom_call.1} parent=1 // pred_check_branch
      %165 = sbr.rel (0) target = $region77
    $region76: #{tpu_custom_call.1} parent=1 // pred_region
      %166 = dma.done [#allocation15], 98304
    $region77: #{tpu_custom_call.1} parent=1 // pred_fallthru
      _
    // Predicated region
    $region78: #{tpu_custom_call.1} parent=1 // pred_check
      _
    $region79: #{tpu_custom_call.1} parent=1 // pred_check_branch
      %168 = sbr.rel (0) target = $region81
    $region80: #{tpu_custom_call.1} parent=1 // pred_region
      %169 = dma.done [#allocation15], 128
    $region81: #{tpu_custom_call.1} parent=1 // pred_fallthru
      _
    // Predicated region
    $region82: #{tpu_custom_call.1} parent=1 // pred_check
      _
    $region83: #{tpu_custom_call.1} parent=1 // pred_check_branch
      %171 = sbr.rel (0) target = $region85
    $region84: #{tpu_custom_call.1} parent=1 // pred_region
      %172 = dma.done [#allocation18], 8192
    $region85: #{tpu_custom_call.1} parent=1 // pred_fallthru
      _
    // Predicated region
    $region86: #{tpu_custom_call.1} parent=1 // pred_check
      _
    $region87: #{tpu_custom_call.1} parent=1 // pred_check_branch
      %174 = sbr.rel (0) target = $region89
    $region88: #{tpu_custom_call.1} parent=1 // pred_region
      %175 = dma.done [#allocation18], 16
    $region89: #{tpu_custom_call.1} parent=1 // pred_fallthru
      _
    %v177 = vld [vmem:[#allocation2] sm:$0xff]
    %v178 = vld [vmem:[#allocation2 + $0x8] sm:$0xff]
    %v179 = vld [vmem:[#allocation2 + $0x10] sm:$0xff]
    %v180 = vld [vmem:[#allocation2 + $0x18] sm:$0xf]
    %v181 = vld [vmem:[#allocation5] sm:$0xff]
    %v182 = vld [vmem:[#allocation5 + $0x8] sm:$0xff]
    %v183 = vld [vmem:[#allocation5 + $0x10] sm:$0xff]
    %v184 = vld [vmem:[#allocation5 + $0x18] sm:$0xff]
    %v185 = vld [vmem:[#allocation5 + $0x20] sm:$0xff]
    %v186 = vld [vmem:[#allocation5 + $0x28] sm:$0xff]
    %v187 = vld [vmem:[#allocation5 + $0x30] sm:$0xff]
    %v188 = vld [vmem:[#allocation5 + $0x38] sm:$0xff]
    %v189 = vld [vmem:[#allocation5 + $0x40] sm:$0xff]
    %v190 = vld [vmem:[#allocation5 + $0x48] sm:$0xff]
    %v191 = vld [vmem:[#allocation5 + $0x50] sm:$0xff]
    %v192 = vld [vmem:[#allocation5 + $0x58] sm:$0xff]
    %v193 = vld [vmem:[#allocation5 + $0x60] sm:$0xff]
    %v194 = vld [vmem:[#allocation5 + $0x68] sm:$0xff]
    %v195 = vld [vmem:[#allocation5 + $0x70] sm:$0xff]
    %v196 = vld [vmem:[#allocation5 + $0x78] sm:$0xff]
    %v197 = vld [vmem:[#allocation5 + $0x80] sm:$0xff]
    %v198 = vld [vmem:[#allocation5 + $0x88] sm:$0xff]
    %v199 = vld [vmem:[#allocation5 + $0x90] sm:$0xff]
    %v200 = vld [vmem:[#allocation5 + $0x98] sm:$0xff]
    %v201 = vld [vmem:[#allocation5 + $0xa0] sm:$0xff]
    %v202 = vld [vmem:[#allocation5 + $0xa8] sm:$0xff]
    %v203 = vld [vmem:[#allocation5 + $0xb0] sm:$0xff]
    %v204 = vld [vmem:[#allocation5 + $0xb8] sm:$0xff]
    %v205 = vld [vmem:[#allocation5 + $0xc0] sm:$0xff]
    %v206 = vld [vmem:[#allocation5 + $0xc8] sm:$0xff]
    %v207 = vld [vmem:[#allocation5 + $0xd0] sm:$0xff]
    %v208 = vld [vmem:[#allocation5 + $0xd8] sm:$0xff]
    %v209 = vld [vmem:[#allocation5 + $0xe0] sm:$0xff]
    %v210 = vld [vmem:[#allocation5 + $0xe8] sm:$0xff]
    %v211 = vld [vmem:[#allocation5 + $0xf0] sm:$0xff]
    %v212 = vld [vmem:[#allocation5 + $0xf8] sm:$0xff]
    %v213 = vld [vmem:[#allocation5 + $0x100] sm:$0xff]
    %v214 = vld [vmem:[#allocation5 + $0x108] sm:$0xff]
    %v215 = vld [vmem:[#allocation5 + $0x110] sm:$0xff]
    %v216 = vld [vmem:[#allocation5 + $0x118] sm:$0xff]
    %v217 = vld [vmem:[#allocation5 + $0x120] sm:$0xff]
    %v218 = vld [vmem:[#allocation5 + $0x128] sm:$0xff]
    %v219 = vld [vmem:[#allocation5 + $0x130] sm:$0xff]
    %v220 = vld [vmem:[#allocation5 + $0x138] sm:$0xff]
    %v221 = vld [vmem:[#allocation5 + $0x140] sm:$0xff]
    %v222 = vld [vmem:[#allocation5 + $0x148] sm:$0xff]
    %v223 = vld [vmem:[#allocation5 + $0x150] sm:$0xff]
    %v224 = vld [vmem:[#allocation5 + $0x158] sm:$0xff]
    %v225 = vld [vmem:[#allocation5 + $0x160] sm:$0xff]
    %v226 = vld [vmem:[#allocation5 + $0x168] sm:$0xff]
    %v227 = vld [vmem:[#allocation5 + $0x170] sm:$0xff]
    %v228 = vld [vmem:[#allocation5 + $0x178] sm:$0xff]
    %v229 = vld [vmem:[#allocation5 + $0x180] sm:$0xff]
    %v230 = vld [vmem:[#allocation5 + $0x188] sm:$0xff]
    %v231 = vld [vmem:[#allocation5 + $0x190] sm:$0xff]
    %v232 = vld [vmem:[#allocation5 + $0x198] sm:$0xff]
    %v233 = vld [vmem:[#allocation5 + $0x1a0] sm:$0xff]
    %v234 = vld [vmem:[#allocation5 + $0x1a8] sm:$0xff]
    %v235 = vld [vmem:[#allocation5 + $0x1b0] sm:$0xff]
    %v236 = vld [vmem:[#allocation5 + $0x1b8] sm:$0xff]
    %v237 = vld [vmem:[#allocation5 + $0x1c0] sm:$0xff]
    %v238 = vld [vmem:[#allocation5 + $0x1c8] sm:$0xff]
    %v239 = vld [vmem:[#allocation5 + $0x1d0] sm:$0xff]
    %v240 = vld [vmem:[#allocation5 + $0x1d8] sm:$0xff]
    %v241 = vld [vmem:[#allocation5 + $0x1e0] sm:$0xff]
    %v242 = vld [vmem:[#allocation5 + $0x1e8] sm:$0xff]
    %v243 = vld [vmem:[#allocation5 + $0x1f0] sm:$0xff]
    %v244 = vld [vmem:[#allocation5 + $0x1f8] sm:$0xff]
    %v245 = vld [vmem:[#allocation5 + $0x200] sm:$0xff]
    %v246 = vld [vmem:[#allocation5 + $0x208] sm:$0xff]
    %v247 = vld [vmem:[#allocation5 + $0x210] sm:$0xff]
    %v248 = vld [vmem:[#allocation5 + $0x218] sm:$0xff]
    %v249 = vld [vmem:[#allocation5 + $0x220] sm:$0xff]
    %v250 = vld [vmem:[#allocation5 + $0x228] sm:$0xff]
    %v251 = vld [vmem:[#allocation5 + $0x230] sm:$0xff]
    %v252 = vld [vmem:[#allocation5 + $0x238] sm:$0xff]
    %v253 = vld [vmem:[#allocation5 + $0x240] sm:$0xff]
    %v254 = vld [vmem:[#allocation5 + $0x248] sm:$0xff]
    %v255 = vld [vmem:[#allocation5 + $0x250] sm:$0xff]
    %v256 = vld [vmem:[#allocation5 + $0x258] sm:$0xff]
    %v257 = vld [vmem:[#allocation5 + $0x260] sm:$0xff]
    %v258 = vld [vmem:[#allocation5 + $0x268] sm:$0xff]
    %v259 = vld [vmem:[#allocation5 + $0x270] sm:$0xff]
    %v260 = vld [vmem:[#allocation5 + $0x278] sm:$0xff]
    %v261 = vld [vmem:[#allocation5 + $0x280] sm:$0xff]
    %v262 = vld [vmem:[#allocation5 + $0x288] sm:$0xff]
    %v263 = vld [vmem:[#allocation5 + $0x290] sm:$0xff]
    %v264 = vld [vmem:[#allocation5 + $0x298] sm:$0xff]
    %v265 = vld [vmem:[#allocation5 + $0x2a0] sm:$0xff]
    %v266 = vld [vmem:[#allocation5 + $0x2a8] sm:$0xff]
    %v267 = vld [vmem:[#allocation5 + $0x2b0] sm:$0xff]
    %v268 = vld [vmem:[#allocation5 + $0x2b8] sm:$0xff]
    %v269 = vld [vmem:[#allocation5 + $0x2c0] sm:$0xff]
    %v270 = vld [vmem:[#allocation5 + $0x2c8] sm:$0xff]
    %v271 = vld [vmem:[#allocation5 + $0x2d0] sm:$0xff]
    %v272 = vld [vmem:[#allocation5 + $0x2d8] sm:$0xff]
    %v273 = vld [vmem:[#allocation5 + $0x2e0] sm:$0xff]
    %v274 = vld [vmem:[#allocation5 + $0x2e8] sm:$0xff]
    %v275 = vld [vmem:[#allocation5 + $0x2f0] sm:$0xff]
    %v276 = vld [vmem:[#allocation5 + $0x2f8] sm:$0xff]
    %v277 = vld [vmem:[#allocation5 + $0x300] sm:$0xff]
    %v278 = vld [vmem:[#allocation5 + $0x308] sm:$0xff]
    %v279 = vld [vmem:[#allocation5 + $0x310] sm:$0xff]
    %v280 = vld [vmem:[#allocation5 + $0x318] sm:$0xff]
    %v281 = vld [vmem:[#allocation5 + $0x320] sm:$0xff]
    %v282 = vld [vmem:[#allocation5 + $0x328] sm:$0xff]
    %v283 = vld [vmem:[#allocation5 + $0x330] sm:$0xff]
    %v284 = vld [vmem:[#allocation5 + $0x338] sm:$0xff]
    %v285 = vld [vmem:[#allocation5 + $0x340] sm:$0xff]
    %v286 = vld [vmem:[#allocation5 + $0x348] sm:$0xff]
    %v287 = vld [vmem:[#allocation5 + $0x350] sm:$0xff]
    %v288 = vld [vmem:[#allocation5 + $0x358] sm:$0xff]
    %v289 = vld [vmem:[#allocation5 + $0x360] sm:$0xff]
    %v290 = vld [vmem:[#allocation5 + $0x368] sm:$0xff]
    %v291 = vld [vmem:[#allocation5 + $0x370] sm:$0xff]
    %v292 = vld [vmem:[#allocation5 + $0x378] sm:$0xff]
    %v293 = vld [vmem:[#allocation5 + $0x380] sm:$0xff]
    %v294 = vld [vmem:[#allocation5 + $0x388] sm:$0xff]
    %v295 = vld [vmem:[#allocation5 + $0x390] sm:$0xff]
    %v296 = vld [vmem:[#allocation5 + $0x398] sm:$0xff]
    %v297 = vld [vmem:[#allocation5 + $0x3a0] sm:$0xff]
    %v298 = vld [vmem:[#allocation5 + $0x3a8] sm:$0xff]
    %v299 = vld [vmem:[#allocation5 + $0x3b0] sm:$0xff]
    %v300 = vld [vmem:[#allocation5 + $0x3b8] sm:$0xff]
    %v301 = vld [vmem:[#allocation5 + $0x3c0] sm:$0xff]
    %v302 = vld [vmem:[#allocation5 + $0x3c8] sm:$0xff]
    %v303 = vld [vmem:[#allocation5 + $0x3d0] sm:$0xff]
    %v304 = vld [vmem:[#allocation5 + $0x3d8] sm:$0xff]
    %v305 = vld [vmem:[#allocation5 + $0x3e0] sm:$0xff]
    %v306 = vld [vmem:[#allocation5 + $0x3e8] sm:$0xff]
    %v307 = vld [vmem:[#allocation5 + $0x3f0] sm:$0xff]
    %v308 = vld [vmem:[#allocation5 + $0x3f8] sm:$0xff]
    %v309 = vld [vmem:[#allocation5 + $0x400] sm:$0xff]
    %v310 = vld [vmem:[#allocation5 + $0x408] sm:$0xff]
    %v311 = vld [vmem:[#allocation5 + $0x410] sm:$0xff]
    %v312 = vld [vmem:[#allocation5 + $0x418] sm:$0xff]
    %v313 = vld [vmem:[#allocation5 + $0x420] sm:$0xff]
    %v314 = vld [vmem:[#allocation5 + $0x428] sm:$0xff]
    %v315 = vld [vmem:[#allocation5 + $0x430] sm:$0xff]
    %v316 = vld [vmem:[#allocation5 + $0x438] sm:$0xff]
    %v317 = vld [vmem:[#allocation5 + $0x440] sm:$0xff]
    %v318 = vld [vmem:[#allocation5 + $0x448] sm:$0xff]
    %v319 = vld [vmem:[#allocation5 + $0x450] sm:$0xff]
    %v320 = vld [vmem:[#allocation5 + $0x458] sm:$0xff]
    %v321 = vld [vmem:[#allocation5 + $0x460] sm:$0xff]
    %v322 = vld [vmem:[#allocation5 + $0x468] sm:$0xff]
    %v323 = vld [vmem:[#allocation5 + $0x470] sm:$0xff]
    %v324 = vld [vmem:[#allocation5 + $0x478] sm:$0xff]
    %v325 = vld [vmem:[#allocation5 + $0x480] sm:$0xff]
    %v326 = vld [vmem:[#allocation5 + $0x488] sm:$0xff]
    %v327 = vld [vmem:[#allocation5 + $0x490] sm:$0xff]
    %v328 = vld [vmem:[#allocation5 + $0x498] sm:$0xff]
    %v329 = vld [vmem:[#allocation5 + $0x4a0] sm:$0xff]
    %v330 = vld [vmem:[#allocation5 + $0x4a8] sm:$0xff]
    %v331 = vld [vmem:[#allocation5 + $0x4b0] sm:$0xff]
    %v332 = vld [vmem:[#allocation5 + $0x4b8] sm:$0xff]
    %v333 = vld [vmem:[#allocation5 + $0x4c0] sm:$0xff]
    %v334 = vld [vmem:[#allocation5 + $0x4c8] sm:$0xff]
    %v335 = vld [vmem:[#allocation5 + $0x4d0] sm:$0xff]
    %v336 = vld [vmem:[#allocation5 + $0x4d8] sm:$0xff]
    %v337 = vld [vmem:[#allocation5 + $0x4e0] sm:$0xff]
    %v338 = vld [vmem:[#allocation5 + $0x4e8] sm:$0xff]
    %v339 = vld [vmem:[#allocation5 + $0x4f0] sm:$0xff]
    %v340 = vld [vmem:[#allocation5 + $0x4f8] sm:$0xff]
    %v341 = vld [vmem:[#allocation5 + $0x500] sm:$0xff]
    %v342 = vld [vmem:[#allocation5 + $0x508] sm:$0xff]
    %v343 = vld [vmem:[#allocation5 + $0x510] sm:$0xff]
    %v344 = vld [vmem:[#allocation5 + $0x518] sm:$0xff]
    %v345 = vld [vmem:[#allocation5 + $0x520] sm:$0xff]
    %v346 = vld [vmem:[#allocation5 + $0x528] sm:$0xff]
    %v347 = vld [vmem:[#allocation5 + $0x530] sm:$0xff]
    %v348 = vld [vmem:[#allocation5 + $0x538] sm:$0xff]
    %v349 = vld [vmem:[#allocation5 + $0x540] sm:$0xff]
    %v350 = vld [vmem:[#allocation5 + $0x548] sm:$0xff]
    %v351 = vld [vmem:[#allocation5 + $0x550] sm:$0xff]
    %v352 = vld [vmem:[#allocation5 + $0x558] sm:$0xff]
    %v353 = vld [vmem:[#allocation5 + $0x560] sm:$0xff]
    %v354 = vld [vmem:[#allocation5 + $0x568] sm:$0xff]
    %v355 = vld [vmem:[#allocation5 + $0x570] sm:$0xff]
    %v356 = vld [vmem:[#allocation5 + $0x578] sm:$0xff]
    %v357 = vld [vmem:[#allocation5 + $0x580] sm:$0xff]
    %v358 = vld [vmem:[#allocation5 + $0x588] sm:$0xff]
    %v359 = vld [vmem:[#allocation5 + $0x590] sm:$0xff]
    %v360 = vld [vmem:[#allocation5 + $0x598] sm:$0xff]
    %v361 = vld [vmem:[#allocation5 + $0x5a0] sm:$0xff]
    %v362 = vld [vmem:[#allocation5 + $0x5a8] sm:$0xff]
    %v363 = vld [vmem:[#allocation5 + $0x5b0] sm:$0xff]
    %v364 = vld [vmem:[#allocation5 + $0x5b8] sm:$0xff]
    %v365 = vld [vmem:[#allocation5 + $0x5c0] sm:$0xff]
    %v366 = vld [vmem:[#allocation5 + $0x5c8] sm:$0xff]
    %v367 = vld [vmem:[#allocation5 + $0x5d0] sm:$0xff]
    %v368 = vld [vmem:[#allocation5 + $0x5d8] sm:$0xff]
    %v369 = vld [vmem:[#allocation5 + $0x5e0] sm:$0xff]
    %v370 = vld [vmem:[#allocation5 + $0x5e8] sm:$0xff]
    %v371 = vld [vmem:[#allocation5 + $0x5f0] sm:$0xff]
    %v372 = vld [vmem:[#allocation5 + $0x5f8] sm:$0xff]
    %v373 = vld [vmem:[#allocation5 + $0x600] sm:$0xff]
    %v374 = vld [vmem:[#allocation5 + $0x608] sm:$0xff]
    %v375 = vld [vmem:[#allocation5 + $0x610] sm:$0xff]
    %v376 = vld [vmem:[#allocation5 + $0x618] sm:$0xff]
    %v377 = vld [vmem:[#allocation5 + $0x620] sm:$0xff]
    %v378 = vld [vmem:[#allocation5 + $0x628] sm:$0xff]
    %v379 = vld [vmem:[#allocation5 + $0x630] sm:$0xff]
    %v380 = vld [vmem:[#allocation5 + $0x638] sm:$0xff]
    %v381 = vld [vmem:[#allocation5 + $0x640] sm:$0xff]
    %v382 = vld [vmem:[#allocation5 + $0x648] sm:$0xff]
    %v383 = vld [vmem:[#allocation5 + $0x650] sm:$0xff]
    %v384 = vld [vmem:[#allocation5 + $0x658] sm:$0xff]
    %v385 = vld [vmem:[#allocation5 + $0x660] sm:$0xff]
    %v386 = vld [vmem:[#allocation5 + $0x668] sm:$0xff]
    %v387 = vld [vmem:[#allocation5 + $0x670] sm:$0xff]
    %v388 = vld [vmem:[#allocation5 + $0x678] sm:$0xff]
    %v389 = vld [vmem:[#allocation5 + $0x680] sm:$0xff]
    %v390 = vld [vmem:[#allocation5 + $0x688] sm:$0xff]
    %v391 = vld [vmem:[#allocation5 + $0x690] sm:$0xff]
    %v392 = vld [vmem:[#allocation5 + $0x698] sm:$0xff]
    %v393 = vld [vmem:[#allocation5 + $0x6a0] sm:$0xff]
    %v394 = vld [vmem:[#allocation5 + $0x6a8] sm:$0xff]
    %v395 = vld [vmem:[#allocation5 + $0x6b0] sm:$0xff]
    %v396 = vld [vmem:[#allocation5 + $0x6b8] sm:$0xff]
    %v397 = vld [vmem:[#allocation5 + $0x6c0] sm:$0xff]
    %v398 = vld [vmem:[#allocation5 + $0x6c8] sm:$0xff]
    %v399 = vld [vmem:[#allocation5 + $0x6d0] sm:$0xff]
    %v400 = vld [vmem:[#allocation5 + $0x6d8] sm:$0xff]
    %v401 = vld [vmem:[#allocation5 + $0x6e0] sm:$0xff]
    %v402 = vld [vmem:[#allocation5 + $0x6e8] sm:$0xff]
    %v403 = vld [vmem:[#allocation5 + $0x6f0] sm:$0xff]
    %v404 = vld [vmem:[#allocation5 + $0x6f8] sm:$0xff]
    %v405 = vld [vmem:[#allocation5 + $0x700] sm:$0xff]
    %v406 = vld [vmem:[#allocation5 + $0x708] sm:$0xff]
    %v407 = vld [vmem:[#allocation5 + $0x710] sm:$0xff]
    %v408 = vld [vmem:[#allocation5 + $0x718] sm:$0xff]
    %v409 = vld [vmem:[#allocation5 + $0x720] sm:$0xff]
    %v410 = vld [vmem:[#allocation5 + $0x728] sm:$0xff]
    %v411 = vld [vmem:[#allocation5 + $0x730] sm:$0xff]
    %v412 = vld [vmem:[#allocation5 + $0x738] sm:$0xff]
    %v413 = vld [vmem:[#allocation5 + $0x740] sm:$0xff]
    %v414 = vld [vmem:[#allocation5 + $0x748] sm:$0xff]
    %v415 = vld [vmem:[#allocation5 + $0x750] sm:$0xff]
    %v416 = vld [vmem:[#allocation5 + $0x758] sm:$0xff]
    %v417 = vld [vmem:[#allocation5 + $0x760] sm:$0xff]
    %v418 = vld [vmem:[#allocation5 + $0x768] sm:$0xff]
    %v419 = vld [vmem:[#allocation5 + $0x770] sm:$0xff]
    %v420 = vld [vmem:[#allocation5 + $0x778] sm:$0xff]
    %v421 = vld [vmem:[#allocation5 + $0x780] sm:$0xff]
    %v422 = vld [vmem:[#allocation5 + $0x788] sm:$0xff]
    %v423 = vld [vmem:[#allocation5 + $0x790] sm:$0xff]
    %v424 = vld [vmem:[#allocation5 + $0x798] sm:$0xff]
    %v425 = vld [vmem:[#allocation5 + $0x7a0] sm:$0xff]
    %v426 = vld [vmem:[#allocation5 + $0x7a8] sm:$0xff]
    %v427 = vld [vmem:[#allocation5 + $0x7b0] sm:$0xff]
    %v428 = vld [vmem:[#allocation5 + $0x7b8] sm:$0xff]
    %v429 = vld [vmem:[#allocation5 + $0x7c0] sm:$0xff]
    %v430 = vld [vmem:[#allocation5 + $0x7c8] sm:$0xff]
    %v431 = vld [vmem:[#allocation5 + $0x7d0] sm:$0xff]
    %v432 = vld [vmem:[#allocation5 + $0x7d8] sm:$0xff]
    %v433 = vld [vmem:[#allocation5 + $0x7e0] sm:$0xff]
    %v434 = vld [vmem:[#allocation5 + $0x7e8] sm:$0xff]
    %v435 = vld [vmem:[#allocation5 + $0x7f0] sm:$0xff]
    %v436 = vld [vmem:[#allocation5 + $0x7f8] sm:$0xff]
    %v437 = vld [vmem:[#allocation5 + $0x800] sm:$0xff]
    %v438 = vld [vmem:[#allocation5 + $0x808] sm:$0xff]
    %v439 = vld [vmem:[#allocation5 + $0x810] sm:$0xff]
    %v440 = vld [vmem:[#allocation5 + $0x818] sm:$0xff]
    %v441 = vld [vmem:[#allocation5 + $0x820] sm:$0xff]
    %v442 = vld [vmem:[#allocation5 + $0x828] sm:$0xff]
    %v443 = vld [vmem:[#allocation5 + $0x830] sm:$0xff]
    %v444 = vld [vmem:[#allocation5 + $0x838] sm:$0xff]
    %v445 = vld [vmem:[#allocation5 + $0x840] sm:$0xff]
    %v446 = vld [vmem:[#allocation5 + $0x848] sm:$0xff]
    %v447 = vld [vmem:[#allocation5 + $0x850] sm:$0xff]
    %v448 = vld [vmem:[#allocation5 + $0x858] sm:$0xff]
    %v449 = vld [vmem:[#allocation5 + $0x860] sm:$0xff]
    %v450 = vld [vmem:[#allocation5 + $0x868] sm:$0xff]
    %v451 = vld [vmem:[#allocation5 + $0x870] sm:$0xff]
    %v452 = vld [vmem:[#allocation5 + $0x878] sm:$0xff]
    %v453 = vld [vmem:[#allocation5 + $0x880] sm:$0xff]
    %v454 = vld [vmem:[#allocation5 + $0x888] sm:$0xff]
    %v455 = vld [vmem:[#allocation5 + $0x890] sm:$0xff]
    %v456 = vld [vmem:[#allocation5 + $0x898] sm:$0xff]
    %v457 = vld [vmem:[#allocation5 + $0x8a0] sm:$0xff]
    %v458 = vld [vmem:[#allocation5 + $0x8a8] sm:$0xff]
    %v459 = vld [vmem:[#allocation5 + $0x8b0] sm:$0xff]
    %v460 = vld [vmem:[#allocation5 + $0x8b8] sm:$0xff]
    %v461 = vld [vmem:[#allocation5 + $0x8c0] sm:$0xff]
    %v462 = vld [vmem:[#allocation5 + $0x8c8] sm:$0xff]
    %v463 = vld [vmem:[#allocation5 + $0x8d0] sm:$0xff]
    %v464 = vld [vmem:[#allocation5 + $0x8d8] sm:$0xff]
    %v465 = vld [vmem:[#allocation5 + $0x8e0] sm:$0xff]
    %v466 = vld [vmem:[#allocation5 + $0x8e8] sm:$0xff]
    %v467 = vld [vmem:[#allocation5 + $0x8f0] sm:$0xff]
    %v468 = vld [vmem:[#allocation5 + $0x8f8] sm:$0xff]
    %v469 = vld [vmem:[#allocation5 + $0x900] sm:$0xff]
    %v470 = vld [vmem:[#allocation5 + $0x908] sm:$0xff]
    %v471 = vld [vmem:[#allocation5 + $0x910] sm:$0xff]
    %v472 = vld [vmem:[#allocation5 + $0x918] sm:$0xff]
    %v473 = vld [vmem:[#allocation5 + $0x920] sm:$0xff]
    %v474 = vld [vmem:[#allocation5 + $0x928] sm:$0xff]
    %v475 = vld [vmem:[#allocation5 + $0x930] sm:$0xff]
    %v476 = vld [vmem:[#allocation5 + $0x938] sm:$0xff]
    %v477 = vld [vmem:[#allocation5 + $0x940] sm:$0xff]
    %v478 = vld [vmem:[#allocation5 + $0x948] sm:$0xff]
    %v479 = vld [vmem:[#allocation5 + $0x950] sm:$0xff]
    %v480 = vld [vmem:[#allocation5 + $0x958] sm:$0xff]
    %v481 = vld [vmem:[#allocation5 + $0x960] sm:$0xff]
    %v482 = vld [vmem:[#allocation5 + $0x968] sm:$0xff]
    %v483 = vld [vmem:[#allocation5 + $0x970] sm:$0xff]
    %v484 = vld [vmem:[#allocation5 + $0x978] sm:$0xff]
    %v485 = vld [vmem:[#allocation5 + $0x980] sm:$0xff]
    %v486 = vld [vmem:[#allocation5 + $0x988] sm:$0xff]
    %v487 = vld [vmem:[#allocation5 + $0x990] sm:$0xff]
    %v488 = vld [vmem:[#allocation5 + $0x998] sm:$0xff]
    %v489 = vld [vmem:[#allocation5 + $0x9a0] sm:$0xff]
    %v490 = vld [vmem:[#allocation5 + $0x9a8] sm:$0xff]
    %v491 = vld [vmem:[#allocation5 + $0x9b0] sm:$0xff]
    %v492 = vld [vmem:[#allocation5 + $0x9b8] sm:$0xff]
    %v493 = vld [vmem:[#allocation5 + $0x9c0] sm:$0xff]
    %v494 = vld [vmem:[#allocation5 + $0x9c8] sm:$0xff]
    %v495 = vld [vmem:[#allocation5 + $0x9d0] sm:$0xff]
    %v496 = vld [vmem:[#allocation5 + $0x9d8] sm:$0xff]
    %v497 = vld [vmem:[#allocation5 + $0x9e0] sm:$0xff]
    %v498 = vld [vmem:[#allocation5 + $0x9e8] sm:$0xff]
    %v499 = vld [vmem:[#allocation5 + $0x9f0] sm:$0xff]
    %v500 = vld [vmem:[#allocation5 + $0x9f8] sm:$0xff]
    %v501 = vld [vmem:[#allocation5 + $0xa00] sm:$0xff]
    %v502 = vld [vmem:[#allocation5 + $0xa08] sm:$0xff]
    %v503 = vld [vmem:[#allocation5 + $0xa10] sm:$0xff]
    %v504 = vld [vmem:[#allocation5 + $0xa18] sm:$0xff]
    %v505 = vld [vmem:[#allocation5 + $0xa20] sm:$0xff]
    %v506 = vld [vmem:[#allocation5 + $0xa28] sm:$0xff]
    %v507 = vld [vmem:[#allocation5 + $0xa30] sm:$0xff]
    %v508 = vld [vmem:[#allocation5 + $0xa38] sm:$0xff]
    %v509 = vld [vmem:[#allocation5 + $0xa40] sm:$0xff]
    %v510 = vld [vmem:[#allocation5 + $0xa48] sm:$0xff]
    %v511 = vld [vmem:[#allocation5 + $0xa50] sm:$0xff]
    %v512 = vld [vmem:[#allocation5 + $0xa58] sm:$0xff]
    %v513 = vld [vmem:[#allocation5 + $0xa60] sm:$0xff]
    %v514 = vld [vmem:[#allocation5 + $0xa68] sm:$0xff]
    %v515 = vld [vmem:[#allocation5 + $0xa70] sm:$0xff]
    %v516 = vld [vmem:[#allocation5 + $0xa78] sm:$0xff]
    %v517 = vld [vmem:[#allocation5 + $0xa80] sm:$0xff]
    %v518 = vld [vmem:[#allocation5 + $0xa88] sm:$0xff]
    %v519 = vld [vmem:[#allocation5 + $0xa90] sm:$0xff]
    %v520 = vld [vmem:[#allocation5 + $0xa98] sm:$0xff]
    %v521 = vld [vmem:[#allocation5 + $0xaa0] sm:$0xff]
    %v522 = vld [vmem:[#allocation5 + $0xaa8] sm:$0xff]
    %v523 = vld [vmem:[#allocation5 + $0xab0] sm:$0xff]
    %v524 = vld [vmem:[#allocation5 + $0xab8] sm:$0xff]
    %v525 = vld [vmem:[#allocation5 + $0xac0] sm:$0xff]
    %v526 = vld [vmem:[#allocation5 + $0xac8] sm:$0xff]
    %v527 = vld [vmem:[#allocation5 + $0xad0] sm:$0xff]
    %v528 = vld [vmem:[#allocation5 + $0xad8] sm:$0xff]
    %v529 = vld [vmem:[#allocation5 + $0xae0] sm:$0xff]
    %v530 = vld [vmem:[#allocation5 + $0xae8] sm:$0xff]
    %v531 = vld [vmem:[#allocation5 + $0xaf0] sm:$0xff]
    %v532 = vld [vmem:[#allocation5 + $0xaf8] sm:$0xff]
    %v533 = vld [vmem:[#allocation5 + $0xb00] sm:$0xff]
    %v534 = vld [vmem:[#allocation5 + $0xb08] sm:$0xff]
    %v535 = vld [vmem:[#allocation5 + $0xb10] sm:$0xff]
    %v536 = vld [vmem:[#allocation5 + $0xb18] sm:$0xff]
    %v537 = vld [vmem:[#allocation5 + $0xb20] sm:$0xff]
    %v538 = vld [vmem:[#allocation5 + $0xb28] sm:$0xff]
    %v539 = vld [vmem:[#allocation5 + $0xb30] sm:$0xff]
    %v540 = vld [vmem:[#allocation5 + $0xb38] sm:$0xff]
    %v541 = vld [vmem:[#allocation5 + $0xb40] sm:$0xff]
    %v542 = vld [vmem:[#allocation5 + $0xb48] sm:$0xff]
    %v543 = vld [vmem:[#allocation5 + $0xb50] sm:$0xff]
    %v544 = vld [vmem:[#allocation5 + $0xb58] sm:$0xff]
    %v545 = vld [vmem:[#allocation5 + $0xb60] sm:$0xff]
    %v546 = vld [vmem:[#allocation5 + $0xb68] sm:$0xff]
    %v547 = vld [vmem:[#allocation5 + $0xb70] sm:$0xff]
    %v548 = vld [vmem:[#allocation5 + $0xb78] sm:$0xff]
    %v549 = vld [vmem:[#allocation5 + $0xb80] sm:$0xff]
    %v550 = vld [vmem:[#allocation5 + $0xb88] sm:$0xff]
    %v551 = vld [vmem:[#allocation5 + $0xb90] sm:$0xff]
    %v552 = vld [vmem:[#allocation5 + $0xb98] sm:$0xff]
    %v553 = vld [vmem:[#allocation5 + $0xba0] sm:$0xff]
    %v554 = vld [vmem:[#allocation5 + $0xba8] sm:$0xff]
    %v555 = vld [vmem:[#allocation5 + $0xbb0] sm:$0xff]
    %v556 = vld [vmem:[#allocation5 + $0xbb8] sm:$0xff]
    %v557 = vld [vmem:[#allocation5 + $0xbc0] sm:$0xff]
    %v558 = vld [vmem:[#allocation5 + $0xbc8] sm:$0xff]
    %v559 = vld [vmem:[#allocation5 + $0xbd0] sm:$0xff]
    %v560 = vld [vmem:[#allocation5 + $0xbd8] sm:$0xff]
    %v561 = vld [vmem:[#allocation5 + $0xbe0] sm:$0xff]
    %v562 = vld [vmem:[#allocation5 + $0xbe8] sm:$0xff]
    %v563 = vld [vmem:[#allocation5 + $0xbf0] sm:$0xff]
    %v564 = vld [vmem:[#allocation5 + $0xbf8] sm:$0xff]
    %v565 = vld [vmem:[#allocation5 + $0xc00] sm:$0xff]
    %v566 = vld [vmem:[#allocation5 + $0xc08] sm:$0xff]
    %v567 = vld [vmem:[#allocation5 + $0xc10] sm:$0xff]
    %v568 = vld [vmem:[#allocation5 + $0xc18] sm:$0xff]
    %v569 = vld [vmem:[#allocation5 + $0xc20] sm:$0xff]
    %v570 = vld [vmem:[#allocation5 + $0xc28] sm:$0xff]
    %v571 = vld [vmem:[#allocation5 + $0xc30] sm:$0xff]
    %v572 = vld [vmem:[#allocation5 + $0xc38] sm:$0xff]
    %v573 = vld [vmem:[#allocation5 + $0xc40] sm:$0xff]
    %v574 = vld [vmem:[#allocation5 + $0xc48] sm:$0xff]
    %v575 = vld [vmem:[#allocation5 + $0xc50] sm:$0xff]
    %v576 = vld [vmem:[#allocation5 + $0xc58] sm:$0xff]
    %v577 = vld [vmem:[#allocation5 + $0xc60] sm:$0xff]
    %v578 = vld [vmem:[#allocation5 + $0xc68] sm:$0xff]
    %v579 = vld [vmem:[#allocation5 + $0xc70] sm:$0xff]
    %v580 = vld [vmem:[#allocation5 + $0xc78] sm:$0xff]
    %v581 = vld [vmem:[#allocation5 + $0xc80] sm:$0xff]
    %v582 = vld [vmem:[#allocation5 + $0xc88] sm:$0xff]
    %v583 = vld [vmem:[#allocation5 + $0xc90] sm:$0xff]
    %v584 = vld [vmem:[#allocation5 + $0xc98] sm:$0xff]
    %v585 = vld [vmem:[#allocation5 + $0xca0] sm:$0xff]
    %v586 = vld [vmem:[#allocation5 + $0xca8] sm:$0xff]
    %v587 = vld [vmem:[#allocation5 + $0xcb0] sm:$0xff]
    %v588 = vld [vmem:[#allocation5 + $0xcb8] sm:$0xff]
    %v589 = vld [vmem:[#allocation5 + $0xcc0] sm:$0xff]
    %v590 = vld [vmem:[#allocation5 + $0xcc8] sm:$0xff]
    %v591 = vld [vmem:[#allocation5 + $0xcd0] sm:$0xff]
    %v592 = vld [vmem:[#allocation5 + $0xcd8] sm:$0xff]
    %v593 = vld [vmem:[#allocation5 + $0xce0] sm:$0xff]
    %v594 = vld [vmem:[#allocation5 + $0xce8] sm:$0xff]
    %v595 = vld [vmem:[#allocation5 + $0xcf0] sm:$0xff]
    %v596 = vld [vmem:[#allocation5 + $0xcf8] sm:$0xff]
    %v597 = vld [vmem:[#allocation5 + $0xd00] sm:$0xff]
    %v598 = vld [vmem:[#allocation5 + $0xd08] sm:$0xff]
    %v599 = vld [vmem:[#allocation5 + $0xd10] sm:$0xff]
    %v600 = vld [vmem:[#allocation5 + $0xd18] sm:$0xff]
    %v601 = vld [vmem:[#allocation5 + $0xd20] sm:$0xff]
    %v602 = vld [vmem:[#allocation5 + $0xd28] sm:$0xff]
    %v603 = vld [vmem:[#allocation5 + $0xd30] sm:$0xff]
    %v604 = vld [vmem:[#allocation5 + $0xd38] sm:$0xff]
    %v605 = vld [vmem:[#allocation5 + $0xd40] sm:$0xff]
    %v606 = vld [vmem:[#allocation5 + $0xd48] sm:$0xff]
    %v607 = vld [vmem:[#allocation5 + $0xd50] sm:$0xff]
    %v608 = vld [vmem:[#allocation5 + $0xd58] sm:$0xff]
    %v609 = vld [vmem:[#allocation5 + $0xd60] sm:$0xff]
    %v610 = vld [vmem:[#allocation5 + $0xd68] sm:$0xff]
    %v611 = vld [vmem:[#allocation5 + $0xd70] sm:$0xff]
    %v612 = vld [vmem:[#allocation5 + $0xd78] sm:$0xff]
    %v613 = vld [vmem:[#allocation5 + $0xd80] sm:$0xff]
    %v614 = vld [vmem:[#allocation5 + $0xd88] sm:$0xff]
    %v615 = vld [vmem:[#allocation5 + $0xd90] sm:$0xff]
    %v616 = vld [vmem:[#allocation5 + $0xd98] sm:$0xff]
    %v617 = vld [vmem:[#allocation5 + $0xda0] sm:$0xff]
    %v618 = vld [vmem:[#allocation5 + $0xda8] sm:$0xff]
    %v619 = vld [vmem:[#allocation5 + $0xdb0] sm:$0xff]
    %v620 = vld [vmem:[#allocation5 + $0xdb8] sm:$0xff]
    %v621 = vld [vmem:[#allocation5 + $0xdc0] sm:$0xff]
    %v622 = vld [vmem:[#allocation5 + $0xdc8] sm:$0xff]
    %v623 = vld [vmem:[#allocation5 + $0xdd0] sm:$0xff]
    %v624 = vld [vmem:[#allocation5 + $0xdd8] sm:$0xff]
    %v625 = vld [vmem:[#allocation5 + $0xde0] sm:$0xff]
    %v626 = vld [vmem:[#allocation5 + $0xde8] sm:$0xff]
    %v627 = vld [vmem:[#allocation5 + $0xdf0] sm:$0xff]
    %v628 = vld [vmem:[#allocation5 + $0xdf8] sm:$0xff]
    %v633 = vunpack.c.l.b16 %v177
    %v634 = vunpack.c.h.b16 %v177
    %v635 = vunpack.c.l.b16 %v178
    %v636 = vunpack.c.h.b16 %v178
    %v637 = vunpack.c.l.b16 %v179
    %v638 = vunpack.c.h.b16 %v179
    %v639 = vunpack.c.l.b16 %v180
    %v640 = vpack.c.b16 %v633, %v633
    %v641 = vpack.c.b16 %v634, %v634
    %v642 = vpack.c.b16 %v635, %v635
    %v643 = vpack.c.b16 %v636, %v636
    %v644 = vpack.c.b16 %v637, %v637
    %v645 = vpack.c.b16 %v638, %v638
    %v646 = vpack.c.b16 %v639, %v639
    %v1102 = vunpack.c.l.b16 %v181
    %v1103 = vunpack.c.h.b16 %v181
    %v1104 = vunpack.c.l.b16 %v182
    %v1105 = vunpack.c.h.b16 %v182
    %v1106 = vunpack.c.l.b16 %v183
    %v1107 = vunpack.c.h.b16 %v183
    %v1108 = vunpack.c.l.b16 %v184
    %v1109 = vunpack.c.h.b16 %v184
    %v1110 = vunpack.c.l.b16 %v185
    %v1111 = vunpack.c.h.b16 %v185
    %v1112 = vunpack.c.l.b16 %v186
    %v1113 = vunpack.c.h.b16 %v186
    %v1114 = vunpack.c.l.b16 %v187
    %v1115 = vunpack.c.h.b16 %v187
    %v1116 = vunpack.c.l.b16 %v188
    %v1117 = vunpack.c.h.b16 %v188
    %v1118 = vunpack.c.l.b16 %v189
    %v1119 = vunpack.c.h.b16 %v189
    %v1120 = vunpack.c.l.b16 %v190
    %v1121 = vunpack.c.h.b16 %v190
    %v1122 = vunpack.c.l.b16 %v191
    %v1123 = vunpack.c.h.b16 %v191
    %v1124 = vunpack.c.l.b16 %v192
    %v1125 = vunpack.c.h.b16 %v192
    %v1126 = vunpack.c.l.b16 %v193
    %v1127 = vunpack.c.h.b16 %v193
    %v1128 = vunpack.c.l.b16 %v194
    %v1129 = vunpack.c.h.b16 %v194
    %v1130 = vunpack.c.l.b16 %v195
    %v1131 = vunpack.c.h.b16 %v195
    %v1132 = vunpack.c.l.b16 %v196
    %v1133 = vunpack.c.h.b16 %v196
    %v1134 = vunpack.c.l.b16 %v197
    %v1135 = vunpack.c.h.b16 %v197
    %v1136 = vunpack.c.l.b16 %v198
    %v1137 = vunpack.c.h.b16 %v198
    %v1138 = vunpack.c.l.b16 %v199
    %v1139 = vunpack.c.h.b16 %v199
    %v1140 = vunpack.c.l.b16 %v200
    %v1141 = vunpack.c.h.b16 %v200
    %v1142 = vunpack.c.l.b16 %v201
    %v1143 = vunpack.c.h.b16 %v201
    %v1144 = vunpack.c.l.b16 %v202
    %v1145 = vunpack.c.h.b16 %v202
    %v1146 = vunpack.c.l.b16 %v203
    %v1147 = vunpack.c.h.b16 %v203
    %v1148 = vunpack.c.l.b16 %v204
    %v1149 = vunpack.c.h.b16 %v204
    %v1150 = vunpack.c.l.b16 %v205
    %v1151 = vunpack.c.h.b16 %v205
    %v1152 = vunpack.c.l.b16 %v206
    %v1153 = vunpack.c.h.b16 %v206
    %v1154 = vunpack.c.l.b16 %v207
    %v1155 = vunpack.c.h.b16 %v207
    %v1156 = vunpack.c.l.b16 %v208
    %v1157 = vunpack.c.h.b16 %v208
    %v1158 = vunpack.c.l.b16 %v209
    %v1159 = vunpack.c.h.b16 %v209
    %v1160 = vunpack.c.l.b16 %v210
    %v1161 = vunpack.c.h.b16 %v210
    %v1162 = vunpack.c.l.b16 %v211
    %v1163 = vunpack.c.h.b16 %v211
    %v1164 = vunpack.c.l.b16 %v212
    %v1165 = vunpack.c.h.b16 %v212
    %v1166 = vunpack.c.l.b16 %v213
    %v1167 = vunpack.c.h.b16 %v213
    %v1168 = vunpack.c.l.b16 %v214
    %v1169 = vunpack.c.h.b16 %v214
    %v1170 = vunpack.c.l.b16 %v215
    %v1171 = vunpack.c.h.b16 %v215
    %v1172 = vunpack.c.l.b16 %v216
    %v1173 = vunpack.c.h.b16 %v216
    %v1174 = vunpack.c.l.b16 %v217
    %v1175 = vunpack.c.h.b16 %v217
    %v1176 = vunpack.c.l.b16 %v218
    %v1177 = vunpack.c.h.b16 %v218
    %v1178 = vunpack.c.l.b16 %v219
    %v1179 = vunpack.c.h.b16 %v219
    %v1180 = vunpack.c.l.b16 %v220
    %v1181 = vunpack.c.h.b16 %v220
    %v1182 = vunpack.c.l.b16 %v221
    %v1183 = vunpack.c.h.b16 %v221
    %v1184 = vunpack.c.l.b16 %v222
    %v1185 = vunpack.c.h.b16 %v222
    %v1186 = vunpack.c.l.b16 %v223
    %v1187 = vunpack.c.h.b16 %v223
    %v1188 = vunpack.c.l.b16 %v224
    %v1189 = vunpack.c.h.b16 %v224
    %v1190 = vunpack.c.l.b16 %v225
    %v1191 = vunpack.c.h.b16 %v225
    %v1192 = vunpack.c.l.b16 %v226
    %v1193 = vunpack.c.h.b16 %v226
    %v1194 = vunpack.c.l.b16 %v227
    %v1195 = vunpack.c.h.b16 %v227
    %v1196 = vunpack.c.l.b16 %v228
    %v1197 = vunpack.c.h.b16 %v228
    %v1198 = vunpack.c.l.b16 %v229
    %v1199 = vunpack.c.h.b16 %v229
    %v1200 = vunpack.c.l.b16 %v230
    %v1201 = vunpack.c.h.b16 %v230
    %v1202 = vunpack.c.l.b16 %v231
    %v1203 = vunpack.c.h.b16 %v231
    %v1204 = vunpack.c.l.b16 %v232
    %v1205 = vunpack.c.h.b16 %v232
    %v1206 = vunpack.c.l.b16 %v233
    %v1207 = vunpack.c.h.b16 %v233
    %v1208 = vunpack.c.l.b16 %v234
    %v1209 = vunpack.c.h.b16 %v234
    %v1210 = vunpack.c.l.b16 %v235
    %v1211 = vunpack.c.h.b16 %v235
    %v1212 = vunpack.c.l.b16 %v236
    %v1213 = vunpack.c.h.b16 %v236
    %v1214 = vunpack.c.l.b16 %v237
    %v1215 = vunpack.c.h.b16 %v237
    %v1216 = vunpack.c.l.b16 %v238
    %v1217 = vunpack.c.h.b16 %v238
    %v1218 = vunpack.c.l.b16 %v239
    %v1219 = vunpack.c.h.b16 %v239
    %v1220 = vunpack.c.l.b16 %v240
    %v1221 = vunpack.c.h.b16 %v240
    %v1222 = vunpack.c.l.b16 %v241
    %v1223 = vunpack.c.h.b16 %v241
    %v1224 = vunpack.c.l.b16 %v242
    %v1225 = vunpack.c.h.b16 %v242
    %v1226 = vunpack.c.l.b16 %v243
    %v1227 = vunpack.c.h.b16 %v243
    %v1228 = vunpack.c.l.b16 %v244
    %v1229 = vunpack.c.h.b16 %v244
    %v1230 = vunpack.c.l.b16 %v245
    %v1231 = vunpack.c.h.b16 %v245
    %v1232 = vunpack.c.l.b16 %v246
    %v1233 = vunpack.c.h.b16 %v246
    %v1234 = vunpack.c.l.b16 %v247
    %v1235 = vunpack.c.h.b16 %v247
    %v1236 = vunpack.c.l.b16 %v248
    %v1237 = vunpack.c.h.b16 %v248
    %v1238 = vunpack.c.l.b16 %v249
    %v1239 = vunpack.c.h.b16 %v249
    %v1240 = vunpack.c.l.b16 %v250
    %v1241 = vunpack.c.h.b16 %v250
    %v1242 = vunpack.c.l.b16 %v251
    %v1243 = vunpack.c.h.b16 %v251
    %v1244 = vunpack.c.l.b16 %v252
    %v1245 = vunpack.c.h.b16 %v252
    %v1246 = vunpack.c.l.b16 %v253
    %v1247 = vunpack.c.h.b16 %v253
    %v1248 = vunpack.c.l.b16 %v254
    %v1249 = vunpack.c.h.b16 %v254
    %v1250 = vunpack.c.l.b16 %v255
    %v1251 = vunpack.c.h.b16 %v255
    %v1252 = vunpack.c.l.b16 %v256
    %v1253 = vunpack.c.h.b16 %v256
    %v1254 = vunpack.c.l.b16 %v257
    %v1255 = vunpack.c.h.b16 %v257
    %v1256 = vunpack.c.l.b16 %v258
    %v1257 = vunpack.c.h.b16 %v258
    %v1258 = vunpack.c.l.b16 %v259
    %v1259 = vunpack.c.h.b16 %v259
    %v1260 = vunpack.c.l.b16 %v260
    %v1261 = vunpack.c.h.b16 %v260
    %v1262 = vunpack.c.l.b16 %v261
    %v1263 = vunpack.c.h.b16 %v261
    %v1264 = vunpack.c.l.b16 %v262
    %v1265 = vunpack.c.h.b16 %v262
    %v1266 = vunpack.c.l.b16 %v263
    %v1267 = vunpack.c.h.b16 %v263
    %v1268 = vunpack.c.l.b16 %v264
    %v1269 = vunpack.c.h.b16 %v264
    %v1270 = vunpack.c.l.b16 %v265
    %v1271 = vunpack.c.h.b16 %v265
    %v1272 = vunpack.c.l.b16 %v266
    %v1273 = vunpack.c.h.b16 %v266
    %v1274 = vunpack.c.l.b16 %v267
    %v1275 = vunpack.c.h.b16 %v267
    %v1276 = vunpack.c.l.b16 %v268
    %v1277 = vunpack.c.h.b16 %v268
    %v1278 = vunpack.c.l.b16 %v269
    %v1279 = vunpack.c.h.b16 %v269
    %v1280 = vunpack.c.l.b16 %v270
    %v1281 = vunpack.c.h.b16 %v270
    %v1282 = vunpack.c.l.b16 %v271
    %v1283 = vunpack.c.h.b16 %v271
    %v1284 = vunpack.c.l.b16 %v272
    %v1285 = vunpack.c.h.b16 %v272
    %v1286 = vunpack.c.l.b16 %v273
    %v1287 = vunpack.c.h.b16 %v273
    %v1288 = vunpack.c.l.b16 %v274
    %v1289 = vunpack.c.h.b16 %v274
    %v1290 = vunpack.c.l.b16 %v275
    %v1291 = vunpack.c.h.b16 %v275
    %v1292 = vunpack.c.l.b16 %v276
    %v1293 = vunpack.c.h.b16 %v276
    %v1294 = vunpack.c.l.b16 %v277
    %v1295 = vunpack.c.h.b16 %v277
    %v1296 = vunpack.c.l.b16 %v278
    %v1297 = vunpack.c.h.b16 %v278
    %v1298 = vunpack.c.l.b16 %v279
    %v1299 = vunpack.c.h.b16 %v279
    %v1300 = vunpack.c.l.b16 %v280
    %v1301 = vunpack.c.h.b16 %v280
    %v1302 = vunpack.c.l.b16 %v281
    %v1303 = vunpack.c.h.b16 %v281
    %v1304 = vunpack.c.l.b16 %v282
    %v1305 = vunpack.c.h.b16 %v282
    %v1306 = vunpack.c.l.b16 %v283
    %v1307 = vunpack.c.h.b16 %v283
    %v1308 = vunpack.c.l.b16 %v284
    %v1309 = vunpack.c.h.b16 %v284
    %v1310 = vunpack.c.l.b16 %v285
    %v1311 = vunpack.c.h.b16 %v285
    %v1312 = vunpack.c.l.b16 %v286
    %v1313 = vunpack.c.h.b16 %v286
    %v1314 = vunpack.c.l.b16 %v287
    %v1315 = vunpack.c.h.b16 %v287
    %v1316 = vunpack.c.l.b16 %v288
    %v1317 = vunpack.c.h.b16 %v288
    %v1318 = vunpack.c.l.b16 %v289
    %v1319 = vunpack.c.h.b16 %v289
    %v1320 = vunpack.c.l.b16 %v290
    %v1321 = vunpack.c.h.b16 %v290
    %v1322 = vunpack.c.l.b16 %v291
    %v1323 = vunpack.c.h.b16 %v291
    %v1324 = vunpack.c.l.b16 %v292
    %v1325 = vunpack.c.h.b16 %v292
    %v1326 = vunpack.c.l.b16 %v293
    %v1327 = vunpack.c.h.b16 %v293
    %v1328 = vunpack.c.l.b16 %v294
    %v1329 = vunpack.c.h.b16 %v294
    %v1330 = vunpack.c.l.b16 %v295
    %v1331 = vunpack.c.h.b16 %v295
    %v1332 = vunpack.c.l.b16 %v296
    %v1333 = vunpack.c.h.b16 %v296
    %v1334 = vunpack.c.l.b16 %v297
    %v1335 = vunpack.c.h.b16 %v297
    %v1336 = vunpack.c.l.b16 %v298
    %v1337 = vunpack.c.h.b16 %v298
    %v1338 = vunpack.c.l.b16 %v299
    %v1339 = vunpack.c.h.b16 %v299
    %v1340 = vunpack.c.l.b16 %v300
    %v1341 = vunpack.c.h.b16 %v300
    %v1342 = vunpack.c.l.b16 %v301
    %v1343 = vunpack.c.h.b16 %v301
    %v1344 = vunpack.c.l.b16 %v302
    %v1345 = vunpack.c.h.b16 %v302
    %v1346 = vunpack.c.l.b16 %v303
    %v1347 = vunpack.c.h.b16 %v303
    %v1348 = vunpack.c.l.b16 %v304
    %v1349 = vunpack.c.h.b16 %v304
    %v1350 = vunpack.c.l.b16 %v305
    %v1351 = vunpack.c.h.b16 %v305
    %v1352 = vunpack.c.l.b16 %v306
    %v1353 = vunpack.c.h.b16 %v306
    %v1354 = vunpack.c.l.b16 %v307
    %v1355 = vunpack.c.h.b16 %v307
    %v1356 = vunpack.c.l.b16 %v308
    %v1357 = vunpack.c.h.b16 %v308
    %v1358 = vunpack.c.l.b16 %v309
    %v1359 = vunpack.c.h.b16 %v309
    %v1360 = vunpack.c.l.b16 %v310
    %v1361 = vunpack.c.h.b16 %v310
    %v1362 = vunpack.c.l.b16 %v311
    %v1363 = vunpack.c.h.b16 %v311
    %v1364 = vunpack.c.l.b16 %v312
    %v1365 = vunpack.c.h.b16 %v312
    %v1366 = vunpack.c.l.b16 %v313
    %v1367 = vunpack.c.h.b16 %v313
    %v1368 = vunpack.c.l.b16 %v314
    %v1369 = vunpack.c.h.b16 %v314
    %v1370 = vunpack.c.l.b16 %v315
    %v1371 = vunpack.c.h.b16 %v315
    %v1372 = vunpack.c.l.b16 %v316
    %v1373 = vunpack.c.h.b16 %v316
    %v1374 = vunpack.c.l.b16 %v317
    %v1375 = vunpack.c.h.b16 %v317
    %v1376 = vunpack.c.l.b16 %v318
    %v1377 = vunpack.c.h.b16 %v318
    %v1378 = vunpack.c.l.b16 %v319
    %v1379 = vunpack.c.h.b16 %v319
    %v1380 = vunpack.c.l.b16 %v320
    %v1381 = vunpack.c.h.b16 %v320
    %v1382 = vunpack.c.l.b16 %v321
    %v1383 = vunpack.c.h.b16 %v321
    %v1384 = vunpack.c.l.b16 %v322
    %v1385 = vunpack.c.h.b16 %v322
    %v1386 = vunpack.c.l.b16 %v323
    %v1387 = vunpack.c.h.b16 %v323
    %v1388 = vunpack.c.l.b16 %v324
    %v1389 = vunpack.c.h.b16 %v324
    %v1390 = vunpack.c.l.b16 %v325
    %v1391 = vunpack.c.h.b16 %v325
    %v1392 = vunpack.c.l.b16 %v326
    %v1393 = vunpack.c.h.b16 %v326
    %v1394 = vunpack.c.l.b16 %v327
    %v1395 = vunpack.c.h.b16 %v327
    %v1396 = vunpack.c.l.b16 %v328
    %v1397 = vunpack.c.h.b16 %v328
    %v1398 = vunpack.c.l.b16 %v329
    %v1399 = vunpack.c.h.b16 %v329
    %v1400 = vunpack.c.l.b16 %v330
    %v1401 = vunpack.c.h.b16 %v330
    %v1402 = vunpack.c.l.b16 %v331
    %v1403 = vunpack.c.h.b16 %v331
    %v1404 = vunpack.c.l.b16 %v332
    %v1405 = vunpack.c.h.b16 %v332
    %v1406 = vunpack.c.l.b16 %v333
    %v1407 = vunpack.c.h.b16 %v333
    %v1408 = vunpack.c.l.b16 %v334
    %v1409 = vunpack.c.h.b16 %v334
    %v1410 = vunpack.c.l.b16 %v335
    %v1411 = vunpack.c.h.b16 %v335
    %v1412 = vunpack.c.l.b16 %v336
    %v1413 = vunpack.c.h.b16 %v336
    %v1414 = vunpack.c.l.b16 %v337
    %v1415 = vunpack.c.h.b16 %v337
    %v1416 = vunpack.c.l.b16 %v338
    %v1417 = vunpack.c.h.b16 %v338
    %v1418 = vunpack.c.l.b16 %v339
    %v1419 = vunpack.c.h.b16 %v339
    %v1420 = vunpack.c.l.b16 %v340
    %v1421 = vunpack.c.h.b16 %v340
    %v1422 = vunpack.c.l.b16 %v341
    %v1423 = vunpack.c.h.b16 %v341
    %v1424 = vunpack.c.l.b16 %v342
    %v1425 = vunpack.c.h.b16 %v342
    %v1426 = vunpack.c.l.b16 %v343
    %v1427 = vunpack.c.h.b16 %v343
    %v1428 = vunpack.c.l.b16 %v344
    %v1429 = vunpack.c.h.b16 %v344
    %v1430 = vunpack.c.l.b16 %v345
    %v1431 = vunpack.c.h.b16 %v345
    %v1432 = vunpack.c.l.b16 %v346
    %v1433 = vunpack.c.h.b16 %v346
    %v1434 = vunpack.c.l.b16 %v347
    %v1435 = vunpack.c.h.b16 %v347
    %v1436 = vunpack.c.l.b16 %v348
    %v1437 = vunpack.c.h.b16 %v348
    %v1438 = vunpack.c.l.b16 %v349
    %v1439 = vunpack.c.h.b16 %v349
    %v1440 = vunpack.c.l.b16 %v350
    %v1441 = vunpack.c.h.b16 %v350
    %v1442 = vunpack.c.l.b16 %v351
    %v1443 = vunpack.c.h.b16 %v351
    %v1444 = vunpack.c.l.b16 %v352
    %v1445 = vunpack.c.h.b16 %v352
    %v1446 = vunpack.c.l.b16 %v353
    %v1447 = vunpack.c.h.b16 %v353
    %v1448 = vunpack.c.l.b16 %v354
    %v1449 = vunpack.c.h.b16 %v354
    %v1450 = vunpack.c.l.b16 %v355
    %v1451 = vunpack.c.h.b16 %v355
    %v1452 = vunpack.c.l.b16 %v356
    %v1453 = vunpack.c.h.b16 %v356
    %v1454 = vunpack.c.l.b16 %v357
    %v1455 = vunpack.c.h.b16 %v357
    %v1456 = vunpack.c.l.b16 %v358
    %v1457 = vunpack.c.h.b16 %v358
    %v1458 = vunpack.c.l.b16 %v359
    %v1459 = vunpack.c.h.b16 %v359
    %v1460 = vunpack.c.l.b16 %v360
    %v1461 = vunpack.c.h.b16 %v360
    %v1462 = vunpack.c.l.b16 %v361
    %v1463 = vunpack.c.h.b16 %v361
    %v1464 = vunpack.c.l.b16 %v362
    %v1465 = vunpack.c.h.b16 %v362
    %v1466 = vunpack.c.l.b16 %v363
    %v1467 = vunpack.c.h.b16 %v363
    %v1468 = vunpack.c.l.b16 %v364
    %v1469 = vunpack.c.h.b16 %v364
    %v1470 = vunpack.c.l.b16 %v365
    %v1471 = vunpack.c.h.b16 %v365
    %v1472 = vunpack.c.l.b16 %v366
    %v1473 = vunpack.c.h.b16 %v366
    %v1474 = vunpack.c.l.b16 %v367
    %v1475 = vunpack.c.h.b16 %v367
    %v1476 = vunpack.c.l.b16 %v368
    %v1477 = vunpack.c.h.b16 %v368
    %v1478 = vunpack.c.l.b16 %v369
    %v1479 = vunpack.c.h.b16 %v369
    %v1480 = vunpack.c.l.b16 %v370
    %v1481 = vunpack.c.h.b16 %v370
    %v1482 = vunpack.c.l.b16 %v371
    %v1483 = vunpack.c.h.b16 %v371
    %v1484 = vunpack.c.l.b16 %v372
    %v1485 = vunpack.c.h.b16 %v372
    %v1486 = vunpack.c.l.b16 %v373
    %v1487 = vunpack.c.h.b16 %v373
    %v1488 = vunpack.c.l.b16 %v374
    %v1489 = vunpack.c.h.b16 %v374
    %v1490 = vunpack.c.l.b16 %v375
    %v1491 = vunpack.c.h.b16 %v375
    %v1492 = vunpack.c.l.b16 %v376
    %v1493 = vunpack.c.h.b16 %v376
    %v1494 = vunpack.c.l.b16 %v377
    %v1495 = vunpack.c.h.b16 %v377
    %v1496 = vunpack.c.l.b16 %v378
    %v1497 = vunpack.c.h.b16 %v378
    %v1498 = vunpack.c.l.b16 %v379
    %v1499 = vunpack.c.h.b16 %v379
    %v1500 = vunpack.c.l.b16 %v380
    %v1501 = vunpack.c.h.b16 %v380
    %v1502 = vunpack.c.l.b16 %v381
    %v1503 = vunpack.c.h.b16 %v381
    %v1504 = vunpack.c.l.b16 %v382
    %v1505 = vunpack.c.h.b16 %v382
    %v1506 = vunpack.c.l.b16 %v383
    %v1507 = vunpack.c.h.b16 %v383
    %v1508 = vunpack.c.l.b16 %v384
    %v1509 = vunpack.c.h.b16 %v384
    %v1510 = vunpack.c.l.b16 %v385
    %v1511 = vunpack.c.h.b16 %v385
    %v1512 = vunpack.c.l.b16 %v386
    %v1513 = vunpack.c.h.b16 %v386
    %v1514 = vunpack.c.l.b16 %v387
    %v1515 = vunpack.c.h.b16 %v387
    %v1516 = vunpack.c.l.b16 %v388
    %v1517 = vunpack.c.h.b16 %v388
    %v1518 = vunpack.c.l.b16 %v389
    %v1519 = vunpack.c.h.b16 %v389
    %v1520 = vunpack.c.l.b16 %v390
    %v1521 = vunpack.c.h.b16 %v390
    %v1522 = vunpack.c.l.b16 %v391
    %v1523 = vunpack.c.h.b16 %v391
    %v1524 = vunpack.c.l.b16 %v392
    %v1525 = vunpack.c.h.b16 %v392
    %v1526 = vunpack.c.l.b16 %v393
    %v1527 = vunpack.c.h.b16 %v393
    %v1528 = vunpack.c.l.b16 %v394
    %v1529 = vunpack.c.h.b16 %v394
    %v1530 = vunpack.c.l.b16 %v395
    %v1531 = vunpack.c.h.b16 %v395
    %v1532 = vunpack.c.l.b16 %v396
    %v1533 = vunpack.c.h.b16 %v396
    %v1534 = vunpack.c.l.b16 %v397
    %v1535 = vunpack.c.h.b16 %v397
    %v1536 = vunpack.c.l.b16 %v398
    %v1537 = vunpack.c.h.b16 %v398
    %v1538 = vunpack.c.l.b16 %v399
    %v1539 = vunpack.c.h.b16 %v399
    %v1540 = vunpack.c.l.b16 %v400
    %v1541 = vunpack.c.h.b16 %v400
    %v1542 = vunpack.c.l.b16 %v401
    %v1543 = vunpack.c.h.b16 %v401
    %v1544 = vunpack.c.l.b16 %v402
    %v1545 = vunpack.c.h.b16 %v402
    %v1546 = vunpack.c.l.b16 %v403
    %v1547 = vunpack.c.h.b16 %v403
    %v1548 = vunpack.c.l.b16 %v404
    %v1549 = vunpack.c.h.b16 %v404
    %v1550 = vunpack.c.l.b16 %v405
    %v1551 = vunpack.c.h.b16 %v405
    %v1552 = vunpack.c.l.b16 %v406
    %v1553 = vunpack.c.h.b16 %v406
    %v1554 = vunpack.c.l.b16 %v407
    %v1555 = vunpack.c.h.b16 %v407
    %v1556 = vunpack.c.l.b16 %v408
    %v1557 = vunpack.c.h.b16 %v408
    %v1558 = vunpack.c.l.b16 %v409
    %v1559 = vunpack.c.h.b16 %v409
    %v1560 = vunpack.c.l.b16 %v410
    %v1561 = vunpack.c.h.b16 %v410
    %v1562 = vunpack.c.l.b16 %v411
    %v1563 = vunpack.c.h.b16 %v411
    %v1564 = vunpack.c.l.b16 %v412
    %v1565 = vunpack.c.h.b16 %v412
    %v1566 = vunpack.c.l.b16 %v413
    %v1567 = vunpack.c.h.b16 %v413
    %v1568 = vunpack.c.l.b16 %v414
    %v1569 = vunpack.c.h.b16 %v414
    %v1570 = vunpack.c.l.b16 %v415
    %v1571 = vunpack.c.h.b16 %v415
    %v1572 = vunpack.c.l.b16 %v416
    %v1573 = vunpack.c.h.b16 %v416
    %v1574 = vunpack.c.l.b16 %v417
    %v1575 = vunpack.c.h.b16 %v417
    %v1576 = vunpack.c.l.b16 %v418
    %v1577 = vunpack.c.h.b16 %v418
    %v1578 = vunpack.c.l.b16 %v419
    %v1579 = vunpack.c.h.b16 %v419
    %v1580 = vunpack.c.l.b16 %v420
    %v1581 = vunpack.c.h.b16 %v420
    %v1582 = vunpack.c.l.b16 %v421
    %v1583 = vunpack.c.h.b16 %v421
    %v1584 = vunpack.c.l.b16 %v422
    %v1585 = vunpack.c.h.b16 %v422
    %v1586 = vunpack.c.l.b16 %v423
    %v1587 = vunpack.c.h.b16 %v423
    %v1588 = vunpack.c.l.b16 %v424
    %v1589 = vunpack.c.h.b16 %v424
    %v1590 = vunpack.c.l.b16 %v425
    %v1591 = vunpack.c.h.b16 %v425
    %v1592 = vunpack.c.l.b16 %v426
    %v1593 = vunpack.c.h.b16 %v426
    %v1594 = vunpack.c.l.b16 %v427
    %v1595 = vunpack.c.h.b16 %v427
    %v1596 = vunpack.c.l.b16 %v428
    %v1597 = vunpack.c.h.b16 %v428
    %v1598 = vunpack.c.l.b16 %v429
    %v1599 = vunpack.c.h.b16 %v429
    %v1600 = vunpack.c.l.b16 %v430
    %v1601 = vunpack.c.h.b16 %v430
    %v1602 = vunpack.c.l.b16 %v431
    %v1603 = vunpack.c.h.b16 %v431
    %v1604 = vunpack.c.l.b16 %v432
    %v1605 = vunpack.c.h.b16 %v432
    %v1606 = vunpack.c.l.b16 %v433
    %v1607 = vunpack.c.h.b16 %v433
    %v1608 = vunpack.c.l.b16 %v434
    %v1609 = vunpack.c.h.b16 %v434
    %v1610 = vunpack.c.l.b16 %v435
    %v1611 = vunpack.c.h.b16 %v435
    %v1612 = vunpack.c.l.b16 %v436
    %v1613 = vunpack.c.h.b16 %v436
    %v1614 = vunpack.c.l.b16 %v437
    %v1615 = vunpack.c.h.b16 %v437
    %v1616 = vunpack.c.l.b16 %v438
    %v1617 = vunpack.c.h.b16 %v438
    %v1618 = vunpack.c.l.b16 %v439
    %v1619 = vunpack.c.h.b16 %v439
    %v1620 = vunpack.c.l.b16 %v440
    %v1621 = vunpack.c.h.b16 %v440
    %v1622 = vunpack.c.l.b16 %v441
    %v1623 = vunpack.c.h.b16 %v441
    %v1624 = vunpack.c.l.b16 %v442
    %v1625 = vunpack.c.h.b16 %v442
    %v1626 = vunpack.c.l.b16 %v443
    %v1627 = vunpack.c.h.b16 %v443
    %v1628 = vunpack.c.l.b16 %v444
    %v1629 = vunpack.c.h.b16 %v444
    %v1630 = vunpack.c.l.b16 %v445
    %v1631 = vunpack.c.h.b16 %v445
    %v1632 = vunpack.c.l.b16 %v446
    %v1633 = vunpack.c.h.b16 %v446
    %v1634 = vunpack.c.l.b16 %v447
    %v1635 = vunpack.c.h.b16 %v447
    %v1636 = vunpack.c.l.b16 %v448
    %v1637 = vunpack.c.h.b16 %v448
    %v1638 = vunpack.c.l.b16 %v449
    %v1639 = vunpack.c.h.b16 %v449
    %v1640 = vunpack.c.l.b16 %v450
    %v1641 = vunpack.c.h.b16 %v450
    %v1642 = vunpack.c.l.b16 %v451
    %v1643 = vunpack.c.h.b16 %v451
    %v1644 = vunpack.c.l.b16 %v452
    %v1645 = vunpack.c.h.b16 %v452
    %v1646 = vunpack.c.l.b16 %v453
    %v1647 = vunpack.c.h.b16 %v453
    %v1648 = vunpack.c.l.b16 %v454
    %v1649 = vunpack.c.h.b16 %v454
    %v1650 = vunpack.c.l.b16 %v455
    %v1651 = vunpack.c.h.b16 %v455
    %v1652 = vunpack.c.l.b16 %v456
    %v1653 = vunpack.c.h.b16 %v456
    %v1654 = vunpack.c.l.b16 %v457
    %v1655 = vunpack.c.h.b16 %v457
    %v1656 = vunpack.c.l.b16 %v458
    %v1657 = vunpack.c.h.b16 %v458
    %v1658 = vunpack.c.l.b16 %v459
    %v1659 = vunpack.c.h.b16 %v459
    %v1660 = vunpack.c.l.b16 %v460
    %v1661 = vunpack.c.h.b16 %v460
    %v1662 = vunpack.c.l.b16 %v461
    %v1663 = vunpack.c.h.b16 %v461
    %v1664 = vunpack.c.l.b16 %v462
    %v1665 = vunpack.c.h.b16 %v462
    %v1666 = vunpack.c.l.b16 %v463
    %v1667 = vunpack.c.h.b16 %v463
    %v1668 = vunpack.c.l.b16 %v464
    %v1669 = vunpack.c.h.b16 %v464
    %v1670 = vunpack.c.l.b16 %v465
    %v1671 = vunpack.c.h.b16 %v465
    %v1672 = vunpack.c.l.b16 %v466
    %v1673 = vunpack.c.h.b16 %v466
    %v1674 = vunpack.c.l.b16 %v467
    %v1675 = vunpack.c.h.b16 %v467
    %v1676 = vunpack.c.l.b16 %v468
    %v1677 = vunpack.c.h.b16 %v468
    %v1678 = vunpack.c.l.b16 %v469
    %v1679 = vunpack.c.h.b16 %v469
    %v1680 = vunpack.c.l.b16 %v470
    %v1681 = vunpack.c.h.b16 %v470
    %v1682 = vunpack.c.l.b16 %v471
    %v1683 = vunpack.c.h.b16 %v471
    %v1684 = vunpack.c.l.b16 %v472
    %v1685 = vunpack.c.h.b16 %v472
    %v1686 = vunpack.c.l.b16 %v473
    %v1687 = vunpack.c.h.b16 %v473
    %v1688 = vunpack.c.l.b16 %v474
    %v1689 = vunpack.c.h.b16 %v474
    %v1690 = vunpack.c.l.b16 %v475
    %v1691 = vunpack.c.h.b16 %v475
    %v1692 = vunpack.c.l.b16 %v476
    %v1693 = vunpack.c.h.b16 %v476
    %v1694 = vunpack.c.l.b16 %v477
    %v1695 = vunpack.c.h.b16 %v477
    %v1696 = vunpack.c.l.b16 %v478
    %v1697 = vunpack.c.h.b16 %v478
    %v1698 = vunpack.c.l.b16 %v479
    %v1699 = vunpack.c.h.b16 %v479
    %v1700 = vunpack.c.l.b16 %v480
    %v1701 = vunpack.c.h.b16 %v480
    %v1702 = vunpack.c.l.b16 %v481
    %v1703 = vunpack.c.h.b16 %v481
    %v1704 = vunpack.c.l.b16 %v482
    %v1705 = vunpack.c.h.b16 %v482
    %v1706 = vunpack.c.l.b16 %v483
    %v1707 = vunpack.c.h.b16 %v483
    %v1708 = vunpack.c.l.b16 %v484
    %v1709 = vunpack.c.h.b16 %v484
    %v1710 = vunpack.c.l.b16 %v485
    %v1711 = vunpack.c.h.b16 %v485
    %v1712 = vunpack.c.l.b16 %v486
    %v1713 = vunpack.c.h.b16 %v486
    %v1714 = vunpack.c.l.b16 %v487
    %v1715 = vunpack.c.h.b16 %v487
    %v1716 = vunpack.c.l.b16 %v488
    %v1717 = vunpack.c.h.b16 %v488
    %v1718 = vunpack.c.l.b16 %v489
    %v1719 = vunpack.c.h.b16 %v489
    %v1720 = vunpack.c.l.b16 %v490
    %v1721 = vunpack.c.h.b16 %v490
    %v1722 = vunpack.c.l.b16 %v491
    %v1723 = vunpack.c.h.b16 %v491
    %v1724 = vunpack.c.l.b16 %v492
    %v1725 = vunpack.c.h.b16 %v492
    %v1726 = vunpack.c.l.b16 %v493
    %v1727 = vunpack.c.h.b16 %v493
    %v1728 = vunpack.c.l.b16 %v494
    %v1729 = vunpack.c.h.b16 %v494
    %v1730 = vunpack.c.l.b16 %v495
    %v1731 = vunpack.c.h.b16 %v495
    %v1732 = vunpack.c.l.b16 %v496
    %v1733 = vunpack.c.h.b16 %v496
    %v1734 = vunpack.c.l.b16 %v497
    %v1735 = vunpack.c.h.b16 %v497
    %v1736 = vunpack.c.l.b16 %v498
    %v1737 = vunpack.c.h.b16 %v498
    %v1738 = vunpack.c.l.b16 %v499
    %v1739 = vunpack.c.h.b16 %v499
    %v1740 = vunpack.c.l.b16 %v500
    %v1741 = vunpack.c.h.b16 %v500
    %v1742 = vunpack.c.l.b16 %v501
    %v1743 = vunpack.c.h.b16 %v501
    %v1744 = vunpack.c.l.b16 %v502
    %v1745 = vunpack.c.h.b16 %v502
    %v1746 = vunpack.c.l.b16 %v503
    %v1747 = vunpack.c.h.b16 %v503
    %v1748 = vunpack.c.l.b16 %v504
    %v1749 = vunpack.c.h.b16 %v504
    %v1750 = vunpack.c.l.b16 %v505
    %v1751 = vunpack.c.h.b16 %v505
    %v1752 = vunpack.c.l.b16 %v506
    %v1753 = vunpack.c.h.b16 %v506
    %v1754 = vunpack.c.l.b16 %v507
    %v1755 = vunpack.c.h.b16 %v507
    %v1756 = vunpack.c.l.b16 %v508
    %v1757 = vunpack.c.h.b16 %v508
    %v1758 = vunpack.c.l.b16 %v509
    %v1759 = vunpack.c.h.b16 %v509
    %v1760 = vunpack.c.l.b16 %v510
    %v1761 = vunpack.c.h.b16 %v510
    %v1762 = vunpack.c.l.b16 %v511
    %v1763 = vunpack.c.h.b16 %v511
    %v1764 = vunpack.c.l.b16 %v512
    %v1765 = vunpack.c.h.b16 %v512
    %v1766 = vunpack.c.l.b16 %v513
    %v1767 = vunpack.c.h.b16 %v513
    %v1768 = vunpack.c.l.b16 %v514
    %v1769 = vunpack.c.h.b16 %v514
    %v1770 = vunpack.c.l.b16 %v515
    %v1771 = vunpack.c.h.b16 %v515
    %v1772 = vunpack.c.l.b16 %v516
    %v1773 = vunpack.c.h.b16 %v516
    %v1774 = vunpack.c.l.b16 %v517
    %v1775 = vunpack.c.h.b16 %v517
    %v1776 = vunpack.c.l.b16 %v518
    %v1777 = vunpack.c.h.b16 %v518
    %v1778 = vunpack.c.l.b16 %v519
    %v1779 = vunpack.c.h.b16 %v519
    %v1780 = vunpack.c.l.b16 %v520
    %v1781 = vunpack.c.h.b16 %v520
    %v1782 = vunpack.c.l.b16 %v521
    %v1783 = vunpack.c.h.b16 %v521
    %v1784 = vunpack.c.l.b16 %v522
    %v1785 = vunpack.c.h.b16 %v522
    %v1786 = vunpack.c.l.b16 %v523
    %v1787 = vunpack.c.h.b16 %v523
    %v1788 = vunpack.c.l.b16 %v524
    %v1789 = vunpack.c.h.b16 %v524
    %v1790 = vunpack.c.l.b16 %v525
    %v1791 = vunpack.c.h.b16 %v525
    %v1792 = vunpack.c.l.b16 %v526
    %v1793 = vunpack.c.h.b16 %v526
    %v1794 = vunpack.c.l.b16 %v527
    %v1795 = vunpack.c.h.b16 %v527
    %v1796 = vunpack.c.l.b16 %v528
    %v1797 = vunpack.c.h.b16 %v528
    %v1798 = vunpack.c.l.b16 %v529
    %v1799 = vunpack.c.h.b16 %v529
    %v1800 = vunpack.c.l.b16 %v530
    %v1801 = vunpack.c.h.b16 %v530
    %v1802 = vunpack.c.l.b16 %v531
    %v1803 = vunpack.c.h.b16 %v531
    %v1804 = vunpack.c.l.b16 %v532
    %v1805 = vunpack.c.h.b16 %v532
    %v1806 = vunpack.c.l.b16 %v533
    %v1807 = vunpack.c.h.b16 %v533
    %v1808 = vunpack.c.l.b16 %v534
    %v1809 = vunpack.c.h.b16 %v534
    %v1810 = vunpack.c.l.b16 %v535
    %v1811 = vunpack.c.h.b16 %v535
    %v1812 = vunpack.c.l.b16 %v536
    %v1813 = vunpack.c.h.b16 %v536
    %v1814 = vunpack.c.l.b16 %v537
    %v1815 = vunpack.c.h.b16 %v537
    %v1816 = vunpack.c.l.b16 %v538
    %v1817 = vunpack.c.h.b16 %v538
    %v1818 = vunpack.c.l.b16 %v539
    %v1819 = vunpack.c.h.b16 %v539
    %v1820 = vunpack.c.l.b16 %v540
    %v1821 = vunpack.c.h.b16 %v540
    %v1822 = vunpack.c.l.b16 %v541
    %v1823 = vunpack.c.h.b16 %v541
    %v1824 = vunpack.c.l.b16 %v542
    %v1825 = vunpack.c.h.b16 %v542
    %v1826 = vunpack.c.l.b16 %v543
    %v1827 = vunpack.c.h.b16 %v543
    %v1828 = vunpack.c.l.b16 %v544
    %v1829 = vunpack.c.h.b16 %v544
    %v1830 = vunpack.c.l.b16 %v545
    %v1831 = vunpack.c.h.b16 %v545
    %v1832 = vunpack.c.l.b16 %v546
    %v1833 = vunpack.c.h.b16 %v546
    %v1834 = vunpack.c.l.b16 %v547
    %v1835 = vunpack.c.h.b16 %v547
    %v1836 = vunpack.c.l.b16 %v548
    %v1837 = vunpack.c.h.b16 %v548
    %v1838 = vunpack.c.l.b16 %v549
    %v1839 = vunpack.c.h.b16 %v549
    %v1840 = vunpack.c.l.b16 %v550
    %v1841 = vunpack.c.h.b16 %v550
    %v1842 = vunpack.c.l.b16 %v551
    %v1843 = vunpack.c.h.b16 %v551
    %v1844 = vunpack.c.l.b16 %v552
    %v1845 = vunpack.c.h.b16 %v552
    %v1846 = vunpack.c.l.b16 %v553
    %v1847 = vunpack.c.h.b16 %v553
    %v1848 = vunpack.c.l.b16 %v554
    %v1849 = vunpack.c.h.b16 %v554
    %v1850 = vunpack.c.l.b16 %v555
    %v1851 = vunpack.c.h.b16 %v555
    %v1852 = vunpack.c.l.b16 %v556
    %v1853 = vunpack.c.h.b16 %v556
    %v1854 = vunpack.c.l.b16 %v557
    %v1855 = vunpack.c.h.b16 %v557
    %v1856 = vunpack.c.l.b16 %v558
    %v1857 = vunpack.c.h.b16 %v558
    %v1858 = vunpack.c.l.b16 %v559
    %v1859 = vunpack.c.h.b16 %v559
    %v1860 = vunpack.c.l.b16 %v560
    %v1861 = vunpack.c.h.b16 %v560
    %v1862 = vunpack.c.l.b16 %v561
    %v1863 = vunpack.c.h.b16 %v561
    %v1864 = vunpack.c.l.b16 %v562
    %v1865 = vunpack.c.h.b16 %v562
    %v1866 = vunpack.c.l.b16 %v563
    %v1867 = vunpack.c.h.b16 %v563
    %v1868 = vunpack.c.l.b16 %v564
    %v1869 = vunpack.c.h.b16 %v564
    %v1870 = vunpack.c.l.b16 %v565
    %v1871 = vunpack.c.h.b16 %v565
    %v1872 = vunpack.c.l.b16 %v566
    %v1873 = vunpack.c.h.b16 %v566
    %v1874 = vunpack.c.l.b16 %v567
    %v1875 = vunpack.c.h.b16 %v567
    %v1876 = vunpack.c.l.b16 %v568
    %v1877 = vunpack.c.h.b16 %v568
    %v1878 = vunpack.c.l.b16 %v569
    %v1879 = vunpack.c.h.b16 %v569
    %v1880 = vunpack.c.l.b16 %v570
    %v1881 = vunpack.c.h.b16 %v570
    %v1882 = vunpack.c.l.b16 %v571
    %v1883 = vunpack.c.h.b16 %v571
    %v1884 = vunpack.c.l.b16 %v572
    %v1885 = vunpack.c.h.b16 %v572
    %v1886 = vunpack.c.l.b16 %v573
    %v1887 = vunpack.c.h.b16 %v573
    %v1888 = vunpack.c.l.b16 %v574
    %v1889 = vunpack.c.h.b16 %v574
    %v1890 = vunpack.c.l.b16 %v575
    %v1891 = vunpack.c.h.b16 %v575
    %v1892 = vunpack.c.l.b16 %v576
    %v1893 = vunpack.c.h.b16 %v576
    %v1894 = vunpack.c.l.b16 %v577
    %v1895 = vunpack.c.h.b16 %v577
    %v1896 = vunpack.c.l.b16 %v578
    %v1897 = vunpack.c.h.b16 %v578
    %v1898 = vunpack.c.l.b16 %v579
    %v1899 = vunpack.c.h.b16 %v579
    %v1900 = vunpack.c.l.b16 %v580
    %v1901 = vunpack.c.h.b16 %v580
    %v1902 = vunpack.c.l.b16 %v581
    %v1903 = vunpack.c.h.b16 %v581
    %v1904 = vunpack.c.l.b16 %v582
    %v1905 = vunpack.c.h.b16 %v582
    %v1906 = vunpack.c.l.b16 %v583
    %v1907 = vunpack.c.h.b16 %v583
    %v1908 = vunpack.c.l.b16 %v584
    %v1909 = vunpack.c.h.b16 %v584
    %v1910 = vunpack.c.l.b16 %v585
    %v1911 = vunpack.c.h.b16 %v585
    %v1912 = vunpack.c.l.b16 %v586
    %v1913 = vunpack.c.h.b16 %v586
    %v1914 = vunpack.c.l.b16 %v587
    %v1915 = vunpack.c.h.b16 %v587
    %v1916 = vunpack.c.l.b16 %v588
    %v1917 = vunpack.c.h.b16 %v588
    %v1918 = vunpack.c.l.b16 %v589
    %v1919 = vunpack.c.h.b16 %v589
    %v1920 = vunpack.c.l.b16 %v590
    %v1921 = vunpack.c.h.b16 %v590
    %v1922 = vunpack.c.l.b16 %v591
    %v1923 = vunpack.c.h.b16 %v591
    %v1924 = vunpack.c.l.b16 %v592
    %v1925 = vunpack.c.h.b16 %v592
    %v1926 = vunpack.c.l.b16 %v593
    %v1927 = vunpack.c.h.b16 %v593
    %v1928 = vunpack.c.l.b16 %v594
    %v1929 = vunpack.c.h.b16 %v594
    %v1930 = vunpack.c.l.b16 %v595
    %v1931 = vunpack.c.h.b16 %v595
    %v1932 = vunpack.c.l.b16 %v596
    %v1933 = vunpack.c.h.b16 %v596
    %v1934 = vunpack.c.l.b16 %v597
    %v1935 = vunpack.c.h.b16 %v597
    %v1936 = vunpack.c.l.b16 %v598
    %v1937 = vunpack.c.h.b16 %v598
    %v1938 = vunpack.c.l.b16 %v599
    %v1939 = vunpack.c.h.b16 %v599
    %v1940 = vunpack.c.l.b16 %v600
    %v1941 = vunpack.c.h.b16 %v600
    %v1942 = vunpack.c.l.b16 %v601
    %v1943 = vunpack.c.h.b16 %v601
    %v1944 = vunpack.c.l.b16 %v602
    %v1945 = vunpack.c.h.b16 %v602
    %v1946 = vunpack.c.l.b16 %v603
    %v1947 = vunpack.c.h.b16 %v603
    %v1948 = vunpack.c.l.b16 %v604
    %v1949 = vunpack.c.h.b16 %v604
    %v1950 = vunpack.c.l.b16 %v605
    %v1951 = vunpack.c.h.b16 %v605
    %v1952 = vunpack.c.l.b16 %v606
    %v1953 = vunpack.c.h.b16 %v606
    %v1954 = vunpack.c.l.b16 %v607
    %v1955 = vunpack.c.h.b16 %v607
    %v1956 = vunpack.c.l.b16 %v608
    %v1957 = vunpack.c.h.b16 %v608
    %v1958 = vunpack.c.l.b16 %v609
    %v1959 = vunpack.c.h.b16 %v609
    %v1960 = vunpack.c.l.b16 %v610
    %v1961 = vunpack.c.h.b16 %v610
    %v1962 = vunpack.c.l.b16 %v611
    %v1963 = vunpack.c.h.b16 %v611
    %v1964 = vunpack.c.l.b16 %v612
    %v1965 = vunpack.c.h.b16 %v612
    %v1966 = vunpack.c.l.b16 %v613
    %v1967 = vunpack.c.h.b16 %v613
    %v1968 = vunpack.c.l.b16 %v614
    %v1969 = vunpack.c.h.b16 %v614
    %v1970 = vunpack.c.l.b16 %v615
    %v1971 = vunpack.c.h.b16 %v615
    %v1972 = vunpack.c.l.b16 %v616
    %v1973 = vunpack.c.h.b16 %v616
    %v1974 = vunpack.c.l.b16 %v617
    %v1975 = vunpack.c.h.b16 %v617
    %v1976 = vunpack.c.l.b16 %v618
    %v1977 = vunpack.c.h.b16 %v618
    %v1978 = vunpack.c.l.b16 %v619
    %v1979 = vunpack.c.h.b16 %v619
    %v1980 = vunpack.c.l.b16 %v620
    %v1981 = vunpack.c.h.b16 %v620
    %v1982 = vunpack.c.l.b16 %v621
    %v1983 = vunpack.c.h.b16 %v621
    %v1984 = vunpack.c.l.b16 %v622
    %v1985 = vunpack.c.h.b16 %v622
    %v1986 = vunpack.c.l.b16 %v623
    %v1987 = vunpack.c.h.b16 %v623
    %v1988 = vunpack.c.l.b16 %v624
    %v1989 = vunpack.c.h.b16 %v624
    %v1990 = vunpack.c.l.b16 %v625
    %v1991 = vunpack.c.h.b16 %v625
    %v1992 = vunpack.c.l.b16 %v626
    %v1993 = vunpack.c.h.b16 %v626
    %v1994 = vunpack.c.l.b16 %v627
    %v1995 = vunpack.c.h.b16 %v627
    %v1996 = vunpack.c.l.b16 %v628
    %v1997 = vunpack.c.h.b16 %v628
    %v1998 = vpack.c.b16 %v1110, %v1102
    %v1999 = vpack.c.b16 %v1111, %v1103
    %v2000 = vpack.c.b16 %v1112, %v1104
    %v2001 = vpack.c.b16 %v1113, %v1105
    %v2002 = vpack.c.b16 %v1114, %v1106
    %v2003 = vpack.c.b16 %v1115, %v1107
    %v2004 = vpack.c.b16 %v1116, %v1108
    %v2005 = vpack.c.b16 %v1117, %v1109
    %v2006 = vpack.c.b16 %v1126, %v1118
    %v2007 = vpack.c.b16 %v1127, %v1119
    %v2008 = vpack.c.b16 %v1128, %v1120
    %v2009 = vpack.c.b16 %v1129, %v1121
    %v2010 = vpack.c.b16 %v1130, %v1122
    %v2011 = vpack.c.b16 %v1131, %v1123
    %v2012 = vpack.c.b16 %v1132, %v1124
    %v2013 = vpack.c.b16 %v1133, %v1125
    %v2014 = vpack.c.b16 %v1142, %v1134
    %v2015 = vpack.c.b16 %v1143, %v1135
    %v2016 = vpack.c.b16 %v1144, %v1136
    %v2017 = vpack.c.b16 %v1145, %v1137
    %v2018 = vpack.c.b16 %v1146, %v1138
    %v2019 = vpack.c.b16 %v1147, %v1139
    %v2020 = vpack.c.b16 %v1148, %v1140
    %v2021 = vpack.c.b16 %v1149, %v1141
    %v2022 = vpack.c.b16 %v1158, %v1150
    %v2023 = vpack.c.b16 %v1159, %v1151
    %v2024 = vpack.c.b16 %v1160, %v1152
    %v2025 = vpack.c.b16 %v1161, %v1153
    %v2026 = vpack.c.b16 %v1162, %v1154
    %v2027 = vpack.c.b16 %v1163, %v1155
    %v2028 = vpack.c.b16 %v1164, %v1156
    %v2029 = vpack.c.b16 %v1165, %v1157
    %v2030 = vpack.c.b16 %v1174, %v1166
    %v2031 = vpack.c.b16 %v1175, %v1167
    %v2032 = vpack.c.b16 %v1176, %v1168
    %v2033 = vpack.c.b16 %v1177, %v1169
    %v2034 = vpack.c.b16 %v1178, %v1170
    %v2035 = vpack.c.b16 %v1179, %v1171
    %v2036 = vpack.c.b16 %v1180, %v1172
    %v2037 = vpack.c.b16 %v1181, %v1173
    %v2038 = vpack.c.b16 %v1190, %v1182
    %v2039 = vpack.c.b16 %v1191, %v1183
    %v2040 = vpack.c.b16 %v1192, %v1184
    %v2041 = vpack.c.b16 %v1193, %v1185
    %v2042 = vpack.c.b16 %v1194, %v1186
    %v2043 = vpack.c.b16 %v1195, %v1187
    %v2044 = vpack.c.b16 %v1196, %v1188
    %v2045 = vpack.c.b16 %v1197, %v1189
    %v2046 = vpack.c.b16 %v1206, %v1198
    %v2047 = vpack.c.b16 %v1207, %v1199
    %v2048 = vpack.c.b16 %v1208, %v1200
    %v2049 = vpack.c.b16 %v1209, %v1201
    %v2050 = vpack.c.b16 %v1210, %v1202
    %v2051 = vpack.c.b16 %v1211, %v1203
    %v2052 = vpack.c.b16 %v1212, %v1204
    %v2053 = vpack.c.b16 %v1213, %v1205
    %v2054 = vpack.c.b16 %v1222, %v1214
    %v2055 = vpack.c.b16 %v1223, %v1215
    %v2056 = vpack.c.b16 %v1224, %v1216
    %v2057 = vpack.c.b16 %v1225, %v1217
    %v2058 = vpack.c.b16 %v1226, %v1218
    %v2059 = vpack.c.b16 %v1227, %v1219
    %v2060 = vpack.c.b16 %v1228, %v1220
    %v2061 = vpack.c.b16 %v1229, %v1221
    %v2062 = vpack.c.b16 %v1238, %v1230
    %v2063 = vpack.c.b16 %v1239, %v1231
    %v2064 = vpack.c.b16 %v1240, %v1232
    %v2065 = vpack.c.b16 %v1241, %v1233
    %v2066 = vpack.c.b16 %v1242, %v1234
    %v2067 = vpack.c.b16 %v1243, %v1235
    %v2068 = vpack.c.b16 %v1244, %v1236
    %v2069 = vpack.c.b16 %v1245, %v1237
    %v2070 = vpack.c.b16 %v1254, %v1246
    %v2071 = vpack.c.b16 %v1255, %v1247
    %v2072 = vpack.c.b16 %v1256, %v1248
    %v2073 = vpack.c.b16 %v1257, %v1249
    %v2074 = vpack.c.b16 %v1258, %v1250
    %v2075 = vpack.c.b16 %v1259, %v1251
    %v2076 = vpack.c.b16 %v1260, %v1252
    %v2077 = vpack.c.b16 %v1261, %v1253
    %v2078 = vpack.c.b16 %v1270, %v1262
    %v2079 = vpack.c.b16 %v1271, %v1263
    %v2080 = vpack.c.b16 %v1272, %v1264
    %v2081 = vpack.c.b16 %v1273, %v1265
    %v2082 = vpack.c.b16 %v1274, %v1266
    %v2083 = vpack.c.b16 %v1275, %v1267
    %v2084 = vpack.c.b16 %v1276, %v1268
    %v2085 = vpack.c.b16 %v1277, %v1269
    %v2086 = vpack.c.b16 %v1286, %v1278
    %v2087 = vpack.c.b16 %v1287, %v1279
    %v2088 = vpack.c.b16 %v1288, %v1280
    %v2089 = vpack.c.b16 %v1289, %v1281
    %v2090 = vpack.c.b16 %v1290, %v1282
    %v2091 = vpack.c.b16 %v1291, %v1283
    %v2092 = vpack.c.b16 %v1292, %v1284
    %v2093 = vpack.c.b16 %v1293, %v1285
    %v2094 = vpack.c.b16 %v1302, %v1294
    %v2095 = vpack.c.b16 %v1303, %v1295
    %v2096 = vpack.c.b16 %v1304, %v1296
    %v2097 = vpack.c.b16 %v1305, %v1297
    %v2098 = vpack.c.b16 %v1306, %v1298
    %v2099 = vpack.c.b16 %v1307, %v1299
    %v2100 = vpack.c.b16 %v1308, %v1300
    %v2101 = vpack.c.b16 %v1309, %v1301
    %v2102 = vpack.c.b16 %v1318, %v1310
    %v2103 = vpack.c.b16 %v1319, %v1311
    %v2104 = vpack.c.b16 %v1320, %v1312
    %v2105 = vpack.c.b16 %v1321, %v1313
    %v2106 = vpack.c.b16 %v1322, %v1314
    %v2107 = vpack.c.b16 %v1323, %v1315
    %v2108 = vpack.c.b16 %v1324, %v1316
    %v2109 = vpack.c.b16 %v1325, %v1317
    %v2110 = vpack.c.b16 %v1334, %v1326
    %v2111 = vpack.c.b16 %v1335, %v1327
    %v2112 = vpack.c.b16 %v1336, %v1328
    %v2113 = vpack.c.b16 %v1337, %v1329
    %v2114 = vpack.c.b16 %v1338, %v1330
    %v2115 = vpack.c.b16 %v1339, %v1331
    %v2116 = vpack.c.b16 %v1340, %v1332
    %v2117 = vpack.c.b16 %v1341, %v1333
    %v2118 = vpack.c.b16 %v1350, %v1342
    %v2119 = vpack.c.b16 %v1351, %v1343
    %v2120 = vpack.c.b16 %v1352, %v1344
    %v2121 = vpack.c.b16 %v1353, %v1345
    %v2122 = vpack.c.b16 %v1354, %v1346
    %v2123 = vpack.c.b16 %v1355, %v1347
    %v2124 = vpack.c.b16 %v1356, %v1348
    %v2125 = vpack.c.b16 %v1357, %v1349
    %v2126 = vpack.c.b16 %v1366, %v1358
    %v2127 = vpack.c.b16 %v1367, %v1359
    %v2128 = vpack.c.b16 %v1368, %v1360
    %v2129 = vpack.c.b16 %v1369, %v1361
    %v2130 = vpack.c.b16 %v1370, %v1362
    %v2131 = vpack.c.b16 %v1371, %v1363
    %v2132 = vpack.c.b16 %v1372, %v1364
    %v2133 = vpack.c.b16 %v1373, %v1365
    %v2134 = vpack.c.b16 %v1382, %v1374
    %v2135 = vpack.c.b16 %v1383, %v1375
    %v2136 = vpack.c.b16 %v1384, %v1376
    %v2137 = vpack.c.b16 %v1385, %v1377
    %v2138 = vpack.c.b16 %v1386, %v1378
    %v2139 = vpack.c.b16 %v1387, %v1379
    %v2140 = vpack.c.b16 %v1388, %v1380
    %v2141 = vpack.c.b16 %v1389, %v1381
    %v2142 = vpack.c.b16 %v1398, %v1390
    %v2143 = vpack.c.b16 %v1399, %v1391
    %v2144 = vpack.c.b16 %v1400, %v1392
    %v2145 = vpack.c.b16 %v1401, %v1393
    %v2146 = vpack.c.b16 %v1402, %v1394
    %v2147 = vpack.c.b16 %v1403, %v1395
    %v2148 = vpack.c.b16 %v1404, %v1396
    %v2149 = vpack.c.b16 %v1405, %v1397
    %v2150 = vpack.c.b16 %v1414, %v1406
    %v2151 = vpack.c.b16 %v1415, %v1407
    %v2152 = vpack.c.b16 %v1416, %v1408
    %v2153 = vpack.c.b16 %v1417, %v1409
    %v2154 = vpack.c.b16 %v1418, %v1410
    %v2155 = vpack.c.b16 %v1419, %v1411
    %v2156 = vpack.c.b16 %v1420, %v1412
    %v2157 = vpack.c.b16 %v1421, %v1413
    %v2158 = vpack.c.b16 %v1430, %v1422
    %v2159 = vpack.c.b16 %v1431, %v1423
    %v2160 = vpack.c.b16 %v1432, %v1424
    %v2161 = vpack.c.b16 %v1433, %v1425
    %v2162 = vpack.c.b16 %v1434, %v1426
    %v2163 = vpack.c.b16 %v1435, %v1427
    %v2164 = vpack.c.b16 %v1436, %v1428
    %v2165 = vpack.c.b16 %v1437, %v1429
    %v2166 = vpack.c.b16 %v1446, %v1438
    %v2167 = vpack.c.b16 %v1447, %v1439
    %v2168 = vpack.c.b16 %v1448, %v1440
    %v2169 = vpack.c.b16 %v1449, %v1441
    %v2170 = vpack.c.b16 %v1450, %v1442
    %v2171 = vpack.c.b16 %v1451, %v1443
    %v2172 = vpack.c.b16 %v1452, %v1444
    %v2173 = vpack.c.b16 %v1453, %v1445
    %v2174 = vpack.c.b16 %v1462, %v1454
    %v2175 = vpack.c.b16 %v1463, %v1455
    %v2176 = vpack.c.b16 %v1464, %v1456
    %v2177 = vpack.c.b16 %v1465, %v1457
    %v2178 = vpack.c.b16 %v1466, %v1458
    %v2179 = vpack.c.b16 %v1467, %v1459
    %v2180 = vpack.c.b16 %v1468, %v1460
    %v2181 = vpack.c.b16 %v1469, %v1461
    %v2182 = vpack.c.b16 %v1478, %v1470
    %v2183 = vpack.c.b16 %v1479, %v1471
    %v2184 = vpack.c.b16 %v1480, %v1472
    %v2185 = vpack.c.b16 %v1481, %v1473
    %v2186 = vpack.c.b16 %v1482, %v1474
    %v2187 = vpack.c.b16 %v1483, %v1475
    %v2188 = vpack.c.b16 %v1484, %v1476
    %v2189 = vpack.c.b16 %v1485, %v1477
    %v2190 = vpack.c.b16 %v1494, %v1486
    %v2191 = vpack.c.b16 %v1495, %v1487
    %v2192 = vpack.c.b16 %v1496, %v1488
    %v2193 = vpack.c.b16 %v1497, %v1489
    %v2194 = vpack.c.b16 %v1498, %v1490
    %v2195 = vpack.c.b16 %v1499, %v1491
    %v2196 = vpack.c.b16 %v1500, %v1492
    %v2197 = vpack.c.b16 %v1501, %v1493
    %v2198 = vpack.c.b16 %v1510, %v1502
    %v2199 = vpack.c.b16 %v1511, %v1503
    %v2200 = vpack.c.b16 %v1512, %v1504
    %v2201 = vpack.c.b16 %v1513, %v1505
    %v2202 = vpack.c.b16 %v1514, %v1506
    %v2203 = vpack.c.b16 %v1515, %v1507
    %v2204 = vpack.c.b16 %v1516, %v1508
    %v2205 = vpack.c.b16 %v1517, %v1509
    %v2206 = vpack.c.b16 %v1526, %v1518
    %v2207 = vpack.c.b16 %v1527, %v1519
    %v2208 = vpack.c.b16 %v1528, %v1520
    %v2209 = vpack.c.b16 %v1529, %v1521
    %v2210 = vpack.c.b16 %v1530, %v1522
    %v2211 = vpack.c.b16 %v1531, %v1523
    %v2212 = vpack.c.b16 %v1532, %v1524
    %v2213 = vpack.c.b16 %v1533, %v1525
    %v2214 = vpack.c.b16 %v1542, %v1534
    %v2215 = vpack.c.b16 %v1543, %v1535
    %v2216 = vpack.c.b16 %v1544, %v1536
    %v2217 = vpack.c.b16 %v1545, %v1537
    %v2218 = vpack.c.b16 %v1546, %v1538
    %v2219 = vpack.c.b16 %v1547, %v1539
    %v2220 = vpack.c.b16 %v1548, %v1540
    %v2221 = vpack.c.b16 %v1549, %v1541
    %v2222 = vpack.c.b16 %v1558, %v1550
    %v2223 = vpack.c.b16 %v1559, %v1551
    %v2224 = vpack.c.b16 %v1560, %v1552
    %v2225 = vpack.c.b16 %v1561, %v1553
    %v2226 = vpack.c.b16 %v1562, %v1554
    %v2227 = vpack.c.b16 %v1563, %v1555
    %v2228 = vpack.c.b16 %v1564, %v1556
    %v2229 = vpack.c.b16 %v1565, %v1557
    %v2230 = vpack.c.b16 %v1574, %v1566
    %v2231 = vpack.c.b16 %v1575, %v1567
    %v2232 = vpack.c.b16 %v1576, %v1568
    %v2233 = vpack.c.b16 %v1577, %v1569
    %v2234 = vpack.c.b16 %v1578, %v1570
    %v2235 = vpack.c.b16 %v1579, %v1571
    %v2236 = vpack.c.b16 %v1580, %v1572
    %v2237 = vpack.c.b16 %v1581, %v1573
    %v2238 = vpack.c.b16 %v1590, %v1582
    %v2239 = vpack.c.b16 %v1591, %v1583
    %v2240 = vpack.c.b16 %v1592, %v1584
    %v2241 = vpack.c.b16 %v1593, %v1585
    %v2242 = vpack.c.b16 %v1594, %v1586
    %v2243 = vpack.c.b16 %v1595, %v1587
    %v2244 = vpack.c.b16 %v1596, %v1588
    %v2245 = vpack.c.b16 %v1597, %v1589
    %v2246 = vpack.c.b16 %v1606, %v1598
    %v2247 = vpack.c.b16 %v1607, %v1599
    %v2248 = vpack.c.b16 %v1608, %v1600
    %v2249 = vpack.c.b16 %v1609, %v1601
    %v2250 = vpack.c.b16 %v1610, %v1602
    %v2251 = vpack.c.b16 %v1611, %v1603
    %v2252 = vpack.c.b16 %v1612, %v1604
    %v2253 = vpack.c.b16 %v1613, %v1605
    %v2254 = vpack.c.b16 %v1622, %v1614
    %v2255 = vpack.c.b16 %v1623, %v1615
    %v2256 = vpack.c.b16 %v1624, %v1616
    %v2257 = vpack.c.b16 %v1625, %v1617
    %v2258 = vpack.c.b16 %v1626, %v1618
    %v2259 = vpack.c.b16 %v1627, %v1619
    %v2260 = vpack.c.b16 %v1628, %v1620
    %v2261 = vpack.c.b16 %v1629, %v1621
    %v2262 = vpack.c.b16 %v1638, %v1630
    %v2263 = vpack.c.b16 %v1639, %v1631
    %v2264 = vpack.c.b16 %v1640, %v1632
    %v2265 = vpack.c.b16 %v1641, %v1633
    %v2266 = vpack.c.b16 %v1642, %v1634
    %v2267 = vpack.c.b16 %v1643, %v1635
    %v2268 = vpack.c.b16 %v1644, %v1636
    %v2269 = vpack.c.b16 %v1645, %v1637
    %v2270 = vpack.c.b16 %v1654, %v1646
    %v2271 = vpack.c.b16 %v1655, %v1647
    %v2272 = vpack.c.b16 %v1656, %v1648
    %v2273 = vpack.c.b16 %v1657, %v1649
    %v2274 = vpack.c.b16 %v1658, %v1650
    %v2275 = vpack.c.b16 %v1659, %v1651
    %v2276 = vpack.c.b16 %v1660, %v1652
    %v2277 = vpack.c.b16 %v1661, %v1653
    %v2278 = vpack.c.b16 %v1670, %v1662
    %v2279 = vpack.c.b16 %v1671, %v1663
    %v2280 = vpack.c.b16 %v1672, %v1664
    %v2281 = vpack.c.b16 %v1673, %v1665
    %v2282 = vpack.c.b16 %v1674, %v1666
    %v2283 = vpack.c.b16 %v1675, %v1667
    %v2284 = vpack.c.b16 %v1676, %v1668
    %v2285 = vpack.c.b16 %v1677, %v1669
    %v2286 = vpack.c.b16 %v1686, %v1678
    %v2287 = vpack.c.b16 %v1687, %v1679
    %v2288 = vpack.c.b16 %v1688, %v1680
    %v2289 = vpack.c.b16 %v1689, %v1681
    %v2290 = vpack.c.b16 %v1690, %v1682
    %v2291 = vpack.c.b16 %v1691, %v1683
    %v2292 = vpack.c.b16 %v1692, %v1684
    %v2293 = vpack.c.b16 %v1693, %v1685
    %v2294 = vpack.c.b16 %v1702, %v1694
    %v2295 = vpack.c.b16 %v1703, %v1695
    %v2296 = vpack.c.b16 %v1704, %v1696
    %v2297 = vpack.c.b16 %v1705, %v1697
    %v2298 = vpack.c.b16 %v1706, %v1698
    %v2299 = vpack.c.b16 %v1707, %v1699
    %v2300 = vpack.c.b16 %v1708, %v1700
    %v2301 = vpack.c.b16 %v1709, %v1701
    %v2302 = vpack.c.b16 %v1718, %v1710
    %v2303 = vpack.c.b16 %v1719, %v1711
    %v2304 = vpack.c.b16 %v1720, %v1712
    %v2305 = vpack.c.b16 %v1721, %v1713
    %v2306 = vpack.c.b16 %v1722, %v1714
    %v2307 = vpack.c.b16 %v1723, %v1715
    %v2308 = vpack.c.b16 %v1724, %v1716
    %v2309 = vpack.c.b16 %v1725, %v1717
    %v2310 = vpack.c.b16 %v1734, %v1726
    %v2311 = vpack.c.b16 %v1735, %v1727
    %v2312 = vpack.c.b16 %v1736, %v1728
    %v2313 = vpack.c.b16 %v1737, %v1729
    %v2314 = vpack.c.b16 %v1738, %v1730
    %v2315 = vpack.c.b16 %v1739, %v1731
    %v2316 = vpack.c.b16 %v1740, %v1732
    %v2317 = vpack.c.b16 %v1741, %v1733
    %v2318 = vpack.c.b16 %v1750, %v1742
    %v2319 = vpack.c.b16 %v1751, %v1743
    %v2320 = vpack.c.b16 %v1752, %v1744
    %v2321 = vpack.c.b16 %v1753, %v1745
    %v2322 = vpack.c.b16 %v1754, %v1746
    %v2323 = vpack.c.b16 %v1755, %v1747
    %v2324 = vpack.c.b16 %v1756, %v1748
    %v2325 = vpack.c.b16 %v1757, %v1749
    %v2326 = vpack.c.b16 %v1766, %v1758
    %v2327 = vpack.c.b16 %v1767, %v1759
    %v2328 = vpack.c.b16 %v1768, %v1760
    %v2329 = vpack.c.b16 %v1769, %v1761
    %v2330 = vpack.c.b16 %v1770, %v1762
    %v2331 = vpack.c.b16 %v1771, %v1763
    %v2332 = vpack.c.b16 %v1772, %v1764
    %v2333 = vpack.c.b16 %v1773, %v1765
    %v2334 = vpack.c.b16 %v1782, %v1774
    %v2335 = vpack.c.b16 %v1783, %v1775
    %v2336 = vpack.c.b16 %v1784, %v1776
    %v2337 = vpack.c.b16 %v1785, %v1777
    %v2338 = vpack.c.b16 %v1786, %v1778
    %v2339 = vpack.c.b16 %v1787, %v1779
    %v2340 = vpack.c.b16 %v1788, %v1780
    %v2341 = vpack.c.b16 %v1789, %v1781
    %v2342 = vpack.c.b16 %v1798, %v1790
    %v2343 = vpack.c.b16 %v1799, %v1791
    %v2344 = vpack.c.b16 %v1800, %v1792
    %v2345 = vpack.c.b16 %v1801, %v1793
    %v2346 = vpack.c.b16 %v1802, %v1794
    %v2347 = vpack.c.b16 %v1803, %v1795
    %v2348 = vpack.c.b16 %v1804, %v1796
    %v2349 = vpack.c.b16 %v1805, %v1797
    %v2350 = vpack.c.b16 %v1814, %v1806
    %v2351 = vpack.c.b16 %v1815, %v1807
    %v2352 = vpack.c.b16 %v1816, %v1808
    %v2353 = vpack.c.b16 %v1817, %v1809
    %v2354 = vpack.c.b16 %v1818, %v1810
    %v2355 = vpack.c.b16 %v1819, %v1811
    %v2356 = vpack.c.b16 %v1820, %v1812
    %v2357 = vpack.c.b16 %v1821, %v1813
    %v2358 = vpack.c.b16 %v1830, %v1822
    %v2359 = vpack.c.b16 %v1831, %v1823
    %v2360 = vpack.c.b16 %v1832, %v1824
    %v2361 = vpack.c.b16 %v1833, %v1825
    %v2362 = vpack.c.b16 %v1834, %v1826
    %v2363 = vpack.c.b16 %v1835, %v1827
    %v2364 = vpack.c.b16 %v1836, %v1828
    %v2365 = vpack.c.b16 %v1837, %v1829
    %v2366 = vpack.c.b16 %v1846, %v1838
    %v2367 = vpack.c.b16 %v1847, %v1839
    %v2368 = vpack.c.b16 %v1848, %v1840
    %v2369 = vpack.c.b16 %v1849, %v1841
    %v2370 = vpack.c.b16 %v1850, %v1842
    %v2371 = vpack.c.b16 %v1851, %v1843
    %v2372 = vpack.c.b16 %v1852, %v1844
    %v2373 = vpack.c.b16 %v1853, %v1845
    %v2374 = vpack.c.b16 %v1862, %v1854
    %v2375 = vpack.c.b16 %v1863, %v1855
    %v2376 = vpack.c.b16 %v1864, %v1856
    %v2377 = vpack.c.b16 %v1865, %v1857
    %v2378 = vpack.c.b16 %v1866, %v1858
    %v2379 = vpack.c.b16 %v1867, %v1859
    %v2380 = vpack.c.b16 %v1868, %v1860
    %v2381 = vpack.c.b16 %v1869, %v1861
    %v2382 = vpack.c.b16 %v1878, %v1870
    %v2383 = vpack.c.b16 %v1879, %v1871
    %v2384 = vpack.c.b16 %v1880, %v1872
    %v2385 = vpack.c.b16 %v1881, %v1873
    %v2386 = vpack.c.b16 %v1882, %v1874
    %v2387 = vpack.c.b16 %v1883, %v1875
    %v2388 = vpack.c.b16 %v1884, %v1876
    %v2389 = vpack.c.b16 %v1885, %v1877
    %v2390 = vpack.c.b16 %v1894, %v1886
    %v2391 = vpack.c.b16 %v1895, %v1887
    %v2392 = vpack.c.b16 %v1896, %v1888
    %v2393 = vpack.c.b16 %v1897, %v1889
    %v2394 = vpack.c.b16 %v1898, %v1890
    %v2395 = vpack.c.b16 %v1899, %v1891
    %v2396 = vpack.c.b16 %v1900, %v1892
    %v2397 = vpack.c.b16 %v1901, %v1893
    %v2398 = vpack.c.b16 %v1910, %v1902
    %v2399 = vpack.c.b16 %v1911, %v1903
    %v2400 = vpack.c.b16 %v1912, %v1904
    %v2401 = vpack.c.b16 %v1913, %v1905
    %v2402 = vpack.c.b16 %v1914, %v1906
    %v2403 = vpack.c.b16 %v1915, %v1907
    %v2404 = vpack.c.b16 %v1916, %v1908
    %v2405 = vpack.c.b16 %v1917, %v1909
    %v2406 = vpack.c.b16 %v1926, %v1918
    %v2407 = vpack.c.b16 %v1927, %v1919
    %v2408 = vpack.c.b16 %v1928, %v1920
    %v2409 = vpack.c.b16 %v1929, %v1921
    %v2410 = vpack.c.b16 %v1930, %v1922
    %v2411 = vpack.c.b16 %v1931, %v1923
    %v2412 = vpack.c.b16 %v1932, %v1924
    %v2413 = vpack.c.b16 %v1933, %v1925
    %v2414 = vpack.c.b16 %v1942, %v1934
    %v2415 = vpack.c.b16 %v1943, %v1935
    %v2416 = vpack.c.b16 %v1944, %v1936
    %v2417 = vpack.c.b16 %v1945, %v1937
    %v2418 = vpack.c.b16 %v1946, %v1938
    %v2419 = vpack.c.b16 %v1947, %v1939
    %v2420 = vpack.c.b16 %v1948, %v1940
    %v2421 = vpack.c.b16 %v1949, %v1941
    %v2422 = vpack.c.b16 %v1958, %v1950
    %v2423 = vpack.c.b16 %v1959, %v1951
    %v2424 = vpack.c.b16 %v1960, %v1952
    %v2425 = vpack.c.b16 %v1961, %v1953
    %v2426 = vpack.c.b16 %v1962, %v1954
    %v2427 = vpack.c.b16 %v1963, %v1955
    %v2428 = vpack.c.b16 %v1964, %v1956
    %v2429 = vpack.c.b16 %v1965, %v1957
    %v2430 = vpack.c.b16 %v1974, %v1966
    %v2431 = vpack.c.b16 %v1975, %v1967
    %v2432 = vpack.c.b16 %v1976, %v1968
    %v2433 = vpack.c.b16 %v1977, %v1969
    %v2434 = vpack.c.b16 %v1978, %v1970
    %v2435 = vpack.c.b16 %v1979, %v1971
    %v2436 = vpack.c.b16 %v1980, %v1972
    %v2437 = vpack.c.b16 %v1981, %v1973
    %v2438 = vpack.c.b16 %v1990, %v1982
    %v2439 = vpack.c.b16 %v1991, %v1983
    %v2440 = vpack.c.b16 %v1992, %v1984
    %v2441 = vpack.c.b16 %v1993, %v1985
    %v2442 = vpack.c.b16 %v1994, %v1986
    %v2443 = vpack.c.b16 %v1995, %v1987
    %v2444 = vpack.c.b16 %v1996, %v1988
    %v2445 = vpack.c.b16 %v1997, %v1989
    %2894 = vmatprep.subr.bf16.mxu0 %v1999
    %2895 = vmatpush1.bf16.msra.mxu0 %v1998
    %2896 = vmatprep.subr.bf16.mxu0 %v2007
    %2897 = vmatpush1.bf16.msra.mxu0 %v2006
    %2898 = vmatprep.subr.bf16.mxu0 %v2015
    %2899 = vmatpush1.bf16.msra.mxu0 %v2014
    %2900 = vmatprep.subr.bf16.mxu0 %v2023
    %2901 = vmatpush1.bf16.msra.mxu0 %v2022
    %2902 = vmatprep.subr.bf16.mxu0 %v2031
    %2903 = vmatpush1.bf16.msra.mxu0 %v2030
    %2904 = vmatprep.subr.bf16.mxu0 %v2039
    %2905 = vmatpush1.bf16.msra.mxu0 %v2038
    %2906 = vmatprep.subr.bf16.mxu0 %v2047
    %2907 = vmatpush1.bf16.msra.mxu0 %v2046
    %2908 = vmatprep.subr.bf16.mxu0 %v2055
    %2909 = vmatpush1.bf16.msra.mxu0 %v2054
    %2910 = vmatprep.subr.bf16.mxu0 %v2063
    %2911 = vmatpush1.bf16.msra.mxu0 %v2062
    %2912 = vmatprep.subr.bf16.mxu0 %v2071
    %2913 = vmatpush1.bf16.msra.mxu0 %v2070
    %2914 = vmatprep.subr.bf16.mxu0 %v2079
    %2915 = vmatpush1.bf16.msra.mxu0 %v2078
    %2916 = vmatprep.subr.bf16.mxu0 %v2087
    %2917 = vmatpush1.bf16.msra.mxu0 %v2086
    %2918 = vmatprep.subr.bf16.mxu0 %v2095
    %2919 = vmatpush1.bf16.msra.mxu0 %v2094
    %2920 = vmatprep.subr.bf16.mxu0 %v2103
    %2921 = vmatpush1.bf16.msra.mxu0 %v2102
    %2922 = vmatprep.subr.bf16.mxu0 %v2111
    %2923 = vmatpush1.bf16.msra.mxu0 %v2110
    %2924 = vmatprep.subr.bf16.mxu0 %v2119
    %2925 = vmatpush1.bf16.msra.mxu0 %v2118
    %2926 = vmatprep.mubr.bf16.mxu0 %v641
    %2927 = vmatmul.mubr.bf16.gmra.mrb[0].mxu0 %v640
    %v2928 = vpop.f32.mrb[0].mxu0
    %v2929 = vadd.f32 0.0, %v2928
    %v2930 = vpop.f32.mrb[0].mxu0
    %v2931 = vadd.f32 0.0, %v2930
    %v2932 = vpop.f32.mrb[0].mxu0
    %v2933 = vpop.f32.mrb[0].mxu0
    %2934 = vdwg.mxu0
    %2935 = vmatprep.subr.bf16.mxu0 %v2127
    %2936 = vmatpush1.bf16.msra.mxu0 %v2126
    %2937 = vmatprep.subr.bf16.mxu0 %v2135
    %2938 = vmatpush1.bf16.msra.mxu0 %v2134
    %2939 = vmatprep.subr.bf16.mxu0 %v2143
    %2940 = vmatpush1.bf16.msra.mxu0 %v2142
    %2941 = vmatprep.subr.bf16.mxu0 %v2151
    %2942 = vmatpush1.bf16.msra.mxu0 %v2150
    %2943 = vmatprep.subr.bf16.mxu0 %v2159
    %2944 = vmatpush1.bf16.msra.mxu0 %v2158
    %2945 = vmatprep.subr.bf16.mxu0 %v2167
    %2946 = vmatpush1.bf16.msra.mxu0 %v2166
    %2947 = vmatprep.subr.bf16.mxu0 %v2175
    %2948 = vmatpush1.bf16.msra.mxu0 %v2174
    %2949 = vmatprep.subr.bf16.mxu0 %v2183
    %2950 = vmatpush1.bf16.msra.mxu0 %v2182
    %2951 = vmatprep.subr.bf16.mxu0 %v2191
    %2952 = vmatpush1.bf16.msra.mxu0 %v2190
    %2953 = vmatprep.subr.bf16.mxu0 %v2199
    %2954 = vmatpush1.bf16.msra.mxu0 %v2198
    %2955 = vmatprep.subr.bf16.mxu0 %v2207
    %2956 = vmatpush1.bf16.msra.mxu0 %v2206
    %2957 = vmatprep.subr.bf16.mxu0 %v2215
    %2958 = vmatpush1.bf16.msra.mxu0 %v2214
    %2959 = vmatprep.subr.bf16.mxu0 %v2223
    %2960 = vmatpush1.bf16.msra.mxu0 %v2222
    %2961 = vmatprep.subr.bf16.mxu0 %v2231
    %2962 = vmatpush1.bf16.msra.mxu0 %v2230
    %2963 = vmatprep.subr.bf16.mxu0 %v2239
    %2964 = vmatpush1.bf16.msra.mxu0 %v2238
    %2965 = vmatprep.subr.bf16.mxu0 %v2247
    %2966 = vmatpush1.bf16.msra.mxu0 %v2246
    %2967 = vmatprep.mubr.bf16.mxu0 %v643
    %2968 = vmatmul.mubr.bf16.gmra.mrb[0].mxu0 %v642
    %v2969 = vpop.f32.mrb[0].mxu0
    %v2970 = vadd.f32 %v2929, %v2969
    %v2971 = vpop.f32.mrb[0].mxu0
    %v2972 = vadd.f32 %v2931, %v2971
    %v2973 = vpop.f32.mrb[0].mxu0
    %v2974 = vpop.f32.mrb[0].mxu0
    %2975 = vdwg.mxu0
    %2976 = vmatprep.subr.bf16.mxu0 %v2255
    %2977 = vmatpush1.bf16.msra.mxu0 %v2254
    %2978 = vmatprep.subr.bf16.mxu0 %v2263
    %2979 = vmatpush1.bf16.msra.mxu0 %v2262
    %2980 = vmatprep.subr.bf16.mxu0 %v2271
    %2981 = vmatpush1.bf16.msra.mxu0 %v2270
    %2982 = vmatprep.subr.bf16.mxu0 %v2279
    %2983 = vmatpush1.bf16.msra.mxu0 %v2278
    %2984 = vmatprep.subr.bf16.mxu0 %v2287
    %2985 = vmatpush1.bf16.msra.mxu0 %v2286
    %2986 = vmatprep.subr.bf16.mxu0 %v2295
    %2987 = vmatpush1.bf16.msra.mxu0 %v2294
    %2988 = vmatprep.subr.bf16.mxu0 %v2303
    %2989 = vmatpush1.bf16.msra.mxu0 %v2302
    %2990 = vmatprep.subr.bf16.mxu0 %v2311
    %2991 = vmatpush1.bf16.msra.mxu0 %v2310
    %2992 = vmatprep.subr.bf16.mxu0 %v2319
    %2993 = vmatpush1.bf16.msra.mxu0 %v2318
    %2994 = vmatprep.subr.bf16.mxu0 %v2327
    %2995 = vmatpush1.bf16.msra.mxu0 %v2326
    %2996 = vmatprep.subr.bf16.mxu0 %v2335
    %2997 = vmatpush1.bf16.msra.mxu0 %v2334
    %2998 = vmatprep.subr.bf16.mxu0 %v2343
    %2999 = vmatpush1.bf16.msra.mxu0 %v2342
    %3000 = vmatprep.subr.bf16.mxu0 %v2351
    %3001 = vmatpush1.bf16.msra.mxu0 %v2350
    %3002 = vmatprep.subr.bf16.mxu0 %v2359
    %3003 = vmatpush1.bf16.msra.mxu0 %v2358
    %3004 = vmatprep.subr.bf16.mxu0 %v2367
    %3005 = vmatpush1.bf16.msra.mxu0 %v2366
    %3006 = vmatprep.subr.bf16.mxu0 %v2375
    %3007 = vmatpush1.bf16.msra.mxu0 %v2374
    %3008 = vmatprep.mubr.bf16.mxu0 %v645
    %3009 = vmatmul.mubr.bf16.gmra.mrb[0].mxu0 %v644
    %v3010 = vpop.f32.mrb[0].mxu0
    %v3011 = vadd.f32 %v2970, %v3010
    %v3012 = vpop.f32.mrb[0].mxu0
    %v3013 = vadd.f32 %v2972, %v3012
    %v3014 = vpop.f32.mrb[0].mxu0
    %v3015 = vpop.f32.mrb[0].mxu0
    %3016 = vdwg.mxu0
    %3017 = vmatprep.subr.bf16.mxu0 %v2383
    %3018 = vmatpush1.bf16.msra.mxu0 %v2382
    %3019 = vmatprep.subr.bf16.mxu0 %v2391
    %3020 = vmatpush1.bf16.msra.mxu0 %v2390
    %3021 = vmatprep.subr.bf16.mxu0 %v2399
    %3022 = vmatpush1.bf16.msra.mxu0 %v2398
    %3023 = vmatprep.subr.bf16.mxu0 %v2407
    %3024 = vmatpush1.bf16.msra.mxu0 %v2406
    %3025 = vmatprep.subr.bf16.mxu0 %v2415
    %3026 = vmatpush1.bf16.msra.mxu0 %v2414
    %3027 = vmatprep.subr.bf16.mxu0 %v2423
    %3028 = vmatpush1.bf16.msra.mxu0 %v2422
    %3029 = vmatprep.subr.bf16.mxu0 %v2431
    %3030 = vmatpush1.bf16.msra.mxu0 %v2430
    %3031 = vmatprep.subr.bf16.mxu0 %v2439
    %3032 = vmatpush1.bf16.msra.mxu0 %v2438
    %3033 = vmatprep.subr.bf16.mxu0 0
    %3034 = vmatpush1.bf16.msra.mxu0 0
    %3035 = vmatprep.subr.bf16.mxu0 0
    %3036 = vmatpush1.bf16.msra.mxu0 0
    %3037 = vmatprep.subr.bf16.mxu0 0
    %3038 = vmatpush1.bf16.msra.mxu0 0
    %3039 = vmatprep.subr.bf16.mxu0 0
    %3040 = vmatpush1.bf16.msra.mxu0 0
    %3041 = vmatprep.subr.bf16.mxu0 0
    %3042 = vmatpush1.bf16.msra.mxu0 0
    %3043 = vmatprep.subr.bf16.mxu0 0
    %3044 = vmatpush1.bf16.msra.mxu0 0
    %3045 = vmatprep.subr.bf16.mxu0 0
    %3046 = vmatpush1.bf16.msra.mxu0 0
    %3047 = vmatprep.subr.bf16.mxu0 0
    %3048 = vmatpush1.bf16.msra.mxu0 0
    %3049 = vmatprep.mubr.bf16.mxu0 0
    %3050 = vmatmul.mubr.bf16.gmra.mrb[0].mxu0 %v646
    %v3051 = vpop.f32.mrb[0].mxu0
    %v3052 = vadd.f32 %v3011, %v3051
    %v3053 = vpop.f32.mrb[0].mxu0
    %v3054 = vadd.f32 %v3013, %v3053
    %v3055 = vpop.f32.mrb[0].mxu0
    %v3056 = vpop.f32.mrb[0].mxu0
    %3057 = vdwg.mxu0
    %3058 = vmatprep.subr.bf16.mxu0 %v2001
    %3059 = vmatpush1.bf16.msra.mxu0 %v2000
    %3060 = vmatprep.subr.bf16.mxu0 %v2009
    %3061 = vmatpush1.bf16.msra.mxu0 %v2008
    %3062 = vmatprep.subr.bf16.mxu0 %v2017
    %3063 = vmatpush1.bf16.msra.mxu0 %v2016
    %3064 = vmatprep.subr.bf16.mxu0 %v2025
    %3065 = vmatpush1.bf16.msra.mxu0 %v2024
    %3066 = vmatprep.subr.bf16.mxu0 %v2033
    %3067 = vmatpush1.bf16.msra.mxu0 %v2032
    %3068 = vmatprep.subr.bf16.mxu0 %v2041
    %3069 = vmatpush1.bf16.msra.mxu0 %v2040
    %3070 = vmatprep.subr.bf16.mxu0 %v2049
    %3071 = vmatpush1.bf16.msra.mxu0 %v2048
    %3072 = vmatprep.subr.bf16.mxu0 %v2057
    %3073 = vmatpush1.bf16.msra.mxu0 %v2056
    %3074 = vmatprep.subr.bf16.mxu0 %v2065
    %3075 = vmatpush1.bf16.msra.mxu0 %v2064
    %3076 = vmatprep.subr.bf16.mxu0 %v2073
    %3077 = vmatpush1.bf16.msra.mxu0 %v2072
    %3078 = vmatprep.subr.bf16.mxu0 %v2081
    %3079 = vmatpush1.bf16.msra.mxu0 %v2080
    %3080 = vmatprep.subr.bf16.mxu0 %v2089
    %3081 = vmatpush1.bf16.msra.mxu0 %v2088
    %3082 = vmatprep.subr.bf16.mxu0 %v2097
    %3083 = vmatpush1.bf16.msra.mxu0 %v2096
    %3084 = vmatprep.subr.bf16.mxu0 %v2105
    %3085 = vmatpush1.bf16.msra.mxu0 %v2104
    %3086 = vmatprep.subr.bf16.mxu0 %v2113
    %3087 = vmatpush1.bf16.msra.mxu0 %v2112
    %3088 = vmatprep.subr.bf16.mxu0 %v2121
    %3089 = vmatpush1.bf16.msra.mxu0 %v2120
    %3090 = vmatprep.mubr.bf16.mxu0 %v641
    %3091 = vmatmul.mubr.bf16.gmra.mrb[0].mxu0 %v640
    %v3092 = vpop.f32.mrb[0].mxu0
    %v3093 = vadd.f32 0.0, %v3092
    %v3094 = vpop.f32.mrb[0].mxu0
    %v3095 = vadd.f32 0.0, %v3094
    %v3096 = vpop.f32.mrb[0].mxu0
    %v3097 = vpop.f32.mrb[0].mxu0
    %3098 = vdwg.mxu0
    %3099 = vmatprep.subr.bf16.mxu0 %v2129
    %3100 = vmatpush1.bf16.msra.mxu0 %v2128
    %3101 = vmatprep.subr.bf16.mxu0 %v2137
    %3102 = vmatpush1.bf16.msra.mxu0 %v2136
    %3103 = vmatprep.subr.bf16.mxu0 %v2145
    %3104 = vmatpush1.bf16.msra.mxu0 %v2144
    %3105 = vmatprep.subr.bf16.mxu0 %v2153
    %3106 = vmatpush1.bf16.msra.mxu0 %v2152
    %3107 = vmatprep.subr.bf16.mxu0 %v2161
    %3108 = vmatpush1.bf16.msra.mxu0 %v2160
    %3109 = vmatprep.subr.bf16.mxu0 %v2169
    %3110 = vmatpush1.bf16.msra.mxu0 %v2168
    %3111 = vmatprep.subr.bf16.mxu0 %v2177
    %3112 = vmatpush1.bf16.msra.mxu0 %v2176
    %3113 = vmatprep.subr.bf16.mxu0 %v2185
    %3114 = vmatpush1.bf16.msra.mxu0 %v2184
    %3115 = vmatprep.subr.bf16.mxu0 %v2193
    %3116 = vmatpush1.bf16.msra.mxu0 %v2192
    %3117 = vmatprep.subr.bf16.mxu0 %v2201
    %3118 = vmatpush1.bf16.msra.mxu0 %v2200
    %3119 = vmatprep.subr.bf16.mxu0 %v2209
    %3120 = vmatpush1.bf16.msra.mxu0 %v2208
    %3121 = vmatprep.subr.bf16.mxu0 %v2217
    %3122 = vmatpush1.bf16.msra.mxu0 %v2216
    %3123 = vmatprep.subr.bf16.mxu0 %v2225
    %3124 = vmatpush1.bf16.msra.mxu0 %v2224
    %3125 = vmatprep.subr.bf16.mxu0 %v2233
    %3126 = vmatpush1.bf16.msra.mxu0 %v2232
    %3127 = vmatprep.subr.bf16.mxu0 %v2241
    %3128 = vmatpush1.bf16.msra.mxu0 %v2240
    %3129 = vmatprep.subr.bf16.mxu0 %v2249
    %3130 = vmatpush1.bf16.msra.mxu0 %v2248
    %3131 = vmatprep.mubr.bf16.mxu0 %v643
    %3132 = vmatmul.mubr.bf16.gmra.mrb[0].mxu0 %v642
    %v3133 = vpop.f32.mrb[0].mxu0
    %v3134 = vadd.f32 %v3093, %v3133
    %v3135 = vpop.f32.mrb[0].mxu0
    %v3136 = vadd.f32 %v3095, %v3135
    %v3137 = vpop.f32.mrb[0].mxu0
    %v3138 = vpop.f32.mrb[0].mxu0
    %3139 = vdwg.mxu0
    %3140 = vmatprep.subr.bf16.mxu0 %v2257
    %3141 = vmatpush1.bf16.msra.mxu0 %v2256
    %3142 = vmatprep.subr.bf16.mxu0 %v2265
    %3143 = vmatpush1.bf16.msra.mxu0 %v2264
    %3144 = vmatprep.subr.bf16.mxu0 %v2273
    %3145 = vmatpush1.bf16.msra.mxu0 %v2272
    %3146 = vmatprep.subr.bf16.mxu0 %v2281
    %3147 = vmatpush1.bf16.msra.mxu0 %v2280
    %3148 = vmatprep.subr.bf16.mxu0 %v2289
    %3149 = vmatpush1.bf16.msra.mxu0 %v2288
    %3150 = vmatprep.subr.bf16.mxu0 %v2297
    %3151 = vmatpush1.bf16.msra.mxu0 %v2296
    %3152 = vmatprep.subr.bf16.mxu0 %v2305
    %3153 = vmatpush1.bf16.msra.mxu0 %v2304
    %3154 = vmatprep.subr.bf16.mxu0 %v2313
    %3155 = vmatpush1.bf16.msra.mxu0 %v2312
    %3156 = vmatprep.subr.bf16.mxu0 %v2321
    %3157 = vmatpush1.bf16.msra.mxu0 %v2320
    %3158 = vmatprep.subr.bf16.mxu0 %v2329
    %3159 = vmatpush1.bf16.msra.mxu0 %v2328
    %3160 = vmatprep.subr.bf16.mxu0 %v2337
    %3161 = vmatpush1.bf16.msra.mxu0 %v2336
    %3162 = vmatprep.subr.bf16.mxu0 %v2345
    %3163 = vmatpush1.bf16.msra.mxu0 %v2344
    %3164 = vmatprep.subr.bf16.mxu0 %v2353
    %3165 = vmatpush1.bf16.msra.mxu0 %v2352
    %3166 = vmatprep.subr.bf16.mxu0 %v2361
    %3167 = vmatpush1.bf16.msra.mxu0 %v2360
    %3168 = vmatprep.subr.bf16.mxu0 %v2369
    %3169 = vmatpush1.bf16.msra.mxu0 %v2368
    %3170 = vmatprep.subr.bf16.mxu0 %v2377
    %3171 = vmatpush1.bf16.msra.mxu0 %v2376
    %3172 = vmatprep.mubr.bf16.mxu0 %v645
    %3173 = vmatmul.mubr.bf16.gmra.mrb[0].mxu0 %v644
    %v3174 = vpop.f32.mrb[0].mxu0
    %v3175 = vadd.f32 %v3134, %v3174
    %v3176 = vpop.f32.mrb[0].mxu0
    %v3177 = vadd.f32 %v3136, %v3176
    %v3178 = vpop.f32.mrb[0].mxu0
    %v3179 = vpop.f32.mrb[0].mxu0
    %3180 = vdwg.mxu0
    %3181 = vmatprep.subr.bf16.mxu0 %v2385
    %3182 = vmatpush1.bf16.msra.mxu0 %v2384
    %3183 = vmatprep.subr.bf16.mxu0 %v2393
    %3184 = vmatpush1.bf16.msra.mxu0 %v2392
    %3185 = vmatprep.subr.bf16.mxu0 %v2401
    %3186 = vmatpush1.bf16.msra.mxu0 %v2400
    %3187 = vmatprep.subr.bf16.mxu0 %v2409
    %3188 = vmatpush1.bf16.msra.mxu0 %v2408
    %3189 = vmatprep.subr.bf16.mxu0 %v2417
    %3190 = vmatpush1.bf16.msra.mxu0 %v2416
    %3191 = vmatprep.subr.bf16.mxu0 %v2425
    %3192 = vmatpush1.bf16.msra.mxu0 %v2424
    %3193 = vmatprep.subr.bf16.mxu0 %v2433
    %3194 = vmatpush1.bf16.msra.mxu0 %v2432
    %3195 = vmatprep.subr.bf16.mxu0 %v2441
    %3196 = vmatpush1.bf16.msra.mxu0 %v2440
    %3197 = vmatprep.subr.bf16.mxu0 0
    %3198 = vmatpush1.bf16.msra.mxu0 0
    %3199 = vmatprep.subr.bf16.mxu0 0
    %3200 = vmatpush1.bf16.msra.mxu0 0
    %3201 = vmatprep.subr.bf16.mxu0 0
    %3202 = vmatpush1.bf16.msra.mxu0 0
    %3203 = vmatprep.subr.bf16.mxu0 0
    %3204 = vmatpush1.bf16.msra.mxu0 0
    %3205 = vmatprep.subr.bf16.mxu0 0
    %3206 = vmatpush1.bf16.msra.mxu0 0
    %3207 = vmatprep.subr.bf16.mxu0 0
    %3208 = vmatpush1.bf16.msra.mxu0 0
    %3209 = vmatprep.subr.bf16.mxu0 0
    %3210 = vmatpush1.bf16.msra.mxu0 0
    %3211 = vmatprep.subr.bf16.mxu0 0
    %3212 = vmatpush1.bf16.msra.mxu0 0
    %3213 = vmatprep.mubr.bf16.mxu0 0
    %3214 = vmatmul.mubr.bf16.gmra.mrb[0].mxu0 %v646
    %v3215 = vpop.f32.mrb[0].mxu0
    %v3216 = vadd.f32 %v3175, %v3215
    %v3217 = vpop.f32.mrb[0].mxu0
    %v3218 = vadd.f32 %v3177, %v3217
    %v3219 = vpop.f32.mrb[0].mxu0
    %v3220 = vpop.f32.mrb[0].mxu0
    %3221 = vdwg.mxu0
    %3222 = vmatprep.subr.bf16.mxu0 %v2003
    %3223 = vmatpush1.bf16.msra.mxu0 %v2002
    %3224 = vmatprep.subr.bf16.mxu0 %v2011
    %3225 = vmatpush1.bf16.msra.mxu0 %v2010
    %3226 = vmatprep.subr.bf16.mxu0 %v2019
    %3227 = vmatpush1.bf16.msra.mxu0 %v2018
    %3228 = vmatprep.subr.bf16.mxu0 %v2027
    %3229 = vmatpush1.bf16.msra.mxu0 %v2026
    %3230 = vmatprep.subr.bf16.mxu0 %v2035
    %3231 = vmatpush1.bf16.msra.mxu0 %v2034
    %3232 = vmatprep.subr.bf16.mxu0 %v2043
    %3233 = vmatpush1.bf16.msra.mxu0 %v2042
    %3234 = vmatprep.subr.bf16.mxu0 %v2051
    %3235 = vmatpush1.bf16.msra.mxu0 %v2050
    %3236 = vmatprep.subr.bf16.mxu0 %v2059
    %3237 = vmatpush1.bf16.msra.mxu0 %v2058
    %3238 = vmatprep.subr.bf16.mxu0 %v2067
    %3239 = vmatpush1.bf16.msra.mxu0 %v2066
    %3240 = vmatprep.subr.bf16.mxu0 %v2075
    %3241 = vmatpush1.bf16.msra.mxu0 %v2074
    %3242 = vmatprep.subr.bf16.mxu0 %v2083
    %3243 = vmatpush1.bf16.msra.mxu0 %v2082
    %3244 = vmatprep.subr.bf16.mxu0 %v2091
    %3245 = vmatpush1.bf16.msra.mxu0 %v2090
    %3246 = vmatprep.subr.bf16.mxu0 %v2099
    %3247 = vmatpush1.bf16.msra.mxu0 %v2098
    %3248 = vmatprep.subr.bf16.mxu0 %v2107
    %3249 = vmatpush1.bf16.msra.mxu0 %v2106
    %3250 = vmatprep.subr.bf16.mxu0 %v2115
    %3251 = vmatpush1.bf16.msra.mxu0 %v2114
    %3252 = vmatprep.subr.bf16.mxu0 %v2123
    %3253 = vmatpush1.bf16.msra.mxu0 %v2122
    %3254 = vmatprep.mubr.bf16.mxu0 %v641
    %3255 = vmatmul.mubr.bf16.gmra.mrb[0].mxu0 %v640
    %v3256 = vpop.f32.mrb[0].mxu0
    %v3257 = vadd.f32 0.0, %v3256
    %v3258 = vpop.f32.mrb[0].mxu0
    %v3259 = vadd.f32 0.0, %v3258
    %v3260 = vpop.f32.mrb[0].mxu0
    %v3261 = vpop.f32.mrb[0].mxu0
    %3262 = vdwg.mxu0
    %3263 = vmatprep.subr.bf16.mxu0 %v2131
    %3264 = vmatpush1.bf16.msra.mxu0 %v2130
    %3265 = vmatprep.subr.bf16.mxu0 %v2139
    %3266 = vmatpush1.bf16.msra.mxu0 %v2138
    %3267 = vmatprep.subr.bf16.mxu0 %v2147
    %3268 = vmatpush1.bf16.msra.mxu0 %v2146
    %3269 = vmatprep.subr.bf16.mxu0 %v2155
    %3270 = vmatpush1.bf16.msra.mxu0 %v2154
    %3271 = vmatprep.subr.bf16.mxu0 %v2163
    %3272 = vmatpush1.bf16.msra.mxu0 %v2162
    %3273 = vmatprep.subr.bf16.mxu0 %v2171
    %3274 = vmatpush1.bf16.msra.mxu0 %v2170
    %3275 = vmatprep.subr.bf16.mxu0 %v2179
    %3276 = vmatpush1.bf16.msra.mxu0 %v2178
    %3277 = vmatprep.subr.bf16.mxu0 %v2187
    %3278 = vmatpush1.bf16.msra.mxu0 %v2186
    %3279 = vmatprep.subr.bf16.mxu0 %v2195
    %3280 = vmatpush1.bf16.msra.mxu0 %v2194
    %3281 = vmatprep.subr.bf16.mxu0 %v2203
    %3282 = vmatpush1.bf16.msra.mxu0 %v2202
    %3283 = vmatprep.subr.bf16.mxu0 %v2211
    %3284 = vmatpush1.bf16.msra.mxu0 %v2210
    %3285 = vmatprep.subr.bf16.mxu0 %v2219
    %3286 = vmatpush1.bf16.msra.mxu0 %v2218
    %3287 = vmatprep.subr.bf16.mxu0 %v2227
    %3288 = vmatpush1.bf16.msra.mxu0 %v2226
    %3289 = vmatprep.subr.bf16.mxu0 %v2235
    %3290 = vmatpush1.bf16.msra.mxu0 %v2234
    %3291 = vmatprep.subr.bf16.mxu0 %v2243
    %3292 = vmatpush1.bf16.msra.mxu0 %v2242
    %3293 = vmatprep.subr.bf16.mxu0 %v2251
    %3294 = vmatpush1.bf16.msra.mxu0 %v2250
    %3295 = vmatprep.mubr.bf16.mxu0 %v643
    %3296 = vmatmul.mubr.bf16.gmra.mrb[0].mxu0 %v642
    %v3297 = vpop.f32.mrb[0].mxu0
    %v3298 = vadd.f32 %v3257, %v3297
    %v3299 = vpop.f32.mrb[0].mxu0
    %v3300 = vadd.f32 %v3259, %v3299
    %v3301 = vpop.f32.mrb[0].mxu0
    %v3302 = vpop.f32.mrb[0].mxu0
    %3303 = vdwg.mxu0
    %3304 = vmatprep.subr.bf16.mxu0 %v2259
    %3305 = vmatpush1.bf16.msra.mxu0 %v2258
    %3306 = vmatprep.subr.bf16.mxu0 %v2267
    %3307 = vmatpush1.bf16.msra.mxu0 %v2266
    %3308 = vmatprep.subr.bf16.mxu0 %v2275
    %3309 = vmatpush1.bf16.msra.mxu0 %v2274
    %3310 = vmatprep.subr.bf16.mxu0 %v2283
    %3311 = vmatpush1.bf16.msra.mxu0 %v2282
    %3312 = vmatprep.subr.bf16.mxu0 %v2291
    %3313 = vmatpush1.bf16.msra.mxu0 %v2290
    %3314 = vmatprep.subr.bf16.mxu0 %v2299
    %3315 = vmatpush1.bf16.msra.mxu0 %v2298
    %3316 = vmatprep.subr.bf16.mxu0 %v2307
    %3317 = vmatpush1.bf16.msra.mxu0 %v2306
    %3318 = vmatprep.subr.bf16.mxu0 %v2315
    %3319 = vmatpush1.bf16.msra.mxu0 %v2314
    %3320 = vmatprep.subr.bf16.mxu0 %v2323
    %3321 = vmatpush1.bf16.msra.mxu0 %v2322
    %3322 = vmatprep.subr.bf16.mxu0 %v2331
    %3323 = vmatpush1.bf16.msra.mxu0 %v2330
    %3324 = vmatprep.subr.bf16.mxu0 %v2339
    %3325 = vmatpush1.bf16.msra.mxu0 %v2338
    %3326 = vmatprep.subr.bf16.mxu0 %v2347
    %3327 = vmatpush1.bf16.msra.mxu0 %v2346
    %3328 = vmatprep.subr.bf16.mxu0 %v2355
    %3329 = vmatpush1.bf16.msra.mxu0 %v2354
    %3330 = vmatprep.subr.bf16.mxu0 %v2363
    %3331 = vmatpush1.bf16.msra.mxu0 %v2362
    %3332 = vmatprep.subr.bf16.mxu0 %v2371
    %3333 = vmatpush1.bf16.msra.mxu0 %v2370
    %3334 = vmatprep.subr.bf16.mxu0 %v2379
    %3335 = vmatpush1.bf16.msra.mxu0 %v2378
    %3336 = vmatprep.mubr.bf16.mxu0 %v645
    %3337 = vmatmul.mubr.bf16.gmra.mrb[0].mxu0 %v644
    %v3338 = vpop.f32.mrb[0].mxu0
    %v3339 = vadd.f32 %v3298, %v3338
    %v3340 = vpop.f32.mrb[0].mxu0
    %v3341 = vadd.f32 %v3300, %v3340
    %v3342 = vpop.f32.mrb[0].mxu0
    %v3343 = vpop.f32.mrb[0].mxu0
    %3344 = vdwg.mxu0
    %3345 = vmatprep.subr.bf16.mxu0 %v2387
    %3346 = vmatpush1.bf16.msra.mxu0 %v2386
    %3347 = vmatprep.subr.bf16.mxu0 %v2395
    %3348 = vmatpush1.bf16.msra.mxu0 %v2394
    %3349 = vmatprep.subr.bf16.mxu0 %v2403
    %3350 = vmatpush1.bf16.msra.mxu0 %v2402
    %3351 = vmatprep.subr.bf16.mxu0 %v2411
    %3352 = vmatpush1.bf16.msra.mxu0 %v2410
    %3353 = vmatprep.subr.bf16.mxu0 %v2419
    %3354 = vmatpush1.bf16.msra.mxu0 %v2418
    %3355 = vmatprep.subr.bf16.mxu0 %v2427
    %3356 = vmatpush1.bf16.msra.mxu0 %v2426
    %3357 = vmatprep.subr.bf16.mxu0 %v2435
    %3358 = vmatpush1.bf16.msra.mxu0 %v2434
    %3359 = vmatprep.subr.bf16.mxu0 %v2443
    %3360 = vmatpush1.bf16.msra.mxu0 %v2442
    %3361 = vmatprep.subr.bf16.mxu0 0
    %3362 = vmatpush1.bf16.msra.mxu0 0
    %3363 = vmatprep.subr.bf16.mxu0 0
    %3364 = vmatpush1.bf16.msra.mxu0 0
    %3365 = vmatprep.subr.bf16.mxu0 0
    %3366 = vmatpush1.bf16.msra.mxu0 0
    %3367 = vmatprep.subr.bf16.mxu0 0
    %3368 = vmatpush1.bf16.msra.mxu0 0
    %3369 = vmatprep.subr.bf16.mxu0 0
    %3370 = vmatpush1.bf16.msra.mxu0 0
    %3371 = vmatprep.subr.bf16.mxu0 0
    %3372 = vmatpush1.bf16.msra.mxu0 0
    %3373 = vmatprep.subr.bf16.mxu0 0
    %3374 = vmatpush1.bf16.msra.mxu0 0
    %3375 = vmatprep.subr.bf16.mxu0 0
    %3376 = vmatpush1.bf16.msra.mxu0 0
    %3377 = vmatprep.mubr.bf16.mxu0 0
    %3378 = vmatmul.mubr.bf16.gmra.mrb[0].mxu0 %v646
    %v3379 = vpop.f32.mrb[0].mxu0
    %v3380 = vadd.f32 %v3339, %v3379
    %v3381 = vpop.f32.mrb[0].mxu0
    %v3382 = vadd.f32 %v3341, %v3381
    %v3383 = vpop.f32.mrb[0].mxu0
    %v3384 = vpop.f32.mrb[0].mxu0
    %3385 = vdwg.mxu0
    %3386 = vmatprep.subr.bf16.mxu0 %v2005
    %3387 = vmatpush1.bf16.msra.mxu0 %v2004
    %3388 = vmatprep.subr.bf16.mxu0 %v2013
    %3389 = vmatpush1.bf16.msra.mxu0 %v2012
    %3390 = vmatprep.subr.bf16.mxu0 %v2021
    %3391 = vmatpush1.bf16.msra.mxu0 %v2020
    %3392 = vmatprep.subr.bf16.mxu0 %v2029
    %3393 = vmatpush1.bf16.msra.mxu0 %v2028
    %3394 = vmatprep.subr.bf16.mxu0 %v2037
    %3395 = vmatpush1.bf16.msra.mxu0 %v2036
    %3396 = vmatprep.subr.bf16.mxu0 %v2045
    %3397 = vmatpush1.bf16.msra.mxu0 %v2044
    %3398 = vmatprep.subr.bf16.mxu0 %v2053
    %3399 = vmatpush1.bf16.msra.mxu0 %v2052
    %3400 = vmatprep.subr.bf16.mxu0 %v2061
    %3401 = vmatpush1.bf16.msra.mxu0 %v2060
    %3402 = vmatprep.subr.bf16.mxu0 %v2069
    %3403 = vmatpush1.bf16.msra.mxu0 %v2068
    %3404 = vmatprep.subr.bf16.mxu0 %v2077
    %3405 = vmatpush1.bf16.msra.mxu0 %v2076
    %3406 = vmatprep.subr.bf16.mxu0 %v2085
    %3407 = vmatpush1.bf16.msra.mxu0 %v2084
    %3408 = vmatprep.subr.bf16.mxu0 %v2093
    %3409 = vmatpush1.bf16.msra.mxu0 %v2092
    %3410 = vmatprep.subr.bf16.mxu0 %v2101
    %3411 = vmatpush1.bf16.msra.mxu0 %v2100
    %3412 = vmatprep.subr.bf16.mxu0 %v2109
    %3413 = vmatpush1.bf16.msra.mxu0 %v2108
    %3414 = vmatprep.subr.bf16.mxu0 %v2117
    %3415 = vmatpush1.bf16.msra.mxu0 %v2116
    %3416 = vmatprep.subr.bf16.mxu0 %v2125
    %3417 = vmatpush1.bf16.msra.mxu0 %v2124
    %3418 = vmatprep.mubr.bf16.mxu0 %v641
    %3419 = vmatmul.mubr.bf16.gmra.mrb[0].mxu0 %v640
    %v3420 = vpop.f32.mrb[0].mxu0
    %v3421 = vadd.f32 0.0, %v3420
    %v3422 = vpop.f32.mrb[0].mxu0
    %v3423 = vadd.f32 0.0, %v3422
    %v3424 = vpop.f32.mrb[0].mxu0
    %v3425 = vpop.f32.mrb[0].mxu0
    %3426 = vdwg.mxu0
    %3427 = vmatprep.subr.bf16.mxu0 %v2133
    %3428 = vmatpush1.bf16.msra.mxu0 %v2132
    %3429 = vmatprep.subr.bf16.mxu0 %v2141
    %3430 = vmatpush1.bf16.msra.mxu0 %v2140
    %3431 = vmatprep.subr.bf16.mxu0 %v2149
    %3432 = vmatpush1.bf16.msra.mxu0 %v2148
    %3433 = vmatprep.subr.bf16.mxu0 %v2157
    %3434 = vmatpush1.bf16.msra.mxu0 %v2156
    %3435 = vmatprep.subr.bf16.mxu0 %v2165
    %3436 = vmatpush1.bf16.msra.mxu0 %v2164
    %3437 = vmatprep.subr.bf16.mxu0 %v2173
    %3438 = vmatpush1.bf16.msra.mxu0 %v2172
    %3439 = vmatprep.subr.bf16.mxu0 %v2181
    %3440 = vmatpush1.bf16.msra.mxu0 %v2180
    %3441 = vmatprep.subr.bf16.mxu0 %v2189
    %3442 = vmatpush1.bf16.msra.mxu0 %v2188
    %3443 = vmatprep.subr.bf16.mxu0 %v2197
    %3444 = vmatpush1.bf16.msra.mxu0 %v2196
    %3445 = vmatprep.subr.bf16.mxu0 %v2205
    %3446 = vmatpush1.bf16.msra.mxu0 %v2204
    %3447 = vmatprep.subr.bf16.mxu0 %v2213
    %3448 = vmatpush1.bf16.msra.mxu0 %v2212
    %3449 = vmatprep.subr.bf16.mxu0 %v2221
    %3450 = vmatpush1.bf16.msra.mxu0 %v2220
    %3451 = vmatprep.subr.bf16.mxu0 %v2229
    %3452 = vmatpush1.bf16.msra.mxu0 %v2228
    %3453 = vmatprep.subr.bf16.mxu0 %v2237
    %3454 = vmatpush1.bf16.msra.mxu0 %v2236
    %3455 = vmatprep.subr.bf16.mxu0 %v2245
    %3456 = vmatpush1.bf16.msra.mxu0 %v2244
    %3457 = vmatprep.subr.bf16.mxu0 %v2253
    %3458 = vmatpush1.bf16.msra.mxu0 %v2252
    %3459 = vmatprep.mubr.bf16.mxu0 %v643
    %3460 = vmatmul.mubr.bf16.gmra.mrb[0].mxu0 %v642
    %v3461 = vpop.f32.mrb[0].mxu0
    %v3462 = vadd.f32 %v3421, %v3461
    %v3463 = vpop.f32.mrb[0].mxu0
    %v3464 = vadd.f32 %v3423, %v3463
    %v3465 = vpop.f32.mrb[0].mxu0
    %v3466 = vpop.f32.mrb[0].mxu0
    %3467 = vdwg.mxu0
    %3468 = vmatprep.subr.bf16.mxu0 %v2261
    %3469 = vmatpush1.bf16.msra.mxu0 %v2260
    %3470 = vmatprep.subr.bf16.mxu0 %v2269
    %3471 = vmatpush1.bf16.msra.mxu0 %v2268
    %3472 = vmatprep.subr.bf16.mxu0 %v2277
    %3473 = vmatpush1.bf16.msra.mxu0 %v2276
    %3474 = vmatprep.subr.bf16.mxu0 %v2285
    %3475 = vmatpush1.bf16.msra.mxu0 %v2284
    %3476 = vmatprep.subr.bf16.mxu0 %v2293
    %3477 = vmatpush1.bf16.msra.mxu0 %v2292
    %3478 = vmatprep.subr.bf16.mxu0 %v2301
    %3479 = vmatpush1.bf16.msra.mxu0 %v2300
    %3480 = vmatprep.subr.bf16.mxu0 %v2309
    %3481 = vmatpush1.bf16.msra.mxu0 %v2308
    %3482 = vmatprep.subr.bf16.mxu0 %v2317
    %3483 = vmatpush1.bf16.msra.mxu0 %v2316
    %3484 = vmatprep.subr.bf16.mxu0 %v2325
    %3485 = vmatpush1.bf16.msra.mxu0 %v2324
    %3486 = vmatprep.subr.bf16.mxu0 %v2333
    %3487 = vmatpush1.bf16.msra.mxu0 %v2332
    %3488 = vmatprep.subr.bf16.mxu0 %v2341
    %3489 = vmatpush1.bf16.msra.mxu0 %v2340
    %3490 = vmatprep.subr.bf16.mxu0 %v2349
    %3491 = vmatpush1.bf16.msra.mxu0 %v2348
    %3492 = vmatprep.subr.bf16.mxu0 %v2357
    %3493 = vmatpush1.bf16.msra.mxu0 %v2356
    %3494 = vmatprep.subr.bf16.mxu0 %v2365
    %3495 = vmatpush1.bf16.msra.mxu0 %v2364
    %3496 = vmatprep.subr.bf16.mxu0 %v2373
    %3497 = vmatpush1.bf16.msra.mxu0 %v2372
    %3498 = vmatprep.subr.bf16.mxu0 %v2381
    %3499 = vmatpush1.bf16.msra.mxu0 %v2380
    %3500 = vmatprep.mubr.bf16.mxu0 %v645
    %3501 = vmatmul.mubr.bf16.gmra.mrb[0].mxu0 %v644
    %v3502 = vpop.f32.mrb[0].mxu0
    %v3503 = vadd.f32 %v3462, %v3502
    %v3504 = vpop.f32.mrb[0].mxu0
    %v3505 = vadd.f32 %v3464, %v3504
    %v3506 = vpop.f32.mrb[0].mxu0
    %v3507 = vpop.f32.mrb[0].mxu0
    %3508 = vdwg.mxu0
    %3509 = vmatprep.subr.bf16.mxu0 %v2389
    %3510 = vmatpush1.bf16.msra.mxu0 %v2388
    %3511 = vmatprep.subr.bf16.mxu0 %v2397
    %3512 = vmatpush1.bf16.msra.mxu0 %v2396
    %3513 = vmatprep.subr.bf16.mxu0 %v2405
    %3514 = vmatpush1.bf16.msra.mxu0 %v2404
    %3515 = vmatprep.subr.bf16.mxu0 %v2413
    %3516 = vmatpush1.bf16.msra.mxu0 %v2412
    %3517 = vmatprep.subr.bf16.mxu0 %v2421
    %3518 = vmatpush1.bf16.msra.mxu0 %v2420
    %3519 = vmatprep.subr.bf16.mxu0 %v2429
    %3520 = vmatpush1.bf16.msra.mxu0 %v2428
    %3521 = vmatprep.subr.bf16.mxu0 %v2437
    %3522 = vmatpush1.bf16.msra.mxu0 %v2436
    %3523 = vmatprep.subr.bf16.mxu0 %v2445
    %3524 = vmatpush1.bf16.msra.mxu0 %v2444
    %3525 = vmatprep.subr.bf16.mxu0 0
    %3526 = vmatpush1.bf16.msra.mxu0 0
    %3527 = vmatprep.subr.bf16.mxu0 0
    %3528 = vmatpush1.bf16.msra.mxu0 0
    %3529 = vmatprep.subr.bf16.mxu0 0
    %3530 = vmatpush1.bf16.msra.mxu0 0
    %3531 = vmatprep.subr.bf16.mxu0 0
    %3532 = vmatpush1.bf16.msra.mxu0 0
    %3533 = vmatprep.subr.bf16.mxu0 0
    %3534 = vmatpush1.bf16.msra.mxu0 0
    %3535 = vmatprep.subr.bf16.mxu0 0
    %3536 = vmatpush1.bf16.msra.mxu0 0
    %3537 = vmatprep.subr.bf16.mxu0 0
    %3538 = vmatpush1.bf16.msra.mxu0 0
    %3539 = vmatprep.subr.bf16.mxu0 0
    %3540 = vmatpush1.bf16.msra.mxu0 0
    %3541 = vmatprep.mubr.bf16.mxu0 0
    %3542 = vmatmul.mubr.bf16.gmra.mrb[0].mxu0 %v646
    %v3543 = vpop.f32.mrb[0].mxu0
    %v3544 = vadd.f32 %v3503, %v3543
    %v3545 = vpop.f32.mrb[0].mxu0
    %v3546 = vadd.f32 %v3505, %v3545
    %v3547 = vpop.f32.mrb[0].mxu0
    %v3548 = vpop.f32.mrb[0].mxu0
    %3549 = vdwg.mxu0
    %v3550 = vmax.f32 %v3052, %v3216
    %v3551 = vmax.f32 %v3054, %v3218
    %v3552 = vmax.f32 %v3380, %v3544
    %v3553 = vmax.f32 %v3382, %v3546
    %v3554 = vmax.f32 %v3550, %v3552
    %v3555 = vmax.f32 %v3551, %v3553
    %v3556 = vld [vmem:[#allocation7] sm:$0x3]
    %v3558 = vlaneseq
    %v3559 = vshrl.u32 %v3558, 7
    %v3560 = vsub.s32 0, %v3559
    %v3561 = vrot.slane %v3556, %v3560
    %v3562 = vlaneseq
    %v3563 = vshrl.u32 %v3562, 7
    %v3564 = vsub.s32 1, %v3563
    %v3565 = vrot.slane %v3556, %v3564
    %v3568 = vadd.f32 %v3554, %v3561
    %v3569 = vadd.f32 %v3555, %v3565
    %v3570 = vmax.f32 %v3568, 0.0
    %v3571 = vmax.f32 %v3569, 0.0
    %v3572 = vpack.c.bf16 %v3570, %v3570
    %v3573 = vpack.c.bf16 %v3571, %v3571
    %v3574 = vld [vmem:[#allocation8] sm:$0xff]
    %v3575 = vld [vmem:[#allocation8 + $0x8] sm:$0xff]
    %v3576 = vld [vmem:[#allocation8 + $0x10] sm:$0xff]
    %v3577 = vld [vmem:[#allocation8 + $0x18] sm:$0xff]
    %v3578 = vld [vmem:[#allocation8 + $0x20] sm:$0xff]
    %v3579 = vld [vmem:[#allocation8 + $0x28] sm:$0xff]
    %v3580 = vld [vmem:[#allocation8 + $0x30] sm:$0xff]
    %v3581 = vld [vmem:[#allocation8 + $0x38] sm:$0xff]
    %v3582 = vld [vmem:[#allocation8 + $0x40] sm:$0xff]
    %v3583 = vld [vmem:[#allocation8 + $0x48] sm:$0xff]
    %v3584 = vld [vmem:[#allocation8 + $0x50] sm:$0xff]
    %v3585 = vld [vmem:[#allocation8 + $0x58] sm:$0xff]
    %v3586 = vld [vmem:[#allocation8 + $0x60] sm:$0xff]
    %v3587 = vld [vmem:[#allocation8 + $0x68] sm:$0xff]
    %v3588 = vld [vmem:[#allocation8 + $0x70] sm:$0xff]
    %v3589 = vld [vmem:[#allocation8 + $0x78] sm:$0xff]
    %v3590 = vld [vmem:[#allocation8 + $0x80] sm:$0xff]
    %v3591 = vld [vmem:[#allocation8 + $0x88] sm:$0xff]
    %v3592 = vld [vmem:[#allocation8 + $0x90] sm:$0xff]
    %v3593 = vld [vmem:[#allocation8 + $0x98] sm:$0xff]
    %v3594 = vld [vmem:[#allocation8 + $0xa0] sm:$0xff]
    %v3595 = vld [vmem:[#allocation8 + $0xa8] sm:$0xff]
    %v3596 = vld [vmem:[#allocation8 + $0xb0] sm:$0xff]
    %v3597 = vld [vmem:[#allocation8 + $0xb8] sm:$0xff]
    %v3598 = vld [vmem:[#allocation8 + $0xc0] sm:$0xff]
    %v3599 = vld [vmem:[#allocation8 + $0xc8] sm:$0xff]
    %v3600 = vld [vmem:[#allocation8 + $0xd0] sm:$0xff]
    %v3601 = vld [vmem:[#allocation8 + $0xd8] sm:$0xff]
    %v3602 = vld [vmem:[#allocation8 + $0xe0] sm:$0xff]
    %v3603 = vld [vmem:[#allocation8 + $0xe8] sm:$0xff]
    %v3604 = vld [vmem:[#allocation8 + $0xf0] sm:$0xff]
    %v3605 = vld [vmem:[#allocation8 + $0xf8] sm:$0xff]
    %v3638 = vunpack.c.l.b16 %v3574
    %v3639 = vunpack.c.h.b16 %v3574
    %v3640 = vunpack.c.l.b16 %v3575
    %v3641 = vunpack.c.h.b16 %v3575
    %v3642 = vunpack.c.l.b16 %v3576
    %v3643 = vunpack.c.h.b16 %v3576
    %v3644 = vunpack.c.l.b16 %v3577
    %v3645 = vunpack.c.h.b16 %v3577
    %v3646 = vunpack.c.l.b16 %v3578
    %v3647 = vunpack.c.h.b16 %v3578
    %v3648 = vunpack.c.l.b16 %v3579
    %v3649 = vunpack.c.h.b16 %v3579
    %v3650 = vunpack.c.l.b16 %v3580
    %v3651 = vunpack.c.h.b16 %v3580
    %v3652 = vunpack.c.l.b16 %v3581
    %v3653 = vunpack.c.h.b16 %v3581
    %v3654 = vunpack.c.l.b16 %v3582
    %v3655 = vunpack.c.h.b16 %v3582
    %v3656 = vunpack.c.l.b16 %v3583
    %v3657 = vunpack.c.h.b16 %v3583
    %v3658 = vunpack.c.l.b16 %v3584
    %v3659 = vunpack.c.h.b16 %v3584
    %v3660 = vunpack.c.l.b16 %v3585
    %v3661 = vunpack.c.h.b16 %v3585
    %v3662 = vunpack.c.l.b16 %v3586
    %v3663 = vunpack.c.h.b16 %v3586
    %v3664 = vunpack.c.l.b16 %v3587
    %v3665 = vunpack.c.h.b16 %v3587
    %v3666 = vunpack.c.l.b16 %v3588
    %v3667 = vunpack.c.h.b16 %v3588
    %v3668 = vunpack.c.l.b16 %v3589
    %v3669 = vunpack.c.h.b16 %v3589
    %v3670 = vunpack.c.l.b16 %v3590
    %v3671 = vunpack.c.h.b16 %v3590
    %v3672 = vunpack.c.l.b16 %v3591
    %v3673 = vunpack.c.h.b16 %v3591
    %v3674 = vunpack.c.l.b16 %v3592
    %v3675 = vunpack.c.h.b16 %v3592
    %v3676 = vunpack.c.l.b16 %v3593
    %v3677 = vunpack.c.h.b16 %v3593
    %v3678 = vunpack.c.l.b16 %v3594
    %v3679 = vunpack.c.h.b16 %v3594
    %v3680 = vunpack.c.l.b16 %v3595
    %v3681 = vunpack.c.h.b16 %v3595
    %v3682 = vunpack.c.l.b16 %v3596
    %v3683 = vunpack.c.h.b16 %v3596
    %v3684 = vunpack.c.l.b16 %v3597
    %v3685 = vunpack.c.h.b16 %v3597
    %v3686 = vunpack.c.l.b16 %v3598
    %v3687 = vunpack.c.h.b16 %v3598
    %v3688 = vunpack.c.l.b16 %v3599
    %v3689 = vunpack.c.h.b16 %v3599
    %v3690 = vunpack.c.l.b16 %v3600
    %v3691 = vunpack.c.h.b16 %v3600
    %v3692 = vunpack.c.l.b16 %v3601
    %v3693 = vunpack.c.h.b16 %v3601
    %v3694 = vunpack.c.l.b16 %v3602
    %v3695 = vunpack.c.h.b16 %v3602
    %v3696 = vunpack.c.l.b16 %v3603
    %v3697 = vunpack.c.h.b16 %v3603
    %v3698 = vunpack.c.l.b16 %v3604
    %v3699 = vunpack.c.h.b16 %v3604
    %v3700 = vunpack.c.l.b16 %v3605
    %v3701 = vunpack.c.h.b16 %v3605
    %v3702 = vpack.c.b16 %v3640, %v3638
    %v3703 = vpack.c.b16 %v3641, %v3639
    %v3704 = vpack.c.b16 %v3644, %v3642
    %v3705 = vpack.c.b16 %v3645, %v3643
    %v3706 = vpack.c.b16 %v3648, %v3646
    %v3707 = vpack.c.b16 %v3649, %v3647
    %v3708 = vpack.c.b16 %v3652, %v3650
    %v3709 = vpack.c.b16 %v3653, %v3651
    %v3710 = vpack.c.b16 %v3656, %v3654
    %v3711 = vpack.c.b16 %v3657, %v3655
    %v3712 = vpack.c.b16 %v3660, %v3658
    %v3713 = vpack.c.b16 %v3661, %v3659
    %v3714 = vpack.c.b16 %v3664, %v3662
    %v3715 = vpack.c.b16 %v3665, %v3663
    %v3716 = vpack.c.b16 %v3668, %v3666
    %v3717 = vpack.c.b16 %v3669, %v3667
    %v3718 = vpack.c.b16 %v3672, %v3670
    %v3719 = vpack.c.b16 %v3673, %v3671
    %v3720 = vpack.c.b16 %v3676, %v3674
    %v3721 = vpack.c.b16 %v3677, %v3675
    %v3722 = vpack.c.b16 %v3680, %v3678
    %v3723 = vpack.c.b16 %v3681, %v3679
    %v3724 = vpack.c.b16 %v3684, %v3682
    %v3725 = vpack.c.b16 %v3685, %v3683
    %v3726 = vpack.c.b16 %v3688, %v3686
    %v3727 = vpack.c.b16 %v3689, %v3687
    %v3728 = vpack.c.b16 %v3692, %v3690
    %v3729 = vpack.c.b16 %v3693, %v3691
    %v3730 = vpack.c.b16 %v3696, %v3694
    %v3731 = vpack.c.b16 %v3697, %v3695
    %v3732 = vpack.c.b16 %v3700, %v3698
    %v3733 = vpack.c.b16 %v3701, %v3699
    %3766 = vmatprep.subr.bf16.mxu0 %v3703
    %3767 = vmatpush1.bf16.msra.mxu0 %v3702
    %3768 = vmatprep.subr.bf16.mxu0 %v3705
    %3769 = vmatpush1.bf16.msra.mxu0 %v3704
    %3770 = vmatprep.subr.bf16.mxu0 %v3707
    %3771 = vmatpush1.bf16.msra.mxu0 %v3706
    %3772 = vmatprep.subr.bf16.mxu0 %v3709
    %3773 = vmatpush1.bf16.msra.mxu0 %v3708
    %3774 = vmatprep.subr.bf16.mxu0 %v3711
    %3775 = vmatpush1.bf16.msra.mxu0 %v3710
    %3776 = vmatprep.subr.bf16.mxu0 %v3713
    %3777 = vmatpush1.bf16.msra.mxu0 %v3712
    %3778 = vmatprep.subr.bf16.mxu0 %v3715
    %3779 = vmatpush1.bf16.msra.mxu0 %v3714
    %3780 = vmatprep.subr.bf16.mxu0 %v3717
    %3781 = vmatpush1.bf16.msra.mxu0 %v3716
    %3782 = vmatprep.subr.bf16.mxu0 %v3719
    %3783 = vmatpush1.bf16.msra.mxu0 %v3718
    %3784 = vmatprep.subr.bf16.mxu0 %v3721
    %3785 = vmatpush1.bf16.msra.mxu0 %v3720
    %3786 = vmatprep.subr.bf16.mxu0 %v3723
    %3787 = vmatpush1.bf16.msra.mxu0 %v3722
    %3788 = vmatprep.subr.bf16.mxu0 %v3725
    %3789 = vmatpush1.bf16.msra.mxu0 %v3724
    %3790 = vmatprep.subr.bf16.mxu0 %v3727
    %3791 = vmatpush1.bf16.msra.mxu0 %v3726
    %3792 = vmatprep.subr.bf16.mxu0 %v3729
    %3793 = vmatpush1.bf16.msra.mxu0 %v3728
    %3794 = vmatprep.subr.bf16.mxu0 %v3731
    %3795 = vmatpush1.bf16.msra.mxu0 %v3730
    %3796 = vmatprep.subr.bf16.mxu0 %v3733
    %3797 = vmatpush1.bf16.msra.mxu0 %v3732
    %3798 = vmatprep.mubr.bf16.mxu0 %v3573
    %3799 = vmatmul.mubr.bf16.gmra.mrb[0].mxu0 %v3572
    %v3800 = vpop.f32.mrb[0].mxu0
    %v3801 = vadd.f32 0.0, %v3800
    %v3802 = vpop.f32.mrb[0].mxu0
    %v3803 = vadd.f32 0.0, %v3802
    %v3804 = vpop.f32.mrb[0].mxu0
    %v3805 = vpop.f32.mrb[0].mxu0
    %3806 = vdwg.mxu0
    %3808 = vrot.lane.b32.xlu0 %v3801, 64
    %v3809 = vpop.permute.xlu0 %3808
    %v3811 = vmax.f32 %v3801, %v3809
    %3813 = vrot.lane.b32.xlu0 %v3803, 64
    %v3814 = vpop.permute.xlu0 %3813
    %v3816 = vmax.f32 %v3803, %v3814
    %v3817 = vmax.f32 %v3811, %v3816
    %v3818 = vld [vmem:[#allocation10] sm:$0x1]
    %v3820 = vlaneseq
    %v3821 = vshrl.u32 %v3820, 7
    %v3822 = vsub.s32 0, %v3821
    %v3823 = vrot.slane %v3818, %v3822
    %v3825 = vadd.f32 %v3817, %v3823
    %v3826 = vmax.f32 %v3825, 0.0
    %v3827 = vpack.c.bf16 %v3826, %v3826
    %v3828 = vld [vmem:[#allocation11] sm:$0xff]
    %v3829 = vld [vmem:[#allocation11 + $0x8] sm:$0xff]
    %v3830 = vld [vmem:[#allocation11 + $0x10] sm:$0xff]
    %v3831 = vld [vmem:[#allocation11 + $0x18] sm:$0xff]
    %v3832 = vld [vmem:[#allocation11 + $0x20] sm:$0xff]
    %v3833 = vld [vmem:[#allocation11 + $0x28] sm:$0xff]
    %v3834 = vld [vmem:[#allocation11 + $0x30] sm:$0xff]
    %v3835 = vld [vmem:[#allocation11 + $0x38] sm:$0xff]
    %v3836 = vld [vmem:[#allocation11 + $0x40] sm:$0xff]
    %v3837 = vld [vmem:[#allocation11 + $0x48] sm:$0xff]
    %v3838 = vld [vmem:[#allocation11 + $0x50] sm:$0xff]
    %v3839 = vld [vmem:[#allocation11 + $0x58] sm:$0xff]
    %v3840 = vld [vmem:[#allocation11 + $0x60] sm:$0xff]
    %v3841 = vld [vmem:[#allocation11 + $0x68] sm:$0xff]
    %v3842 = vld [vmem:[#allocation11 + $0x70] sm:$0xff]
    %v3843 = vld [vmem:[#allocation11 + $0x78] sm:$0xff]
    %v3844 = vld [vmem:[#allocation11 + $0x80] sm:$0xff]
    %v3845 = vld [vmem:[#allocation11 + $0x88] sm:$0xff]
    %v3846 = vld [vmem:[#allocation11 + $0x90] sm:$0xff]
    %v3847 = vld [vmem:[#allocation11 + $0x98] sm:$0xff]
    %v3848 = vld [vmem:[#allocation11 + $0xa0] sm:$0xff]
    %v3849 = vld [vmem:[#allocation11 + $0xa8] sm:$0xff]
    %v3850 = vld [vmem:[#allocation11 + $0xb0] sm:$0xff]
    %v3851 = vld [vmem:[#allocation11 + $0xb8] sm:$0xff]
    %v3852 = vld [vmem:[#allocation11 + $0xc0] sm:$0xff]
    %v3853 = vld [vmem:[#allocation11 + $0xc8] sm:$0xff]
    %v3854 = vld [vmem:[#allocation11 + $0xd0] sm:$0xff]
    %v3855 = vld [vmem:[#allocation11 + $0xd8] sm:$0xff]
    %v3856 = vld [vmem:[#allocation11 + $0xe0] sm:$0xff]
    %v3857 = vld [vmem:[#allocation11 + $0xe8] sm:$0xff]
    %v3858 = vld [vmem:[#allocation11 + $0xf0] sm:$0xff]
    %v3859 = vld [vmem:[#allocation11 + $0xf8] sm:$0xff]
    %v3860 = vld [vmem:[#allocation11 + $0x100] sm:$0xff]
    %v3861 = vld [vmem:[#allocation11 + $0x108] sm:$0xff]
    %v3862 = vld [vmem:[#allocation11 + $0x110] sm:$0xff]
    %v3863 = vld [vmem:[#allocation11 + $0x118] sm:$0xff]
    %v3864 = vld [vmem:[#allocation11 + $0x120] sm:$0xff]
    %v3865 = vld [vmem:[#allocation11 + $0x128] sm:$0xff]
    %v3866 = vld [vmem:[#allocation11 + $0x130] sm:$0xff]
    %v3867 = vld [vmem:[#allocation11 + $0x138] sm:$0xff]
    %v3868 = vld [vmem:[#allocation11 + $0x140] sm:$0xff]
    %v3869 = vld [vmem:[#allocation11 + $0x148] sm:$0xff]
    %v3870 = vld [vmem:[#allocation11 + $0x150] sm:$0xff]
    %v3871 = vld [vmem:[#allocation11 + $0x158] sm:$0xff]
    %v3872 = vld [vmem:[#allocation11 + $0x160] sm:$0xff]
    %v3873 = vld [vmem:[#allocation11 + $0x168] sm:$0xff]
    %v3874 = vld [vmem:[#allocation11 + $0x170] sm:$0xff]
    %v3875 = vld [vmem:[#allocation11 + $0x178] sm:$0xff]
    %v3876 = vld [vmem:[#allocation13] sm:$0xff]
    %v3877 = vld [vmem:[#allocation13 + $0x8] sm:$0xf]
    %v3880 = vlaneseq
    %v3881 = vshrl.u32 %v3880, 7
    %v3882 = vsub.s32 0, %v3881
    %v3883 = vrot.slane %v3876, %v3882
    %v3884 = vlaneseq
    %v3885 = vshrl.u32 %v3884, 7
    %v3886 = vsub.s32 1, %v3885
    %v3887 = vrot.slane %v3876, %v3886
    %v3888 = vlaneseq
    %v3889 = vshrl.u32 %v3888, 7
    %v3890 = vsub.s32 2, %v3889
    %v3891 = vrot.slane %v3876, %v3890
    %v3892 = vlaneseq
    %v3893 = vshrl.u32 %v3892, 7
    %v3894 = vsub.s32 3, %v3893
    %v3895 = vrot.slane %v3876, %v3894
    %v3896 = vlaneseq
    %v3897 = vshrl.u32 %v3896, 7
    %v3898 = vsub.s32 4, %v3897
    %v3899 = vrot.slane %v3876, %v3898
    %v3900 = vlaneseq
    %v3901 = vshrl.u32 %v3900, 7
    %v3902 = vsub.s32 5, %v3901
    %v3903 = vrot.slane %v3876, %v3902
    %v3904 = vlaneseq
    %v3905 = vshrl.u32 %v3904, 7
    %v3906 = vsub.s32 6, %v3905
    %v3907 = vrot.slane %v3876, %v3906
    %v3908 = vlaneseq
    %v3909 = vshrl.u32 %v3908, 7
    %v3910 = vsub.s32 7, %v3909
    %v3911 = vrot.slane %v3876, %v3910
    %v3912 = vlaneseq
    %v3913 = vshrl.u32 %v3912, 7
    %v3914 = vsub.s32 0, %v3913
    %v3915 = vrot.slane %v3877, %v3914
    %v3916 = vlaneseq
    %v3917 = vshrl.u32 %v3916, 7
    %v3918 = vsub.s32 1, %v3917
    %v3919 = vrot.slane %v3877, %v3918
    %v3920 = vlaneseq
    %v3921 = vshrl.u32 %v3920, 7
    %v3922 = vsub.s32 2, %v3921
    %v3923 = vrot.slane %v3877, %v3922
    %v3924 = vlaneseq
    %v3925 = vshrl.u32 %v3924, 7
    %v3926 = vsub.s32 3, %v3925
    %v3927 = vrot.slane %v3877, %v3926
    %v3988 = vunpack.c.l.b16 %v3828
    %v3989 = vunpack.c.h.b16 %v3828
    %v3990 = vunpack.c.l.b16 %v3829
    %v3991 = vunpack.c.h.b16 %v3829
    %v3992 = vunpack.c.l.b16 %v3830
    %v3993 = vunpack.c.h.b16 %v3830
    %v3994 = vunpack.c.l.b16 %v3831
    %v3995 = vunpack.c.h.b16 %v3831
    %v3996 = vunpack.c.l.b16 %v3832
    %v3997 = vunpack.c.h.b16 %v3832
    %v3998 = vunpack.c.l.b16 %v3833
    %v3999 = vunpack.c.h.b16 %v3833
    %v4000 = vunpack.c.l.b16 %v3834
    %v4001 = vunpack.c.h.b16 %v3834
    %v4002 = vunpack.c.l.b16 %v3835
    %v4003 = vunpack.c.h.b16 %v3835
    %v4004 = vunpack.c.l.b16 %v3836
    %v4005 = vunpack.c.h.b16 %v3836
    %v4006 = vunpack.c.l.b16 %v3837
    %v4007 = vunpack.c.h.b16 %v3837
    %v4008 = vunpack.c.l.b16 %v3838
    %v4009 = vunpack.c.h.b16 %v3838
    %v4010 = vunpack.c.l.b16 %v3839
    %v4011 = vunpack.c.h.b16 %v3839
    %v4012 = vunpack.c.l.b16 %v3840
    %v4013 = vunpack.c.h.b16 %v3840
    %v4014 = vunpack.c.l.b16 %v3841
    %v4015 = vunpack.c.h.b16 %v3841
    %v4016 = vunpack.c.l.b16 %v3842
    %v4017 = vunpack.c.h.b16 %v3842
    %v4018 = vunpack.c.l.b16 %v3843
    %v4019 = vunpack.c.h.b16 %v3843
    %v4020 = vunpack.c.l.b16 %v3844
    %v4021 = vunpack.c.h.b16 %v3844
    %v4022 = vunpack.c.l.b16 %v3845
    %v4023 = vunpack.c.h.b16 %v3845
    %v4024 = vunpack.c.l.b16 %v3846
    %v4025 = vunpack.c.h.b16 %v3846
    %v4026 = vunpack.c.l.b16 %v3847
    %v4027 = vunpack.c.h.b16 %v3847
    %v4028 = vunpack.c.l.b16 %v3848
    %v4029 = vunpack.c.h.b16 %v3848
    %v4030 = vunpack.c.l.b16 %v3849
    %v4031 = vunpack.c.h.b16 %v3849
    %v4032 = vunpack.c.l.b16 %v3850
    %v4033 = vunpack.c.h.b16 %v3850
    %v4034 = vunpack.c.l.b16 %v3851
    %v4035 = vunpack.c.h.b16 %v3851
    %v4036 = vunpack.c.l.b16 %v3852
    %v4037 = vunpack.c.h.b16 %v3852
    %v4038 = vunpack.c.l.b16 %v3853
    %v4039 = vunpack.c.h.b16 %v3853
    %v4040 = vunpack.c.l.b16 %v3854
    %v4041 = vunpack.c.h.b16 %v3854
    %v4042 = vunpack.c.l.b16 %v3855
    %v4043 = vunpack.c.h.b16 %v3855
    %v4044 = vunpack.c.l.b16 %v3856
    %v4045 = vunpack.c.h.b16 %v3856
    %v4046 = vunpack.c.l.b16 %v3857
    %v4047 = vunpack.c.h.b16 %v3857
    %v4048 = vunpack.c.l.b16 %v3858
    %v4049 = vunpack.c.h.b16 %v3858
    %v4050 = vunpack.c.l.b16 %v3859
    %v4051 = vunpack.c.h.b16 %v3859
    %v4052 = vunpack.c.l.b16 %v3860
    %v4053 = vunpack.c.h.b16 %v3860
    %v4054 = vunpack.c.l.b16 %v3861
    %v4055 = vunpack.c.h.b16 %v3861
    %v4056 = vunpack.c.l.b16 %v3862
    %v4057 = vunpack.c.h.b16 %v3862
    %v4058 = vunpack.c.l.b16 %v3863
    %v4059 = vunpack.c.h.b16 %v3863
    %v4060 = vunpack.c.l.b16 %v3864
    %v4061 = vunpack.c.h.b16 %v3864
    %v4062 = vunpack.c.l.b16 %v3865
    %v4063 = vunpack.c.h.b16 %v3865
    %v4064 = vunpack.c.l.b16 %v3866
    %v4065 = vunpack.c.h.b16 %v3866
    %v4066 = vunpack.c.l.b16 %v3867
    %v4067 = vunpack.c.h.b16 %v3867
    %v4068 = vunpack.c.l.b16 %v3868
    %v4069 = vunpack.c.h.b16 %v3868
    %v4070 = vunpack.c.l.b16 %v3869
    %v4071 = vunpack.c.h.b16 %v3869
    %v4072 = vunpack.c.l.b16 %v3870
    %v4073 = vunpack.c.h.b16 %v3870
    %v4074 = vunpack.c.l.b16 %v3871
    %v4075 = vunpack.c.h.b16 %v3871
    %v4076 = vunpack.c.l.b16 %v3872
    %v4077 = vunpack.c.h.b16 %v3872
    %v4078 = vunpack.c.l.b16 %v3873
    %v4079 = vunpack.c.h.b16 %v3873
    %v4080 = vunpack.c.l.b16 %v3874
    %v4081 = vunpack.c.h.b16 %v3874
    %v4082 = vunpack.c.l.b16 %v3875
    %v4083 = vunpack.c.h.b16 %v3875
    %v4084 = vpack.c.b16 %v4000, %v3988
    %v4085 = vpack.c.b16 %v4001, %v3989
    %v4086 = vpack.c.b16 %v4002, %v3990
    %v4087 = vpack.c.b16 %v4003, %v3991
    %v4088 = vpack.c.b16 %v4004, %v3992
    %v4089 = vpack.c.b16 %v4005, %v3993
    %v4090 = vpack.c.b16 %v4006, %v3994
    %v4091 = vpack.c.b16 %v4007, %v3995
    %v4092 = vpack.c.b16 %v4008, %v3996
    %v4093 = vpack.c.b16 %v4009, %v3997
    %v4094 = vpack.c.b16 %v4010, %v3998
    %v4095 = vpack.c.b16 %v4011, %v3999
    %v4096 = vpack.c.b16 %v4024, %v4012
    %v4097 = vpack.c.b16 %v4025, %v4013
    %v4098 = vpack.c.b16 %v4026, %v4014
    %v4099 = vpack.c.b16 %v4027, %v4015
    %v4100 = vpack.c.b16 %v4028, %v4016
    %v4101 = vpack.c.b16 %v4029, %v4017
    %v4102 = vpack.c.b16 %v4030, %v4018
    %v4103 = vpack.c.b16 %v4031, %v4019
    %v4104 = vpack.c.b16 %v4032, %v4020
    %v4105 = vpack.c.b16 %v4033, %v4021
    %v4106 = vpack.c.b16 %v4034, %v4022
    %v4107 = vpack.c.b16 %v4035, %v4023
    %v4108 = vpack.c.b16 %v4048, %v4036
    %v4109 = vpack.c.b16 %v4049, %v4037
    %v4110 = vpack.c.b16 %v4050, %v4038
    %v4111 = vpack.c.b16 %v4051, %v4039
    %v4112 = vpack.c.b16 %v4052, %v4040
    %v4113 = vpack.c.b16 %v4053, %v4041
    %v4114 = vpack.c.b16 %v4054, %v4042
    %v4115 = vpack.c.b16 %v4055, %v4043
    %v4116 = vpack.c.b16 %v4056, %v4044
    %v4117 = vpack.c.b16 %v4057, %v4045
    %v4118 = vpack.c.b16 %v4058, %v4046
    %v4119 = vpack.c.b16 %v4059, %v4047
    %v4120 = vpack.c.b16 %v4072, %v4060
    %v4121 = vpack.c.b16 %v4073, %v4061
    %v4122 = vpack.c.b16 %v4074, %v4062
    %v4123 = vpack.c.b16 %v4075, %v4063
    %v4124 = vpack.c.b16 %v4076, %v4064
    %v4125 = vpack.c.b16 %v4077, %v4065
    %v4126 = vpack.c.b16 %v4078, %v4066
    %v4127 = vpack.c.b16 %v4079, %v4067
    %v4128 = vpack.c.b16 %v4080, %v4068
    %v4129 = vpack.c.b16 %v4081, %v4069
    %v4130 = vpack.c.b16 %v4082, %v4070
    %v4131 = vpack.c.b16 %v4083, %v4071
    %vm4180 = vcmask 523264
    %v4182 = vsel %vm4180, %v3827, 0
    %4184 = vmatprep.subr.bf16.mxu0 %v4085
    %4185 = vmatpush1.bf16.msra.mxu0 %v4084
    %4186 = vmatprep.subr.bf16.mxu0 %v4097
    %4187 = vmatpush1.bf16.msra.mxu0 %v4096
    %4188 = vmatprep.subr.bf16.mxu0 %v4109
    %4189 = vmatpush1.bf16.msra.mxu0 %v4108
    %4190 = vmatprep.subr.bf16.mxu0 %v4121
    %4191 = vmatpush1.bf16.msra.mxu0 %v4120
    %4192 = vmatprep.subr.bf16.mxu0 0
    %4193 = vmatpush1.bf16.msra.mxu0 0
    %4194 = vmatprep.subr.bf16.mxu0 0
    %4195 = vmatpush1.bf16.msra.mxu0 0
    %4196 = vmatprep.subr.bf16.mxu0 0
    %4197 = vmatpush1.bf16.msra.mxu0 0
    %4198 = vmatprep.subr.bf16.mxu0 0
    %4199 = vmatpush1.bf16.msra.mxu0 0
    %4200 = vmatprep.subr.bf16.mxu0 0
    %4201 = vmatpush1.bf16.msra.mxu0 0
    %4202 = vmatprep.subr.bf16.mxu0 0
    %4203 = vmatpush1.bf16.msra.mxu0 0
    %4204 = vmatprep.subr.bf16.mxu0 0
    %4205 = vmatpush1.bf16.msra.mxu0 0
    %4206 = vmatprep.subr.bf16.mxu0 0
    %4207 = vmatpush1.bf16.msra.mxu0 0
    %4208 = vmatprep.subr.bf16.mxu0 0
    %4209 = vmatpush1.bf16.msra.mxu0 0
    %4210 = vmatprep.subr.bf16.mxu0 0
    %4211 = vmatpush1.bf16.msra.mxu0 0
    %4212 = vmatprep.subr.bf16.mxu0 0
    %4213 = vmatpush1.bf16.msra.mxu0 0
    %4214 = vmatprep.subr.bf16.mxu0 0
    %4215 = vmatpush1.bf16.msra.mxu0 0
    %4216 = vmatprep.mubr.bf16.mxu0 0
    %4217 = vmatmul.mubr.bf16.gmra.mrb[0].mxu0 %v4182
    %v4218 = vpop.f32.mrb[0].mxu0
    %v4219 = vadd.f32 %v3883, %v4218
    %v4220 = vpop.f32.mrb[0].mxu0
    %v4221 = vadd.f32 %v3887, %v4220
    %v4222 = vpop.f32.mrb[0].mxu0
    %v4223 = vpop.f32.mrb[0].mxu0
    %4224 = vdwg.mxu0
    %4225 = vmatprep.subr.bf16.mxu0 %v4087
    %4226 = vmatpush1.bf16.msra.mxu0 %v4086
    %4227 = vmatprep.subr.bf16.mxu0 %v4099
    %4228 = vmatpush1.bf16.msra.mxu0 %v4098
    %4229 = vmatprep.subr.bf16.mxu0 %v4111
    %4230 = vmatpush1.bf16.msra.mxu0 %v4110
    %4231 = vmatprep.subr.bf16.mxu0 %v4123
    %4232 = vmatpush1.bf16.msra.mxu0 %v4122
    %4233 = vmatprep.subr.bf16.mxu0 0
    %4234 = vmatpush1.bf16.msra.mxu0 0
    %4235 = vmatprep.subr.bf16.mxu0 0
    %4236 = vmatpush1.bf16.msra.mxu0 0
    %4237 = vmatprep.subr.bf16.mxu0 0
    %4238 = vmatpush1.bf16.msra.mxu0 0
    %4239 = vmatprep.subr.bf16.mxu0 0
    %4240 = vmatpush1.bf16.msra.mxu0 0
    %4241 = vmatprep.subr.bf16.mxu0 0
    %4242 = vmatpush1.bf16.msra.mxu0 0
    %4243 = vmatprep.subr.bf16.mxu0 0
    %4244 = vmatpush1.bf16.msra.mxu0 0
    %4245 = vmatprep.subr.bf16.mxu0 0
    %4246 = vmatpush1.bf16.msra.mxu0 0
    %4247 = vmatprep.subr.bf16.mxu0 0
    %4248 = vmatpush1.bf16.msra.mxu0 0
    %4249 = vmatprep.subr.bf16.mxu0 0
    %4250 = vmatpush1.bf16.msra.mxu0 0
    %4251 = vmatprep.subr.bf16.mxu0 0
    %4252 = vmatpush1.bf16.msra.mxu0 0
    %4253 = vmatprep.subr.bf16.mxu0 0
    %4254 = vmatpush1.bf16.msra.mxu0 0
    %4255 = vmatprep.subr.bf16.mxu0 0
    %4256 = vmatpush1.bf16.msra.mxu0 0
    %4257 = vmatprep.mubr.bf16.mxu0 0
    %4258 = vmatmul.mubr.bf16.gmra.mrb[0].mxu0 %v4182
    %v4259 = vpop.f32.mrb[0].mxu0
    %v4260 = vadd.f32 %v3891, %v4259
    %v4261 = vpop.f32.mrb[0].mxu0
    %v4262 = vadd.f32 %v3895, %v4261
    %v4263 = vpop.f32.mrb[0].mxu0
    %v4264 = vpop.f32.mrb[0].mxu0
    %4265 = vdwg.mxu0
    %4266 = vmatprep.subr.bf16.mxu0 %v4089
    %4267 = vmatpush1.bf16.msra.mxu0 %v4088
    %4268 = vmatprep.subr.bf16.mxu0 %v4101
    %4269 = vmatpush1.bf16.msra.mxu0 %v4100
    %4270 = vmatprep.subr.bf16.mxu0 %v4113
    %4271 = vmatpush1.bf16.msra.mxu0 %v4112
    %4272 = vmatprep.subr.bf16.mxu0 %v4125
    %4273 = vmatpush1.bf16.msra.mxu0 %v4124
    %4274 = vmatprep.subr.bf16.mxu0 0
    %4275 = vmatpush1.bf16.msra.mxu0 0
    %4276 = vmatprep.subr.bf16.mxu0 0
    %4277 = vmatpush1.bf16.msra.mxu0 0
    %4278 = vmatprep.subr.bf16.mxu0 0
    %4279 = vmatpush1.bf16.msra.mxu0 0
    %4280 = vmatprep.subr.bf16.mxu0 0
    %4281 = vmatpush1.bf16.msra.mxu0 0
    %4282 = vmatprep.subr.bf16.mxu0 0
    %4283 = vmatpush1.bf16.msra.mxu0 0
    %4284 = vmatprep.subr.bf16.mxu0 0
    %4285 = vmatpush1.bf16.msra.mxu0 0
    %4286 = vmatprep.subr.bf16.mxu0 0
    %4287 = vmatpush1.bf16.msra.mxu0 0
    %4288 = vmatprep.subr.bf16.mxu0 0
    %4289 = vmatpush1.bf16.msra.mxu0 0
    %4290 = vmatprep.subr.bf16.mxu0 0
    %4291 = vmatpush1.bf16.msra.mxu0 0
    %4292 = vmatprep.subr.bf16.mxu0 0
    %4293 = vmatpush1.bf16.msra.mxu0 0
    %4294 = vmatprep.subr.bf16.mxu0 0
    %4295 = vmatpush1.bf16.msra.mxu0 0
    %4296 = vmatprep.subr.bf16.mxu0 0
    %4297 = vmatpush1.bf16.msra.mxu0 0
    %4298 = vmatprep.mubr.bf16.mxu0 0
    %4299 = vmatmul.mubr.bf16.gmra.mrb[0].mxu0 %v4182
    %v4300 = vpop.f32.mrb[0].mxu0
    %v4301 = vadd.f32 %v3899, %v4300
    %v4302 = vpop.f32.mrb[0].mxu0
    %v4303 = vadd.f32 %v3903, %v4302
    %v4304 = vpop.f32.mrb[0].mxu0
    %v4305 = vpop.f32.mrb[0].mxu0
    %4306 = vdwg.mxu0
    %4307 = vmatprep.subr.bf16.mxu0 %v4091
    %4308 = vmatpush1.bf16.msra.mxu0 %v4090
    %4309 = vmatprep.subr.bf16.mxu0 %v4103
    %4310 = vmatpush1.bf16.msra.mxu0 %v4102
    %4311 = vmatprep.subr.bf16.mxu0 %v4115
    %4312 = vmatpush1.bf16.msra.mxu0 %v4114
    %4313 = vmatprep.subr.bf16.mxu0 %v4127
    %4314 = vmatpush1.bf16.msra.mxu0 %v4126
    %4315 = vmatprep.subr.bf16.mxu0 0
    %4316 = vmatpush1.bf16.msra.mxu0 0
    %4317 = vmatprep.subr.bf16.mxu0 0
    %4318 = vmatpush1.bf16.msra.mxu0 0
    %4319 = vmatprep.subr.bf16.mxu0 0
    %4320 = vmatpush1.bf16.msra.mxu0 0
    %4321 = vmatprep.subr.bf16.mxu0 0
    %4322 = vmatpush1.bf16.msra.mxu0 0
    %4323 = vmatprep.subr.bf16.mxu0 0
    %4324 = vmatpush1.bf16.msra.mxu0 0
    %4325 = vmatprep.subr.bf16.mxu0 0
    %4326 = vmatpush1.bf16.msra.mxu0 0
    %4327 = vmatprep.subr.bf16.mxu0 0
    %4328 = vmatpush1.bf16.msra.mxu0 0
    %4329 = vmatprep.subr.bf16.mxu0 0
    %4330 = vmatpush1.bf16.msra.mxu0 0
    %4331 = vmatprep.subr.bf16.mxu0 0
    %4332 = vmatpush1.bf16.msra.mxu0 0
    %4333 = vmatprep.subr.bf16.mxu0 0
    %4334 = vmatpush1.bf16.msra.mxu0 0
    %4335 = vmatprep.subr.bf16.mxu0 0
    %4336 = vmatpush1.bf16.msra.mxu0 0
    %4337 = vmatprep.subr.bf16.mxu0 0
    %4338 = vmatpush1.bf16.msra.mxu0 0
    %4339 = vmatprep.mubr.bf16.mxu0 0
    %4340 = vmatmul.mubr.bf16.gmra.mrb[0].mxu0 %v4182
    %v4341 = vpop.f32.mrb[0].mxu0
    %v4342 = vadd.f32 %v3907, %v4341
    %v4343 = vpop.f32.mrb[0].mxu0
    %v4344 = vadd.f32 %v3911, %v4343
    %v4345 = vpop.f32.mrb[0].mxu0
    %v4346 = vpop.f32.mrb[0].mxu0
    %4347 = vdwg.mxu0
    %4348 = vmatprep.subr.bf16.mxu0 %v4093
    %4349 = vmatpush1.bf16.msra.mxu0 %v4092
    %4350 = vmatprep.subr.bf16.mxu0 %v4105
    %4351 = vmatpush1.bf16.msra.mxu0 %v4104
    %4352 = vmatprep.subr.bf16.mxu0 %v4117
    %4353 = vmatpush1.bf16.msra.mxu0 %v4116
    %4354 = vmatprep.subr.bf16.mxu0 %v4129
    %4355 = vmatpush1.bf16.msra.mxu0 %v4128
    %4356 = vmatprep.subr.bf16.mxu0 0
    %4357 = vmatpush1.bf16.msra.mxu0 0
    %4358 = vmatprep.subr.bf16.mxu0 0
    %4359 = vmatpush1.bf16.msra.mxu0 0
    %4360 = vmatprep.subr.bf16.mxu0 0
    %4361 = vmatpush1.bf16.msra.mxu0 0
    %4362 = vmatprep.subr.bf16.mxu0 0
    %4363 = vmatpush1.bf16.msra.mxu0 0
    %4364 = vmatprep.subr.bf16.mxu0 0
    %4365 = vmatpush1.bf16.msra.mxu0 0
    %4366 = vmatprep.subr.bf16.mxu0 0
    %4367 = vmatpush1.bf16.msra.mxu0 0
    %4368 = vmatprep.subr.bf16.mxu0 0
    %4369 = vmatpush1.bf16.msra.mxu0 0
    %4370 = vmatprep.subr.bf16.mxu0 0
    %4371 = vmatpush1.bf16.msra.mxu0 0
    %4372 = vmatprep.subr.bf16.mxu0 0
    %4373 = vmatpush1.bf16.msra.mxu0 0
    %4374 = vmatprep.subr.bf16.mxu0 0
    %4375 = vmatpush1.bf16.msra.mxu0 0
    %4376 = vmatprep.subr.bf16.mxu0 0
    %4377 = vmatpush1.bf16.msra.mxu0 0
    %4378 = vmatprep.subr.bf16.mxu0 0
    %4379 = vmatpush1.bf16.msra.mxu0 0
    %4380 = vmatprep.mubr.bf16.mxu0 0
    %4381 = vmatmul.mubr.bf16.gmra.mrb[0].mxu0 %v4182
    %v4382 = vpop.f32.mrb[0].mxu0
    %v4383 = vadd.f32 %v3915, %v4382
    %v4384 = vpop.f32.mrb[0].mxu0
    %v4385 = vadd.f32 %v3919, %v4384
    %v4386 = vpop.f32.mrb[0].mxu0
    %v4387 = vpop.f32.mrb[0].mxu0
    %4388 = vdwg.mxu0
    %4389 = vmatprep.subr.bf16.mxu0 %v4095
    %4390 = vmatpush1.bf16.msra.mxu0 %v4094
    %4391 = vmatprep.subr.bf16.mxu0 %v4107
    %4392 = vmatpush1.bf16.msra.mxu0 %v4106
    %4393 = vmatprep.subr.bf16.mxu0 %v4119
    %4394 = vmatpush1.bf16.msra.mxu0 %v4118
    %4395 = vmatprep.subr.bf16.mxu0 %v4131
    %4396 = vmatpush1.bf16.msra.mxu0 %v4130
    %4397 = vmatprep.subr.bf16.mxu0 0
    %4398 = vmatpush1.bf16.msra.mxu0 0
    %4399 = vmatprep.subr.bf16.mxu0 0
    %4400 = vmatpush1.bf16.msra.mxu0 0
    %4401 = vmatprep.subr.bf16.mxu0 0
    %4402 = vmatpush1.bf16.msra.mxu0 0
    %4403 = vmatprep.subr.bf16.mxu0 0
    %4404 = vmatpush1.bf16.msra.mxu0 0
    %4405 = vmatprep.subr.bf16.mxu0 0
    %4406 = vmatpush1.bf16.msra.mxu0 0
    %4407 = vmatprep.subr.bf16.mxu0 0
    %4408 = vmatpush1.bf16.msra.mxu0 0
    %4409 = vmatprep.subr.bf16.mxu0 0
    %4410 = vmatpush1.bf16.msra.mxu0 0
    %4411 = vmatprep.subr.bf16.mxu0 0
    %4412 = vmatpush1.bf16.msra.mxu0 0
    %4413 = vmatprep.subr.bf16.mxu0 0
    %4414 = vmatpush1.bf16.msra.mxu0 0
    %4415 = vmatprep.subr.bf16.mxu0 0
    %4416 = vmatpush1.bf16.msra.mxu0 0
    %4417 = vmatprep.subr.bf16.mxu0 0
    %4418 = vmatpush1.bf16.msra.mxu0 0
    %4419 = vmatprep.subr.bf16.mxu0 0
    %4420 = vmatpush1.bf16.msra.mxu0 0
    %4421 = vmatprep.mubr.bf16.mxu0 0
    %4422 = vmatmul.mubr.bf16.gmra.mrb[0].mxu0 %v4182
    %v4423 = vpop.f32.mrb[0].mxu0
    %v4424 = vadd.f32 %v3923, %v4423
    %v4425 = vpop.f32.mrb[0].mxu0
    %v4426 = vadd.f32 %v3927, %v4425
    %v4427 = vpop.f32.mrb[0].mxu0
    %v4428 = vpop.f32.mrb[0].mxu0
    %4429 = vdwg.mxu0
    %v4430 = vmax.f32 %v4219, 0.0
    %v4431 = vmax.f32 %v4221, 0.0
    %v4432 = vmax.f32 %v4260, 0.0
    %v4433 = vmax.f32 %v4262, 0.0
    %v4434 = vmax.f32 %v4301, 0.0
    %v4435 = vmax.f32 %v4303, 0.0
    %v4436 = vmax.f32 %v4342, 0.0
    %v4437 = vmax.f32 %v4344, 0.0
    %v4438 = vmax.f32 %v4383, 0.0
    %v4439 = vmax.f32 %v4385, 0.0
    %v4440 = vmax.f32 %v4424, 0.0
    %v4441 = vmax.f32 %v4426, 0.0
    %v4442 = vpack.c.bf16 %v4430, %v4430
    %v4443 = vpack.c.bf16 %v4431, %v4431
    %v4444 = vpack.c.bf16 %v4432, %v4432
    %v4445 = vpack.c.bf16 %v4433, %v4433
    %v4446 = vpack.c.bf16 %v4434, %v4434
    %v4447 = vpack.c.bf16 %v4435, %v4435
    %v4448 = vpack.c.bf16 %v4436, %v4436
    %v4449 = vpack.c.bf16 %v4437, %v4437
    %v4450 = vpack.c.bf16 %v4438, %v4438
    %v4451 = vpack.c.bf16 %v4439, %v4439
    %v4452 = vpack.c.bf16 %v4440, %v4440
    %v4453 = vpack.c.bf16 %v4441, %v4441
    %v4454 = vld [vmem:[#allocation14] sm:$0xff]
    %v4455 = vld [vmem:[#allocation14 + $0x8] sm:$0xff]
    %v4456 = vld [vmem:[#allocation14 + $0x10] sm:$0xff]
    %v4457 = vld [vmem:[#allocation14 + $0x18] sm:$0xff]
    %v4458 = vld [vmem:[#allocation14 + $0x20] sm:$0xff]
    %v4459 = vld [vmem:[#allocation14 + $0x28] sm:$0xff]
    %v4460 = vld [vmem:[#allocation14 + $0x30] sm:$0xff]
    %v4461 = vld [vmem:[#allocation14 + $0x38] sm:$0xff]
    %v4462 = vld [vmem:[#allocation14 + $0x40] sm:$0xff]
    %v4463 = vld [vmem:[#allocation14 + $0x48] sm:$0xff]
    %v4464 = vld [vmem:[#allocation14 + $0x50] sm:$0xff]
    %v4465 = vld [vmem:[#allocation14 + $0x58] sm:$0xff]
    %v4466 = vld [vmem:[#allocation14 + $0x60] sm:$0xff]
    %v4467 = vld [vmem:[#allocation14 + $0x68] sm:$0xff]
    %v4468 = vld [vmem:[#allocation14 + $0x70] sm:$0xff]
    %v4469 = vld [vmem:[#allocation14 + $0x78] sm:$0xff]
    %v4470 = vld [vmem:[#allocation14 + $0x80] sm:$0xff]
    %v4471 = vld [vmem:[#allocation14 + $0x88] sm:$0xff]
    %v4472 = vld [vmem:[#allocation14 + $0x90] sm:$0xff]
    %v4473 = vld [vmem:[#allocation14 + $0x98] sm:$0xff]
    %v4474 = vld [vmem:[#allocation14 + $0xa0] sm:$0xff]
    %v4475 = vld [vmem:[#allocation14 + $0xa8] sm:$0xff]
    %v4476 = vld [vmem:[#allocation14 + $0xb0] sm:$0xff]
    %v4477 = vld [vmem:[#allocation14 + $0xb8] sm:$0xff]
    %v4478 = vld [vmem:[#allocation14 + $0xc0] sm:$0xff]
    %v4479 = vld [vmem:[#allocation14 + $0xc8] sm:$0xff]
    %v4480 = vld [vmem:[#allocation14 + $0xd0] sm:$0xff]
    %v4481 = vld [vmem:[#allocation14 + $0xd8] sm:$0xff]
    %v4482 = vld [vmem:[#allocation14 + $0xe0] sm:$0xff]
    %v4483 = vld [vmem:[#allocation14 + $0xe8] sm:$0xff]
    %v4484 = vld [vmem:[#allocation14 + $0xf0] sm:$0xff]
    %v4485 = vld [vmem:[#allocation14 + $0xf8] sm:$0xff]
    %v4486 = vld [vmem:[#allocation14 + $0x100] sm:$0xff]
    %v4487 = vld [vmem:[#allocation14 + $0x108] sm:$0xff]
    %v4488 = vld [vmem:[#allocation14 + $0x110] sm:$0xff]
    %v4489 = vld [vmem:[#allocation14 + $0x118] sm:$0xff]
    %v4490 = vld [vmem:[#allocation14 + $0x120] sm:$0xff]
    %v4491 = vld [vmem:[#allocation14 + $0x128] sm:$0xff]
    %v4492 = vld [vmem:[#allocation14 + $0x130] sm:$0xff]
    %v4493 = vld [vmem:[#allocation14 + $0x138] sm:$0xff]
    %v4494 = vld [vmem:[#allocation14 + $0x140] sm:$0xff]
    %v4495 = vld [vmem:[#allocation14 + $0x148] sm:$0xff]
    %v4496 = vld [vmem:[#allocation14 + $0x150] sm:$0xff]
    %v4497 = vld [vmem:[#allocation14 + $0x158] sm:$0xff]
    %v4498 = vld [vmem:[#allocation14 + $0x160] sm:$0xff]
    %v4499 = vld [vmem:[#allocation14 + $0x168] sm:$0xff]
    %v4500 = vld [vmem:[#allocation14 + $0x170] sm:$0xff]
    %v4501 = vld [vmem:[#allocation14 + $0x178] sm:$0xff]
    %v4502 = vld [vmem:[#allocation14 + $0x180] sm:$0xff]
    %v4503 = vld [vmem:[#allocation14 + $0x188] sm:$0xff]
    %v4504 = vld [vmem:[#allocation14 + $0x190] sm:$0xff]
    %v4505 = vld [vmem:[#allocation14 + $0x198] sm:$0xff]
    %v4506 = vld [vmem:[#allocation14 + $0x1a0] sm:$0xff]
    %v4507 = vld [vmem:[#allocation14 + $0x1a8] sm:$0xff]
    %v4508 = vld [vmem:[#allocation14 + $0x1b0] sm:$0xff]
    %v4509 = vld [vmem:[#allocation14 + $0x1b8] sm:$0xff]
    %v4510 = vld [vmem:[#allocation14 + $0x1c0] sm:$0xff]
    %v4511 = vld [vmem:[#allocation14 + $0x1c8] sm:$0xff]
    %v4512 = vld [vmem:[#allocation14 + $0x1d0] sm:$0xff]
    %v4513 = vld [vmem:[#allocation14 + $0x1d8] sm:$0xff]
    %v4514 = vld [vmem:[#allocation14 + $0x1e0] sm:$0xff]
    %v4515 = vld [vmem:[#allocation14 + $0x1e8] sm:$0xff]
    %v4516 = vld [vmem:[#allocation14 + $0x1f0] sm:$0xff]
    %v4517 = vld [vmem:[#allocation14 + $0x1f8] sm:$0xff]
    %v4518 = vld [vmem:[#allocation14 + $0x200] sm:$0xff]
    %v4519 = vld [vmem:[#allocation14 + $0x208] sm:$0xff]
    %v4520 = vld [vmem:[#allocation14 + $0x210] sm:$0xff]
    %v4521 = vld [vmem:[#allocation14 + $0x218] sm:$0xff]
    %v4522 = vld [vmem:[#allocation14 + $0x220] sm:$0xff]
    %v4523 = vld [vmem:[#allocation14 + $0x228] sm:$0xff]
    %v4524 = vld [vmem:[#allocation14 + $0x230] sm:$0xff]
    %v4525 = vld [vmem:[#allocation14 + $0x238] sm:$0xff]
    %v4526 = vld [vmem:[#allocation14 + $0x240] sm:$0xff]
    %v4527 = vld [vmem:[#allocation14 + $0x248] sm:$0xff]
    %v4528 = vld [vmem:[#allocation14 + $0x250] sm:$0xff]
    %v4529 = vld [vmem:[#allocation14 + $0x258] sm:$0xff]
    %v4530 = vld [vmem:[#allocation14 + $0x260] sm:$0xff]
    %v4531 = vld [vmem:[#allocation14 + $0x268] sm:$0xff]
    %v4532 = vld [vmem:[#allocation14 + $0x270] sm:$0xff]
    %v4533 = vld [vmem:[#allocation14 + $0x278] sm:$0xff]
    %v4534 = vld [vmem:[#allocation14 + $0x280] sm:$0xff]
    %v4535 = vld [vmem:[#allocation14 + $0x288] sm:$0xff]
    %v4536 = vld [vmem:[#allocation14 + $0x290] sm:$0xff]
    %v4537 = vld [vmem:[#allocation14 + $0x298] sm:$0xff]
    %v4538 = vld [vmem:[#allocation14 + $0x2a0] sm:$0xff]
    %v4539 = vld [vmem:[#allocation14 + $0x2a8] sm:$0xff]
    %v4540 = vld [vmem:[#allocation14 + $0x2b0] sm:$0xff]
    %v4541 = vld [vmem:[#allocation14 + $0x2b8] sm:$0xff]
    %v4542 = vld [vmem:[#allocation14 + $0x2c0] sm:$0xff]
    %v4543 = vld [vmem:[#allocation14 + $0x2c8] sm:$0xff]
    %v4544 = vld [vmem:[#allocation14 + $0x2d0] sm:$0xff]
    %v4545 = vld [vmem:[#allocation14 + $0x2d8] sm:$0xff]
    %v4546 = vld [vmem:[#allocation14 + $0x2e0] sm:$0xff]
    %v4547 = vld [vmem:[#allocation14 + $0x2e8] sm:$0xff]
    %v4548 = vld [vmem:[#allocation14 + $0x2f0] sm:$0xff]
    %v4549 = vld [vmem:[#allocation14 + $0x2f8] sm:$0xff]
    %v4550 = vld [vmem:[#allocation14 + $0x300] sm:$0xff]
    %v4551 = vld [vmem:[#allocation14 + $0x308] sm:$0xff]
    %v4552 = vld [vmem:[#allocation14 + $0x310] sm:$0xff]
    %v4553 = vld [vmem:[#allocation14 + $0x318] sm:$0xff]
    %v4554 = vld [vmem:[#allocation14 + $0x320] sm:$0xff]
    %v4555 = vld [vmem:[#allocation14 + $0x328] sm:$0xff]
    %v4556 = vld [vmem:[#allocation14 + $0x330] sm:$0xff]
    %v4557 = vld [vmem:[#allocation14 + $0x338] sm:$0xff]
    %v4558 = vld [vmem:[#allocation14 + $0x340] sm:$0xff]
    %v4559 = vld [vmem:[#allocation14 + $0x348] sm:$0xff]
    %v4560 = vld [vmem:[#allocation14 + $0x350] sm:$0xff]
    %v4561 = vld [vmem:[#allocation14 + $0x358] sm:$0xff]
    %v4562 = vld [vmem:[#allocation14 + $0x360] sm:$0xff]
    %v4563 = vld [vmem:[#allocation14 + $0x368] sm:$0xff]
    %v4564 = vld [vmem:[#allocation14 + $0x370] sm:$0xff]
    %v4565 = vld [vmem:[#allocation14 + $0x378] sm:$0xff]
    %v4566 = vld [vmem:[#allocation14 + $0x380] sm:$0xff]
    %v4567 = vld [vmem:[#allocation14 + $0x388] sm:$0xff]
    %v4568 = vld [vmem:[#allocation14 + $0x390] sm:$0xff]
    %v4569 = vld [vmem:[#allocation14 + $0x398] sm:$0xff]
    %v4570 = vld [vmem:[#allocation14 + $0x3a0] sm:$0xff]
    %v4571 = vld [vmem:[#allocation14 + $0x3a8] sm:$0xff]
    %v4572 = vld [vmem:[#allocation14 + $0x3b0] sm:$0xff]
    %v4573 = vld [vmem:[#allocation14 + $0x3b8] sm:$0xff]
    %v4574 = vld [vmem:[#allocation14 + $0x3c0] sm:$0xff]
    %v4575 = vld [vmem:[#allocation14 + $0x3c8] sm:$0xff]
    %v4576 = vld [vmem:[#allocation14 + $0x3d0] sm:$0xff]
    %v4577 = vld [vmem:[#allocation14 + $0x3d8] sm:$0xff]
    %v4578 = vld [vmem:[#allocation14 + $0x3e0] sm:$0xff]
    %v4579 = vld [vmem:[#allocation14 + $0x3e8] sm:$0xff]
    %v4580 = vld [vmem:[#allocation14 + $0x3f0] sm:$0xff]
    %v4581 = vld [vmem:[#allocation14 + $0x3f8] sm:$0xff]
    %v4582 = vld [vmem:[#allocation14 + $0x400] sm:$0xff]
    %v4583 = vld [vmem:[#allocation14 + $0x408] sm:$0xff]
    %v4584 = vld [vmem:[#allocation14 + $0x410] sm:$0xff]
    %v4585 = vld [vmem:[#allocation14 + $0x418] sm:$0xff]
    %v4586 = vld [vmem:[#allocation14 + $0x420] sm:$0xff]
    %v4587 = vld [vmem:[#allocation14 + $0x428] sm:$0xff]
    %v4588 = vld [vmem:[#allocation14 + $0x430] sm:$0xff]
    %v4589 = vld [vmem:[#allocation14 + $0x438] sm:$0xff]
    %v4590 = vld [vmem:[#allocation14 + $0x440] sm:$0xff]
    %v4591 = vld [vmem:[#allocation14 + $0x448] sm:$0xff]
    %v4592 = vld [vmem:[#allocation14 + $0x450] sm:$0xff]
    %v4593 = vld [vmem:[#allocation14 + $0x458] sm:$0xff]
    %v4594 = vld [vmem:[#allocation14 + $0x460] sm:$0xff]
    %v4595 = vld [vmem:[#allocation14 + $0x468] sm:$0xff]
    %v4596 = vld [vmem:[#allocation14 + $0x470] sm:$0xff]
    %v4597 = vld [vmem:[#allocation14 + $0x478] sm:$0xff]
    %v4598 = vld [vmem:[#allocation14 + $0x480] sm:$0xff]
    %v4599 = vld [vmem:[#allocation14 + $0x488] sm:$0xff]
    %v4600 = vld [vmem:[#allocation14 + $0x490] sm:$0xff]
    %v4601 = vld [vmem:[#allocation14 + $0x498] sm:$0xff]
    %v4602 = vld [vmem:[#allocation14 + $0x4a0] sm:$0xff]
    %v4603 = vld [vmem:[#allocation14 + $0x4a8] sm:$0xff]
    %v4604 = vld [vmem:[#allocation14 + $0x4b0] sm:$0xff]
    %v4605 = vld [vmem:[#allocation14 + $0x4b8] sm:$0xff]
    %v4606 = vld [vmem:[#allocation14 + $0x4c0] sm:$0xff]
    %v4607 = vld [vmem:[#allocation14 + $0x4c8] sm:$0xff]
    %v4608 = vld [vmem:[#allocation14 + $0x4d0] sm:$0xff]
    %v4609 = vld [vmem:[#allocation14 + $0x4d8] sm:$0xff]
    %v4610 = vld [vmem:[#allocation14 + $0x4e0] sm:$0xff]
    %v4611 = vld [vmem:[#allocation14 + $0x4e8] sm:$0xff]
    %v4612 = vld [vmem:[#allocation14 + $0x4f0] sm:$0xff]
    %v4613 = vld [vmem:[#allocation14 + $0x4f8] sm:$0xff]
    %v4614 = vld [vmem:[#allocation14 + $0x500] sm:$0xff]
    %v4615 = vld [vmem:[#allocation14 + $0x508] sm:$0xff]
    %v4616 = vld [vmem:[#allocation14 + $0x510] sm:$0xff]
    %v4617 = vld [vmem:[#allocation14 + $0x518] sm:$0xff]
    %v4618 = vld [vmem:[#allocation14 + $0x520] sm:$0xff]
    %v4619 = vld [vmem:[#allocation14 + $0x528] sm:$0xff]
    %v4620 = vld [vmem:[#allocation14 + $0x530] sm:$0xff]
    %v4621 = vld [vmem:[#allocation14 + $0x538] sm:$0xff]
    %v4622 = vld [vmem:[#allocation14 + $0x540] sm:$0xff]
    %v4623 = vld [vmem:[#allocation14 + $0x548] sm:$0xff]
    %v4624 = vld [vmem:[#allocation14 + $0x550] sm:$0xff]
    %v4625 = vld [vmem:[#allocation14 + $0x558] sm:$0xff]
    %v4626 = vld [vmem:[#allocation14 + $0x560] sm:$0xff]
    %v4627 = vld [vmem:[#allocation14 + $0x568] sm:$0xff]
    %v4628 = vld [vmem:[#allocation14 + $0x570] sm:$0xff]
    %v4629 = vld [vmem:[#allocation14 + $0x578] sm:$0xff]
    %v4630 = vld [vmem:[#allocation14 + $0x580] sm:$0xff]
    %v4631 = vld [vmem:[#allocation14 + $0x588] sm:$0xff]
    %v4632 = vld [vmem:[#allocation14 + $0x590] sm:$0xff]
    %v4633 = vld [vmem:[#allocation14 + $0x598] sm:$0xff]
    %v4634 = vld [vmem:[#allocation14 + $0x5a0] sm:$0xff]
    %v4635 = vld [vmem:[#allocation14 + $0x5a8] sm:$0xff]
    %v4636 = vld [vmem:[#allocation14 + $0x5b0] sm:$0xff]
    %v4637 = vld [vmem:[#allocation14 + $0x5b8] sm:$0xff]
    %v4638 = vld [vmem:[#allocation14 + $0x5c0] sm:$0xff]
    %v4639 = vld [vmem:[#allocation14 + $0x5c8] sm:$0xff]
    %v4640 = vld [vmem:[#allocation14 + $0x5d0] sm:$0xff]
    %v4641 = vld [vmem:[#allocation14 + $0x5d8] sm:$0xff]
    %v4642 = vld [vmem:[#allocation14 + $0x5e0] sm:$0xff]
    %v4643 = vld [vmem:[#allocation14 + $0x5e8] sm:$0xff]
    %v4644 = vld [vmem:[#allocation14 + $0x5f0] sm:$0xff]
    %v4645 = vld [vmem:[#allocation14 + $0x5f8] sm:$0xff]
    %v4646 = vld [vmem:[#allocation14 + $0x600] sm:$0xff]
    %v4647 = vld [vmem:[#allocation14 + $0x608] sm:$0xff]
    %v4648 = vld [vmem:[#allocation14 + $0x610] sm:$0xff]
    %v4649 = vld [vmem:[#allocation14 + $0x618] sm:$0xff]
    %v4650 = vld [vmem:[#allocation14 + $0x620] sm:$0xff]
    %v4651 = vld [vmem:[#allocation14 + $0x628] sm:$0xff]
    %v4652 = vld [vmem:[#allocation14 + $0x630] sm:$0xff]
    %v4653 = vld [vmem:[#allocation14 + $0x638] sm:$0xff]
    %v4654 = vld [vmem:[#allocation14 + $0x640] sm:$0xff]
    %v4655 = vld [vmem:[#allocation14 + $0x648] sm:$0xff]
    %v4656 = vld [vmem:[#allocation14 + $0x650] sm:$0xff]
    %v4657 = vld [vmem:[#allocation14 + $0x658] sm:$0xff]
    %v4658 = vld [vmem:[#allocation14 + $0x660] sm:$0xff]
    %v4659 = vld [vmem:[#allocation14 + $0x668] sm:$0xff]
    %v4660 = vld [vmem:[#allocation14 + $0x670] sm:$0xff]
    %v4661 = vld [vmem:[#allocation14 + $0x678] sm:$0xff]
    %v4662 = vld [vmem:[#allocation14 + $0x680] sm:$0xff]
    %v4663 = vld [vmem:[#allocation14 + $0x688] sm:$0xff]
    %v4664 = vld [vmem:[#allocation14 + $0x690] sm:$0xff]
    %v4665 = vld [vmem:[#allocation14 + $0x698] sm:$0xff]
    %v4666 = vld [vmem:[#allocation14 + $0x6a0] sm:$0xff]
    %v4667 = vld [vmem:[#allocation14 + $0x6a8] sm:$0xff]
    %v4668 = vld [vmem:[#allocation14 + $0x6b0] sm:$0xff]
    %v4669 = vld [vmem:[#allocation14 + $0x6b8] sm:$0xff]
    %v4670 = vld [vmem:[#allocation14 + $0x6c0] sm:$0xff]
    %v4671 = vld [vmem:[#allocation14 + $0x6c8] sm:$0xff]
    %v4672 = vld [vmem:[#allocation14 + $0x6d0] sm:$0xff]
    %v4673 = vld [vmem:[#allocation14 + $0x6d8] sm:$0xff]
    %v4674 = vld [vmem:[#allocation14 + $0x6e0] sm:$0xff]
    %v4675 = vld [vmem:[#allocation14 + $0x6e8] sm:$0xff]
    %v4676 = vld [vmem:[#allocation14 + $0x6f0] sm:$0xff]
    %v4677 = vld [vmem:[#allocation14 + $0x6f8] sm:$0xff]
    %v4678 = vld [vmem:[#allocation14 + $0x700] sm:$0xff]
    %v4679 = vld [vmem:[#allocation14 + $0x708] sm:$0xff]
    %v4680 = vld [vmem:[#allocation14 + $0x710] sm:$0xff]
    %v4681 = vld [vmem:[#allocation14 + $0x718] sm:$0xff]
    %v4682 = vld [vmem:[#allocation14 + $0x720] sm:$0xff]
    %v4683 = vld [vmem:[#allocation14 + $0x728] sm:$0xff]
    %v4684 = vld [vmem:[#allocation14 + $0x730] sm:$0xff]
    %v4685 = vld [vmem:[#allocation14 + $0x738] sm:$0xff]
    %v4686 = vld [vmem:[#allocation14 + $0x740] sm:$0xff]
    %v4687 = vld [vmem:[#allocation14 + $0x748] sm:$0xff]
    %v4688 = vld [vmem:[#allocation14 + $0x750] sm:$0xff]
    %v4689 = vld [vmem:[#allocation14 + $0x758] sm:$0xff]
    %v4690 = vld [vmem:[#allocation14 + $0x760] sm:$0xff]
    %v4691 = vld [vmem:[#allocation14 + $0x768] sm:$0xff]
    %v4692 = vld [vmem:[#allocation14 + $0x770] sm:$0xff]
    %v4693 = vld [vmem:[#allocation14 + $0x778] sm:$0xff]
    %v4694 = vld [vmem:[#allocation14 + $0x780] sm:$0xff]
    %v4695 = vld [vmem:[#allocation14 + $0x788] sm:$0xff]
    %v4696 = vld [vmem:[#allocation14 + $0x790] sm:$0xff]
    %v4697 = vld [vmem:[#allocation14 + $0x798] sm:$0xff]
    %v4698 = vld [vmem:[#allocation14 + $0x7a0] sm:$0xff]
    %v4699 = vld [vmem:[#allocation14 + $0x7a8] sm:$0xff]
    %v4700 = vld [vmem:[#allocation14 + $0x7b0] sm:$0xff]
    %v4701 = vld [vmem:[#allocation14 + $0x7b8] sm:$0xff]
    %v4702 = vld [vmem:[#allocation14 + $0x7c0] sm:$0xff]
    %v4703 = vld [vmem:[#allocation14 + $0x7c8] sm:$0xff]
    %v4704 = vld [vmem:[#allocation14 + $0x7d0] sm:$0xff]
    %v4705 = vld [vmem:[#allocation14 + $0x7d8] sm:$0xff]
    %v4706 = vld [vmem:[#allocation14 + $0x7e0] sm:$0xff]
    %v4707 = vld [vmem:[#allocation14 + $0x7e8] sm:$0xff]
    %v4708 = vld [vmem:[#allocation14 + $0x7f0] sm:$0xff]
    %v4709 = vld [vmem:[#allocation14 + $0x7f8] sm:$0xff]
    %v4710 = vld [vmem:[#allocation14 + $0x800] sm:$0xff]
    %v4711 = vld [vmem:[#allocation14 + $0x808] sm:$0xff]
    %v4712 = vld [vmem:[#allocation14 + $0x810] sm:$0xff]
    %v4713 = vld [vmem:[#allocation14 + $0x818] sm:$0xff]
    %v4714 = vld [vmem:[#allocation14 + $0x820] sm:$0xff]
    %v4715 = vld [vmem:[#allocation14 + $0x828] sm:$0xff]
    %v4716 = vld [vmem:[#allocation14 + $0x830] sm:$0xff]
    %v4717 = vld [vmem:[#allocation14 + $0x838] sm:$0xff]
    %v4718 = vld [vmem:[#allocation14 + $0x840] sm:$0xff]
    %v4719 = vld [vmem:[#allocation14 + $0x848] sm:$0xff]
    %v4720 = vld [vmem:[#allocation14 + $0x850] sm:$0xff]
    %v4721 = vld [vmem:[#allocation14 + $0x858] sm:$0xff]
    %v4722 = vld [vmem:[#allocation14 + $0x860] sm:$0xff]
    %v4723 = vld [vmem:[#allocation14 + $0x868] sm:$0xff]
    %v4724 = vld [vmem:[#allocation14 + $0x870] sm:$0xff]
    %v4725 = vld [vmem:[#allocation14 + $0x878] sm:$0xff]
    %v4726 = vld [vmem:[#allocation14 + $0x880] sm:$0xff]
    %v4727 = vld [vmem:[#allocation14 + $0x888] sm:$0xff]
    %v4728 = vld [vmem:[#allocation14 + $0x890] sm:$0xff]
    %v4729 = vld [vmem:[#allocation14 + $0x898] sm:$0xff]
    %v4730 = vld [vmem:[#allocation14 + $0x8a0] sm:$0xff]
    %v4731 = vld [vmem:[#allocation14 + $0x8a8] sm:$0xff]
    %v4732 = vld [vmem:[#allocation14 + $0x8b0] sm:$0xff]
    %v4733 = vld [vmem:[#allocation14 + $0x8b8] sm:$0xff]
    %v4734 = vld [vmem:[#allocation14 + $0x8c0] sm:$0xff]
    %v4735 = vld [vmem:[#allocation14 + $0x8c8] sm:$0xff]
    %v4736 = vld [vmem:[#allocation14 + $0x8d0] sm:$0xff]
    %v4737 = vld [vmem:[#allocation14 + $0x8d8] sm:$0xff]
    %v4738 = vld [vmem:[#allocation14 + $0x8e0] sm:$0xff]
    %v4739 = vld [vmem:[#allocation14 + $0x8e8] sm:$0xff]
    %v4740 = vld [vmem:[#allocation14 + $0x8f0] sm:$0xff]
    %v4741 = vld [vmem:[#allocation14 + $0x8f8] sm:$0xff]
    %v4742 = vld [vmem:[#allocation14 + $0x900] sm:$0xff]
    %v4743 = vld [vmem:[#allocation14 + $0x908] sm:$0xff]
    %v4744 = vld [vmem:[#allocation14 + $0x910] sm:$0xff]
    %v4745 = vld [vmem:[#allocation14 + $0x918] sm:$0xff]
    %v4746 = vld [vmem:[#allocation14 + $0x920] sm:$0xff]
    %v4747 = vld [vmem:[#allocation14 + $0x928] sm:$0xff]
    %v4748 = vld [vmem:[#allocation14 + $0x930] sm:$0xff]
    %v4749 = vld [vmem:[#allocation14 + $0x938] sm:$0xff]
    %v4750 = vld [vmem:[#allocation14 + $0x940] sm:$0xff]
    %v4751 = vld [vmem:[#allocation14 + $0x948] sm:$0xff]
    %v4752 = vld [vmem:[#allocation14 + $0x950] sm:$0xff]
    %v4753 = vld [vmem:[#allocation14 + $0x958] sm:$0xff]
    %v4754 = vld [vmem:[#allocation14 + $0x960] sm:$0xff]
    %v4755 = vld [vmem:[#allocation14 + $0x968] sm:$0xff]
    %v4756 = vld [vmem:[#allocation14 + $0x970] sm:$0xff]
    %v4757 = vld [vmem:[#allocation14 + $0x978] sm:$0xff]
    %v4758 = vld [vmem:[#allocation14 + $0x980] sm:$0xff]
    %v4759 = vld [vmem:[#allocation14 + $0x988] sm:$0xff]
    %v4760 = vld [vmem:[#allocation14 + $0x990] sm:$0xff]
    %v4761 = vld [vmem:[#allocation14 + $0x998] sm:$0xff]
    %v4762 = vld [vmem:[#allocation14 + $0x9a0] sm:$0xff]
    %v4763 = vld [vmem:[#allocation14 + $0x9a8] sm:$0xff]
    %v4764 = vld [vmem:[#allocation14 + $0x9b0] sm:$0xff]
    %v4765 = vld [vmem:[#allocation14 + $0x9b8] sm:$0xff]
    %v4766 = vld [vmem:[#allocation14 + $0x9c0] sm:$0xff]
    %v4767 = vld [vmem:[#allocation14 + $0x9c8] sm:$0xff]
    %v4768 = vld [vmem:[#allocation14 + $0x9d0] sm:$0xff]
    %v4769 = vld [vmem:[#allocation14 + $0x9d8] sm:$0xff]
    %v4770 = vld [vmem:[#allocation14 + $0x9e0] sm:$0xff]
    %v4771 = vld [vmem:[#allocation14 + $0x9e8] sm:$0xff]
    %v4772 = vld [vmem:[#allocation14 + $0x9f0] sm:$0xff]
    %v4773 = vld [vmem:[#allocation14 + $0x9f8] sm:$0xff]
    %v4774 = vld [vmem:[#allocation14 + $0xa00] sm:$0xff]
    %v4775 = vld [vmem:[#allocation14 + $0xa08] sm:$0xff]
    %v4776 = vld [vmem:[#allocation14 + $0xa10] sm:$0xff]
    %v4777 = vld [vmem:[#allocation14 + $0xa18] sm:$0xff]
    %v4778 = vld [vmem:[#allocation14 + $0xa20] sm:$0xff]
    %v4779 = vld [vmem:[#allocation14 + $0xa28] sm:$0xff]
    %v4780 = vld [vmem:[#allocation14 + $0xa30] sm:$0xff]
    %v4781 = vld [vmem:[#allocation14 + $0xa38] sm:$0xff]
    %v4782 = vld [vmem:[#allocation14 + $0xa40] sm:$0xff]
    %v4783 = vld [vmem:[#allocation14 + $0xa48] sm:$0xff]
    %v4784 = vld [vmem:[#allocation14 + $0xa50] sm:$0xff]
    %v4785 = vld [vmem:[#allocation14 + $0xa58] sm:$0xff]
    %v4786 = vld [vmem:[#allocation14 + $0xa60] sm:$0xff]
    %v4787 = vld [vmem:[#allocation14 + $0xa68] sm:$0xff]
    %v4788 = vld [vmem:[#allocation14 + $0xa70] sm:$0xff]
    %v4789 = vld [vmem:[#allocation14 + $0xa78] sm:$0xff]
    %v4790 = vld [vmem:[#allocation14 + $0xa80] sm:$0xff]
    %v4791 = vld [vmem:[#allocation14 + $0xa88] sm:$0xff]
    %v4792 = vld [vmem:[#allocation14 + $0xa90] sm:$0xff]
    %v4793 = vld [vmem:[#allocation14 + $0xa98] sm:$0xff]
    %v4794 = vld [vmem:[#allocation14 + $0xaa0] sm:$0xff]
    %v4795 = vld [vmem:[#allocation14 + $0xaa8] sm:$0xff]
    %v4796 = vld [vmem:[#allocation14 + $0xab0] sm:$0xff]
    %v4797 = vld [vmem:[#allocation14 + $0xab8] sm:$0xff]
    %v4798 = vld [vmem:[#allocation14 + $0xac0] sm:$0xff]
    %v4799 = vld [vmem:[#allocation14 + $0xac8] sm:$0xff]
    %v4800 = vld [vmem:[#allocation14 + $0xad0] sm:$0xff]
    %v4801 = vld [vmem:[#allocation14 + $0xad8] sm:$0xff]
    %v4802 = vld [vmem:[#allocation14 + $0xae0] sm:$0xff]
    %v4803 = vld [vmem:[#allocation14 + $0xae8] sm:$0xff]
    %v4804 = vld [vmem:[#allocation14 + $0xaf0] sm:$0xff]
    %v4805 = vld [vmem:[#allocation14 + $0xaf8] sm:$0xff]
    %v4806 = vld [vmem:[#allocation14 + $0xb00] sm:$0xff]
    %v4807 = vld [vmem:[#allocation14 + $0xb08] sm:$0xff]
    %v4808 = vld [vmem:[#allocation14 + $0xb10] sm:$0xff]
    %v4809 = vld [vmem:[#allocation14 + $0xb18] sm:$0xff]
    %v4810 = vld [vmem:[#allocation14 + $0xb20] sm:$0xff]
    %v4811 = vld [vmem:[#allocation14 + $0xb28] sm:$0xff]
    %v4812 = vld [vmem:[#allocation14 + $0xb30] sm:$0xff]
    %v4813 = vld [vmem:[#allocation14 + $0xb38] sm:$0xff]
    %v4814 = vld [vmem:[#allocation14 + $0xb40] sm:$0xff]
    %v4815 = vld [vmem:[#allocation14 + $0xb48] sm:$0xff]
    %v4816 = vld [vmem:[#allocation14 + $0xb50] sm:$0xff]
    %v4817 = vld [vmem:[#allocation14 + $0xb58] sm:$0xff]
    %v4818 = vld [vmem:[#allocation14 + $0xb60] sm:$0xff]
    %v4819 = vld [vmem:[#allocation14 + $0xb68] sm:$0xff]
    %v4820 = vld [vmem:[#allocation14 + $0xb70] sm:$0xff]
    %v4821 = vld [vmem:[#allocation14 + $0xb78] sm:$0xff]
    %v4822 = vld [vmem:[#allocation14 + $0xb80] sm:$0xff]
    %v4823 = vld [vmem:[#allocation14 + $0xb88] sm:$0xff]
    %v4824 = vld [vmem:[#allocation14 + $0xb90] sm:$0xff]
    %v4825 = vld [vmem:[#allocation14 + $0xb98] sm:$0xff]
    %v4826 = vld [vmem:[#allocation14 + $0xba0] sm:$0xff]
    %v4827 = vld [vmem:[#allocation14 + $0xba8] sm:$0xff]
    %v4828 = vld [vmem:[#allocation14 + $0xbb0] sm:$0xff]
    %v4829 = vld [vmem:[#allocation14 + $0xbb8] sm:$0xff]
    %v4830 = vld [vmem:[#allocation14 + $0xbc0] sm:$0xff]
    %v4831 = vld [vmem:[#allocation14 + $0xbc8] sm:$0xff]
    %v4832 = vld [vmem:[#allocation14 + $0xbd0] sm:$0xff]
    %v4833 = vld [vmem:[#allocation14 + $0xbd8] sm:$0xff]
    %v4834 = vld [vmem:[#allocation14 + $0xbe0] sm:$0xff]
    %v4835 = vld [vmem:[#allocation14 + $0xbe8] sm:$0xff]
    %v4836 = vld [vmem:[#allocation14 + $0xbf0] sm:$0xff]
    %v4837 = vld [vmem:[#allocation14 + $0xbf8] sm:$0xff]
    %v4838 = vld [vmem:[#allocation14 + $0xc00] sm:$0xff]
    %v4839 = vld [vmem:[#allocation14 + $0xc08] sm:$0xff]
    %v4840 = vld [vmem:[#allocation14 + $0xc10] sm:$0xff]
    %v4841 = vld [vmem:[#allocation14 + $0xc18] sm:$0xff]
    %v4842 = vld [vmem:[#allocation14 + $0xc20] sm:$0xff]
    %v4843 = vld [vmem:[#allocation14 + $0xc28] sm:$0xff]
    %v4844 = vld [vmem:[#allocation14 + $0xc30] sm:$0xff]
    %v4845 = vld [vmem:[#allocation14 + $0xc38] sm:$0xff]
    %v4846 = vld [vmem:[#allocation14 + $0xc40] sm:$0xff]
    %v4847 = vld [vmem:[#allocation14 + $0xc48] sm:$0xff]
    %v4848 = vld [vmem:[#allocation14 + $0xc50] sm:$0xff]
    %v4849 = vld [vmem:[#allocation14 + $0xc58] sm:$0xff]
    %v4850 = vld [vmem:[#allocation14 + $0xc60] sm:$0xff]
    %v4851 = vld [vmem:[#allocation14 + $0xc68] sm:$0xff]
    %v4852 = vld [vmem:[#allocation14 + $0xc70] sm:$0xff]
    %v4853 = vld [vmem:[#allocation14 + $0xc78] sm:$0xff]
    %v4854 = vld [vmem:[#allocation14 + $0xc80] sm:$0xff]
    %v4855 = vld [vmem:[#allocation14 + $0xc88] sm:$0xff]
    %v4856 = vld [vmem:[#allocation14 + $0xc90] sm:$0xff]
    %v4857 = vld [vmem:[#allocation14 + $0xc98] sm:$0xff]
    %v4858 = vld [vmem:[#allocation14 + $0xca0] sm:$0xff]
    %v4859 = vld [vmem:[#allocation14 + $0xca8] sm:$0xff]
    %v4860 = vld [vmem:[#allocation14 + $0xcb0] sm:$0xff]
    %v4861 = vld [vmem:[#allocation14 + $0xcb8] sm:$0xff]
    %v4862 = vld [vmem:[#allocation14 + $0xcc0] sm:$0xff]
    %v4863 = vld [vmem:[#allocation14 + $0xcc8] sm:$0xff]
    %v4864 = vld [vmem:[#allocation14 + $0xcd0] sm:$0xff]
    %v4865 = vld [vmem:[#allocation14 + $0xcd8] sm:$0xff]
    %v4866 = vld [vmem:[#allocation14 + $0xce0] sm:$0xff]
    %v4867 = vld [vmem:[#allocation14 + $0xce8] sm:$0xff]
    %v4868 = vld [vmem:[#allocation14 + $0xcf0] sm:$0xff]
    %v4869 = vld [vmem:[#allocation14 + $0xcf8] sm:$0xff]
    %v4870 = vld [vmem:[#allocation14 + $0xd00] sm:$0xff]
    %v4871 = vld [vmem:[#allocation14 + $0xd08] sm:$0xff]
    %v4872 = vld [vmem:[#allocation14 + $0xd10] sm:$0xff]
    %v4873 = vld [vmem:[#allocation14 + $0xd18] sm:$0xff]
    %v4874 = vld [vmem:[#allocation14 + $0xd20] sm:$0xff]
    %v4875 = vld [vmem:[#allocation14 + $0xd28] sm:$0xff]
    %v4876 = vld [vmem:[#allocation14 + $0xd30] sm:$0xff]
    %v4877 = vld [vmem:[#allocation14 + $0xd38] sm:$0xff]
    %v4878 = vld [vmem:[#allocation14 + $0xd40] sm:$0xff]
    %v4879 = vld [vmem:[#allocation14 + $0xd48] sm:$0xff]
    %v4880 = vld [vmem:[#allocation14 + $0xd50] sm:$0xff]
    %v4881 = vld [vmem:[#allocation14 + $0xd58] sm:$0xff]
    %v4882 = vld [vmem:[#allocation14 + $0xd60] sm:$0xff]
    %v4883 = vld [vmem:[#allocation14 + $0xd68] sm:$0xff]
    %v4884 = vld [vmem:[#allocation14 + $0xd70] sm:$0xff]
    %v4885 = vld [vmem:[#allocation14 + $0xd78] sm:$0xff]
    %v4886 = vld [vmem:[#allocation14 + $0xd80] sm:$0xff]
    %v4887 = vld [vmem:[#allocation14 + $0xd88] sm:$0xff]
    %v4888 = vld [vmem:[#allocation14 + $0xd90] sm:$0xff]
    %v4889 = vld [vmem:[#allocation14 + $0xd98] sm:$0xff]
    %v4890 = vld [vmem:[#allocation14 + $0xda0] sm:$0xff]
    %v4891 = vld [vmem:[#allocation14 + $0xda8] sm:$0xff]
    %v4892 = vld [vmem:[#allocation14 + $0xdb0] sm:$0xff]
    %v4893 = vld [vmem:[#allocation14 + $0xdb8] sm:$0xff]
    %v4894 = vld [vmem:[#allocation14 + $0xdc0] sm:$0xff]
    %v4895 = vld [vmem:[#allocation14 + $0xdc8] sm:$0xff]
    %v4896 = vld [vmem:[#allocation14 + $0xdd0] sm:$0xff]
    %v4897 = vld [vmem:[#allocation14 + $0xdd8] sm:$0xff]
    %v4898 = vld [vmem:[#allocation14 + $0xde0] sm:$0xff]
    %v4899 = vld [vmem:[#allocation14 + $0xde8] sm:$0xff]
    %v4900 = vld [vmem:[#allocation14 + $0xdf0] sm:$0xff]
    %v4901 = vld [vmem:[#allocation14 + $0xdf8] sm:$0xff]
    %v4902 = vld [vmem:[#allocation14 + $0xe00] sm:$0xff]
    %v4903 = vld [vmem:[#allocation14 + $0xe08] sm:$0xff]
    %v4904 = vld [vmem:[#allocation14 + $0xe10] sm:$0xff]
    %v4905 = vld [vmem:[#allocation14 + $0xe18] sm:$0xff]
    %v4906 = vld [vmem:[#allocation14 + $0xe20] sm:$0xff]
    %v4907 = vld [vmem:[#allocation14 + $0xe28] sm:$0xff]
    %v4908 = vld [vmem:[#allocation14 + $0xe30] sm:$0xff]
    %v4909 = vld [vmem:[#allocation14 + $0xe38] sm:$0xff]
    %v4910 = vld [vmem:[#allocation14 + $0xe40] sm:$0xff]
    %v4911 = vld [vmem:[#allocation14 + $0xe48] sm:$0xff]
    %v4912 = vld [vmem:[#allocation14 + $0xe50] sm:$0xff]
    %v4913 = vld [vmem:[#allocation14 + $0xe58] sm:$0xff]
    %v4914 = vld [vmem:[#allocation14 + $0xe60] sm:$0xff]
    %v4915 = vld [vmem:[#allocation14 + $0xe68] sm:$0xff]
    %v4916 = vld [vmem:[#allocation14 + $0xe70] sm:$0xff]
    %v4917 = vld [vmem:[#allocation14 + $0xe78] sm:$0xff]
    %v4918 = vld [vmem:[#allocation14 + $0xe80] sm:$0xff]
    %v4919 = vld [vmem:[#allocation14 + $0xe88] sm:$0xff]
    %v4920 = vld [vmem:[#allocation14 + $0xe90] sm:$0xff]
    %v4921 = vld [vmem:[#allocation14 + $0xe98] sm:$0xff]
    %v4922 = vld [vmem:[#allocation14 + $0xea0] sm:$0xff]
    %v4923 = vld [vmem:[#allocation14 + $0xea8] sm:$0xff]
    %v4924 = vld [vmem:[#allocation14 + $0xeb0] sm:$0xff]
    %v4925 = vld [vmem:[#allocation14 + $0xeb8] sm:$0xff]
    %v4926 = vld [vmem:[#allocation14 + $0xec0] sm:$0xff]
    %v4927 = vld [vmem:[#allocation14 + $0xec8] sm:$0xff]
    %v4928 = vld [vmem:[#allocation14 + $0xed0] sm:$0xff]
    %v4929 = vld [vmem:[#allocation14 + $0xed8] sm:$0xff]
    %v4930 = vld [vmem:[#allocation14 + $0xee0] sm:$0xff]
    %v4931 = vld [vmem:[#allocation14 + $0xee8] sm:$0xff]
    %v4932 = vld [vmem:[#allocation14 + $0xef0] sm:$0xff]
    %v4933 = vld [vmem:[#allocation14 + $0xef8] sm:$0xff]
    %v4934 = vld [vmem:[#allocation14 + $0xf00] sm:$0xff]
    %v4935 = vld [vmem:[#allocation14 + $0xf08] sm:$0xff]
    %v4936 = vld [vmem:[#allocation14 + $0xf10] sm:$0xff]
    %v4937 = vld [vmem:[#allocation14 + $0xf18] sm:$0xff]
    %v4938 = vld [vmem:[#allocation14 + $0xf20] sm:$0xff]
    %v4939 = vld [vmem:[#allocation14 + $0xf28] sm:$0xff]
    %v4940 = vld [vmem:[#allocation14 + $0xf30] sm:$0xff]
    %v4941 = vld [vmem:[#allocation14 + $0xf38] sm:$0xff]
    %v4942 = vld [vmem:[#allocation14 + $0xf40] sm:$0xff]
    %v4943 = vld [vmem:[#allocation14 + $0xf48] sm:$0xff]
    %v4944 = vld [vmem:[#allocation14 + $0xf50] sm:$0xff]
    %v4945 = vld [vmem:[#allocation14 + $0xf58] sm:$0xff]
    %v4946 = vld [vmem:[#allocation14 + $0xf60] sm:$0xff]
    %v4947 = vld [vmem:[#allocation14 + $0xf68] sm:$0xff]
    %v4948 = vld [vmem:[#allocation14 + $0xf70] sm:$0xff]
    %v4949 = vld [vmem:[#allocation14 + $0xf78] sm:$0xff]
    %v4950 = vld [vmem:[#allocation14 + $0xf80] sm:$0xff]
    %v4951 = vld [vmem:[#allocation14 + $0xf88] sm:$0xff]
    %v4952 = vld [vmem:[#allocation14 + $0xf90] sm:$0xff]
    %v4953 = vld [vmem:[#allocation14 + $0xf98] sm:$0xff]
    %v4954 = vld [vmem:[#allocation14 + $0xfa0] sm:$0xff]
    %v4955 = vld [vmem:[#allocation14 + $0xfa8] sm:$0xff]
    %v4956 = vld [vmem:[#allocation14 + $0xfb0] sm:$0xff]
    %v4957 = vld [vmem:[#allocation14 + $0xfb8] sm:$0xff]
    %v4958 = vld [vmem:[#allocation14 + $0xfc0] sm:$0xff]
    %v4959 = vld [vmem:[#allocation14 + $0xfc8] sm:$0xff]
    %v4960 = vld [vmem:[#allocation14 + $0xfd0] sm:$0xff]
    %v4961 = vld [vmem:[#allocation14 + $0xfd8] sm:$0xff]
    %v4962 = vld [vmem:[#allocation14 + $0xfe0] sm:$0xff]
    %v4963 = vld [vmem:[#allocation14 + $0xfe8] sm:$0xff]
    %v4964 = vld [vmem:[#allocation14 + $0xff0] sm:$0xff]
    %v4965 = vld [vmem:[#allocation14 + $0xff8] sm:$0xff]
    %v4966 = vld [vmem:[#allocation14 + $0x1000] sm:$0xff]
    %v4967 = vld [vmem:[#allocation14 + $0x1008] sm:$0xff]
    %v4968 = vld [vmem:[#allocation14 + $0x1010] sm:$0xff]
    %v4969 = vld [vmem:[#allocation14 + $0x1018] sm:$0xff]
    %v4970 = vld [vmem:[#allocation14 + $0x1020] sm:$0xff]
    %v4971 = vld [vmem:[#allocation14 + $0x1028] sm:$0xff]
    %v4972 = vld [vmem:[#allocation14 + $0x1030] sm:$0xff]
    %v4973 = vld [vmem:[#allocation14 + $0x1038] sm:$0xff]
    %v4974 = vld [vmem:[#allocation14 + $0x1040] sm:$0xff]
    %v4975 = vld [vmem:[#allocation14 + $0x1048] sm:$0xff]
    %v4976 = vld [vmem:[#allocation14 + $0x1050] sm:$0xff]
    %v4977 = vld [vmem:[#allocation14 + $0x1058] sm:$0xff]
    %v4978 = vld [vmem:[#allocation14 + $0x1060] sm:$0xff]
    %v4979 = vld [vmem:[#allocation14 + $0x1068] sm:$0xff]
    %v4980 = vld [vmem:[#allocation14 + $0x1070] sm:$0xff]
    %v4981 = vld [vmem:[#allocation14 + $0x1078] sm:$0xff]
    %v4982 = vld [vmem:[#allocation14 + $0x1080] sm:$0xff]
    %v4983 = vld [vmem:[#allocation14 + $0x1088] sm:$0xff]
    %v4984 = vld [vmem:[#allocation14 + $0x1090] sm:$0xff]
    %v4985 = vld [vmem:[#allocation14 + $0x1098] sm:$0xff]
    %v4986 = vld [vmem:[#allocation14 + $0x10a0] sm:$0xff]
    %v4987 = vld [vmem:[#allocation14 + $0x10a8] sm:$0xff]
    %v4988 = vld [vmem:[#allocation14 + $0x10b0] sm:$0xff]
    %v4989 = vld [vmem:[#allocation14 + $0x10b8] sm:$0xff]
    %v4990 = vld [vmem:[#allocation14 + $0x10c0] sm:$0xff]
    %v4991 = vld [vmem:[#allocation14 + $0x10c8] sm:$0xff]
    %v4992 = vld [vmem:[#allocation14 + $0x10d0] sm:$0xff]
    %v4993 = vld [vmem:[#allocation14 + $0x10d8] sm:$0xff]
    %v4994 = vld [vmem:[#allocation14 + $0x10e0] sm:$0xff]
    %v4995 = vld [vmem:[#allocation14 + $0x10e8] sm:$0xff]
    %v4996 = vld [vmem:[#allocation14 + $0x10f0] sm:$0xff]
    %v4997 = vld [vmem:[#allocation14 + $0x10f8] sm:$0xff]
    %v4998 = vld [vmem:[#allocation14 + $0x1100] sm:$0xff]
    %v4999 = vld [vmem:[#allocation14 + $0x1108] sm:$0xff]
    %v5000 = vld [vmem:[#allocation14 + $0x1110] sm:$0xff]
    %v5001 = vld [vmem:[#allocation14 + $0x1118] sm:$0xff]
    %v5002 = vld [vmem:[#allocation14 + $0x1120] sm:$0xff]
    %v5003 = vld [vmem:[#allocation14 + $0x1128] sm:$0xff]
    %v5004 = vld [vmem:[#allocation14 + $0x1130] sm:$0xff]
    %v5005 = vld [vmem:[#allocation14 + $0x1138] sm:$0xff]
    %v5006 = vld [vmem:[#allocation14 + $0x1140] sm:$0xff]
    %v5007 = vld [vmem:[#allocation14 + $0x1148] sm:$0xff]
    %v5008 = vld [vmem:[#allocation14 + $0x1150] sm:$0xff]
    %v5009 = vld [vmem:[#allocation14 + $0x1158] sm:$0xff]
    %v5010 = vld [vmem:[#allocation14 + $0x1160] sm:$0xff]
    %v5011 = vld [vmem:[#allocation14 + $0x1168] sm:$0xff]
    %v5012 = vld [vmem:[#allocation14 + $0x1170] sm:$0xff]
    %v5013 = vld [vmem:[#allocation14 + $0x1178] sm:$0xff]
    %v5014 = vld [vmem:[#allocation14 + $0x1180] sm:$0xff]
    %v5015 = vld [vmem:[#allocation14 + $0x1188] sm:$0xff]
    %v5016 = vld [vmem:[#allocation14 + $0x1190] sm:$0xff]
    %v5017 = vld [vmem:[#allocation14 + $0x1198] sm:$0xff]
    %v5018 = vld [vmem:[#allocation14 + $0x11a0] sm:$0xff]
    %v5019 = vld [vmem:[#allocation14 + $0x11a8] sm:$0xff]
    %v5020 = vld [vmem:[#allocation14 + $0x11b0] sm:$0xff]
    %v5021 = vld [vmem:[#allocation14 + $0x11b8] sm:$0xff]
    %v5022 = vld [vmem:[#allocation14 + $0x11c0] sm:$0xff]
    %v5023 = vld [vmem:[#allocation14 + $0x11c8] sm:$0xff]
    %v5024 = vld [vmem:[#allocation14 + $0x11d0] sm:$0xff]
    %v5025 = vld [vmem:[#allocation14 + $0x11d8] sm:$0xff]
    %v5026 = vld [vmem:[#allocation14 + $0x11e0] sm:$0xff]
    %v5027 = vld [vmem:[#allocation14 + $0x11e8] sm:$0xff]
    %v5028 = vld [vmem:[#allocation14 + $0x11f0] sm:$0xff]
    %v5029 = vld [vmem:[#allocation14 + $0x11f8] sm:$0xff]
    %v5030 = vld [vmem:[#allocation14 + $0x1200] sm:$0xff]
    %v5031 = vld [vmem:[#allocation14 + $0x1208] sm:$0xff]
    %v5032 = vld [vmem:[#allocation14 + $0x1210] sm:$0xff]
    %v5033 = vld [vmem:[#allocation14 + $0x1218] sm:$0xff]
    %v5034 = vld [vmem:[#allocation14 + $0x1220] sm:$0xff]
    %v5035 = vld [vmem:[#allocation14 + $0x1228] sm:$0xff]
    %v5036 = vld [vmem:[#allocation14 + $0x1230] sm:$0xff]
    %v5037 = vld [vmem:[#allocation14 + $0x1238] sm:$0xff]
    %v5038 = vld [vmem:[#allocation14 + $0x1240] sm:$0xff]
    %v5039 = vld [vmem:[#allocation14 + $0x1248] sm:$0xff]
    %v5040 = vld [vmem:[#allocation14 + $0x1250] sm:$0xff]
    %v5041 = vld [vmem:[#allocation14 + $0x1258] sm:$0xff]
    %v5042 = vld [vmem:[#allocation14 + $0x1260] sm:$0xff]
    %v5043 = vld [vmem:[#allocation14 + $0x1268] sm:$0xff]
    %v5044 = vld [vmem:[#allocation14 + $0x1270] sm:$0xff]
    %v5045 = vld [vmem:[#allocation14 + $0x1278] sm:$0xff]
    %v5046 = vld [vmem:[#allocation14 + $0x1280] sm:$0xff]
    %v5047 = vld [vmem:[#allocation14 + $0x1288] sm:$0xff]
    %v5048 = vld [vmem:[#allocation14 + $0x1290] sm:$0xff]
    %v5049 = vld [vmem:[#allocation14 + $0x1298] sm:$0xff]
    %v5050 = vld [vmem:[#allocation14 + $0x12a0] sm:$0xff]
    %v5051 = vld [vmem:[#allocation14 + $0x12a8] sm:$0xff]
    %v5052 = vld [vmem:[#allocation14 + $0x12b0] sm:$0xff]
    %v5053 = vld [vmem:[#allocation14 + $0x12b8] sm:$0xff]
    %v5054 = vld [vmem:[#allocation14 + $0x12c0] sm:$0xff]
    %v5055 = vld [vmem:[#allocation14 + $0x12c8] sm:$0xff]
    %v5056 = vld [vmem:[#allocation14 + $0x12d0] sm:$0xff]
    %v5057 = vld [vmem:[#allocation14 + $0x12d8] sm:$0xff]
    %v5058 = vld [vmem:[#allocation14 + $0x12e0] sm:$0xff]
    %v5059 = vld [vmem:[#allocation14 + $0x12e8] sm:$0xff]
    %v5060 = vld [vmem:[#allocation14 + $0x12f0] sm:$0xff]
    %v5061 = vld [vmem:[#allocation14 + $0x12f8] sm:$0xff]
    %v5062 = vld [vmem:[#allocation14 + $0x1300] sm:$0xff]
    %v5063 = vld [vmem:[#allocation14 + $0x1308] sm:$0xff]
    %v5064 = vld [vmem:[#allocation14 + $0x1310] sm:$0xff]
    %v5065 = vld [vmem:[#allocation14 + $0x1318] sm:$0xff]
    %v5066 = vld [vmem:[#allocation14 + $0x1320] sm:$0xff]
    %v5067 = vld [vmem:[#allocation14 + $0x1328] sm:$0xff]
    %v5068 = vld [vmem:[#allocation14 + $0x1330] sm:$0xff]
    %v5069 = vld [vmem:[#allocation14 + $0x1338] sm:$0xff]
    %v5070 = vld [vmem:[#allocation14 + $0x1340] sm:$0xff]
    %v5071 = vld [vmem:[#allocation14 + $0x1348] sm:$0xff]
    %v5072 = vld [vmem:[#allocation14 + $0x1350] sm:$0xff]
    %v5073 = vld [vmem:[#allocation14 + $0x1358] sm:$0xff]
    %v5074 = vld [vmem:[#allocation14 + $0x1360] sm:$0xff]
    %v5075 = vld [vmem:[#allocation14 + $0x1368] sm:$0xff]
    %v5076 = vld [vmem:[#allocation14 + $0x1370] sm:$0xff]
    %v5077 = vld [vmem:[#allocation14 + $0x1378] sm:$0xff]
    %v5078 = vld [vmem:[#allocation14 + $0x1380] sm:$0xff]
    %v5079 = vld [vmem:[#allocation14 + $0x1388] sm:$0xff]
    %v5080 = vld [vmem:[#allocation14 + $0x1390] sm:$0xff]
    %v5081 = vld [vmem:[#allocation14 + $0x1398] sm:$0xff]
    %v5082 = vld [vmem:[#allocation14 + $0x13a0] sm:$0xff]
    %v5083 = vld [vmem:[#allocation14 + $0x13a8] sm:$0xff]
    %v5084 = vld [vmem:[#allocation14 + $0x13b0] sm:$0xff]
    %v5085 = vld [vmem:[#allocation14 + $0x13b8] sm:$0xff]
    %v5086 = vld [vmem:[#allocation14 + $0x13c0] sm:$0xff]
    %v5087 = vld [vmem:[#allocation14 + $0x13c8] sm:$0xff]
    %v5088 = vld [vmem:[#allocation14 + $0x13d0] sm:$0xff]
    %v5089 = vld [vmem:[#allocation14 + $0x13d8] sm:$0xff]
    %v5090 = vld [vmem:[#allocation14 + $0x13e0] sm:$0xff]
    %v5091 = vld [vmem:[#allocation14 + $0x13e8] sm:$0xff]
    %v5092 = vld [vmem:[#allocation14 + $0x13f0] sm:$0xff]
    %v5093 = vld [vmem:[#allocation14 + $0x13f8] sm:$0xff]
    %v5094 = vld [vmem:[#allocation14 + $0x1400] sm:$0xff]
    %v5095 = vld [vmem:[#allocation14 + $0x1408] sm:$0xff]
    %v5096 = vld [vmem:[#allocation14 + $0x1410] sm:$0xff]
    %v5097 = vld [vmem:[#allocation14 + $0x1418] sm:$0xff]
    %v5098 = vld [vmem:[#allocation14 + $0x1420] sm:$0xff]
    %v5099 = vld [vmem:[#allocation14 + $0x1428] sm:$0xff]
    %v5100 = vld [vmem:[#allocation14 + $0x1430] sm:$0xff]
    %v5101 = vld [vmem:[#allocation14 + $0x1438] sm:$0xff]
    %v5102 = vld [vmem:[#allocation14 + $0x1440] sm:$0xff]
    %v5103 = vld [vmem:[#allocation14 + $0x1448] sm:$0xff]
    %v5104 = vld [vmem:[#allocation14 + $0x1450] sm:$0xff]
    %v5105 = vld [vmem:[#allocation14 + $0x1458] sm:$0xff]
    %v5106 = vld [vmem:[#allocation14 + $0x1460] sm:$0xff]
    %v5107 = vld [vmem:[#allocation14 + $0x1468] sm:$0xff]
    %v5108 = vld [vmem:[#allocation14 + $0x1470] sm:$0xff]
    %v5109 = vld [vmem:[#allocation14 + $0x1478] sm:$0xff]
    %v5110 = vld [vmem:[#allocation14 + $0x1480] sm:$0xff]
    %v5111 = vld [vmem:[#allocation14 + $0x1488] sm:$0xff]
    %v5112 = vld [vmem:[#allocation14 + $0x1490] sm:$0xff]
    %v5113 = vld [vmem:[#allocation14 + $0x1498] sm:$0xff]
    %v5114 = vld [vmem:[#allocation14 + $0x14a0] sm:$0xff]
    %v5115 = vld [vmem:[#allocation14 + $0x14a8] sm:$0xff]
    %v5116 = vld [vmem:[#allocation14 + $0x14b0] sm:$0xff]
    %v5117 = vld [vmem:[#allocation14 + $0x14b8] sm:$0xff]
    %v5118 = vld [vmem:[#allocation14 + $0x14c0] sm:$0xff]
    %v5119 = vld [vmem:[#allocation14 + $0x14c8] sm:$0xff]
    %v5120 = vld [vmem:[#allocation14 + $0x14d0] sm:$0xff]
    %v5121 = vld [vmem:[#allocation14 + $0x14d8] sm:$0xff]
    %v5122 = vld [vmem:[#allocation14 + $0x14e0] sm:$0xff]
    %v5123 = vld [vmem:[#allocation14 + $0x14e8] sm:$0xff]
    %v5124 = vld [vmem:[#allocation14 + $0x14f0] sm:$0xff]
    %v5125 = vld [vmem:[#allocation14 + $0x14f8] sm:$0xff]
    %v5126 = vld [vmem:[#allocation14 + $0x1500] sm:$0xff]
    %v5127 = vld [vmem:[#allocation14 + $0x1508] sm:$0xff]
    %v5128 = vld [vmem:[#allocation14 + $0x1510] sm:$0xff]
    %v5129 = vld [vmem:[#allocation14 + $0x1518] sm:$0xff]
    %v5130 = vld [vmem:[#allocation14 + $0x1520] sm:$0xff]
    %v5131 = vld [vmem:[#allocation14 + $0x1528] sm:$0xff]
    %v5132 = vld [vmem:[#allocation14 + $0x1530] sm:$0xff]
    %v5133 = vld [vmem:[#allocation14 + $0x1538] sm:$0xff]
    %v5134 = vld [vmem:[#allocation14 + $0x1540] sm:$0xff]
    %v5135 = vld [vmem:[#allocation14 + $0x1548] sm:$0xff]
    %v5136 = vld [vmem:[#allocation14 + $0x1550] sm:$0xff]
    %v5137 = vld [vmem:[#allocation14 + $0x1558] sm:$0xff]
    %v5138 = vld [vmem:[#allocation14 + $0x1560] sm:$0xff]
    %v5139 = vld [vmem:[#allocation14 + $0x1568] sm:$0xff]
    %v5140 = vld [vmem:[#allocation14 + $0x1570] sm:$0xff]
    %v5141 = vld [vmem:[#allocation14 + $0x1578] sm:$0xff]
    %v5142 = vld [vmem:[#allocation14 + $0x1580] sm:$0xff]
    %v5143 = vld [vmem:[#allocation14 + $0x1588] sm:$0xff]
    %v5144 = vld [vmem:[#allocation14 + $0x1590] sm:$0xff]
    %v5145 = vld [vmem:[#allocation14 + $0x1598] sm:$0xff]
    %v5146 = vld [vmem:[#allocation14 + $0x15a0] sm:$0xff]
    %v5147 = vld [vmem:[#allocation14 + $0x15a8] sm:$0xff]
    %v5148 = vld [vmem:[#allocation14 + $0x15b0] sm:$0xff]
    %v5149 = vld [vmem:[#allocation14 + $0x15b8] sm:$0xff]
    %v5150 = vld [vmem:[#allocation14 + $0x15c0] sm:$0xff]
    %v5151 = vld [vmem:[#allocation14 + $0x15c8] sm:$0xff]
    %v5152 = vld [vmem:[#allocation14 + $0x15d0] sm:$0xff]
    %v5153 = vld [vmem:[#allocation14 + $0x15d8] sm:$0xff]
    %v5154 = vld [vmem:[#allocation14 + $0x15e0] sm:$0xff]
    %v5155 = vld [vmem:[#allocation14 + $0x15e8] sm:$0xff]
    %v5156 = vld [vmem:[#allocation14 + $0x15f0] sm:$0xff]
    %v5157 = vld [vmem:[#allocation14 + $0x15f8] sm:$0xff]
    %v5158 = vld [vmem:[#allocation14 + $0x1600] sm:$0xff]
    %v5159 = vld [vmem:[#allocation14 + $0x1608] sm:$0xff]
    %v5160 = vld [vmem:[#allocation14 + $0x1610] sm:$0xff]
    %v5161 = vld [vmem:[#allocation14 + $0x1618] sm:$0xff]
    %v5162 = vld [vmem:[#allocation14 + $0x1620] sm:$0xff]
    %v5163 = vld [vmem:[#allocation14 + $0x1628] sm:$0xff]
    %v5164 = vld [vmem:[#allocation14 + $0x1630] sm:$0xff]
    %v5165 = vld [vmem:[#allocation14 + $0x1638] sm:$0xff]
    %v5166 = vld [vmem:[#allocation14 + $0x1640] sm:$0xff]
    %v5167 = vld [vmem:[#allocation14 + $0x1648] sm:$0xff]
    %v5168 = vld [vmem:[#allocation14 + $0x1650] sm:$0xff]
    %v5169 = vld [vmem:[#allocation14 + $0x1658] sm:$0xff]
    %v5170 = vld [vmem:[#allocation14 + $0x1660] sm:$0xff]
    %v5171 = vld [vmem:[#allocation14 + $0x1668] sm:$0xff]
    %v5172 = vld [vmem:[#allocation14 + $0x1670] sm:$0xff]
    %v5173 = vld [vmem:[#allocation14 + $0x1678] sm:$0xff]
    %v5174 = vld [vmem:[#allocation14 + $0x1680] sm:$0xff]
    %v5175 = vld [vmem:[#allocation14 + $0x1688] sm:$0xff]
    %v5176 = vld [vmem:[#allocation14 + $0x1690] sm:$0xff]
    %v5177 = vld [vmem:[#allocation14 + $0x1698] sm:$0xff]
    %v5178 = vld [vmem:[#allocation14 + $0x16a0] sm:$0xff]
    %v5179 = vld [vmem:[#allocation14 + $0x16a8] sm:$0xff]
    %v5180 = vld [vmem:[#allocation14 + $0x16b0] sm:$0xff]
    %v5181 = vld [vmem:[#allocation14 + $0x16b8] sm:$0xff]
    %v5182 = vld [vmem:[#allocation14 + $0x16c0] sm:$0xff]
    %v5183 = vld [vmem:[#allocation14 + $0x16c8] sm:$0xff]
    %v5184 = vld [vmem:[#allocation14 + $0x16d0] sm:$0xff]
    %v5185 = vld [vmem:[#allocation14 + $0x16d8] sm:$0xff]
    %v5186 = vld [vmem:[#allocation14 + $0x16e0] sm:$0xff]
    %v5187 = vld [vmem:[#allocation14 + $0x16e8] sm:$0xff]
    %v5188 = vld [vmem:[#allocation14 + $0x16f0] sm:$0xff]
    %v5189 = vld [vmem:[#allocation14 + $0x16f8] sm:$0xff]
    %v5190 = vld [vmem:[#allocation14 + $0x1700] sm:$0xff]
    %v5191 = vld [vmem:[#allocation14 + $0x1708] sm:$0xff]
    %v5192 = vld [vmem:[#allocation14 + $0x1710] sm:$0xff]
    %v5193 = vld [vmem:[#allocation14 + $0x1718] sm:$0xff]
    %v5194 = vld [vmem:[#allocation14 + $0x1720] sm:$0xff]
    %v5195 = vld [vmem:[#allocation14 + $0x1728] sm:$0xff]
    %v5196 = vld [vmem:[#allocation14 + $0x1730] sm:$0xff]
    %v5197 = vld [vmem:[#allocation14 + $0x1738] sm:$0xff]
    %v5198 = vld [vmem:[#allocation14 + $0x1740] sm:$0xff]
    %v5199 = vld [vmem:[#allocation14 + $0x1748] sm:$0xff]
    %v5200 = vld [vmem:[#allocation14 + $0x1750] sm:$0xff]
    %v5201 = vld [vmem:[#allocation14 + $0x1758] sm:$0xff]
    %v5202 = vld [vmem:[#allocation14 + $0x1760] sm:$0xff]
    %v5203 = vld [vmem:[#allocation14 + $0x1768] sm:$0xff]
    %v5204 = vld [vmem:[#allocation14 + $0x1770] sm:$0xff]
    %v5205 = vld [vmem:[#allocation14 + $0x1778] sm:$0xff]
    %v5206 = vld [vmem:[#allocation14 + $0x1780] sm:$0xff]
    %v5207 = vld [vmem:[#allocation14 + $0x1788] sm:$0xff]
    %v5208 = vld [vmem:[#allocation14 + $0x1790] sm:$0xff]
    %v5209 = vld [vmem:[#allocation14 + $0x1798] sm:$0xff]
    %v5210 = vld [vmem:[#allocation14 + $0x17a0] sm:$0xff]
    %v5211 = vld [vmem:[#allocation14 + $0x17a8] sm:$0xff]
    %v5212 = vld [vmem:[#allocation14 + $0x17b0] sm:$0xff]
    %v5213 = vld [vmem:[#allocation14 + $0x17b8] sm:$0xff]
    %v5214 = vld [vmem:[#allocation14 + $0x17c0] sm:$0xff]
    %v5215 = vld [vmem:[#allocation14 + $0x17c8] sm:$0xff]
    %v5216 = vld [vmem:[#allocation14 + $0x17d0] sm:$0xff]
    %v5217 = vld [vmem:[#allocation14 + $0x17d8] sm:$0xff]
    %v5218 = vld [vmem:[#allocation14 + $0x17e0] sm:$0xff]
    %v5219 = vld [vmem:[#allocation14 + $0x17e8] sm:$0xff]
    %v5220 = vld [vmem:[#allocation14 + $0x17f0] sm:$0xff]
    %v5221 = vld [vmem:[#allocation14 + $0x17f8] sm:$0xff]
    %v5222 = vld [vmem:[#allocation16] sm:$0xff]
    %v5224 = vlaneseq
    %v5225 = vshrl.u32 %v5224, 7
    %v5226 = vsub.s32 0, %v5225
    %v5227 = vrot.slane %v5222, %v5226
    %v5228 = vlaneseq
    %v5229 = vshrl.u32 %v5228, 7
    %v5230 = vsub.s32 1, %v5229
    %v5231 = vrot.slane %v5222, %v5230
    %v5232 = vlaneseq
    %v5233 = vshrl.u32 %v5232, 7
    %v5234 = vsub.s32 2, %v5233
    %v5235 = vrot.slane %v5222, %v5234
    %v5236 = vlaneseq
    %v5237 = vshrl.u32 %v5236, 7
    %v5238 = vsub.s32 3, %v5237
    %v5239 = vrot.slane %v5222, %v5238
    %v5240 = vlaneseq
    %v5241 = vshrl.u32 %v5240, 7
    %v5242 = vsub.s32 4, %v5241
    %v5243 = vrot.slane %v5222, %v5242
    %v5244 = vlaneseq
    %v5245 = vshrl.u32 %v5244, 7
    %v5246 = vsub.s32 5, %v5245
    %v5247 = vrot.slane %v5222, %v5246
    %v5248 = vlaneseq
    %v5249 = vshrl.u32 %v5248, 7
    %v5250 = vsub.s32 6, %v5249
    %v5251 = vrot.slane %v5222, %v5250
    %v5252 = vlaneseq
    %v5253 = vshrl.u32 %v5252, 7
    %v5254 = vsub.s32 7, %v5253
    %v5255 = vrot.slane %v5222, %v5254
    %v6032 = vunpack.c.l.b16 %v4454
    %v6033 = vunpack.c.h.b16 %v4454
    %v6034 = vunpack.c.l.b16 %v4455
    %v6035 = vunpack.c.h.b16 %v4455
    %v6036 = vunpack.c.l.b16 %v4456
    %v6037 = vunpack.c.h.b16 %v4456
    %v6038 = vunpack.c.l.b16 %v4457
    %v6039 = vunpack.c.h.b16 %v4457
    %v6040 = vunpack.c.l.b16 %v4458
    %v6041 = vunpack.c.h.b16 %v4458
    %v6042 = vunpack.c.l.b16 %v4459
    %v6043 = vunpack.c.h.b16 %v4459
    %v6044 = vunpack.c.l.b16 %v4460
    %v6045 = vunpack.c.h.b16 %v4460
    %v6046 = vunpack.c.l.b16 %v4461
    %v6047 = vunpack.c.h.b16 %v4461
    %v6048 = vunpack.c.l.b16 %v4462
    %v6049 = vunpack.c.h.b16 %v4462
    %v6050 = vunpack.c.l.b16 %v4463
    %v6051 = vunpack.c.h.b16 %v4463
    %v6052 = vunpack.c.l.b16 %v4464
    %v6053 = vunpack.c.h.b16 %v4464
    %v6054 = vunpack.c.l.b16 %v4465
    %v6055 = vunpack.c.h.b16 %v4465
    %v6056 = vunpack.c.l.b16 %v4466
    %v6057 = vunpack.c.h.b16 %v4466
    %v6058 = vunpack.c.l.b16 %v4467
    %v6059 = vunpack.c.h.b16 %v4467
    %v6060 = vunpack.c.l.b16 %v4468
    %v6061 = vunpack.c.h.b16 %v4468
    %v6062 = vunpack.c.l.b16 %v4469
    %v6063 = vunpack.c.h.b16 %v4469
    %v6064 = vunpack.c.l.b16 %v4470
    %v6065 = vunpack.c.h.b16 %v4470
    %v6066 = vunpack.c.l.b16 %v4471
    %v6067 = vunpack.c.h.b16 %v4471
    %v6068 = vunpack.c.l.b16 %v4472
    %v6069 = vunpack.c.h.b16 %v4472
    %v6070 = vunpack.c.l.b16 %v4473
    %v6071 = vunpack.c.h.b16 %v4473
    %v6072 = vunpack.c.l.b16 %v4474
    %v6073 = vunpack.c.h.b16 %v4474
    %v6074 = vunpack.c.l.b16 %v4475
    %v6075 = vunpack.c.h.b16 %v4475
    %v6076 = vunpack.c.l.b16 %v4476
    %v6077 = vunpack.c.h.b16 %v4476
    %v6078 = vunpack.c.l.b16 %v4477
    %v6079 = vunpack.c.h.b16 %v4477
    %v6080 = vunpack.c.l.b16 %v4478
    %v6081 = vunpack.c.h.b16 %v4478
    %v6082 = vunpack.c.l.b16 %v4479
    %v6083 = vunpack.c.h.b16 %v4479
    %v6084 = vunpack.c.l.b16 %v4480
    %v6085 = vunpack.c.h.b16 %v4480
    %v6086 = vunpack.c.l.b16 %v4481
    %v6087 = vunpack.c.h.b16 %v4481
    %v6088 = vunpack.c.l.b16 %v4482
    %v6089 = vunpack.c.h.b16 %v4482
    %v6090 = vunpack.c.l.b16 %v4483
    %v6091 = vunpack.c.h.b16 %v4483
    %v6092 = vunpack.c.l.b16 %v4484
    %v6093 = vunpack.c.h.b16 %v4484
    %v6094 = vunpack.c.l.b16 %v4485
    %v6095 = vunpack.c.h.b16 %v4485
    %v6096 = vunpack.c.l.b16 %v4486
    %v6097 = vunpack.c.h.b16 %v4486
    %v6098 = vunpack.c.l.b16 %v4487
    %v6099 = vunpack.c.h.b16 %v4487
    %v6100 = vunpack.c.l.b16 %v4488
    %v6101 = vunpack.c.h.b16 %v4488
    %v6102 = vunpack.c.l.b16 %v4489
    %v6103 = vunpack.c.h.b16 %v4489
    %v6104 = vunpack.c.l.b16 %v4490
    %v6105 = vunpack.c.h.b16 %v4490
    %v6106 = vunpack.c.l.b16 %v4491
    %v6107 = vunpack.c.h.b16 %v4491
    %v6108 = vunpack.c.l.b16 %v4492
    %v6109 = vunpack.c.h.b16 %v4492
    %v6110 = vunpack.c.l.b16 %v4493
    %v6111 = vunpack.c.h.b16 %v4493
    %v6112 = vunpack.c.l.b16 %v4494
    %v6113 = vunpack.c.h.b16 %v4494
    %v6114 = vunpack.c.l.b16 %v4495
    %v6115 = vunpack.c.h.b16 %v4495
    %v6116 = vunpack.c.l.b16 %v4496
    %v6117 = vunpack.c.h.b16 %v4496
    %v6118 = vunpack.c.l.b16 %v4497
    %v6119 = vunpack.c.h.b16 %v4497
    %v6120 = vunpack.c.l.b16 %v4498
    %v6121 = vunpack.c.h.b16 %v4498
    %v6122 = vunpack.c.l.b16 %v4499
    %v6123 = vunpack.c.h.b16 %v4499
    %v6124 = vunpack.c.l.b16 %v4500
    %v6125 = vunpack.c.h.b16 %v4500
    %v6126 = vunpack.c.l.b16 %v4501
    %v6127 = vunpack.c.h.b16 %v4501
    %v6128 = vunpack.c.l.b16 %v4502
    %v6129 = vunpack.c.h.b16 %v4502
    %v6130 = vunpack.c.l.b16 %v4503
    %v6131 = vunpack.c.h.b16 %v4503
    %v6132 = vunpack.c.l.b16 %v4504
    %v6133 = vunpack.c.h.b16 %v4504
    %v6134 = vunpack.c.l.b16 %v4505
    %v6135 = vunpack.c.h.b16 %v4505
    %v6136 = vunpack.c.l.b16 %v4506
    %v6137 = vunpack.c.h.b16 %v4506
    %v6138 = vunpack.c.l.b16 %v4507
    %v6139 = vunpack.c.h.b16 %v4507
    %v6140 = vunpack.c.l.b16 %v4508
    %v6141 = vunpack.c.h.b16 %v4508
    %v6142 = vunpack.c.l.b16 %v4509
    %v6143 = vunpack.c.h.b16 %v4509
    %v6144 = vunpack.c.l.b16 %v4510
    %v6145 = vunpack.c.h.b16 %v4510
    %v6146 = vunpack.c.l.b16 %v4511
    %v6147 = vunpack.c.h.b16 %v4511
    %v6148 = vunpack.c.l.b16 %v4512
    %v6149 = vunpack.c.h.b16 %v4512
    %v6150 = vunpack.c.l.b16 %v4513
    %v6151 = vunpack.c.h.b16 %v4513
    %v6152 = vunpack.c.l.b16 %v4514
    %v6153 = vunpack.c.h.b16 %v4514
    %v6154 = vunpack.c.l.b16 %v4515
    %v6155 = vunpack.c.h.b16 %v4515
    %v6156 = vunpack.c.l.b16 %v4516
    %v6157 = vunpack.c.h.b16 %v4516
    %v6158 = vunpack.c.l.b16 %v4517
    %v6159 = vunpack.c.h.b16 %v4517
    %v6160 = vunpack.c.l.b16 %v4518
    %v6161 = vunpack.c.h.b16 %v4518
    %v6162 = vunpack.c.l.b16 %v4519
    %v6163 = vunpack.c.h.b16 %v4519
    %v6164 = vunpack.c.l.b16 %v4520
    %v6165 = vunpack.c.h.b16 %v4520
    %v6166 = vunpack.c.l.b16 %v4521
    %v6167 = vunpack.c.h.b16 %v4521
    %v6168 = vunpack.c.l.b16 %v4522
    %v6169 = vunpack.c.h.b16 %v4522
    %v6170 = vunpack.c.l.b16 %v4523
    %v6171 = vunpack.c.h.b16 %v4523
    %v6172 = vunpack.c.l.b16 %v4524
    %v6173 = vunpack.c.h.b16 %v4524
    %v6174 = vunpack.c.l.b16 %v4525
    %v6175 = vunpack.c.h.b16 %v4525
    %v6176 = vunpack.c.l.b16 %v4526
    %v6177 = vunpack.c.h.b16 %v4526
    %v6178 = vunpack.c.l.b16 %v4527
    %v6179 = vunpack.c.h.b16 %v4527
    %v6180 = vunpack.c.l.b16 %v4528
    %v6181 = vunpack.c.h.b16 %v4528
    %v6182 = vunpack.c.l.b16 %v4529
    %v6183 = vunpack.c.h.b16 %v4529
    %v6184 = vunpack.c.l.b16 %v4530
    %v6185 = vunpack.c.h.b16 %v4530
    %v6186 = vunpack.c.l.b16 %v4531
    %v6187 = vunpack.c.h.b16 %v4531
    %v6188 = vunpack.c.l.b16 %v4532
    %v6189 = vunpack.c.h.b16 %v4532
    %v6190 = vunpack.c.l.b16 %v4533
    %v6191 = vunpack.c.h.b16 %v4533
    %v6192 = vunpack.c.l.b16 %v4534
    %v6193 = vunpack.c.h.b16 %v4534
    %v6194 = vunpack.c.l.b16 %v4535
    %v6195 = vunpack.c.h.b16 %v4535
    %v6196 = vunpack.c.l.b16 %v4536
    %v6197 = vunpack.c.h.b16 %v4536
    %v6198 = vunpack.c.l.b16 %v4537
    %v6199 = vunpack.c.h.b16 %v4537
    %v6200 = vunpack.c.l.b16 %v4538
    %v6201 = vunpack.c.h.b16 %v4538
    %v6202 = vunpack.c.l.b16 %v4539
    %v6203 = vunpack.c.h.b16 %v4539
    %v6204 = vunpack.c.l.b16 %v4540
    %v6205 = vunpack.c.h.b16 %v4540
    %v6206 = vunpack.c.l.b16 %v4541
    %v6207 = vunpack.c.h.b16 %v4541
    %v6208 = vunpack.c.l.b16 %v4542
    %v6209 = vunpack.c.h.b16 %v4542
    %v6210 = vunpack.c.l.b16 %v4543
    %v6211 = vunpack.c.h.b16 %v4543
    %v6212 = vunpack.c.l.b16 %v4544
    %v6213 = vunpack.c.h.b16 %v4544
    %v6214 = vunpack.c.l.b16 %v4545
    %v6215 = vunpack.c.h.b16 %v4545
    %v6216 = vunpack.c.l.b16 %v4546
    %v6217 = vunpack.c.h.b16 %v4546
    %v6218 = vunpack.c.l.b16 %v4547
    %v6219 = vunpack.c.h.b16 %v4547
    %v6220 = vunpack.c.l.b16 %v4548
    %v6221 = vunpack.c.h.b16 %v4548
    %v6222 = vunpack.c.l.b16 %v4549
    %v6223 = vunpack.c.h.b16 %v4549
    %v6224 = vunpack.c.l.b16 %v4550
    %v6225 = vunpack.c.h.b16 %v4550
    %v6226 = vunpack.c.l.b16 %v4551
    %v6227 = vunpack.c.h.b16 %v4551
    %v6228 = vunpack.c.l.b16 %v4552
    %v6229 = vunpack.c.h.b16 %v4552
    %v6230 = vunpack.c.l.b16 %v4553
    %v6231 = vunpack.c.h.b16 %v4553
    %v6232 = vunpack.c.l.b16 %v4554
    %v6233 = vunpack.c.h.b16 %v4554
    %v6234 = vunpack.c.l.b16 %v4555
    %v6235 = vunpack.c.h.b16 %v4555
    %v6236 = vunpack.c.l.b16 %v4556
    %v6237 = vunpack.c.h.b16 %v4556
    %v6238 = vunpack.c.l.b16 %v4557
    %v6239 = vunpack.c.h.b16 %v4557
    %v6240 = vunpack.c.l.b16 %v4558
    %v6241 = vunpack.c.h.b16 %v4558
    %v6242 = vunpack.c.l.b16 %v4559
    %v6243 = vunpack.c.h.b16 %v4559
    %v6244 = vunpack.c.l.b16 %v4560
    %v6245 = vunpack.c.h.b16 %v4560
    %v6246 = vunpack.c.l.b16 %v4561
    %v6247 = vunpack.c.h.b16 %v4561
    %v6248 = vunpack.c.l.b16 %v4562
    %v6249 = vunpack.c.h.b16 %v4562
    %v6250 = vunpack.c.l.b16 %v4563
    %v6251 = vunpack.c.h.b16 %v4563
    %v6252 = vunpack.c.l.b16 %v4564
    %v6253 = vunpack.c.h.b16 %v4564
    %v6254 = vunpack.c.l.b16 %v4565
    %v6255 = vunpack.c.h.b16 %v4565
    %v6256 = vunpack.c.l.b16 %v4566
    %v6257 = vunpack.c.h.b16 %v4566
    %v6258 = vunpack.c.l.b16 %v4567
    %v6259 = vunpack.c.h.b16 %v4567
    %v6260 = vunpack.c.l.b16 %v4568
    %v6261 = vunpack.c.h.b16 %v4568
    %v6262 = vunpack.c.l.b16 %v4569
    %v6263 = vunpack.c.h.b16 %v4569
    %v6264 = vunpack.c.l.b16 %v4570
    %v6265 = vunpack.c.h.b16 %v4570
    %v6266 = vunpack.c.l.b16 %v4571
    %v6267 = vunpack.c.h.b16 %v4571
    %v6268 = vunpack.c.l.b16 %v4572
    %v6269 = vunpack.c.h.b16 %v4572
    %v6270 = vunpack.c.l.b16 %v4573
    %v6271 = vunpack.c.h.b16 %v4573
    %v6272 = vunpack.c.l.b16 %v4574
    %v6273 = vunpack.c.h.b16 %v4574
    %v6274 = vunpack.c.l.b16 %v4575
    %v6275 = vunpack.c.h.b16 %v4575
    %v6276 = vunpack.c.l.b16 %v4576
    %v6277 = vunpack.c.h.b16 %v4576
    %v6278 = vunpack.c.l.b16 %v4577
    %v6279 = vunpack.c.h.b16 %v4577
    %v6280 = vunpack.c.l.b16 %v4578
    %v6281 = vunpack.c.h.b16 %v4578
    %v6282 = vunpack.c.l.b16 %v4579
    %v6283 = vunpack.c.h.b16 %v4579
    %v6284 = vunpack.c.l.b16 %v4580
    %v6285 = vunpack.c.h.b16 %v4580
    %v6286 = vunpack.c.l.b16 %v4581
    %v6287 = vunpack.c.h.b16 %v4581
    %v6288 = vunpack.c.l.b16 %v4582
    %v6289 = vunpack.c.h.b16 %v4582
    %v6290 = vunpack.c.l.b16 %v4583
    %v6291 = vunpack.c.h.b16 %v4583
    %v6292 = vunpack.c.l.b16 %v4584
    %v6293 = vunpack.c.h.b16 %v4584
    %v6294 = vunpack.c.l.b16 %v4585
    %v6295 = vunpack.c.h.b16 %v4585
    %v6296 = vunpack.c.l.b16 %v4586
    %v6297 = vunpack.c.h.b16 %v4586
    %v6298 = vunpack.c.l.b16 %v4587
    %v6299 = vunpack.c.h.b16 %v4587
    %v6300 = vunpack.c.l.b16 %v4588
    %v6301 = vunpack.c.h.b16 %v4588
    %v6302 = vunpack.c.l.b16 %v4589
    %v6303 = vunpack.c.h.b16 %v4589
    %v6304 = vunpack.c.l.b16 %v4590
    %v6305 = vunpack.c.h.b16 %v4590
    %v6306 = vunpack.c.l.b16 %v4591
    %v6307 = vunpack.c.h.b16 %v4591
    %v6308 = vunpack.c.l.b16 %v4592
    %v6309 = vunpack.c.h.b16 %v4592
    %v6310 = vunpack.c.l.b16 %v4593
    %v6311 = vunpack.c.h.b16 %v4593
    %v6312 = vunpack.c.l.b16 %v4594
    %v6313 = vunpack.c.h.b16 %v4594
    %v6314 = vunpack.c.l.b16 %v4595
    %v6315 = vunpack.c.h.b16 %v4595
    %v6316 = vunpack.c.l.b16 %v4596
    %v6317 = vunpack.c.h.b16 %v4596
    %v6318 = vunpack.c.l.b16 %v4597
    %v6319 = vunpack.c.h.b16 %v4597
    %v6320 = vunpack.c.l.b16 %v4598
    %v6321 = vunpack.c.h.b16 %v4598
    %v6322 = vunpack.c.l.b16 %v4599
    %v6323 = vunpack.c.h.b16 %v4599
    %v6324 = vunpack.c.l.b16 %v4600
    %v6325 = vunpack.c.h.b16 %v4600
    %v6326 = vunpack.c.l.b16 %v4601
    %v6327 = vunpack.c.h.b16 %v4601
    %v6328 = vunpack.c.l.b16 %v4602
    %v6329 = vunpack.c.h.b16 %v4602
    %v6330 = vunpack.c.l.b16 %v4603
    %v6331 = vunpack.c.h.b16 %v4603
    %v6332 = vunpack.c.l.b16 %v4604
    %v6333 = vunpack.c.h.b16 %v4604
    %v6334 = vunpack.c.l.b16 %v4605
    %v6335 = vunpack.c.h.b16 %v4605
    %v6336 = vunpack.c.l.b16 %v4606
    %v6337 = vunpack.c.h.b16 %v4606
    %v6338 = vunpack.c.l.b16 %v4607
    %v6339 = vunpack.c.h.b16 %v4607
    %v6340 = vunpack.c.l.b16 %v4608
    %v6341 = vunpack.c.h.b16 %v4608
    %v6342 = vunpack.c.l.b16 %v4609
    %v6343 = vunpack.c.h.b16 %v4609
    %v6344 = vunpack.c.l.b16 %v4610
    %v6345 = vunpack.c.h.b16 %v4610
    %v6346 = vunpack.c.l.b16 %v4611
    %v6347 = vunpack.c.h.b16 %v4611
    %v6348 = vunpack.c.l.b16 %v4612
    %v6349 = vunpack.c.h.b16 %v4612
    %v6350 = vunpack.c.l.b16 %v4613
    %v6351 = vunpack.c.h.b16 %v4613
    %v6352 = vunpack.c.l.b16 %v4614
    %v6353 = vunpack.c.h.b16 %v4614
    %v6354 = vunpack.c.l.b16 %v4615
    %v6355 = vunpack.c.h.b16 %v4615
    %v6356 = vunpack.c.l.b16 %v4616
    %v6357 = vunpack.c.h.b16 %v4616
    %v6358 = vunpack.c.l.b16 %v4617
    %v6359 = vunpack.c.h.b16 %v4617
    %v6360 = vunpack.c.l.b16 %v4618
    %v6361 = vunpack.c.h.b16 %v4618
    %v6362 = vunpack.c.l.b16 %v4619
    %v6363 = vunpack.c.h.b16 %v4619
    %v6364 = vunpack.c.l.b16 %v4620
    %v6365 = vunpack.c.h.b16 %v4620
    %v6366 = vunpack.c.l.b16 %v4621
    %v6367 = vunpack.c.h.b16 %v4621
    %v6368 = vunpack.c.l.b16 %v4622
    %v6369 = vunpack.c.h.b16 %v4622
    %v6370 = vunpack.c.l.b16 %v4623
    %v6371 = vunpack.c.h.b16 %v4623
    %v6372 = vunpack.c.l.b16 %v4624
    %v6373 = vunpack.c.h.b16 %v4624
    %v6374 = vunpack.c.l.b16 %v4625
    %v6375 = vunpack.c.h.b16 %v4625
    %v6376 = vunpack.c.l.b16 %v4626
    %v6377 = vunpack.c.h.b16 %v4626
    %v6378 = vunpack.c.l.b16 %v4627
    %v6379 = vunpack.c.h.b16 %v4627
    %v6380 = vunpack.c.l.b16 %v4628
    %v6381 = vunpack.c.h.b16 %v4628
    %v6382 = vunpack.c.l.b16 %v4629
    %v6383 = vunpack.c.h.b16 %v4629
    %v6384 = vunpack.c.l.b16 %v4630
    %v6385 = vunpack.c.h.b16 %v4630
    %v6386 = vunpack.c.l.b16 %v4631
    %v6387 = vunpack.c.h.b16 %v4631
    %v6388 = vunpack.c.l.b16 %v4632
    %v6389 = vunpack.c.h.b16 %v4632
    %v6390 = vunpack.c.l.b16 %v4633
    %v6391 = vunpack.c.h.b16 %v4633
    %v6392 = vunpack.c.l.b16 %v4634
    %v6393 = vunpack.c.h.b16 %v4634
    %v6394 = vunpack.c.l.b16 %v4635
    %v6395 = vunpack.c.h.b16 %v4635
    %v6396 = vunpack.c.l.b16 %v4636
    %v6397 = vunpack.c.h.b16 %v4636
    %v6398 = vunpack.c.l.b16 %v4637
    %v6399 = vunpack.c.h.b16 %v4637
    %v6400 = vunpack.c.l.b16 %v4638
    %v6401 = vunpack.c.h.b16 %v4638
    %v6402 = vunpack.c.l.b16 %v4639
    %v6403 = vunpack.c.h.b16 %v4639
    %v6404 = vunpack.c.l.b16 %v4640
    %v6405 = vunpack.c.h.b16 %v4640
    %v6406 = vunpack.c.l.b16 %v4641
    %v6407 = vunpack.c.h.b16 %v4641
    %v6408 = vunpack.c.l.b16 %v4642
    %v6409 = vunpack.c.h.b16 %v4642
    %v6410 = vunpack.c.l.b16 %v4643
    %v6411 = vunpack.c.h.b16 %v4643
    %v6412 = vunpack.c.l.b16 %v4644
    %v6413 = vunpack.c.h.b16 %v4644
    %v6414 = vunpack.c.l.b16 %v4645
    %v6415 = vunpack.c.h.b16 %v4645
    %v6416 = vunpack.c.l.b16 %v4646
    %v6417 = vunpack.c.h.b16 %v4646
    %v6418 = vunpack.c.l.b16 %v4647
    %v6419 = vunpack.c.h.b16 %v4647
    %v6420 = vunpack.c.l.b16 %v4648
    %v6421 = vunpack.c.h.b16 %v4648
    %v6422 = vunpack.c.l.b16 %v4649
    %v6423 = vunpack.c.h.b16 %v4649
    %v6424 = vunpack.c.l.b16 %v4650
    %v6425 = vunpack.c.h.b16 %v4650
    %v6426 = vunpack.c.l.b16 %v4651
    %v6427 = vunpack.c.h.b16 %v4651
    %v6428 = vunpack.c.l.b16 %v4652
    %v6429 = vunpack.c.h.b16 %v4652
    %v6430 = vunpack.c.l.b16 %v4653
    %v6431 = vunpack.c.h.b16 %v4653
    %v6432 = vunpack.c.l.b16 %v4654
    %v6433 = vunpack.c.h.b16 %v4654
    %v6434 = vunpack.c.l.b16 %v4655
    %v6435 = vunpack.c.h.b16 %v4655
    %v6436 = vunpack.c.l.b16 %v4656
    %v6437 = vunpack.c.h.b16 %v4656
    %v6438 = vunpack.c.l.b16 %v4657
    %v6439 = vunpack.c.h.b16 %v4657
    %v6440 = vunpack.c.l.b16 %v4658
    %v6441 = vunpack.c.h.b16 %v4658
    %v6442 = vunpack.c.l.b16 %v4659
    %v6443 = vunpack.c.h.b16 %v4659
    %v6444 = vunpack.c.l.b16 %v4660
    %v6445 = vunpack.c.h.b16 %v4660
    %v6446 = vunpack.c.l.b16 %v4661
    %v6447 = vunpack.c.h.b16 %v4661
    %v6448 = vunpack.c.l.b16 %v4662
    %v6449 = vunpack.c.h.b16 %v4662
    %v6450 = vunpack.c.l.b16 %v4663
    %v6451 = vunpack.c.h.b16 %v4663
    %v6452 = vunpack.c.l.b16 %v4664
    %v6453 = vunpack.c.h.b16 %v4664
    %v6454 = vunpack.c.l.b16 %v4665
    %v6455 = vunpack.c.h.b16 %v4665
    %v6456 = vunpack.c.l.b16 %v4666
    %v6457 = vunpack.c.h.b16 %v4666
    %v6458 = vunpack.c.l.b16 %v4667
    %v6459 = vunpack.c.h.b16 %v4667
    %v6460 = vunpack.c.l.b16 %v4668
    %v6461 = vunpack.c.h.b16 %v4668
    %v6462 = vunpack.c.l.b16 %v4669
    %v6463 = vunpack.c.h.b16 %v4669
    %v6464 = vunpack.c.l.b16 %v4670
    %v6465 = vunpack.c.h.b16 %v4670
    %v6466 = vunpack.c.l.b16 %v4671
    %v6467 = vunpack.c.h.b16 %v4671
    %v6468 = vunpack.c.l.b16 %v4672
    %v6469 = vunpack.c.h.b16 %v4672
    %v6470 = vunpack.c.l.b16 %v4673
    %v6471 = vunpack.c.h.b16 %v4673
    %v6472 = vunpack.c.l.b16 %v4674
    %v6473 = vunpack.c.h.b16 %v4674
    %v6474 = vunpack.c.l.b16 %v4675
    %v6475 = vunpack.c.h.b16 %v4675
    %v6476 = vunpack.c.l.b16 %v4676
    %v6477 = vunpack.c.h.b16 %v4676
    %v6478 = vunpack.c.l.b16 %v4677
    %v6479 = vunpack.c.h.b16 %v4677
    %v6480 = vunpack.c.l.b16 %v4678
    %v6481 = vunpack.c.h.b16 %v4678
    %v6482 = vunpack.c.l.b16 %v4679
    %v6483 = vunpack.c.h.b16 %v4679
    %v6484 = vunpack.c.l.b16 %v4680
    %v6485 = vunpack.c.h.b16 %v4680
    %v6486 = vunpack.c.l.b16 %v4681
    %v6487 = vunpack.c.h.b16 %v4681
    %v6488 = vunpack.c.l.b16 %v4682
    %v6489 = vunpack.c.h.b16 %v4682
    %v6490 = vunpack.c.l.b16 %v4683
    %v6491 = vunpack.c.h.b16 %v4683
    %v6492 = vunpack.c.l.b16 %v4684
    %v6493 = vunpack.c.h.b16 %v4684
    %v6494 = vunpack.c.l.b16 %v4685
    %v6495 = vunpack.c.h.b16 %v4685
    %v6496 = vunpack.c.l.b16 %v4686
    %v6497 = vunpack.c.h.b16 %v4686
    %v6498 = vunpack.c.l.b16 %v4687
    %v6499 = vunpack.c.h.b16 %v4687
    %v6500 = vunpack.c.l.b16 %v4688
    %v6501 = vunpack.c.h.b16 %v4688
    %v6502 = vunpack.c.l.b16 %v4689
    %v6503 = vunpack.c.h.b16 %v4689
    %v6504 = vunpack.c.l.b16 %v4690
    %v6505 = vunpack.c.h.b16 %v4690
    %v6506 = vunpack.c.l.b16 %v4691
    %v6507 = vunpack.c.h.b16 %v4691
    %v6508 = vunpack.c.l.b16 %v4692
    %v6509 = vunpack.c.h.b16 %v4692
    %v6510 = vunpack.c.l.b16 %v4693
    %v6511 = vunpack.c.h.b16 %v4693
    %v6512 = vunpack.c.l.b16 %v4694
    %v6513 = vunpack.c.h.b16 %v4694
    %v6514 = vunpack.c.l.b16 %v4695
    %v6515 = vunpack.c.h.b16 %v4695
    %v6516 = vunpack.c.l.b16 %v4696
    %v6517 = vunpack.c.h.b16 %v4696
    %v6518 = vunpack.c.l.b16 %v4697
    %v6519 = vunpack.c.h.b16 %v4697
    %v6520 = vunpack.c.l.b16 %v4698
    %v6521 = vunpack.c.h.b16 %v4698
    %v6522 = vunpack.c.l.b16 %v4699
    %v6523 = vunpack.c.h.b16 %v4699
    %v6524 = vunpack.c.l.b16 %v4700
    %v6525 = vunpack.c.h.b16 %v4700
    %v6526 = vunpack.c.l.b16 %v4701
    %v6527 = vunpack.c.h.b16 %v4701
    %v6528 = vunpack.c.l.b16 %v4702
    %v6529 = vunpack.c.h.b16 %v4702
    %v6530 = vunpack.c.l.b16 %v4703
    %v6531 = vunpack.c.h.b16 %v4703
    %v6532 = vunpack.c.l.b16 %v4704
    %v6533 = vunpack.c.h.b16 %v4704
    %v6534 = vunpack.c.l.b16 %v4705
    %v6535 = vunpack.c.h.b16 %v4705
    %v6536 = vunpack.c.l.b16 %v4706
    %v6537 = vunpack.c.h.b16 %v4706
    %v6538 = vunpack.c.l.b16 %v4707
    %v6539 = vunpack.c.h.b16 %v4707
    %v6540 = vunpack.c.l.b16 %v4708
    %v6541 = vunpack.c.h.b16 %v4708
    %v6542 = vunpack.c.l.b16 %v4709
    %v6543 = vunpack.c.h.b16 %v4709
    %v6544 = vunpack.c.l.b16 %v4710
    %v6545 = vunpack.c.h.b16 %v4710
    %v6546 = vunpack.c.l.b16 %v4711
    %v6547 = vunpack.c.h.b16 %v4711
    %v6548 = vunpack.c.l.b16 %v4712
    %v6549 = vunpack.c.h.b16 %v4712
    %v6550 = vunpack.c.l.b16 %v4713
    %v6551 = vunpack.c.h.b16 %v4713
    %v6552 = vunpack.c.l.b16 %v4714
    %v6553 = vunpack.c.h.b16 %v4714
    %v6554 = vunpack.c.l.b16 %v4715
    %v6555 = vunpack.c.h.b16 %v4715
    %v6556 = vunpack.c.l.b16 %v4716
    %v6557 = vunpack.c.h.b16 %v4716
    %v6558 = vunpack.c.l.b16 %v4717
    %v6559 = vunpack.c.h.b16 %v4717
    %v6560 = vunpack.c.l.b16 %v4718
    %v6561 = vunpack.c.h.b16 %v4718
    %v6562 = vunpack.c.l.b16 %v4719
    %v6563 = vunpack.c.h.b16 %v4719
    %v6564 = vunpack.c.l.b16 %v4720
    %v6565 = vunpack.c.h.b16 %v4720
    %v6566 = vunpack.c.l.b16 %v4721
    %v6567 = vunpack.c.h.b16 %v4721
    %v6568 = vunpack.c.l.b16 %v4722
    %v6569 = vunpack.c.h.b16 %v4722
    %v6570 = vunpack.c.l.b16 %v4723
    %v6571 = vunpack.c.h.b16 %v4723
    %v6572 = vunpack.c.l.b16 %v4724
    %v6573 = vunpack.c.h.b16 %v4724
    %v6574 = vunpack.c.l.b16 %v4725
    %v6575 = vunpack.c.h.b16 %v4725
    %v6576 = vunpack.c.l.b16 %v4726
    %v6577 = vunpack.c.h.b16 %v4726
    %v6578 = vunpack.c.l.b16 %v4727
    %v6579 = vunpack.c.h.b16 %v4727
    %v6580 = vunpack.c.l.b16 %v4728
    %v6581 = vunpack.c.h.b16 %v4728
    %v6582 = vunpack.c.l.b16 %v4729
    %v6583 = vunpack.c.h.b16 %v4729
    %v6584 = vunpack.c.l.b16 %v4730
    %v6585 = vunpack.c.h.b16 %v4730
    %v6586 = vunpack.c.l.b16 %v4731
    %v6587 = vunpack.c.h.b16 %v4731
    %v6588 = vunpack.c.l.b16 %v4732
    %v6589 = vunpack.c.h.b16 %v4732
    %v6590 = vunpack.c.l.b16 %v4733
    %v6591 = vunpack.c.h.b16 %v4733
    %v6592 = vunpack.c.l.b16 %v4734
    %v6593 = vunpack.c.h.b16 %v4734
    %v6594 = vunpack.c.l.b16 %v4735
    %v6595 = vunpack.c.h.b16 %v4735
    %v6596 = vunpack.c.l.b16 %v4736
    %v6597 = vunpack.c.h.b16 %v4736
    %v6598 = vunpack.c.l.b16 %v4737
    %v6599 = vunpack.c.h.b16 %v4737
    %v6600 = vunpack.c.l.b16 %v4738
    %v6601 = vunpack.c.h.b16 %v4738
    %v6602 = vunpack.c.l.b16 %v4739
    %v6603 = vunpack.c.h.b16 %v4739
    %v6604 = vunpack.c.l.b16 %v4740
    %v6605 = vunpack.c.h.b16 %v4740
    %v6606 = vunpack.c.l.b16 %v4741
    %v6607 = vunpack.c.h.b16 %v4741
    %v6608 = vunpack.c.l.b16 %v4742
    %v6609 = vunpack.c.h.b16 %v4742
    %v6610 = vunpack.c.l.b16 %v4743
    %v6611 = vunpack.c.h.b16 %v4743
    %v6612 = vunpack.c.l.b16 %v4744
    %v6613 = vunpack.c.h.b16 %v4744
    %v6614 = vunpack.c.l.b16 %v4745
    %v6615 = vunpack.c.h.b16 %v4745
    %v6616 = vunpack.c.l.b16 %v4746
    %v6617 = vunpack.c.h.b16 %v4746
    %v6618 = vunpack.c.l.b16 %v4747
    %v6619 = vunpack.c.h.b16 %v4747
    %v6620 = vunpack.c.l.b16 %v4748
    %v6621 = vunpack.c.h.b16 %v4748
    %v6622 = vunpack.c.l.b16 %v4749
    %v6623 = vunpack.c.h.b16 %v4749
    %v6624 = vunpack.c.l.b16 %v4750
    %v6625 = vunpack.c.h.b16 %v4750
    %v6626 = vunpack.c.l.b16 %v4751
    %v6627 = vunpack.c.h.b16 %v4751
    %v6628 = vunpack.c.l.b16 %v4752
    %v6629 = vunpack.c.h.b16 %v4752
    %v6630 = vunpack.c.l.b16 %v4753
    %v6631 = vunpack.c.h.b16 %v4753
    %v6632 = vunpack.c.l.b16 %v4754
    %v6633 = vunpack.c.h.b16 %v4754
    %v6634 = vunpack.c.l.b16 %v4755
    %v6635 = vunpack.c.h.b16 %v4755
    %v6636 = vunpack.c.l.b16 %v4756
    %v6637 = vunpack.c.h.b16 %v4756
    %v6638 = vunpack.c.l.b16 %v4757
    %v6639 = vunpack.c.h.b16 %v4757
    %v6640 = vunpack.c.l.b16 %v4758
    %v6641 = vunpack.c.h.b16 %v4758
    %v6642 = vunpack.c.l.b16 %v4759
    %v6643 = vunpack.c.h.b16 %v4759
    %v6644 = vunpack.c.l.b16 %v4760
    %v6645 = vunpack.c.h.b16 %v4760
    %v6646 = vunpack.c.l.b16 %v4761
    %v6647 = vunpack.c.h.b16 %v4761
    %v6648 = vunpack.c.l.b16 %v4762
    %v6649 = vunpack.c.h.b16 %v4762
    %v6650 = vunpack.c.l.b16 %v4763
    %v6651 = vunpack.c.h.b16 %v4763
    %v6652 = vunpack.c.l.b16 %v4764
    %v6653 = vunpack.c.h.b16 %v4764
    %v6654 = vunpack.c.l.b16 %v4765
    %v6655 = vunpack.c.h.b16 %v4765
    %v6656 = vunpack.c.l.b16 %v4766
    %v6657 = vunpack.c.h.b16 %v4766
    %v6658 = vunpack.c.l.b16 %v4767
    %v6659 = vunpack.c.h.b16 %v4767
    %v6660 = vunpack.c.l.b16 %v4768
    %v6661 = vunpack.c.h.b16 %v4768
    %v6662 = vunpack.c.l.b16 %v4769
    %v6663 = vunpack.c.h.b16 %v4769
    %v6664 = vunpack.c.l.b16 %v4770
    %v6665 = vunpack.c.h.b16 %v4770
    %v6666 = vunpack.c.l.b16 %v4771
    %v6667 = vunpack.c.h.b16 %v4771
    %v6668 = vunpack.c.l.b16 %v4772
    %v6669 = vunpack.c.h.b16 %v4772
    %v6670 = vunpack.c.l.b16 %v4773
    %v6671 = vunpack.c.h.b16 %v4773
    %v6672 = vunpack.c.l.b16 %v4774
    %v6673 = vunpack.c.h.b16 %v4774
    %v6674 = vunpack.c.l.b16 %v4775
    %v6675 = vunpack.c.h.b16 %v4775
    %v6676 = vunpack.c.l.b16 %v4776
    %v6677 = vunpack.c.h.b16 %v4776
    %v6678 = vunpack.c.l.b16 %v4777
    %v6679 = vunpack.c.h.b16 %v4777
    %v6680 = vunpack.c.l.b16 %v4778
    %v6681 = vunpack.c.h.b16 %v4778
    %v6682 = vunpack.c.l.b16 %v4779
    %v6683 = vunpack.c.h.b16 %v4779
    %v6684 = vunpack.c.l.b16 %v4780
    %v6685 = vunpack.c.h.b16 %v4780
    %v6686 = vunpack.c.l.b16 %v4781
    %v6687 = vunpack.c.h.b16 %v4781
    %v6688 = vunpack.c.l.b16 %v4782
    %v6689 = vunpack.c.h.b16 %v4782
    %v6690 = vunpack.c.l.b16 %v4783
    %v6691 = vunpack.c.h.b16 %v4783
    %v6692 = vunpack.c.l.b16 %v4784
    %v6693 = vunpack.c.h.b16 %v4784
    %v6694 = vunpack.c.l.b16 %v4785
    %v6695 = vunpack.c.h.b16 %v4785
    %v6696 = vunpack.c.l.b16 %v4786
    %v6697 = vunpack.c.h.b16 %v4786
    %v6698 = vunpack.c.l.b16 %v4787
    %v6699 = vunpack.c.h.b16 %v4787
    %v6700 = vunpack.c.l.b16 %v4788
    %v6701 = vunpack.c.h.b16 %v4788
    %v6702 = vunpack.c.l.b16 %v4789
    %v6703 = vunpack.c.h.b16 %v4789
    %v6704 = vunpack.c.l.b16 %v4790
    %v6705 = vunpack.c.h.b16 %v4790
    %v6706 = vunpack.c.l.b16 %v4791
    %v6707 = vunpack.c.h.b16 %v4791
    %v6708 = vunpack.c.l.b16 %v4792
    %v6709 = vunpack.c.h.b16 %v4792
    %v6710 = vunpack.c.l.b16 %v4793
    %v6711 = vunpack.c.h.b16 %v4793
    %v6712 = vunpack.c.l.b16 %v4794
    %v6713 = vunpack.c.h.b16 %v4794
    %v6714 = vunpack.c.l.b16 %v4795
    %v6715 = vunpack.c.h.b16 %v4795
    %v6716 = vunpack.c.l.b16 %v4796
    %v6717 = vunpack.c.h.b16 %v4796
    %v6718 = vunpack.c.l.b16 %v4797
    %v6719 = vunpack.c.h.b16 %v4797
    %v6720 = vunpack.c.l.b16 %v4798
    %v6721 = vunpack.c.h.b16 %v4798
    %v6722 = vunpack.c.l.b16 %v4799
    %v6723 = vunpack.c.h.b16 %v4799
    %v6724 = vunpack.c.l.b16 %v4800
    %v6725 = vunpack.c.h.b16 %v4800
    %v6726 = vunpack.c.l.b16 %v4801
    %v6727 = vunpack.c.h.b16 %v4801
    %v6728 = vunpack.c.l.b16 %v4802
    %v6729 = vunpack.c.h.b16 %v4802
    %v6730 = vunpack.c.l.b16 %v4803
    %v6731 = vunpack.c.h.b16 %v4803
    %v6732 = vunpack.c.l.b16 %v4804
    %v6733 = vunpack.c.h.b16 %v4804
    %v6734 = vunpack.c.l.b16 %v4805
    %v6735 = vunpack.c.h.b16 %v4805
    %v6736 = vunpack.c.l.b16 %v4806
    %v6737 = vunpack.c.h.b16 %v4806
    %v6738 = vunpack.c.l.b16 %v4807
    %v6739 = vunpack.c.h.b16 %v4807
    %v6740 = vunpack.c.l.b16 %v4808
    %v6741 = vunpack.c.h.b16 %v4808
    %v6742 = vunpack.c.l.b16 %v4809
    %v6743 = vunpack.c.h.b16 %v4809
    %v6744 = vunpack.c.l.b16 %v4810
    %v6745 = vunpack.c.h.b16 %v4810
    %v6746 = vunpack.c.l.b16 %v4811
    %v6747 = vunpack.c.h.b16 %v4811
    %v6748 = vunpack.c.l.b16 %v4812
    %v6749 = vunpack.c.h.b16 %v4812
    %v6750 = vunpack.c.l.b16 %v4813
    %v6751 = vunpack.c.h.b16 %v4813
    %v6752 = vunpack.c.l.b16 %v4814
    %v6753 = vunpack.c.h.b16 %v4814
    %v6754 = vunpack.c.l.b16 %v4815
    %v6755 = vunpack.c.h.b16 %v4815
    %v6756 = vunpack.c.l.b16 %v4816
    %v6757 = vunpack.c.h.b16 %v4816
    %v6758 = vunpack.c.l.b16 %v4817
    %v6759 = vunpack.c.h.b16 %v4817
    %v6760 = vunpack.c.l.b16 %v4818
    %v6761 = vunpack.c.h.b16 %v4818
    %v6762 = vunpack.c.l.b16 %v4819
    %v6763 = vunpack.c.h.b16 %v4819
    %v6764 = vunpack.c.l.b16 %v4820
    %v6765 = vunpack.c.h.b16 %v4820
    %v6766 = vunpack.c.l.b16 %v4821
    %v6767 = vunpack.c.h.b16 %v4821
    %v6768 = vunpack.c.l.b16 %v4822
    %v6769 = vunpack.c.h.b16 %v4822
    %v6770 = vunpack.c.l.b16 %v4823
    %v6771 = vunpack.c.h.b16 %v4823
    %v6772 = vunpack.c.l.b16 %v4824
    %v6773 = vunpack.c.h.b16 %v4824
    %v6774 = vunpack.c.l.b16 %v4825
    %v6775 = vunpack.c.h.b16 %v4825
    %v6776 = vunpack.c.l.b16 %v4826
    %v6777 = vunpack.c.h.b16 %v4826
    %v6778 = vunpack.c.l.b16 %v4827
    %v6779 = vunpack.c.h.b16 %v4827
    %v6780 = vunpack.c.l.b16 %v4828
    %v6781 = vunpack.c.h.b16 %v4828
    %v6782 = vunpack.c.l.b16 %v4829
    %v6783 = vunpack.c.h.b16 %v4829
    %v6784 = vunpack.c.l.b16 %v4830
    %v6785 = vunpack.c.h.b16 %v4830
    %v6786 = vunpack.c.l.b16 %v4831
    %v6787 = vunpack.c.h.b16 %v4831
    %v6788 = vunpack.c.l.b16 %v4832
    %v6789 = vunpack.c.h.b16 %v4832
    %v6790 = vunpack.c.l.b16 %v4833
    %v6791 = vunpack.c.h.b16 %v4833
    %v6792 = vunpack.c.l.b16 %v4834
    %v6793 = vunpack.c.h.b16 %v4834
    %v6794 = vunpack.c.l.b16 %v4835
    %v6795 = vunpack.c.h.b16 %v4835
    %v6796 = vunpack.c.l.b16 %v4836
    %v6797 = vunpack.c.h.b16 %v4836
    %v6798 = vunpack.c.l.b16 %v4837
    %v6799 = vunpack.c.h.b16 %v4837
    %v6800 = vunpack.c.l.b16 %v4838
    %v6801 = vunpack.c.h.b16 %v4838
    %v6802 = vunpack.c.l.b16 %v4839
    %v6803 = vunpack.c.h.b16 %v4839
    %v6804 = vunpack.c.l.b16 %v4840
    %v6805 = vunpack.c.h.b16 %v4840
    %v6806 = vunpack.c.l.b16 %v4841
    %v6807 = vunpack.c.h.b16 %v4841
    %v6808 = vunpack.c.l.b16 %v4842
    %v6809 = vunpack.c.h.b16 %v4842
    %v6810 = vunpack.c.l.b16 %v4843
    %v6811 = vunpack.c.h.b16 %v4843
    %v6812 = vunpack.c.l.b16 %v4844
    %v6813 = vunpack.c.h.b16 %v4844
    %v6814 = vunpack.c.l.b16 %v4845
    %v6815 = vunpack.c.h.b16 %v4845
    %v6816 = vunpack.c.l.b16 %v4846
    %v6817 = vunpack.c.h.b16 %v4846
    %v6818 = vunpack.c.l.b16 %v4847
    %v6819 = vunpack.c.h.b16 %v4847
    %v6820 = vunpack.c.l.b16 %v4848
    %v6821 = vunpack.c.h.b16 %v4848
    %v6822 = vunpack.c.l.b16 %v4849
    %v6823 = vunpack.c.h.b16 %v4849
    %v6824 = vunpack.c.l.b16 %v4850
    %v6825 = vunpack.c.h.b16 %v4850
    %v6826 = vunpack.c.l.b16 %v4851
    %v6827 = vunpack.c.h.b16 %v4851
    %v6828 = vunpack.c.l.b16 %v4852
    %v6829 = vunpack.c.h.b16 %v4852
    %v6830 = vunpack.c.l.b16 %v4853
    %v6831 = vunpack.c.h.b16 %v4853
    %v6832 = vunpack.c.l.b16 %v4854
    %v6833 = vunpack.c.h.b16 %v4854
    %v6834 = vunpack.c.l.b16 %v4855
    %v6835 = vunpack.c.h.b16 %v4855
    %v6836 = vunpack.c.l.b16 %v4856
    %v6837 = vunpack.c.h.b16 %v4856
    %v6838 = vunpack.c.l.b16 %v4857
    %v6839 = vunpack.c.h.b16 %v4857
    %v6840 = vunpack.c.l.b16 %v4858
    %v6841 = vunpack.c.h.b16 %v4858
    %v6842 = vunpack.c.l.b16 %v4859
    %v6843 = vunpack.c.h.b16 %v4859
    %v6844 = vunpack.c.l.b16 %v4860
    %v6845 = vunpack.c.h.b16 %v4860
    %v6846 = vunpack.c.l.b16 %v4861
    %v6847 = vunpack.c.h.b16 %v4861
    %v6848 = vunpack.c.l.b16 %v4862
    %v6849 = vunpack.c.h.b16 %v4862
    %v6850 = vunpack.c.l.b16 %v4863
    %v6851 = vunpack.c.h.b16 %v4863
    %v6852 = vunpack.c.l.b16 %v4864
    %v6853 = vunpack.c.h.b16 %v4864
    %v6854 = vunpack.c.l.b16 %v4865
    %v6855 = vunpack.c.h.b16 %v4865
    %v6856 = vunpack.c.l.b16 %v4866
    %v6857 = vunpack.c.h.b16 %v4866
    %v6858 = vunpack.c.l.b16 %v4867
    %v6859 = vunpack.c.h.b16 %v4867
    %v6860 = vunpack.c.l.b16 %v4868
    %v6861 = vunpack.c.h.b16 %v4868
    %v6862 = vunpack.c.l.b16 %v4869
    %v6863 = vunpack.c.h.b16 %v4869
    %v6864 = vunpack.c.l.b16 %v4870
    %v6865 = vunpack.c.h.b16 %v4870
    %v6866 = vunpack.c.l.b16 %v4871
    %v6867 = vunpack.c.h.b16 %v4871
    %v6868 = vunpack.c.l.b16 %v4872
    %v6869 = vunpack.c.h.b16 %v4872
    %v6870 = vunpack.c.l.b16 %v4873
    %v6871 = vunpack.c.h.b16 %v4873
    %v6872 = vunpack.c.l.b16 %v4874
    %v6873 = vunpack.c.h.b16 %v4874
    %v6874 = vunpack.c.l.b16 %v4875
    %v6875 = vunpack.c.h.b16 %v4875
    %v6876 = vunpack.c.l.b16 %v4876
    %v6877 = vunpack.c.h.b16 %v4876
    %v6878 = vunpack.c.l.b16 %v4877
    %v6879 = vunpack.c.h.b16 %v4877
    %v6880 = vunpack.c.l.b16 %v4878
    %v6881 = vunpack.c.h.b16 %v4878
    %v6882 = vunpack.c.l.b16 %v4879
    %v6883 = vunpack.c.h.b16 %v4879
    %v6884 = vunpack.c.l.b16 %v4880
    %v6885 = vunpack.c.h.b16 %v4880
    %v6886 = vunpack.c.l.b16 %v4881
    %v6887 = vunpack.c.h.b16 %v4881
    %v6888 = vunpack.c.l.b16 %v4882
    %v6889 = vunpack.c.h.b16 %v4882
    %v6890 = vunpack.c.l.b16 %v4883
    %v6891 = vunpack.c.h.b16 %v4883
    %v6892 = vunpack.c.l.b16 %v4884
    %v6893 = vunpack.c.h.b16 %v4884
    %v6894 = vunpack.c.l.b16 %v4885
    %v6895 = vunpack.c.h.b16 %v4885
    %v6896 = vunpack.c.l.b16 %v4886
    %v6897 = vunpack.c.h.b16 %v4886
    %v6898 = vunpack.c.l.b16 %v4887
    %v6899 = vunpack.c.h.b16 %v4887
    %v6900 = vunpack.c.l.b16 %v4888
    %v6901 = vunpack.c.h.b16 %v4888
    %v6902 = vunpack.c.l.b16 %v4889
    %v6903 = vunpack.c.h.b16 %v4889
    %v6904 = vunpack.c.l.b16 %v4890
    %v6905 = vunpack.c.h.b16 %v4890
    %v6906 = vunpack.c.l.b16 %v4891
    %v6907 = vunpack.c.h.b16 %v4891
    %v6908 = vunpack.c.l.b16 %v4892
    %v6909 = vunpack.c.h.b16 %v4892
    %v6910 = vunpack.c.l.b16 %v4893
    %v6911 = vunpack.c.h.b16 %v4893
    %v6912 = vunpack.c.l.b16 %v4894
    %v6913 = vunpack.c.h.b16 %v4894
    %v6914 = vunpack.c.l.b16 %v4895
    %v6915 = vunpack.c.h.b16 %v4895
    %v6916 = vunpack.c.l.b16 %v4896
    %v6917 = vunpack.c.h.b16 %v4896
    %v6918 = vunpack.c.l.b16 %v4897
    %v6919 = vunpack.c.h.b16 %v4897
    %v6920 = vunpack.c.l.b16 %v4898
    %v6921 = vunpack.c.h.b16 %v4898
    %v6922 = vunpack.c.l.b16 %v4899
    %v6923 = vunpack.c.h.b16 %v4899
    %v6924 = vunpack.c.l.b16 %v4900
    %v6925 = vunpack.c.h.b16 %v4900
    %v6926 = vunpack.c.l.b16 %v4901
    %v6927 = vunpack.c.h.b16 %v4901
    %v6928 = vunpack.c.l.b16 %v4902
    %v6929 = vunpack.c.h.b16 %v4902
    %v6930 = vunpack.c.l.b16 %v4903
    %v6931 = vunpack.c.h.b16 %v4903
    %v6932 = vunpack.c.l.b16 %v4904
    %v6933 = vunpack.c.h.b16 %v4904
    %v6934 = vunpack.c.l.b16 %v4905
    %v6935 = vunpack.c.h.b16 %v4905
    %v6936 = vunpack.c.l.b16 %v4906
    %v6937 = vunpack.c.h.b16 %v4906
    %v6938 = vunpack.c.l.b16 %v4907
    %v6939 = vunpack.c.h.b16 %v4907
    %v6940 = vunpack.c.l.b16 %v4908
    %v6941 = vunpack.c.h.b16 %v4908
    %v6942 = vunpack.c.l.b16 %v4909
    %v6943 = vunpack.c.h.b16 %v4909
    %v6944 = vunpack.c.l.b16 %v4910
    %v6945 = vunpack.c.h.b16 %v4910
    %v6946 = vunpack.c.l.b16 %v4911
    %v6947 = vunpack.c.h.b16 %v4911
    %v6948 = vunpack.c.l.b16 %v4912
    %v6949 = vunpack.c.h.b16 %v4912
    %v6950 = vunpack.c.l.b16 %v4913
    %v6951 = vunpack.c.h.b16 %v4913
    %v6952 = vunpack.c.l.b16 %v4914
    %v6953 = vunpack.c.h.b16 %v4914
    %v6954 = vunpack.c.l.b16 %v4915
    %v6955 = vunpack.c.h.b16 %v4915
    %v6956 = vunpack.c.l.b16 %v4916
    %v6957 = vunpack.c.h.b16 %v4916
    %v6958 = vunpack.c.l.b16 %v4917
    %v6959 = vunpack.c.h.b16 %v4917
    %v6960 = vunpack.c.l.b16 %v4918
    %v6961 = vunpack.c.h.b16 %v4918
    %v6962 = vunpack.c.l.b16 %v4919
    %v6963 = vunpack.c.h.b16 %v4919
    %v6964 = vunpack.c.l.b16 %v4920
    %v6965 = vunpack.c.h.b16 %v4920
    %v6966 = vunpack.c.l.b16 %v4921
    %v6967 = vunpack.c.h.b16 %v4921
    %v6968 = vunpack.c.l.b16 %v4922
    %v6969 = vunpack.c.h.b16 %v4922
    %v6970 = vunpack.c.l.b16 %v4923
    %v6971 = vunpack.c.h.b16 %v4923
    %v6972 = vunpack.c.l.b16 %v4924
    %v6973 = vunpack.c.h.b16 %v4924
    %v6974 = vunpack.c.l.b16 %v4925
    %v6975 = vunpack.c.h.b16 %v4925
    %v6976 = vunpack.c.l.b16 %v4926
    %v6977 = vunpack.c.h.b16 %v4926
    %v6978 = vunpack.c.l.b16 %v4927
    %v6979 = vunpack.c.h.b16 %v4927
    %v6980 = vunpack.c.l.b16 %v4928
    %v6981 = vunpack.c.h.b16 %v4928
    %v6982 = vunpack.c.l.b16 %v4929
    %v6983 = vunpack.c.h.b16 %v4929
    %v6984 = vunpack.c.l.b16 %v4930
    %v6985 = vunpack.c.h.b16 %v4930
    %v6986 = vunpack.c.l.b16 %v4931
    %v6987 = vunpack.c.h.b16 %v4931
    %v6988 = vunpack.c.l.b16 %v4932
    %v6989 = vunpack.c.h.b16 %v4932
    %v6990 = vunpack.c.l.b16 %v4933
    %v6991 = vunpack.c.h.b16 %v4933
    %v6992 = vunpack.c.l.b16 %v4934
    %v6993 = vunpack.c.h.b16 %v4934
    %v6994 = vunpack.c.l.b16 %v4935
    %v6995 = vunpack.c.h.b16 %v4935
    %v6996 = vunpack.c.l.b16 %v4936
    %v6997 = vunpack.c.h.b16 %v4936
    %v6998 = vunpack.c.l.b16 %v4937
    %v6999 = vunpack.c.h.b16 %v4937
    %v7000 = vunpack.c.l.b16 %v4938
    %v7001 = vunpack.c.h.b16 %v4938
    %v7002 = vunpack.c.l.b16 %v4939
    %v7003 = vunpack.c.h.b16 %v4939
    %v7004 = vunpack.c.l.b16 %v4940
    %v7005 = vunpack.c.h.b16 %v4940
    %v7006 = vunpack.c.l.b16 %v4941
    %v7007 = vunpack.c.h.b16 %v4941
    %v7008 = vunpack.c.l.b16 %v4942
    %v7009 = vunpack.c.h.b16 %v4942
    %v7010 = vunpack.c.l.b16 %v4943
    %v7011 = vunpack.c.h.b16 %v4943
    %v7012 = vunpack.c.l.b16 %v4944
    %v7013 = vunpack.c.h.b16 %v4944
    %v7014 = vunpack.c.l.b16 %v4945
    %v7015 = vunpack.c.h.b16 %v4945
    %v7016 = vunpack.c.l.b16 %v4946
    %v7017 = vunpack.c.h.b16 %v4946
    %v7018 = vunpack.c.l.b16 %v4947
    %v7019 = vunpack.c.h.b16 %v4947
    %v7020 = vunpack.c.l.b16 %v4948
    %v7021 = vunpack.c.h.b16 %v4948
    %v7022 = vunpack.c.l.b16 %v4949
    %v7023 = vunpack.c.h.b16 %v4949
    %v7024 = vunpack.c.l.b16 %v4950
    %v7025 = vunpack.c.h.b16 %v4950
    %v7026 = vunpack.c.l.b16 %v4951
    %v7027 = vunpack.c.h.b16 %v4951
    %v7028 = vunpack.c.l.b16 %v4952
    %v7029 = vunpack.c.h.b16 %v4952
    %v7030 = vunpack.c.l.b16 %v4953
    %v7031 = vunpack.c.h.b16 %v4953
    %v7032 = vunpack.c.l.b16 %v4954
    %v7033 = vunpack.c.h.b16 %v4954
    %v7034 = vunpack.c.l.b16 %v4955
    %v7035 = vunpack.c.h.b16 %v4955
    %v7036 = vunpack.c.l.b16 %v4956
    %v7037 = vunpack.c.h.b16 %v4956
    %v7038 = vunpack.c.l.b16 %v4957
    %v7039 = vunpack.c.h.b16 %v4957
    %v7040 = vunpack.c.l.b16 %v4958
    %v7041 = vunpack.c.h.b16 %v4958
    %v7042 = vunpack.c.l.b16 %v4959
    %v7043 = vunpack.c.h.b16 %v4959
    %v7044 = vunpack.c.l.b16 %v4960
    %v7045 = vunpack.c.h.b16 %v4960
    %v7046 = vunpack.c.l.b16 %v4961
    %v7047 = vunpack.c.h.b16 %v4961
    %v7048 = vunpack.c.l.b16 %v4962
    %v7049 = vunpack.c.h.b16 %v4962
    %v7050 = vunpack.c.l.b16 %v4963
    %v7051 = vunpack.c.h.b16 %v4963
    %v7052 = vunpack.c.l.b16 %v4964
    %v7053 = vunpack.c.h.b16 %v4964
    %v7054 = vunpack.c.l.b16 %v4965
    %v7055 = vunpack.c.h.b16 %v4965
    %v7056 = vunpack.c.l.b16 %v4966
    %v7057 = vunpack.c.h.b16 %v4966
    %v7058 = vunpack.c.l.b16 %v4967
    %v7059 = vunpack.c.h.b16 %v4967
    %v7060 = vunpack.c.l.b16 %v4968
    %v7061 = vunpack.c.h.b16 %v4968
    %v7062 = vunpack.c.l.b16 %v4969
    %v7063 = vunpack.c.h.b16 %v4969
    %v7064 = vunpack.c.l.b16 %v4970
    %v7065 = vunpack.c.h.b16 %v4970
    %v7066 = vunpack.c.l.b16 %v4971
    %v7067 = vunpack.c.h.b16 %v4971
    %v7068 = vunpack.c.l.b16 %v4972
    %v7069 = vunpack.c.h.b16 %v4972
    %v7070 = vunpack.c.l.b16 %v4973
    %v7071 = vunpack.c.h.b16 %v4973
    %v7072 = vunpack.c.l.b16 %v4974
    %v7073 = vunpack.c.h.b16 %v4974
    %v7074 = vunpack.c.l.b16 %v4975
    %v7075 = vunpack.c.h.b16 %v4975
    %v7076 = vunpack.c.l.b16 %v4976
    %v7077 = vunpack.c.h.b16 %v4976
    %v7078 = vunpack.c.l.b16 %v4977
    %v7079 = vunpack.c.h.b16 %v4977
    %v7080 = vunpack.c.l.b16 %v4978
    %v7081 = vunpack.c.h.b16 %v4978
    %v7082 = vunpack.c.l.b16 %v4979
    %v7083 = vunpack.c.h.b16 %v4979
    %v7084 = vunpack.c.l.b16 %v4980
    %v7085 = vunpack.c.h.b16 %v4980
    %v7086 = vunpack.c.l.b16 %v4981
    %v7087 = vunpack.c.h.b16 %v4981
    %v7088 = vunpack.c.l.b16 %v4982
    %v7089 = vunpack.c.h.b16 %v4982
    %v7090 = vunpack.c.l.b16 %v4983
    %v7091 = vunpack.c.h.b16 %v4983
    %v7092 = vunpack.c.l.b16 %v4984
    %v7093 = vunpack.c.h.b16 %v4984
    %v7094 = vunpack.c.l.b16 %v4985
    %v7095 = vunpack.c.h.b16 %v4985
    %v7096 = vunpack.c.l.b16 %v4986
    %v7097 = vunpack.c.h.b16 %v4986
    %v7098 = vunpack.c.l.b16 %v4987
    %v7099 = vunpack.c.h.b16 %v4987
    %v7100 = vunpack.c.l.b16 %v4988
    %v7101 = vunpack.c.h.b16 %v4988
    %v7102 = vunpack.c.l.b16 %v4989
    %v7103 = vunpack.c.h.b16 %v4989
    %v7104 = vunpack.c.l.b16 %v4990
    %v7105 = vunpack.c.h.b16 %v4990
    %v7106 = vunpack.c.l.b16 %v4991
    %v7107 = vunpack.c.h.b16 %v4991
    %v7108 = vunpack.c.l.b16 %v4992
    %v7109 = vunpack.c.h.b16 %v4992
    %v7110 = vunpack.c.l.b16 %v4993
    %v7111 = vunpack.c.h.b16 %v4993
    %v7112 = vunpack.c.l.b16 %v4994
    %v7113 = vunpack.c.h.b16 %v4994
    %v7114 = vunpack.c.l.b16 %v4995
    %v7115 = vunpack.c.h.b16 %v4995
    %v7116 = vunpack.c.l.b16 %v4996
    %v7117 = vunpack.c.h.b16 %v4996
    %v7118 = vunpack.c.l.b16 %v4997
    %v7119 = vunpack.c.h.b16 %v4997
    %v7120 = vunpack.c.l.b16 %v4998
    %v7121 = vunpack.c.h.b16 %v4998
    %v7122 = vunpack.c.l.b16 %v4999
    %v7123 = vunpack.c.h.b16 %v4999
    %v7124 = vunpack.c.l.b16 %v5000
    %v7125 = vunpack.c.h.b16 %v5000
    %v7126 = vunpack.c.l.b16 %v5001
    %v7127 = vunpack.c.h.b16 %v5001
    %v7128 = vunpack.c.l.b16 %v5002
    %v7129 = vunpack.c.h.b16 %v5002
    %v7130 = vunpack.c.l.b16 %v5003
    %v7131 = vunpack.c.h.b16 %v5003
    %v7132 = vunpack.c.l.b16 %v5004
    %v7133 = vunpack.c.h.b16 %v5004
    %v7134 = vunpack.c.l.b16 %v5005
    %v7135 = vunpack.c.h.b16 %v5005
    %v7136 = vunpack.c.l.b16 %v5006
    %v7137 = vunpack.c.h.b16 %v5006
    %v7138 = vunpack.c.l.b16 %v5007
    %v7139 = vunpack.c.h.b16 %v5007
    %v7140 = vunpack.c.l.b16 %v5008
    %v7141 = vunpack.c.h.b16 %v5008
    %v7142 = vunpack.c.l.b16 %v5009
    %v7143 = vunpack.c.h.b16 %v5009
    %v7144 = vunpack.c.l.b16 %v5010
    %v7145 = vunpack.c.h.b16 %v5010
    %v7146 = vunpack.c.l.b16 %v5011
    %v7147 = vunpack.c.h.b16 %v5011
    %v7148 = vunpack.c.l.b16 %v5012
    %v7149 = vunpack.c.h.b16 %v5012
    %v7150 = vunpack.c.l.b16 %v5013
    %v7151 = vunpack.c.h.b16 %v5013
    %v7152 = vunpack.c.l.b16 %v5014
    %v7153 = vunpack.c.h.b16 %v5014
    %v7154 = vunpack.c.l.b16 %v5015
    %v7155 = vunpack.c.h.b16 %v5015
    %v7156 = vunpack.c.l.b16 %v5016
    %v7157 = vunpack.c.h.b16 %v5016
    %v7158 = vunpack.c.l.b16 %v5017
    %v7159 = vunpack.c.h.b16 %v5017
    %v7160 = vunpack.c.l.b16 %v5018
    %v7161 = vunpack.c.h.b16 %v5018
    %v7162 = vunpack.c.l.b16 %v5019
    %v7163 = vunpack.c.h.b16 %v5019
    %v7164 = vunpack.c.l.b16 %v5020
    %v7165 = vunpack.c.h.b16 %v5020
    %v7166 = vunpack.c.l.b16 %v5021
    %v7167 = vunpack.c.h.b16 %v5021
    %v7168 = vunpack.c.l.b16 %v5022
    %v7169 = vunpack.c.h.b16 %v5022
    %v7170 = vunpack.c.l.b16 %v5023
    %v7171 = vunpack.c.h.b16 %v5023
    %v7172 = vunpack.c.l.b16 %v5024
    %v7173 = vunpack.c.h.b16 %v5024
    %v7174 = vunpack.c.l.b16 %v5025
    %v7175 = vunpack.c.h.b16 %v5025
    %v7176 = vunpack.c.l.b16 %v5026
    %v7177 = vunpack.c.h.b16 %v5026
    %v7178 = vunpack.c.l.b16 %v5027
    %v7179 = vunpack.c.h.b16 %v5027
    %v7180 = vunpack.c.l.b16 %v5028
    %v7181 = vunpack.c.h.b16 %v5028
    %v7182 = vunpack.c.l.b16 %v5029
    %v7183 = vunpack.c.h.b16 %v5029
    %v7184 = vunpack.c.l.b16 %v5030
    %v7185 = vunpack.c.h.b16 %v5030
    %v7186 = vunpack.c.l.b16 %v5031
    %v7187 = vunpack.c.h.b16 %v5031
    %v7188 = vunpack.c.l.b16 %v5032
    %v7189 = vunpack.c.h.b16 %v5032
    %v7190 = vunpack.c.l.b16 %v5033
    %v7191 = vunpack.c.h.b16 %v5033
    %v7192 = vunpack.c.l.b16 %v5034
    %v7193 = vunpack.c.h.b16 %v5034
    %v7194 = vunpack.c.l.b16 %v5035
    %v7195 = vunpack.c.h.b16 %v5035
    %v7196 = vunpack.c.l.b16 %v5036
    %v7197 = vunpack.c.h.b16 %v5036
    %v7198 = vunpack.c.l.b16 %v5037
    %v7199 = vunpack.c.h.b16 %v5037
    %v7200 = vunpack.c.l.b16 %v5038
    %v7201 = vunpack.c.h.b16 %v5038
    %v7202 = vunpack.c.l.b16 %v5039
    %v7203 = vunpack.c.h.b16 %v5039
    %v7204 = vunpack.c.l.b16 %v5040
    %v7205 = vunpack.c.h.b16 %v5040
    %v7206 = vunpack.c.l.b16 %v5041
    %v7207 = vunpack.c.h.b16 %v5041
    %v7208 = vunpack.c.l.b16 %v5042
    %v7209 = vunpack.c.h.b16 %v5042
    %v7210 = vunpack.c.l.b16 %v5043
    %v7211 = vunpack.c.h.b16 %v5043
    %v7212 = vunpack.c.l.b16 %v5044
    %v7213 = vunpack.c.h.b16 %v5044
    %v7214 = vunpack.c.l.b16 %v5045
    %v7215 = vunpack.c.h.b16 %v5045
    %v7216 = vunpack.c.l.b16 %v5046
    %v7217 = vunpack.c.h.b16 %v5046
    %v7218 = vunpack.c.l.b16 %v5047
    %v7219 = vunpack.c.h.b16 %v5047
    %v7220 = vunpack.c.l.b16 %v5048
    %v7221 = vunpack.c.h.b16 %v5048
    %v7222 = vunpack.c.l.b16 %v5049
    %v7223 = vunpack.c.h.b16 %v5049
    %v7224 = vunpack.c.l.b16 %v5050
    %v7225 = vunpack.c.h.b16 %v5050
    %v7226 = vunpack.c.l.b16 %v5051
    %v7227 = vunpack.c.h.b16 %v5051
    %v7228 = vunpack.c.l.b16 %v5052
    %v7229 = vunpack.c.h.b16 %v5052
    %v7230 = vunpack.c.l.b16 %v5053
    %v7231 = vunpack.c.h.b16 %v5053
    %v7232 = vunpack.c.l.b16 %v5054
    %v7233 = vunpack.c.h.b16 %v5054
    %v7234 = vunpack.c.l.b16 %v5055
    %v7235 = vunpack.c.h.b16 %v5055
    %v7236 = vunpack.c.l.b16 %v5056
    %v7237 = vunpack.c.h.b16 %v5056
    %v7238 = vunpack.c.l.b16 %v5057
    %v7239 = vunpack.c.h.b16 %v5057
    %v7240 = vunpack.c.l.b16 %v5058
    %v7241 = vunpack.c.h.b16 %v5058
    %v7242 = vunpack.c.l.b16 %v5059
    %v7243 = vunpack.c.h.b16 %v5059
    %v7244 = vunpack.c.l.b16 %v5060
    %v7245 = vunpack.c.h.b16 %v5060
    %v7246 = vunpack.c.l.b16 %v5061
    %v7247 = vunpack.c.h.b16 %v5061
    %v7248 = vunpack.c.l.b16 %v5062
    %v7249 = vunpack.c.h.b16 %v5062
    %v7250 = vunpack.c.l.b16 %v5063
    %v7251 = vunpack.c.h.b16 %v5063
    %v7252 = vunpack.c.l.b16 %v5064
    %v7253 = vunpack.c.h.b16 %v5064
    %v7254 = vunpack.c.l.b16 %v5065
    %v7255 = vunpack.c.h.b16 %v5065
    %v7256 = vunpack.c.l.b16 %v5066
    %v7257 = vunpack.c.h.b16 %v5066
    %v7258 = vunpack.c.l.b16 %v5067
    %v7259 = vunpack.c.h.b16 %v5067
    %v7260 = vunpack.c.l.b16 %v5068
    %v7261 = vunpack.c.h.b16 %v5068
    %v7262 = vunpack.c.l.b16 %v5069
    %v7263 = vunpack.c.h.b16 %v5069
    %v7264 = vunpack.c.l.b16 %v5070
    %v7265 = vunpack.c.h.b16 %v5070
    %v7266 = vunpack.c.l.b16 %v5071
    %v7267 = vunpack.c.h.b16 %v5071
    %v7268 = vunpack.c.l.b16 %v5072
    %v7269 = vunpack.c.h.b16 %v5072
    %v7270 = vunpack.c.l.b16 %v5073
    %v7271 = vunpack.c.h.b16 %v5073
    %v7272 = vunpack.c.l.b16 %v5074
    %v7273 = vunpack.c.h.b16 %v5074
    %v7274 = vunpack.c.l.b16 %v5075
    %v7275 = vunpack.c.h.b16 %v5075
    %v7276 = vunpack.c.l.b16 %v5076
    %v7277 = vunpack.c.h.b16 %v5076
    %v7278 = vunpack.c.l.b16 %v5077
    %v7279 = vunpack.c.h.b16 %v5077
    %v7280 = vunpack.c.l.b16 %v5078
    %v7281 = vunpack.c.h.b16 %v5078
    %v7282 = vunpack.c.l.b16 %v5079
    %v7283 = vunpack.c.h.b16 %v5079
    %v7284 = vunpack.c.l.b16 %v5080
    %v7285 = vunpack.c.h.b16 %v5080
    %v7286 = vunpack.c.l.b16 %v5081
    %v7287 = vunpack.c.h.b16 %v5081
    %v7288 = vunpack.c.l.b16 %v5082
    %v7289 = vunpack.c.h.b16 %v5082
    %v7290 = vunpack.c.l.b16 %v5083
    %v7291 = vunpack.c.h.b16 %v5083
    %v7292 = vunpack.c.l.b16 %v5084
    %v7293 = vunpack.c.h.b16 %v5084
    %v7294 = vunpack.c.l.b16 %v5085
    %v7295 = vunpack.c.h.b16 %v5085
    %v7296 = vunpack.c.l.b16 %v5086
    %v7297 = vunpack.c.h.b16 %v5086
    %v7298 = vunpack.c.l.b16 %v5087
    %v7299 = vunpack.c.h.b16 %v5087
    %v7300 = vunpack.c.l.b16 %v5088
    %v7301 = vunpack.c.h.b16 %v5088
    %v7302 = vunpack.c.l.b16 %v5089
    %v7303 = vunpack.c.h.b16 %v5089
    %v7304 = vunpack.c.l.b16 %v5090
    %v7305 = vunpack.c.h.b16 %v5090
    %v7306 = vunpack.c.l.b16 %v5091
    %v7307 = vunpack.c.h.b16 %v5091
    %v7308 = vunpack.c.l.b16 %v5092
    %v7309 = vunpack.c.h.b16 %v5092
    %v7310 = vunpack.c.l.b16 %v5093
    %v7311 = vunpack.c.h.b16 %v5093
    %v7312 = vunpack.c.l.b16 %v5094
    %v7313 = vunpack.c.h.b16 %v5094
    %v7314 = vunpack.c.l.b16 %v5095
    %v7315 = vunpack.c.h.b16 %v5095
    %v7316 = vunpack.c.l.b16 %v5096
    %v7317 = vunpack.c.h.b16 %v5096
    %v7318 = vunpack.c.l.b16 %v5097
    %v7319 = vunpack.c.h.b16 %v5097
    %v7320 = vunpack.c.l.b16 %v5098
    %v7321 = vunpack.c.h.b16 %v5098
    %v7322 = vunpack.c.l.b16 %v5099
    %v7323 = vunpack.c.h.b16 %v5099
    %v7324 = vunpack.c.l.b16 %v5100
    %v7325 = vunpack.c.h.b16 %v5100
    %v7326 = vunpack.c.l.b16 %v5101
    %v7327 = vunpack.c.h.b16 %v5101
    %v7328 = vunpack.c.l.b16 %v5102
    %v7329 = vunpack.c.h.b16 %v5102
    %v7330 = vunpack.c.l.b16 %v5103
    %v7331 = vunpack.c.h.b16 %v5103
    %v7332 = vunpack.c.l.b16 %v5104
    %v7333 = vunpack.c.h.b16 %v5104
    %v7334 = vunpack.c.l.b16 %v5105
    %v7335 = vunpack.c.h.b16 %v5105
    %v7336 = vunpack.c.l.b16 %v5106
    %v7337 = vunpack.c.h.b16 %v5106
    %v7338 = vunpack.c.l.b16 %v5107
    %v7339 = vunpack.c.h.b16 %v5107
    %v7340 = vunpack.c.l.b16 %v5108
    %v7341 = vunpack.c.h.b16 %v5108
    %v7342 = vunpack.c.l.b16 %v5109
    %v7343 = vunpack.c.h.b16 %v5109
    %v7344 = vunpack.c.l.b16 %v5110
    %v7345 = vunpack.c.h.b16 %v5110
    %v7346 = vunpack.c.l.b16 %v5111
    %v7347 = vunpack.c.h.b16 %v5111
    %v7348 = vunpack.c.l.b16 %v5112
    %v7349 = vunpack.c.h.b16 %v5112
    %v7350 = vunpack.c.l.b16 %v5113
    %v7351 = vunpack.c.h.b16 %v5113
    %v7352 = vunpack.c.l.b16 %v5114
    %v7353 = vunpack.c.h.b16 %v5114
    %v7354 = vunpack.c.l.b16 %v5115
    %v7355 = vunpack.c.h.b16 %v5115
    %v7356 = vunpack.c.l.b16 %v5116
    %v7357 = vunpack.c.h.b16 %v5116
    %v7358 = vunpack.c.l.b16 %v5117
    %v7359 = vunpack.c.h.b16 %v5117
    %v7360 = vunpack.c.l.b16 %v5118
    %v7361 = vunpack.c.h.b16 %v5118
    %v7362 = vunpack.c.l.b16 %v5119
    %v7363 = vunpack.c.h.b16 %v5119
    %v7364 = vunpack.c.l.b16 %v5120
    %v7365 = vunpack.c.h.b16 %v5120
    %v7366 = vunpack.c.l.b16 %v5121
    %v7367 = vunpack.c.h.b16 %v5121
    %v7368 = vunpack.c.l.b16 %v5122
    %v7369 = vunpack.c.h.b16 %v5122
    %v7370 = vunpack.c.l.b16 %v5123
    %v7371 = vunpack.c.h.b16 %v5123
    %v7372 = vunpack.c.l.b16 %v5124
    %v7373 = vunpack.c.h.b16 %v5124
    %v7374 = vunpack.c.l.b16 %v5125
    %v7375 = vunpack.c.h.b16 %v5125
    %v7376 = vunpack.c.l.b16 %v5126
    %v7377 = vunpack.c.h.b16 %v5126
    %v7378 = vunpack.c.l.b16 %v5127
    %v7379 = vunpack.c.h.b16 %v5127
    %v7380 = vunpack.c.l.b16 %v5128
    %v7381 = vunpack.c.h.b16 %v5128
    %v7382 = vunpack.c.l.b16 %v5129
    %v7383 = vunpack.c.h.b16 %v5129
    %v7384 = vunpack.c.l.b16 %v5130
    %v7385 = vunpack.c.h.b16 %v5130
    %v7386 = vunpack.c.l.b16 %v5131
    %v7387 = vunpack.c.h.b16 %v5131
    %v7388 = vunpack.c.l.b16 %v5132
    %v7389 = vunpack.c.h.b16 %v5132
    %v7390 = vunpack.c.l.b16 %v5133
    %v7391 = vunpack.c.h.b16 %v5133
    %v7392 = vunpack.c.l.b16 %v5134
    %v7393 = vunpack.c.h.b16 %v5134
    %v7394 = vunpack.c.l.b16 %v5135
    %v7395 = vunpack.c.h.b16 %v5135
    %v7396 = vunpack.c.l.b16 %v5136
    %v7397 = vunpack.c.h.b16 %v5136
    %v7398 = vunpack.c.l.b16 %v5137
    %v7399 = vunpack.c.h.b16 %v5137
    %v7400 = vunpack.c.l.b16 %v5138
    %v7401 = vunpack.c.h.b16 %v5138
    %v7402 = vunpack.c.l.b16 %v5139
    %v7403 = vunpack.c.h.b16 %v5139
    %v7404 = vunpack.c.l.b16 %v5140
    %v7405 = vunpack.c.h.b16 %v5140
    %v7406 = vunpack.c.l.b16 %v5141
    %v7407 = vunpack.c.h.b16 %v5141
    %v7408 = vunpack.c.l.b16 %v5142
    %v7409 = vunpack.c.h.b16 %v5142
    %v7410 = vunpack.c.l.b16 %v5143
    %v7411 = vunpack.c.h.b16 %v5143
    %v7412 = vunpack.c.l.b16 %v5144
    %v7413 = vunpack.c.h.b16 %v5144
    %v7414 = vunpack.c.l.b16 %v5145
    %v7415 = vunpack.c.h.b16 %v5145
    %v7416 = vunpack.c.l.b16 %v5146
    %v7417 = vunpack.c.h.b16 %v5146
    %v7418 = vunpack.c.l.b16 %v5147
    %v7419 = vunpack.c.h.b16 %v5147
    %v7420 = vunpack.c.l.b16 %v5148
    %v7421 = vunpack.c.h.b16 %v5148
    %v7422 = vunpack.c.l.b16 %v5149
    %v7423 = vunpack.c.h.b16 %v5149
    %v7424 = vunpack.c.l.b16 %v5150
    %v7425 = vunpack.c.h.b16 %v5150
    %v7426 = vunpack.c.l.b16 %v5151
    %v7427 = vunpack.c.h.b16 %v5151
    %v7428 = vunpack.c.l.b16 %v5152
    %v7429 = vunpack.c.h.b16 %v5152
    %v7430 = vunpack.c.l.b16 %v5153
    %v7431 = vunpack.c.h.b16 %v5153
    %v7432 = vunpack.c.l.b16 %v5154
    %v7433 = vunpack.c.h.b16 %v5154
    %v7434 = vunpack.c.l.b16 %v5155
    %v7435 = vunpack.c.h.b16 %v5155
    %v7436 = vunpack.c.l.b16 %v5156
    %v7437 = vunpack.c.h.b16 %v5156
    %v7438 = vunpack.c.l.b16 %v5157
    %v7439 = vunpack.c.h.b16 %v5157
    %v7440 = vunpack.c.l.b16 %v5158
    %v7441 = vunpack.c.h.b16 %v5158
    %v7442 = vunpack.c.l.b16 %v5159
    %v7443 = vunpack.c.h.b16 %v5159
    %v7444 = vunpack.c.l.b16 %v5160
    %v7445 = vunpack.c.h.b16 %v5160
    %v7446 = vunpack.c.l.b16 %v5161
    %v7447 = vunpack.c.h.b16 %v5161
    %v7448 = vunpack.c.l.b16 %v5162
    %v7449 = vunpack.c.h.b16 %v5162
    %v7450 = vunpack.c.l.b16 %v5163
    %v7451 = vunpack.c.h.b16 %v5163
    %v7452 = vunpack.c.l.b16 %v5164
    %v7453 = vunpack.c.h.b16 %v5164
    %v7454 = vunpack.c.l.b16 %v5165
    %v7455 = vunpack.c.h.b16 %v5165
    %v7456 = vunpack.c.l.b16 %v5166
    %v7457 = vunpack.c.h.b16 %v5166
    %v7458 = vunpack.c.l.b16 %v5167
    %v7459 = vunpack.c.h.b16 %v5167
    %v7460 = vunpack.c.l.b16 %v5168
    %v7461 = vunpack.c.h.b16 %v5168
    %v7462 = vunpack.c.l.b16 %v5169
    %v7463 = vunpack.c.h.b16 %v5169
    %v7464 = vunpack.c.l.b16 %v5170
    %v7465 = vunpack.c.h.b16 %v5170
    %v7466 = vunpack.c.l.b16 %v5171
    %v7467 = vunpack.c.h.b16 %v5171
    %v7468 = vunpack.c.l.b16 %v5172
    %v7469 = vunpack.c.h.b16 %v5172
    %v7470 = vunpack.c.l.b16 %v5173
    %v7471 = vunpack.c.h.b16 %v5173
    %v7472 = vunpack.c.l.b16 %v5174
    %v7473 = vunpack.c.h.b16 %v5174
    %v7474 = vunpack.c.l.b16 %v5175
    %v7475 = vunpack.c.h.b16 %v5175
    %v7476 = vunpack.c.l.b16 %v5176
    %v7477 = vunpack.c.h.b16 %v5176
    %v7478 = vunpack.c.l.b16 %v5177
    %v7479 = vunpack.c.h.b16 %v5177
    %v7480 = vunpack.c.l.b16 %v5178
    %v7481 = vunpack.c.h.b16 %v5178
    %v7482 = vunpack.c.l.b16 %v5179
    %v7483 = vunpack.c.h.b16 %v5179
    %v7484 = vunpack.c.l.b16 %v5180
    %v7485 = vunpack.c.h.b16 %v5180
    %v7486 = vunpack.c.l.b16 %v5181
    %v7487 = vunpack.c.h.b16 %v5181
    %v7488 = vunpack.c.l.b16 %v5182
    %v7489 = vunpack.c.h.b16 %v5182
    %v7490 = vunpack.c.l.b16 %v5183
    %v7491 = vunpack.c.h.b16 %v5183
    %v7492 = vunpack.c.l.b16 %v5184
    %v7493 = vunpack.c.h.b16 %v5184
    %v7494 = vunpack.c.l.b16 %v5185
    %v7495 = vunpack.c.h.b16 %v5185
    %v7496 = vunpack.c.l.b16 %v5186
    %v7497 = vunpack.c.h.b16 %v5186
    %v7498 = vunpack.c.l.b16 %v5187
    %v7499 = vunpack.c.h.b16 %v5187
    %v7500 = vunpack.c.l.b16 %v5188
    %v7501 = vunpack.c.h.b16 %v5188
    %v7502 = vunpack.c.l.b16 %v5189
    %v7503 = vunpack.c.h.b16 %v5189
    %v7504 = vunpack.c.l.b16 %v5190
    %v7505 = vunpack.c.h.b16 %v5190
    %v7506 = vunpack.c.l.b16 %v5191
    %v7507 = vunpack.c.h.b16 %v5191
    %v7508 = vunpack.c.l.b16 %v5192
    %v7509 = vunpack.c.h.b16 %v5192
    %v7510 = vunpack.c.l.b16 %v5193
    %v7511 = vunpack.c.h.b16 %v5193
    %v7512 = vunpack.c.l.b16 %v5194
    %v7513 = vunpack.c.h.b16 %v5194
    %v7514 = vunpack.c.l.b16 %v5195
    %v7515 = vunpack.c.h.b16 %v5195
    %v7516 = vunpack.c.l.b16 %v5196
    %v7517 = vunpack.c.h.b16 %v5196
    %v7518 = vunpack.c.l.b16 %v5197
    %v7519 = vunpack.c.h.b16 %v5197
    %v7520 = vunpack.c.l.b16 %v5198
    %v7521 = vunpack.c.h.b16 %v5198
    %v7522 = vunpack.c.l.b16 %v5199
    %v7523 = vunpack.c.h.b16 %v5199
    %v7524 = vunpack.c.l.b16 %v5200
    %v7525 = vunpack.c.h.b16 %v5200
    %v7526 = vunpack.c.l.b16 %v5201
    %v7527 = vunpack.c.h.b16 %v5201
    %v7528 = vunpack.c.l.b16 %v5202
    %v7529 = vunpack.c.h.b16 %v5202
    %v7530 = vunpack.c.l.b16 %v5203
    %v7531 = vunpack.c.h.b16 %v5203
    %v7532 = vunpack.c.l.b16 %v5204
    %v7533 = vunpack.c.h.b16 %v5204
    %v7534 = vunpack.c.l.b16 %v5205
    %v7535 = vunpack.c.h.b16 %v5205
    %v7536 = vunpack.c.l.b16 %v5206
    %v7537 = vunpack.c.h.b16 %v5206
    %v7538 = vunpack.c.l.b16 %v5207
    %v7539 = vunpack.c.h.b16 %v5207
    %v7540 = vunpack.c.l.b16 %v5208
    %v7541 = vunpack.c.h.b16 %v5208
    %v7542 = vunpack.c.l.b16 %v5209
    %v7543 = vunpack.c.h.b16 %v5209
    %v7544 = vunpack.c.l.b16 %v5210
    %v7545 = vunpack.c.h.b16 %v5210
    %v7546 = vunpack.c.l.b16 %v5211
    %v7547 = vunpack.c.h.b16 %v5211
    %v7548 = vunpack.c.l.b16 %v5212
    %v7549 = vunpack.c.h.b16 %v5212
    %v7550 = vunpack.c.l.b16 %v5213
    %v7551 = vunpack.c.h.b16 %v5213
    %v7552 = vunpack.c.l.b16 %v5214
    %v7553 = vunpack.c.h.b16 %v5214
    %v7554 = vunpack.c.l.b16 %v5215
    %v7555 = vunpack.c.h.b16 %v5215
    %v7556 = vunpack.c.l.b16 %v5216
    %v7557 = vunpack.c.h.b16 %v5216
    %v7558 = vunpack.c.l.b16 %v5217
    %v7559 = vunpack.c.h.b16 %v5217
    %v7560 = vunpack.c.l.b16 %v5218
    %v7561 = vunpack.c.h.b16 %v5218
    %v7562 = vunpack.c.l.b16 %v5219
    %v7563 = vunpack.c.h.b16 %v5219
    %v7564 = vunpack.c.l.b16 %v5220
    %v7565 = vunpack.c.h.b16 %v5220
    %v7566 = vunpack.c.l.b16 %v5221
    %v7567 = vunpack.c.h.b16 %v5221
    %v7568 = vpack.c.b16 %v6040, %v6032
    %v7569 = vpack.c.b16 %v6041, %v6033
    %v7570 = vpack.c.b16 %v6042, %v6034
    %v7571 = vpack.c.b16 %v6043, %v6035
    %v7572 = vpack.c.b16 %v6044, %v6036
    %v7573 = vpack.c.b16 %v6045, %v6037
    %v7574 = vpack.c.b16 %v6046, %v6038
    %v7575 = vpack.c.b16 %v6047, %v6039
    %v7576 = vpack.c.b16 %v6056, %v6048
    %v7577 = vpack.c.b16 %v6057, %v6049
    %v7578 = vpack.c.b16 %v6058, %v6050
    %v7579 = vpack.c.b16 %v6059, %v6051
    %v7580 = vpack.c.b16 %v6060, %v6052
    %v7581 = vpack.c.b16 %v6061, %v6053
    %v7582 = vpack.c.b16 %v6062, %v6054
    %v7583 = vpack.c.b16 %v6063, %v6055
    %v7584 = vpack.c.b16 %v6072, %v6064
    %v7585 = vpack.c.b16 %v6073, %v6065
    %v7586 = vpack.c.b16 %v6074, %v6066
    %v7587 = vpack.c.b16 %v6075, %v6067
    %v7588 = vpack.c.b16 %v6076, %v6068
    %v7589 = vpack.c.b16 %v6077, %v6069
    %v7590 = vpack.c.b16 %v6078, %v6070
    %v7591 = vpack.c.b16 %v6079, %v6071
    %v7592 = vpack.c.b16 %v6088, %v6080
    %v7593 = vpack.c.b16 %v6089, %v6081
    %v7594 = vpack.c.b16 %v6090, %v6082
    %v7595 = vpack.c.b16 %v6091, %v6083
    %v7596 = vpack.c.b16 %v6092, %v6084
    %v7597 = vpack.c.b16 %v6093, %v6085
    %v7598 = vpack.c.b16 %v6094, %v6086
    %v7599 = vpack.c.b16 %v6095, %v6087
    %v7600 = vpack.c.b16 %v6104, %v6096
    %v7601 = vpack.c.b16 %v6105, %v6097
    %v7602 = vpack.c.b16 %v6106, %v6098
    %v7603 = vpack.c.b16 %v6107, %v6099
    %v7604 = vpack.c.b16 %v6108, %v6100
    %v7605 = vpack.c.b16 %v6109, %v6101
    %v7606 = vpack.c.b16 %v6110, %v6102
    %v7607 = vpack.c.b16 %v6111, %v6103
    %v7608 = vpack.c.b16 %v6120, %v6112
    %v7609 = vpack.c.b16 %v6121, %v6113
    %v7610 = vpack.c.b16 %v6122, %v6114
    %v7611 = vpack.c.b16 %v6123, %v6115
    %v7612 = vpack.c.b16 %v6124, %v6116
    %v7613 = vpack.c.b16 %v6125, %v6117
    %v7614 = vpack.c.b16 %v6126, %v6118
    %v7615 = vpack.c.b16 %v6127, %v6119
    %v7616 = vpack.c.b16 %v6136, %v6128
    %v7617 = vpack.c.b16 %v6137, %v6129
    %v7618 = vpack.c.b16 %v6138, %v6130
    %v7619 = vpack.c.b16 %v6139, %v6131
    %v7620 = vpack.c.b16 %v6140, %v6132
    %v7621 = vpack.c.b16 %v6141, %v6133
    %v7622 = vpack.c.b16 %v6142, %v6134
    %v7623 = vpack.c.b16 %v6143, %v6135
    %v7624 = vpack.c.b16 %v6152, %v6144
    %v7625 = vpack.c.b16 %v6153, %v6145
    %v7626 = vpack.c.b16 %v6154, %v6146
    %v7627 = vpack.c.b16 %v6155, %v6147
    %v7628 = vpack.c.b16 %v6156, %v6148
    %v7629 = vpack.c.b16 %v6157, %v6149
    %v7630 = vpack.c.b16 %v6158, %v6150
    %v7631 = vpack.c.b16 %v6159, %v6151
    %v7632 = vpack.c.b16 %v6168, %v6160
    %v7633 = vpack.c.b16 %v6169, %v6161
    %v7634 = vpack.c.b16 %v6170, %v6162
    %v7635 = vpack.c.b16 %v6171, %v6163
    %v7636 = vpack.c.b16 %v6172, %v6164
    %v7637 = vpack.c.b16 %v6173, %v6165
    %v7638 = vpack.c.b16 %v6174, %v6166
    %v7639 = vpack.c.b16 %v6175, %v6167
    %v7640 = vpack.c.b16 %v6184, %v6176
    %v7641 = vpack.c.b16 %v6185, %v6177
    %v7642 = vpack.c.b16 %v6186, %v6178
    %v7643 = vpack.c.b16 %v6187, %v6179
    %v7644 = vpack.c.b16 %v6188, %v6180
    %v7645 = vpack.c.b16 %v6189, %v6181
    %v7646 = vpack.c.b16 %v6190, %v6182
    %v7647 = vpack.c.b16 %v6191, %v6183
    %v7648 = vpack.c.b16 %v6200, %v6192
    %v7649 = vpack.c.b16 %v6201, %v6193
    %v7650 = vpack.c.b16 %v6202, %v6194
    %v7651 = vpack.c.b16 %v6203, %v6195
    %v7652 = vpack.c.b16 %v6204, %v6196
    %v7653 = vpack.c.b16 %v6205, %v6197
    %v7654 = vpack.c.b16 %v6206, %v6198
    %v7655 = vpack.c.b16 %v6207, %v6199
    %v7656 = vpack.c.b16 %v6216, %v6208
    %v7657 = vpack.c.b16 %v6217, %v6209
    %v7658 = vpack.c.b16 %v6218, %v6210
    %v7659 = vpack.c.b16 %v6219, %v6211
    %v7660 = vpack.c.b16 %v6220, %v6212
    %v7661 = vpack.c.b16 %v6221, %v6213
    %v7662 = vpack.c.b16 %v6222, %v6214
    %v7663 = vpack.c.b16 %v6223, %v6215
    %v7664 = vpack.c.b16 %v6232, %v6224
    %v7665 = vpack.c.b16 %v6233, %v6225
    %v7666 = vpack.c.b16 %v6234, %v6226
    %v7667 = vpack.c.b16 %v6235, %v6227
    %v7668 = vpack.c.b16 %v6236, %v6228
    %v7669 = vpack.c.b16 %v6237, %v6229
    %v7670 = vpack.c.b16 %v6238, %v6230
    %v7671 = vpack.c.b16 %v6239, %v6231
    %v7672 = vpack.c.b16 %v6248, %v6240
    %v7673 = vpack.c.b16 %v6249, %v6241
    %v7674 = vpack.c.b16 %v6250, %v6242
    %v7675 = vpack.c.b16 %v6251, %v6243
    %v7676 = vpack.c.b16 %v6252, %v6244
    %v7677 = vpack.c.b16 %v6253, %v6245
    %v7678 = vpack.c.b16 %v6254, %v6246
    %v7679 = vpack.c.b16 %v6255, %v6247
    %v7680 = vpack.c.b16 %v6264, %v6256
    %v7681 = vpack.c.b16 %v6265, %v6257
    %v7682 = vpack.c.b16 %v6266, %v6258
    %v7683 = vpack.c.b16 %v6267, %v6259
    %v7684 = vpack.c.b16 %v6268, %v6260
    %v7685 = vpack.c.b16 %v6269, %v6261
    %v7686 = vpack.c.b16 %v6270, %v6262
    %v7687 = vpack.c.b16 %v6271, %v6263
    %v7688 = vpack.c.b16 %v6280, %v6272
    %v7689 = vpack.c.b16 %v6281, %v6273
    %v7690 = vpack.c.b16 %v6282, %v6274
    %v7691 = vpack.c.b16 %v6283, %v6275
    %v7692 = vpack.c.b16 %v6284, %v6276
    %v7693 = vpack.c.b16 %v6285, %v6277
    %v7694 = vpack.c.b16 %v6286, %v6278
    %v7695 = vpack.c.b16 %v6287, %v6279
    %v7696 = vpack.c.b16 %v6296, %v6288
    %v7697 = vpack.c.b16 %v6297, %v6289
    %v7698 = vpack.c.b16 %v6298, %v6290
    %v7699 = vpack.c.b16 %v6299, %v6291
    %v7700 = vpack.c.b16 %v6300, %v6292
    %v7701 = vpack.c.b16 %v6301, %v6293
    %v7702 = vpack.c.b16 %v6302, %v6294
    %v7703 = vpack.c.b16 %v6303, %v6295
    %v7704 = vpack.c.b16 %v6312, %v6304
    %v7705 = vpack.c.b16 %v6313, %v6305
    %v7706 = vpack.c.b16 %v6314, %v6306
    %v7707 = vpack.c.b16 %v6315, %v6307
    %v7708 = vpack.c.b16 %v6316, %v6308
    %v7709 = vpack.c.b16 %v6317, %v6309
    %v7710 = vpack.c.b16 %v6318, %v6310
    %v7711 = vpack.c.b16 %v6319, %v6311
    %v7712 = vpack.c.b16 %v6328, %v6320
    %v7713 = vpack.c.b16 %v6329, %v6321
    %v7714 = vpack.c.b16 %v6330, %v6322
    %v7715 = vpack.c.b16 %v6331, %v6323
    %v7716 = vpack.c.b16 %v6332, %v6324
    %v7717 = vpack.c.b16 %v6333, %v6325
    %v7718 = vpack.c.b16 %v6334, %v6326
    %v7719 = vpack.c.b16 %v6335, %v6327
    %v7720 = vpack.c.b16 %v6344, %v6336
    %v7721 = vpack.c.b16 %v6345, %v6337
    %v7722 = vpack.c.b16 %v6346, %v6338
    %v7723 = vpack.c.b16 %v6347, %v6339
    %v7724 = vpack.c.b16 %v6348, %v6340
    %v7725 = vpack.c.b16 %v6349, %v6341
    %v7726 = vpack.c.b16 %v6350, %v6342
    %v7727 = vpack.c.b16 %v6351, %v6343
    %v7728 = vpack.c.b16 %v6360, %v6352
    %v7729 = vpack.c.b16 %v6361, %v6353
    %v7730 = vpack.c.b16 %v6362, %v6354
    %v7731 = vpack.c.b16 %v6363, %v6355
    %v7732 = vpack.c.b16 %v6364, %v6356
    %v7733 = vpack.c.b16 %v6365, %v6357
    %v7734 = vpack.c.b16 %v6366, %v6358
    %v7735 = vpack.c.b16 %v6367, %v6359
    %v7736 = vpack.c.b16 %v6376, %v6368
    %v7737 = vpack.c.b16 %v6377, %v6369
    %v7738 = vpack.c.b16 %v6378, %v6370
    %v7739 = vpack.c.b16 %v6379, %v6371
    %v7740 = vpack.c.b16 %v6380, %v6372
    %v7741 = vpack.c.b16 %v6381, %v6373
    %v7742 = vpack.c.b16 %v6382, %v6374
    %v7743 = vpack.c.b16 %v6383, %v6375
    %v7744 = vpack.c.b16 %v6392, %v6384
    %v7745 = vpack.c.b16 %v6393, %v6385
    %v7746 = vpack.c.b16 %v6394, %v6386
    %v7747 = vpack.c.b16 %v6395, %v6387
    %v7748 = vpack.c.b16 %v6396, %v6388
    %v7749 = vpack.c.b16 %v6397, %v6389
    %v7750 = vpack.c.b16 %v6398, %v6390
    %v7751 = vpack.c.b16 %v6399, %v6391
    %v7752 = vpack.c.b16 %v6408, %v6400
    %v7753 = vpack.c.b16 %v6409, %v6401
    %v7754 = vpack.c.b16 %v6410, %v6402
    %v7755 = vpack.c.b16 %v6411, %v6403
    %v7756 = vpack.c.b16 %v6412, %v6404
    %v7757 = vpack.c.b16 %v6413, %v6405
    %v7758 = vpack.c.b16 %v6414, %v6406
    %v7759 = vpack.c.b16 %v6415, %v6407
    %v7760 = vpack.c.b16 %v6424, %v6416
    %v7761 = vpack.c.b16 %v6425, %v6417
    %v7762 = vpack.c.b16 %v6426, %v6418
    %v7763 = vpack.c.b16 %v6427, %v6419
    %v7764 = vpack.c.b16 %v6428, %v6420
    %v7765 = vpack.c.b16 %v6429, %v6421
    %v7766 = vpack.c.b16 %v6430, %v6422
    %v7767 = vpack.c.b16 %v6431, %v6423
    %v7768 = vpack.c.b16 %v6440, %v6432
    %v7769 = vpack.c.b16 %v6441, %v6433
    %v7770 = vpack.c.b16 %v6442, %v6434
    %v7771 = vpack.c.b16 %v6443, %v6435
    %v7772 = vpack.c.b16 %v6444, %v6436
    %v7773 = vpack.c.b16 %v6445, %v6437
    %v7774 = vpack.c.b16 %v6446, %v6438
    %v7775 = vpack.c.b16 %v6447, %v6439
    %v7776 = vpack.c.b16 %v6456, %v6448
    %v7777 = vpack.c.b16 %v6457, %v6449
    %v7778 = vpack.c.b16 %v6458, %v6450
    %v7779 = vpack.c.b16 %v6459, %v6451
    %v7780 = vpack.c.b16 %v6460, %v6452
    %v7781 = vpack.c.b16 %v6461, %v6453
    %v7782 = vpack.c.b16 %v6462, %v6454
    %v7783 = vpack.c.b16 %v6463, %v6455
    %v7784 = vpack.c.b16 %v6472, %v6464
    %v7785 = vpack.c.b16 %v6473, %v6465
    %v7786 = vpack.c.b16 %v6474, %v6466
    %v7787 = vpack.c.b16 %v6475, %v6467
    %v7788 = vpack.c.b16 %v6476, %v6468
    %v7789 = vpack.c.b16 %v6477, %v6469
    %v7790 = vpack.c.b16 %v6478, %v6470
    %v7791 = vpack.c.b16 %v6479, %v6471
    %v7792 = vpack.c.b16 %v6488, %v6480
    %v7793 = vpack.c.b16 %v6489, %v6481
    %v7794 = vpack.c.b16 %v6490, %v6482
    %v7795 = vpack.c.b16 %v6491, %v6483
    %v7796 = vpack.c.b16 %v6492, %v6484
    %v7797 = vpack.c.b16 %v6493, %v6485
    %v7798 = vpack.c.b16 %v6494, %v6486
    %v7799 = vpack.c.b16 %v6495, %v6487
    %v7800 = vpack.c.b16 %v6504, %v6496
    %v7801 = vpack.c.b16 %v6505, %v6497
    %v7802 = vpack.c.b16 %v6506, %v6498
    %v7803 = vpack.c.b16 %v6507, %v6499
    %v7804 = vpack.c.b16 %v6508, %v6500
    %v7805 = vpack.c.b16 %v6509, %v6501
    %v7806 = vpack.c.b16 %v6510, %v6502
    %v7807 = vpack.c.b16 %v6511, %v6503
    %v7808 = vpack.c.b16 %v6520, %v6512
    %v7809 = vpack.c.b16 %v6521, %v6513
    %v7810 = vpack.c.b16 %v6522, %v6514
    %v7811 = vpack.c.b16 %v6523, %v6515
    %v7812 = vpack.c.b16 %v6524, %v6516
    %v7813 = vpack.c.b16 %v6525, %v6517
    %v7814 = vpack.c.b16 %v6526, %v6518
    %v7815 = vpack.c.b16 %v6527, %v6519
    %v7816 = vpack.c.b16 %v6536, %v6528
    %v7817 = vpack.c.b16 %v6537, %v6529
    %v7818 = vpack.c.b16 %v6538, %v6530
    %v7819 = vpack.c.b16 %v6539, %v6531
    %v7820 = vpack.c.b16 %v6540, %v6532
    %v7821 = vpack.c.b16 %v6541, %v6533
    %v7822 = vpack.c.b16 %v6542, %v6534
    %v7823 = vpack.c.b16 %v6543, %v6535
    %v7824 = vpack.c.b16 %v6552, %v6544
    %v7825 = vpack.c.b16 %v6553, %v6545
    %v7826 = vpack.c.b16 %v6554, %v6546
    %v7827 = vpack.c.b16 %v6555, %v6547
    %v7828 = vpack.c.b16 %v6556, %v6548
    %v7829 = vpack.c.b16 %v6557, %v6549
    %v7830 = vpack.c.b16 %v6558, %v6550
    %v7831 = vpack.c.b16 %v6559, %v6551
    %v7832 = vpack.c.b16 %v6568, %v6560
    %v7833 = vpack.c.b16 %v6569, %v6561
    %v7834 = vpack.c.b16 %v6570, %v6562
    %v7835 = vpack.c.b16 %v6571, %v6563
    %v7836 = vpack.c.b16 %v6572, %v6564
    %v7837 = vpack.c.b16 %v6573, %v6565
    %v7838 = vpack.c.b16 %v6574, %v6566
    %v7839 = vpack.c.b16 %v6575, %v6567
    %v7840 = vpack.c.b16 %v6584, %v6576
    %v7841 = vpack.c.b16 %v6585, %v6577
    %v7842 = vpack.c.b16 %v6586, %v6578
    %v7843 = vpack.c.b16 %v6587, %v6579
    %v7844 = vpack.c.b16 %v6588, %v6580
    %v7845 = vpack.c.b16 %v6589, %v6581
    %v7846 = vpack.c.b16 %v6590, %v6582
    %v7847 = vpack.c.b16 %v6591, %v6583
    %v7848 = vpack.c.b16 %v6600, %v6592
    %v7849 = vpack.c.b16 %v6601, %v6593
    %v7850 = vpack.c.b16 %v6602, %v6594
    %v7851 = vpack.c.b16 %v6603, %v6595
    %v7852 = vpack.c.b16 %v6604, %v6596
    %v7853 = vpack.c.b16 %v6605, %v6597
    %v7854 = vpack.c.b16 %v6606, %v6598
    %v7855 = vpack.c.b16 %v6607, %v6599
    %v7856 = vpack.c.b16 %v6616, %v6608
    %v7857 = vpack.c.b16 %v6617, %v6609
    %v7858 = vpack.c.b16 %v6618, %v6610
    %v7859 = vpack.c.b16 %v6619, %v6611
    %v7860 = vpack.c.b16 %v6620, %v6612
    %v7861 = vpack.c.b16 %v6621, %v6613
    %v7862 = vpack.c.b16 %v6622, %v6614
    %v7863 = vpack.c.b16 %v6623, %v6615
    %v7864 = vpack.c.b16 %v6632, %v6624
    %v7865 = vpack.c.b16 %v6633, %v6625
    %v7866 = vpack.c.b16 %v6634, %v6626
    %v7867 = vpack.c.b16 %v6635, %v6627
    %v7868 = vpack.c.b16 %v6636, %v6628
    %v7869 = vpack.c.b16 %v6637, %v6629
    %v7870 = vpack.c.b16 %v6638, %v6630
    %v7871 = vpack.c.b16 %v6639, %v6631
    %v7872 = vpack.c.b16 %v6648, %v6640
    %v7873 = vpack.c.b16 %v6649, %v6641
    %v7874 = vpack.c.b16 %v6650, %v6642
    %v7875 = vpack.c.b16 %v6651, %v6643
    %v7876 = vpack.c.b16 %v6652, %v6644
    %v7877 = vpack.c.b16 %v6653, %v6645
    %v7878 = vpack.c.b16 %v6654, %v6646
    %v7879 = vpack.c.b16 %v6655, %v6647
    %v7880 = vpack.c.b16 %v6664, %v6656
    %v7881 = vpack.c.b16 %v6665, %v6657
    %v7882 = vpack.c.b16 %v6666, %v6658
    %v7883 = vpack.c.b16 %v6667, %v6659
    %v7884 = vpack.c.b16 %v6668, %v6660
    %v7885 = vpack.c.b16 %v6669, %v6661
    %v7886 = vpack.c.b16 %v6670, %v6662
    %v7887 = vpack.c.b16 %v6671, %v6663
    %v7888 = vpack.c.b16 %v6680, %v6672
    %v7889 = vpack.c.b16 %v6681, %v6673
    %v7890 = vpack.c.b16 %v6682, %v6674
    %v7891 = vpack.c.b16 %v6683, %v6675
    %v7892 = vpack.c.b16 %v6684, %v6676
    %v7893 = vpack.c.b16 %v6685, %v6677
    %v7894 = vpack.c.b16 %v6686, %v6678
    %v7895 = vpack.c.b16 %v6687, %v6679
    %v7896 = vpack.c.b16 %v6696, %v6688
    %v7897 = vpack.c.b16 %v6697, %v6689
    %v7898 = vpack.c.b16 %v6698, %v6690
    %v7899 = vpack.c.b16 %v6699, %v6691
    %v7900 = vpack.c.b16 %v6700, %v6692
    %v7901 = vpack.c.b16 %v6701, %v6693
    %v7902 = vpack.c.b16 %v6702, %v6694
    %v7903 = vpack.c.b16 %v6703, %v6695
    %v7904 = vpack.c.b16 %v6712, %v6704
    %v7905 = vpack.c.b16 %v6713, %v6705
    %v7906 = vpack.c.b16 %v6714, %v6706
    %v7907 = vpack.c.b16 %v6715, %v6707
    %v7908 = vpack.c.b16 %v6716, %v6708
    %v7909 = vpack.c.b16 %v6717, %v6709
    %v7910 = vpack.c.b16 %v6718, %v6710
    %v7911 = vpack.c.b16 %v6719, %v6711
    %v7912 = vpack.c.b16 %v6728, %v6720
    %v7913 = vpack.c.b16 %v6729, %v6721
    %v7914 = vpack.c.b16 %v6730, %v6722
    %v7915 = vpack.c.b16 %v6731, %v6723
    %v7916 = vpack.c.b16 %v6732, %v6724
    %v7917 = vpack.c.b16 %v6733, %v6725
    %v7918 = vpack.c.b16 %v6734, %v6726
    %v7919 = vpack.c.b16 %v6735, %v6727
    %v7920 = vpack.c.b16 %v6744, %v6736
    %v7921 = vpack.c.b16 %v6745, %v6737
    %v7922 = vpack.c.b16 %v6746, %v6738
    %v7923 = vpack.c.b16 %v6747, %v6739
    %v7924 = vpack.c.b16 %v6748, %v6740
    %v7925 = vpack.c.b16 %v6749, %v6741
    %v7926 = vpack.c.b16 %v6750, %v6742
    %v7927 = vpack.c.b16 %v6751, %v6743
    %v7928 = vpack.c.b16 %v6760, %v6752
    %v7929 = vpack.c.b16 %v6761, %v6753
    %v7930 = vpack.c.b16 %v6762, %v6754
    %v7931 = vpack.c.b16 %v6763, %v6755
    %v7932 = vpack.c.b16 %v6764, %v6756
    %v7933 = vpack.c.b16 %v6765, %v6757
    %v7934 = vpack.c.b16 %v6766, %v6758
    %v7935 = vpack.c.b16 %v6767, %v6759
    %v7936 = vpack.c.b16 %v6776, %v6768
    %v7937 = vpack.c.b16 %v6777, %v6769
    %v7938 = vpack.c.b16 %v6778, %v6770
    %v7939 = vpack.c.b16 %v6779, %v6771
    %v7940 = vpack.c.b16 %v6780, %v6772
    %v7941 = vpack.c.b16 %v6781, %v6773
    %v7942 = vpack.c.b16 %v6782, %v6774
    %v7943 = vpack.c.b16 %v6783, %v6775
    %v7944 = vpack.c.b16 %v6792, %v6784
    %v7945 = vpack.c.b16 %v6793, %v6785
    %v7946 = vpack.c.b16 %v6794, %v6786
    %v7947 = vpack.c.b16 %v6795, %v6787
    %v7948 = vpack.c.b16 %v6796, %v6788
    %v7949 = vpack.c.b16 %v6797, %v6789
    %v7950 = vpack.c.b16 %v6798, %v6790
    %v7951 = vpack.c.b16 %v6799, %v6791
    %v7952 = vpack.c.b16 %v6808, %v6800
    %v7953 = vpack.c.b16 %v6809, %v6801
    %v7954 = vpack.c.b16 %v6810, %v6802
    %v7955 = vpack.c.b16 %v6811, %v6803
    %v7956 = vpack.c.b16 %v6812, %v6804
    %v7957 = vpack.c.b16 %v6813, %v6805
    %v7958 = vpack.c.b16 %v6814, %v6806
    %v7959 = vpack.c.b16 %v6815, %v6807
    %v7960 = vpack.c.b16 %v6824, %v6816
    %v7961 = vpack.c.b16 %v6825, %v6817
    %v7962 = vpack.c.b16 %v6826, %v6818
    %v7963 = vpack.c.b16 %v6827, %v6819
    %v7964 = vpack.c.b16 %v6828, %v6820
    %v7965 = vpack.c.b16 %v6829, %v6821
    %v7966 = vpack.c.b16 %v6830, %v6822
    %v7967 = vpack.c.b16 %v6831, %v6823
    %v7968 = vpack.c.b16 %v6840, %v6832
    %v7969 = vpack.c.b16 %v6841, %v6833
    %v7970 = vpack.c.b16 %v6842, %v6834
    %v7971 = vpack.c.b16 %v6843, %v6835
    %v7972 = vpack.c.b16 %v6844, %v6836
    %v7973 = vpack.c.b16 %v6845, %v6837
    %v7974 = vpack.c.b16 %v6846, %v6838
    %v7975 = vpack.c.b16 %v6847, %v6839
    %v7976 = vpack.c.b16 %v6856, %v6848
    %v7977 = vpack.c.b16 %v6857, %v6849
    %v7978 = vpack.c.b16 %v6858, %v6850
    %v7979 = vpack.c.b16 %v6859, %v6851
    %v7980 = vpack.c.b16 %v6860, %v6852
    %v7981 = vpack.c.b16 %v6861, %v6853
    %v7982 = vpack.c.b16 %v6862, %v6854
    %v7983 = vpack.c.b16 %v6863, %v6855
    %v7984 = vpack.c.b16 %v6872, %v6864
    %v7985 = vpack.c.b16 %v6873, %v6865
    %v7986 = vpack.c.b16 %v6874, %v6866
    %v7987 = vpack.c.b16 %v6875, %v6867
    %v7988 = vpack.c.b16 %v6876, %v6868
    %v7989 = vpack.c.b16 %v6877, %v6869
    %v7990 = vpack.c.b16 %v6878, %v6870
    %v7991 = vpack.c.b16 %v6879, %v6871
    %v7992 = vpack.c.b16 %v6888, %v6880
    %v7993 = vpack.c.b16 %v6889, %v6881
    %v7994 = vpack.c.b16 %v6890, %v6882
    %v7995 = vpack.c.b16 %v6891, %v6883
    %v7996 = vpack.c.b16 %v6892, %v6884
    %v7997 = vpack.c.b16 %v6893, %v6885
    %v7998 = vpack.c.b16 %v6894, %v6886
    %v7999 = vpack.c.b16 %v6895, %v6887
    %v8000 = vpack.c.b16 %v6904, %v6896
    %v8001 = vpack.c.b16 %v6905, %v6897
    %v8002 = vpack.c.b16 %v6906, %v6898
    %v8003 = vpack.c.b16 %v6907, %v6899
    %v8004 = vpack.c.b16 %v6908, %v6900
    %v8005 = vpack.c.b16 %v6909, %v6901
    %v8006 = vpack.c.b16 %v6910, %v6902
    %v8007 = vpack.c.b16 %v6911, %v6903
    %v8008 = vpack.c.b16 %v6920, %v6912
    %v8009 = vpack.c.b16 %v6921, %v6913
    %v8010 = vpack.c.b16 %v6922, %v6914
    %v8011 = vpack.c.b16 %v6923, %v6915
    %v8012 = vpack.c.b16 %v6924, %v6916
    %v8013 = vpack.c.b16 %v6925, %v6917
    %v8014 = vpack.c.b16 %v6926, %v6918
    %v8015 = vpack.c.b16 %v6927, %v6919
    %v8016 = vpack.c.b16 %v6936, %v6928
    %v8017 = vpack.c.b16 %v6937, %v6929
    %v8018 = vpack.c.b16 %v6938, %v6930
    %v8019 = vpack.c.b16 %v6939, %v6931
    %v8020 = vpack.c.b16 %v6940, %v6932
    %v8021 = vpack.c.b16 %v6941, %v6933
    %v8022 = vpack.c.b16 %v6942, %v6934
    %v8023 = vpack.c.b16 %v6943, %v6935
    %v8024 = vpack.c.b16 %v6952, %v6944
    %v8025 = vpack.c.b16 %v6953, %v6945
    %v8026 = vpack.c.b16 %v6954, %v6946
    %v8027 = vpack.c.b16 %v6955, %v6947
    %v8028 = vpack.c.b16 %v6956, %v6948
    %v8029 = vpack.c.b16 %v6957, %v6949
    %v8030 = vpack.c.b16 %v6958, %v6950
    %v8031 = vpack.c.b16 %v6959, %v6951
    %v8032 = vpack.c.b16 %v6968, %v6960
    %v8033 = vpack.c.b16 %v6969, %v6961
    %v8034 = vpack.c.b16 %v6970, %v6962
    %v8035 = vpack.c.b16 %v6971, %v6963
    %v8036 = vpack.c.b16 %v6972, %v6964
    %v8037 = vpack.c.b16 %v6973, %v6965
    %v8038 = vpack.c.b16 %v6974, %v6966
    %v8039 = vpack.c.b16 %v6975, %v6967
    %v8040 = vpack.c.b16 %v6984, %v6976
    %v8041 = vpack.c.b16 %v6985, %v6977
    %v8042 = vpack.c.b16 %v6986, %v6978
    %v8043 = vpack.c.b16 %v6987, %v6979
    %v8044 = vpack.c.b16 %v6988, %v6980
    %v8045 = vpack.c.b16 %v6989, %v6981
    %v8046 = vpack.c.b16 %v6990, %v6982
    %v8047 = vpack.c.b16 %v6991, %v6983
    %v8048 = vpack.c.b16 %v7000, %v6992
    %v8049 = vpack.c.b16 %v7001, %v6993
    %v8050 = vpack.c.b16 %v7002, %v6994
    %v8051 = vpack.c.b16 %v7003, %v6995
    %v8052 = vpack.c.b16 %v7004, %v6996
    %v8053 = vpack.c.b16 %v7005, %v6997
    %v8054 = vpack.c.b16 %v7006, %v6998
    %v8055 = vpack.c.b16 %v7007, %v6999
    %v8056 = vpack.c.b16 %v7016, %v7008
    %v8057 = vpack.c.b16 %v7017, %v7009
    %v8058 = vpack.c.b16 %v7018, %v7010
    %v8059 = vpack.c.b16 %v7019, %v7011
    %v8060 = vpack.c.b16 %v7020, %v7012
    %v8061 = vpack.c.b16 %v7021, %v7013
    %v8062 = vpack.c.b16 %v7022, %v7014
    %v8063 = vpack.c.b16 %v7023, %v7015
    %v8064 = vpack.c.b16 %v7032, %v7024
    %v8065 = vpack.c.b16 %v7033, %v7025
    %v8066 = vpack.c.b16 %v7034, %v7026
    %v8067 = vpack.c.b16 %v7035, %v7027
    %v8068 = vpack.c.b16 %v7036, %v7028
    %v8069 = vpack.c.b16 %v7037, %v7029
    %v8070 = vpack.c.b16 %v7038, %v7030
    %v8071 = vpack.c.b16 %v7039, %v7031
    %v8072 = vpack.c.b16 %v7048, %v7040
    %v8073 = vpack.c.b16 %v7049, %v7041
    %v8074 = vpack.c.b16 %v7050, %v7042
    %v8075 = vpack.c.b16 %v7051, %v7043
    %v8076 = vpack.c.b16 %v7052, %v7044
    %v8077 = vpack.c.b16 %v7053, %v7045
    %v8078 = vpack.c.b16 %v7054, %v7046
    %v8079 = vpack.c.b16 %v7055, %v7047
    %v8080 = vpack.c.b16 %v7064, %v7056
    %v8081 = vpack.c.b16 %v7065, %v7057
    %v8082 = vpack.c.b16 %v7066, %v7058
    %v8083 = vpack.c.b16 %v7067, %v7059
    %v8084 = vpack.c.b16 %v7068, %v7060
    %v8085 = vpack.c.b16 %v7069, %v7061
    %v8086 = vpack.c.b16 %v7070, %v7062
    %v8087 = vpack.c.b16 %v7071, %v7063
    %v8088 = vpack.c.b16 %v7080, %v7072
    %v8089 = vpack.c.b16 %v7081, %v7073
    %v8090 = vpack.c.b16 %v7082, %v7074
    %v8091 = vpack.c.b16 %v7083, %v7075
    %v8092 = vpack.c.b16 %v7084, %v7076
    %v8093 = vpack.c.b16 %v7085, %v7077
    %v8094 = vpack.c.b16 %v7086, %v7078
    %v8095 = vpack.c.b16 %v7087, %v7079
    %v8096 = vpack.c.b16 %v7096, %v7088
    %v8097 = vpack.c.b16 %v7097, %v7089
    %v8098 = vpack.c.b16 %v7098, %v7090
    %v8099 = vpack.c.b16 %v7099, %v7091
    %v8100 = vpack.c.b16 %v7100, %v7092
    %v8101 = vpack.c.b16 %v7101, %v7093
    %v8102 = vpack.c.b16 %v7102, %v7094
    %v8103 = vpack.c.b16 %v7103, %v7095
    %v8104 = vpack.c.b16 %v7112, %v7104
    %v8105 = vpack.c.b16 %v7113, %v7105
    %v8106 = vpack.c.b16 %v7114, %v7106
    %v8107 = vpack.c.b16 %v7115, %v7107
    %v8108 = vpack.c.b16 %v7116, %v7108
    %v8109 = vpack.c.b16 %v7117, %v7109
    %v8110 = vpack.c.b16 %v7118, %v7110
    %v8111 = vpack.c.b16 %v7119, %v7111
    %v8112 = vpack.c.b16 %v7128, %v7120
    %v8113 = vpack.c.b16 %v7129, %v7121
    %v8114 = vpack.c.b16 %v7130, %v7122
    %v8115 = vpack.c.b16 %v7131, %v7123
    %v8116 = vpack.c.b16 %v7132, %v7124
    %v8117 = vpack.c.b16 %v7133, %v7125
    %v8118 = vpack.c.b16 %v7134, %v7126
    %v8119 = vpack.c.b16 %v7135, %v7127
    %v8120 = vpack.c.b16 %v7144, %v7136
    %v8121 = vpack.c.b16 %v7145, %v7137
    %v8122 = vpack.c.b16 %v7146, %v7138
    %v8123 = vpack.c.b16 %v7147, %v7139
    %v8124 = vpack.c.b16 %v7148, %v7140
    %v8125 = vpack.c.b16 %v7149, %v7141
    %v8126 = vpack.c.b16 %v7150, %v7142
    %v8127 = vpack.c.b16 %v7151, %v7143
    %v8128 = vpack.c.b16 %v7160, %v7152
    %v8129 = vpack.c.b16 %v7161, %v7153
    %v8130 = vpack.c.b16 %v7162, %v7154
    %v8131 = vpack.c.b16 %v7163, %v7155
    %v8132 = vpack.c.b16 %v7164, %v7156
    %v8133 = vpack.c.b16 %v7165, %v7157
    %v8134 = vpack.c.b16 %v7166, %v7158
    %v8135 = vpack.c.b16 %v7167, %v7159
    %v8136 = vpack.c.b16 %v7176, %v7168
    %v8137 = vpack.c.b16 %v7177, %v7169
    %v8138 = vpack.c.b16 %v7178, %v7170
    %v8139 = vpack.c.b16 %v7179, %v7171
    %v8140 = vpack.c.b16 %v7180, %v7172
    %v8141 = vpack.c.b16 %v7181, %v7173
    %v8142 = vpack.c.b16 %v7182, %v7174
    %v8143 = vpack.c.b16 %v7183, %v7175
    %v8144 = vpack.c.b16 %v7192, %v7184
    %v8145 = vpack.c.b16 %v7193, %v7185
    %v8146 = vpack.c.b16 %v7194, %v7186
    %v8147 = vpack.c.b16 %v7195, %v7187
    %v8148 = vpack.c.b16 %v7196, %v7188
    %v8149 = vpack.c.b16 %v7197, %v7189
    %v8150 = vpack.c.b16 %v7198, %v7190
    %v8151 = vpack.c.b16 %v7199, %v7191
    %v8152 = vpack.c.b16 %v7208, %v7200
    %v8153 = vpack.c.b16 %v7209, %v7201
    %v8154 = vpack.c.b16 %v7210, %v7202
    %v8155 = vpack.c.b16 %v7211, %v7203
    %v8156 = vpack.c.b16 %v7212, %v7204
    %v8157 = vpack.c.b16 %v7213, %v7205
    %v8158 = vpack.c.b16 %v7214, %v7206
    %v8159 = vpack.c.b16 %v7215, %v7207
    %v8160 = vpack.c.b16 %v7224, %v7216
    %v8161 = vpack.c.b16 %v7225, %v7217
    %v8162 = vpack.c.b16 %v7226, %v7218
    %v8163 = vpack.c.b16 %v7227, %v7219
    %v8164 = vpack.c.b16 %v7228, %v7220
    %v8165 = vpack.c.b16 %v7229, %v7221
    %v8166 = vpack.c.b16 %v7230, %v7222
    %v8167 = vpack.c.b16 %v7231, %v7223
    %v8168 = vpack.c.b16 %v7240, %v7232
    %v8169 = vpack.c.b16 %v7241, %v7233
    %v8170 = vpack.c.b16 %v7242, %v7234
    %v8171 = vpack.c.b16 %v7243, %v7235
    %v8172 = vpack.c.b16 %v7244, %v7236
    %v8173 = vpack.c.b16 %v7245, %v7237
    %v8174 = vpack.c.b16 %v7246, %v7238
    %v8175 = vpack.c.b16 %v7247, %v7239
    %v8176 = vpack.c.b16 %v7256, %v7248
    %v8177 = vpack.c.b16 %v7257, %v7249
    %v8178 = vpack.c.b16 %v7258, %v7250
    %v8179 = vpack.c.b16 %v7259, %v7251
    %v8180 = vpack.c.b16 %v7260, %v7252
    %v8181 = vpack.c.b16 %v7261, %v7253
    %v8182 = vpack.c.b16 %v7262, %v7254
    %v8183 = vpack.c.b16 %v7263, %v7255
    %v8184 = vpack.c.b16 %v7272, %v7264
    %v8185 = vpack.c.b16 %v7273, %v7265
    %v8186 = vpack.c.b16 %v7274, %v7266
    %v8187 = vpack.c.b16 %v7275, %v7267
    %v8188 = vpack.c.b16 %v7276, %v7268
    %v8189 = vpack.c.b16 %v7277, %v7269
    %v8190 = vpack.c.b16 %v7278, %v7270
    %v8191 = vpack.c.b16 %v7279, %v7271
    %v8192 = vpack.c.b16 %v7288, %v7280
    %v8193 = vpack.c.b16 %v7289, %v7281
    %v8194 = vpack.c.b16 %v7290, %v7282
    %v8195 = vpack.c.b16 %v7291, %v7283
    %v8196 = vpack.c.b16 %v7292, %v7284
    %v8197 = vpack.c.b16 %v7293, %v7285
    %v8198 = vpack.c.b16 %v7294, %v7286
    %v8199 = vpack.c.b16 %v7295, %v7287
    %v8200 = vpack.c.b16 %v7304, %v7296
    %v8201 = vpack.c.b16 %v7305, %v7297
    %v8202 = vpack.c.b16 %v7306, %v7298
    %v8203 = vpack.c.b16 %v7307, %v7299
    %v8204 = vpack.c.b16 %v7308, %v7300
    %v8205 = vpack.c.b16 %v7309, %v7301
    %v8206 = vpack.c.b16 %v7310, %v7302
    %v8207 = vpack.c.b16 %v7311, %v7303
    %v8208 = vpack.c.b16 %v7320, %v7312
    %v8209 = vpack.c.b16 %v7321, %v7313
    %v8210 = vpack.c.b16 %v7322, %v7314
    %v8211 = vpack.c.b16 %v7323, %v7315
    %v8212 = vpack.c.b16 %v7324, %v7316
    %v8213 = vpack.c.b16 %v7325, %v7317
    %v8214 = vpack.c.b16 %v7326, %v7318
    %v8215 = vpack.c.b16 %v7327, %v7319
    %v8216 = vpack.c.b16 %v7336, %v7328
    %v8217 = vpack.c.b16 %v7337, %v7329
    %v8218 = vpack.c.b16 %v7338, %v7330
    %v8219 = vpack.c.b16 %v7339, %v7331
    %v8220 = vpack.c.b16 %v7340, %v7332
    %v8221 = vpack.c.b16 %v7341, %v7333
    %v8222 = vpack.c.b16 %v7342, %v7334
    %v8223 = vpack.c.b16 %v7343, %v7335
    %v8224 = vpack.c.b16 %v7352, %v7344
    %v8225 = vpack.c.b16 %v7353, %v7345
    %v8226 = vpack.c.b16 %v7354, %v7346
    %v8227 = vpack.c.b16 %v7355, %v7347
    %v8228 = vpack.c.b16 %v7356, %v7348
    %v8229 = vpack.c.b16 %v7357, %v7349
    %v8230 = vpack.c.b16 %v7358, %v7350
    %v8231 = vpack.c.b16 %v7359, %v7351
    %v8232 = vpack.c.b16 %v7368, %v7360
    %v8233 = vpack.c.b16 %v7369, %v7361
    %v8234 = vpack.c.b16 %v7370, %v7362
    %v8235 = vpack.c.b16 %v7371, %v7363
    %v8236 = vpack.c.b16 %v7372, %v7364
    %v8237 = vpack.c.b16 %v7373, %v7365
    %v8238 = vpack.c.b16 %v7374, %v7366
    %v8239 = vpack.c.b16 %v7375, %v7367
    %v8240 = vpack.c.b16 %v7384, %v7376
    %v8241 = vpack.c.b16 %v7385, %v7377
    %v8242 = vpack.c.b16 %v7386, %v7378
    %v8243 = vpack.c.b16 %v7387, %v7379
    %v8244 = vpack.c.b16 %v7388, %v7380
    %v8245 = vpack.c.b16 %v7389, %v7381
    %v8246 = vpack.c.b16 %v7390, %v7382
    %v8247 = vpack.c.b16 %v7391, %v7383
    %v8248 = vpack.c.b16 %v7400, %v7392
    %v8249 = vpack.c.b16 %v7401, %v7393
    %v8250 = vpack.c.b16 %v7402, %v7394
    %v8251 = vpack.c.b16 %v7403, %v7395
    %v8252 = vpack.c.b16 %v7404, %v7396
    %v8253 = vpack.c.b16 %v7405, %v7397
    %v8254 = vpack.c.b16 %v7406, %v7398
    %v8255 = vpack.c.b16 %v7407, %v7399
    %v8256 = vpack.c.b16 %v7416, %v7408
    %v8257 = vpack.c.b16 %v7417, %v7409
    %v8258 = vpack.c.b16 %v7418, %v7410
    %v8259 = vpack.c.b16 %v7419, %v7411
    %v8260 = vpack.c.b16 %v7420, %v7412
    %v8261 = vpack.c.b16 %v7421, %v7413
    %v8262 = vpack.c.b16 %v7422, %v7414
    %v8263 = vpack.c.b16 %v7423, %v7415
    %v8264 = vpack.c.b16 %v7432, %v7424
    %v8265 = vpack.c.b16 %v7433, %v7425
    %v8266 = vpack.c.b16 %v7434, %v7426
    %v8267 = vpack.c.b16 %v7435, %v7427
    %v8268 = vpack.c.b16 %v7436, %v7428
    %v8269 = vpack.c.b16 %v7437, %v7429
    %v8270 = vpack.c.b16 %v7438, %v7430
    %v8271 = vpack.c.b16 %v7439, %v7431
    %v8272 = vpack.c.b16 %v7448, %v7440
    %v8273 = vpack.c.b16 %v7449, %v7441
    %v8274 = vpack.c.b16 %v7450, %v7442
    %v8275 = vpack.c.b16 %v7451, %v7443
    %v8276 = vpack.c.b16 %v7452, %v7444
    %v8277 = vpack.c.b16 %v7453, %v7445
    %v8278 = vpack.c.b16 %v7454, %v7446
    %v8279 = vpack.c.b16 %v7455, %v7447
    %v8280 = vpack.c.b16 %v7464, %v7456
    %v8281 = vpack.c.b16 %v7465, %v7457
    %v8282 = vpack.c.b16 %v7466, %v7458
    %v8283 = vpack.c.b16 %v7467, %v7459
    %v8284 = vpack.c.b16 %v7468, %v7460
    %v8285 = vpack.c.b16 %v7469, %v7461
    %v8286 = vpack.c.b16 %v7470, %v7462
    %v8287 = vpack.c.b16 %v7471, %v7463
    %v8288 = vpack.c.b16 %v7480, %v7472
    %v8289 = vpack.c.b16 %v7481, %v7473
    %v8290 = vpack.c.b16 %v7482, %v7474
    %v8291 = vpack.c.b16 %v7483, %v7475
    %v8292 = vpack.c.b16 %v7484, %v7476
    %v8293 = vpack.c.b16 %v7485, %v7477
    %v8294 = vpack.c.b16 %v7486, %v7478
    %v8295 = vpack.c.b16 %v7487, %v7479
    %v8296 = vpack.c.b16 %v7496, %v7488
    %v8297 = vpack.c.b16 %v7497, %v7489
    %v8298 = vpack.c.b16 %v7498, %v7490
    %v8299 = vpack.c.b16 %v7499, %v7491
    %v8300 = vpack.c.b16 %v7500, %v7492
    %v8301 = vpack.c.b16 %v7501, %v7493
    %v8302 = vpack.c.b16 %v7502, %v7494
    %v8303 = vpack.c.b16 %v7503, %v7495
    %v8304 = vpack.c.b16 %v7512, %v7504
    %v8305 = vpack.c.b16 %v7513, %v7505
    %v8306 = vpack.c.b16 %v7514, %v7506
    %v8307 = vpack.c.b16 %v7515, %v7507
    %v8308 = vpack.c.b16 %v7516, %v7508
    %v8309 = vpack.c.b16 %v7517, %v7509
    %v8310 = vpack.c.b16 %v7518, %v7510
    %v8311 = vpack.c.b16 %v7519, %v7511
    %v8312 = vpack.c.b16 %v7528, %v7520
    %v8313 = vpack.c.b16 %v7529, %v7521
    %v8314 = vpack.c.b16 %v7530, %v7522
    %v8315 = vpack.c.b16 %v7531, %v7523
    %v8316 = vpack.c.b16 %v7532, %v7524
    %v8317 = vpack.c.b16 %v7533, %v7525
    %v8318 = vpack.c.b16 %v7534, %v7526
    %v8319 = vpack.c.b16 %v7535, %v7527
    %v8320 = vpack.c.b16 %v7544, %v7536
    %v8321 = vpack.c.b16 %v7545, %v7537
    %v8322 = vpack.c.b16 %v7546, %v7538
    %v8323 = vpack.c.b16 %v7547, %v7539
    %v8324 = vpack.c.b16 %v7548, %v7540
    %v8325 = vpack.c.b16 %v7549, %v7541
    %v8326 = vpack.c.b16 %v7550, %v7542
    %v8327 = vpack.c.b16 %v7551, %v7543
    %v8328 = vpack.c.b16 %v7560, %v7552
    %v8329 = vpack.c.b16 %v7561, %v7553
    %v8330 = vpack.c.b16 %v7562, %v7554
    %v8331 = vpack.c.b16 %v7563, %v7555
    %v8332 = vpack.c.b16 %v7564, %v7556
    %v8333 = vpack.c.b16 %v7565, %v7557
    %v8334 = vpack.c.b16 %v7566, %v7558
    %v8335 = vpack.c.b16 %v7567, %v7559
    %9104 = vmatprep.subr.bf16.mxu0 %v7569
    %9105 = vmatpush1.bf16.msra.mxu0 %v7568
    %9106 = vmatprep.subr.bf16.mxu0 %v7577
    %9107 = vmatpush1.bf16.msra.mxu0 %v7576
    %9108 = vmatprep.subr.bf16.mxu0 %v7585
    %9109 = vmatpush1.bf16.msra.mxu0 %v7584
    %9110 = vmatprep.subr.bf16.mxu0 %v7593
    %9111 = vmatpush1.bf16.msra.mxu0 %v7592
    %9112 = vmatprep.subr.bf16.mxu0 %v7601
    %9113 = vmatpush1.bf16.msra.mxu0 %v7600
    %9114 = vmatprep.subr.bf16.mxu0 %v7609
    %9115 = vmatpush1.bf16.msra.mxu0 %v7608
    %9116 = vmatprep.subr.bf16.mxu0 %v7617
    %9117 = vmatpush1.bf16.msra.mxu0 %v7616
    %9118 = vmatprep.subr.bf16.mxu0 %v7625
    %9119 = vmatpush1.bf16.msra.mxu0 %v7624
    %9120 = vmatprep.subr.bf16.mxu0 %v7633
    %9121 = vmatpush1.bf16.msra.mxu0 %v7632
    %9122 = vmatprep.subr.bf16.mxu0 %v7641
    %9123 = vmatpush1.bf16.msra.mxu0 %v7640
    %9124 = vmatprep.subr.bf16.mxu0 %v7649
    %9125 = vmatpush1.bf16.msra.mxu0 %v7648
    %9126 = vmatprep.subr.bf16.mxu0 %v7657
    %9127 = vmatpush1.bf16.msra.mxu0 %v7656
    %9128 = vmatprep.subr.bf16.mxu0 %v7665
    %9129 = vmatpush1.bf16.msra.mxu0 %v7664
    %9130 = vmatprep.subr.bf16.mxu0 %v7673
    %9131 = vmatpush1.bf16.msra.mxu0 %v7672
    %9132 = vmatprep.subr.bf16.mxu0 %v7681
    %9133 = vmatpush1.bf16.msra.mxu0 %v7680
    %9134 = vmatprep.subr.bf16.mxu0 %v7689
    %9135 = vmatpush1.bf16.msra.mxu0 %v7688
    %9136 = vmatprep.mubr.bf16.mxu0 %v4443
    %9137 = vmatmul.mubr.bf16.gmra.mrb[0].mxu0 %v4442
    %v9138 = vpop.f32.mrb[0].mxu0
    %v9139 = vadd.f32 %v5227, %v9138
    %v9140 = vpop.f32.mrb[0].mxu0
    %v9141 = vadd.f32 %v5231, %v9140
    %v9142 = vpop.f32.mrb[0].mxu0
    %v9143 = vpop.f32.mrb[0].mxu0
    %9144 = vdwg.mxu0
    %9145 = vmatprep.subr.bf16.mxu0 %v7697
    %9146 = vmatpush1.bf16.msra.mxu0 %v7696
    %9147 = vmatprep.subr.bf16.mxu0 %v7705
    %9148 = vmatpush1.bf16.msra.mxu0 %v7704
    %9149 = vmatprep.subr.bf16.mxu0 %v7713
    %9150 = vmatpush1.bf16.msra.mxu0 %v7712
    %9151 = vmatprep.subr.bf16.mxu0 %v7721
    %9152 = vmatpush1.bf16.msra.mxu0 %v7720
    %9153 = vmatprep.subr.bf16.mxu0 %v7729
    %9154 = vmatpush1.bf16.msra.mxu0 %v7728
    %9155 = vmatprep.subr.bf16.mxu0 %v7737
    %9156 = vmatpush1.bf16.msra.mxu0 %v7736
    %9157 = vmatprep.subr.bf16.mxu0 %v7745
    %9158 = vmatpush1.bf16.msra.mxu0 %v7744
    %9159 = vmatprep.subr.bf16.mxu0 %v7753
    %9160 = vmatpush1.bf16.msra.mxu0 %v7752
    %9161 = vmatprep.subr.bf16.mxu0 %v7761
    %9162 = vmatpush1.bf16.msra.mxu0 %v7760
    %9163 = vmatprep.subr.bf16.mxu0 %v7769
    %9164 = vmatpush1.bf16.msra.mxu0 %v7768
    %9165 = vmatprep.subr.bf16.mxu0 %v7777
    %9166 = vmatpush1.bf16.msra.mxu0 %v7776
    %9167 = vmatprep.subr.bf16.mxu0 %v7785
    %9168 = vmatpush1.bf16.msra.mxu0 %v7784
    %9169 = vmatprep.subr.bf16.mxu0 %v7793
    %9170 = vmatpush1.bf16.msra.mxu0 %v7792
    %9171 = vmatprep.subr.bf16.mxu0 %v7801
    %9172 = vmatpush1.bf16.msra.mxu0 %v7800
    %9173 = vmatprep.subr.bf16.mxu0 %v7809
    %9174 = vmatpush1.bf16.msra.mxu0 %v7808
    %9175 = vmatprep.subr.bf16.mxu0 %v7817
    %9176 = vmatpush1.bf16.msra.mxu0 %v7816
    %9177 = vmatprep.mubr.bf16.mxu0 %v4445
    %9178 = vmatmul.mubr.bf16.gmra.mrb[0].mxu0 %v4444
    %v9179 = vpop.f32.mrb[0].mxu0
    %v9180 = vadd.f32 %v9139, %v9179
    %v9181 = vpop.f32.mrb[0].mxu0
    %v9182 = vadd.f32 %v9141, %v9181
    %v9183 = vpop.f32.mrb[0].mxu0
    %v9184 = vpop.f32.mrb[0].mxu0
    %9185 = vdwg.mxu0
    %9186 = vmatprep.subr.bf16.mxu0 %v7825
    %9187 = vmatpush1.bf16.msra.mxu0 %v7824
    %9188 = vmatprep.subr.bf16.mxu0 %v7833
    %9189 = vmatpush1.bf16.msra.mxu0 %v7832
    %9190 = vmatprep.subr.bf16.mxu0 %v7841
    %9191 = vmatpush1.bf16.msra.mxu0 %v7840
    %9192 = vmatprep.subr.bf16.mxu0 %v7849
    %9193 = vmatpush1.bf16.msra.mxu0 %v7848
    %9194 = vmatprep.subr.bf16.mxu0 %v7857
    %9195 = vmatpush1.bf16.msra.mxu0 %v7856
    %9196 = vmatprep.subr.bf16.mxu0 %v7865
    %9197 = vmatpush1.bf16.msra.mxu0 %v7864
    %9198 = vmatprep.subr.bf16.mxu0 %v7873
    %9199 = vmatpush1.bf16.msra.mxu0 %v7872
    %9200 = vmatprep.subr.bf16.mxu0 %v7881
    %9201 = vmatpush1.bf16.msra.mxu0 %v7880
    %9202 = vmatprep.subr.bf16.mxu0 %v7889
    %9203 = vmatpush1.bf16.msra.mxu0 %v7888
    %9204 = vmatprep.subr.bf16.mxu0 %v7897
    %9205 = vmatpush1.bf16.msra.mxu0 %v7896
    %9206 = vmatprep.subr.bf16.mxu0 %v7905
    %9207 = vmatpush1.bf16.msra.mxu0 %v7904
    %9208 = vmatprep.subr.bf16.mxu0 %v7913
    %9209 = vmatpush1.bf16.msra.mxu0 %v7912
    %9210 = vmatprep.subr.bf16.mxu0 %v7921
    %9211 = vmatpush1.bf16.msra.mxu0 %v7920
    %9212 = vmatprep.subr.bf16.mxu0 %v7929
    %9213 = vmatpush1.bf16.msra.mxu0 %v7928
    %9214 = vmatprep.subr.bf16.mxu0 %v7937
    %9215 = vmatpush1.bf16.msra.mxu0 %v7936
    %9216 = vmatprep.subr.bf16.mxu0 %v7945
    %9217 = vmatpush1.bf16.msra.mxu0 %v7944
    %9218 = vmatprep.mubr.bf16.mxu0 %v4447
    %9219 = vmatmul.mubr.bf16.gmra.mrb[0].mxu0 %v4446
    %v9220 = vpop.f32.mrb[0].mxu0
    %v9221 = vadd.f32 %v9180, %v9220
    %v9222 = vpop.f32.mrb[0].mxu0
    %v9223 = vadd.f32 %v9182, %v9222
    %v9224 = vpop.f32.mrb[0].mxu0
    %v9225 = vpop.f32.mrb[0].mxu0
    %9226 = vdwg.mxu0
    %9227 = vmatprep.subr.bf16.mxu0 %v7953
    %9228 = vmatpush1.bf16.msra.mxu0 %v7952
    %9229 = vmatprep.subr.bf16.mxu0 %v7961
    %9230 = vmatpush1.bf16.msra.mxu0 %v7960
    %9231 = vmatprep.subr.bf16.mxu0 %v7969
    %9232 = vmatpush1.bf16.msra.mxu0 %v7968
    %9233 = vmatprep.subr.bf16.mxu0 %v7977
    %9234 = vmatpush1.bf16.msra.mxu0 %v7976
    %9235 = vmatprep.subr.bf16.mxu0 %v7985
    %9236 = vmatpush1.bf16.msra.mxu0 %v7984
    %9237 = vmatprep.subr.bf16.mxu0 %v7993
    %9238 = vmatpush1.bf16.msra.mxu0 %v7992
    %9239 = vmatprep.subr.bf16.mxu0 %v8001
    %9240 = vmatpush1.bf16.msra.mxu0 %v8000
    %9241 = vmatprep.subr.bf16.mxu0 %v8009
    %9242 = vmatpush1.bf16.msra.mxu0 %v8008
    %9243 = vmatprep.subr.bf16.mxu0 %v8017
    %9244 = vmatpush1.bf16.msra.mxu0 %v8016
    %9245 = vmatprep.subr.bf16.mxu0 %v8025
    %9246 = vmatpush1.bf16.msra.mxu0 %v8024
    %9247 = vmatprep.subr.bf16.mxu0 %v8033
    %9248 = vmatpush1.bf16.msra.mxu0 %v8032
    %9249 = vmatprep.subr.bf16.mxu0 %v8041
    %9250 = vmatpush1.bf16.msra.mxu0 %v8040
    %9251 = vmatprep.subr.bf16.mxu0 %v8049
    %9252 = vmatpush1.bf16.msra.mxu0 %v8048
    %9253 = vmatprep.subr.bf16.mxu0 %v8057
    %9254 = vmatpush1.bf16.msra.mxu0 %v8056
    %9255 = vmatprep.subr.bf16.mxu0 %v8065
    %9256 = vmatpush1.bf16.msra.mxu0 %v8064
    %9257 = vmatprep.subr.bf16.mxu0 %v8073
    %9258 = vmatpush1.bf16.msra.mxu0 %v8072
    %9259 = vmatprep.mubr.bf16.mxu0 %v4449
    %9260 = vmatmul.mubr.bf16.gmra.mrb[0].mxu0 %v4448
    %v9261 = vpop.f32.mrb[0].mxu0
    %v9262 = vadd.f32 %v9221, %v9261
    %v9263 = vpop.f32.mrb[0].mxu0
    %v9264 = vadd.f32 %v9223, %v9263
    %v9265 = vpop.f32.mrb[0].mxu0
    %v9266 = vpop.f32.mrb[0].mxu0
    %9267 = vdwg.mxu0
    %9268 = vmatprep.subr.bf16.mxu0 %v8081
    %9269 = vmatpush1.bf16.msra.mxu0 %v8080
    %9270 = vmatprep.subr.bf16.mxu0 %v8089
    %9271 = vmatpush1.bf16.msra.mxu0 %v8088
    %9272 = vmatprep.subr.bf16.mxu0 %v8097
    %9273 = vmatpush1.bf16.msra.mxu0 %v8096
    %9274 = vmatprep.subr.bf16.mxu0 %v8105
    %9275 = vmatpush1.bf16.msra.mxu0 %v8104
    %9276 = vmatprep.subr.bf16.mxu0 %v8113
    %9277 = vmatpush1.bf16.msra.mxu0 %v8112
    %9278 = vmatprep.subr.bf16.mxu0 %v8121
    %9279 = vmatpush1.bf16.msra.mxu0 %v8120
    %9280 = vmatprep.subr.bf16.mxu0 %v8129
    %9281 = vmatpush1.bf16.msra.mxu0 %v8128
    %9282 = vmatprep.subr.bf16.mxu0 %v8137
    %9283 = vmatpush1.bf16.msra.mxu0 %v8136
    %9284 = vmatprep.subr.bf16.mxu0 %v8145
    %9285 = vmatpush1.bf16.msra.mxu0 %v8144
    %9286 = vmatprep.subr.bf16.mxu0 %v8153
    %9287 = vmatpush1.bf16.msra.mxu0 %v8152
    %9288 = vmatprep.subr.bf16.mxu0 %v8161
    %9289 = vmatpush1.bf16.msra.mxu0 %v8160
    %9290 = vmatprep.subr.bf16.mxu0 %v8169
    %9291 = vmatpush1.bf16.msra.mxu0 %v8168
    %9292 = vmatprep.subr.bf16.mxu0 %v8177
    %9293 = vmatpush1.bf16.msra.mxu0 %v8176
    %9294 = vmatprep.subr.bf16.mxu0 %v8185
    %9295 = vmatpush1.bf16.msra.mxu0 %v8184
    %9296 = vmatprep.subr.bf16.mxu0 %v8193
    %9297 = vmatpush1.bf16.msra.mxu0 %v8192
    %9298 = vmatprep.subr.bf16.mxu0 %v8201
    %9299 = vmatpush1.bf16.msra.mxu0 %v8200
    %9300 = vmatprep.mubr.bf16.mxu0 %v4451
    %9301 = vmatmul.mubr.bf16.gmra.mrb[0].mxu0 %v4450
    %v9302 = vpop.f32.mrb[0].mxu0
    %v9303 = vadd.f32 %v9262, %v9302
    %v9304 = vpop.f32.mrb[0].mxu0
    %v9305 = vadd.f32 %v9264, %v9304
    %v9306 = vpop.f32.mrb[0].mxu0
    %v9307 = vpop.f32.mrb[0].mxu0
    %9308 = vdwg.mxu0
    %9309 = vmatprep.subr.bf16.mxu0 %v8209
    %9310 = vmatpush1.bf16.msra.mxu0 %v8208
    %9311 = vmatprep.subr.bf16.mxu0 %v8217
    %9312 = vmatpush1.bf16.msra.mxu0 %v8216
    %9313 = vmatprep.subr.bf16.mxu0 %v8225
    %9314 = vmatpush1.bf16.msra.mxu0 %v8224
    %9315 = vmatprep.subr.bf16.mxu0 %v8233
    %9316 = vmatpush1.bf16.msra.mxu0 %v8232
    %9317 = vmatprep.subr.bf16.mxu0 %v8241
    %9318 = vmatpush1.bf16.msra.mxu0 %v8240
    %9319 = vmatprep.subr.bf16.mxu0 %v8249
    %9320 = vmatpush1.bf16.msra.mxu0 %v8248
    %9321 = vmatprep.subr.bf16.mxu0 %v8257
    %9322 = vmatpush1.bf16.msra.mxu0 %v8256
    %9323 = vmatprep.subr.bf16.mxu0 %v8265
    %9324 = vmatpush1.bf16.msra.mxu0 %v8264
    %9325 = vmatprep.subr.bf16.mxu0 %v8273
    %9326 = vmatpush1.bf16.msra.mxu0 %v8272
    %9327 = vmatprep.subr.bf16.mxu0 %v8281
    %9328 = vmatpush1.bf16.msra.mxu0 %v8280
    %9329 = vmatprep.subr.bf16.mxu0 %v8289
    %9330 = vmatpush1.bf16.msra.mxu0 %v8288
    %9331 = vmatprep.subr.bf16.mxu0 %v8297
    %9332 = vmatpush1.bf16.msra.mxu0 %v8296
    %9333 = vmatprep.subr.bf16.mxu0 %v8305
    %9334 = vmatpush1.bf16.msra.mxu0 %v8304
    %9335 = vmatprep.subr.bf16.mxu0 %v8313
    %9336 = vmatpush1.bf16.msra.mxu0 %v8312
    %9337 = vmatprep.subr.bf16.mxu0 %v8321
    %9338 = vmatpush1.bf16.msra.mxu0 %v8320
    %9339 = vmatprep.subr.bf16.mxu0 %v8329
    %9340 = vmatpush1.bf16.msra.mxu0 %v8328
    %9341 = vmatprep.mubr.bf16.mxu0 %v4453
    %9342 = vmatmul.mubr.bf16.gmra.mrb[0].mxu0 %v4452
    %v9343 = vpop.f32.mrb[0].mxu0
    %v9344 = vadd.f32 %v9303, %v9343
    %v9345 = vpop.f32.mrb[0].mxu0
    %v9346 = vadd.f32 %v9305, %v9345
    %v9347 = vpop.f32.mrb[0].mxu0
    %v9348 = vpop.f32.mrb[0].mxu0
    %9349 = vdwg.mxu0
    %9350 = vmatprep.subr.bf16.mxu0 %v7571
    %9351 = vmatpush1.bf16.msra.mxu0 %v7570
    %9352 = vmatprep.subr.bf16.mxu0 %v7579
    %9353 = vmatpush1.bf16.msra.mxu0 %v7578
    %9354 = vmatprep.subr.bf16.mxu0 %v7587
    %9355 = vmatpush1.bf16.msra.mxu0 %v7586
    %9356 = vmatprep.subr.bf16.mxu0 %v7595
    %9357 = vmatpush1.bf16.msra.mxu0 %v7594
    %9358 = vmatprep.subr.bf16.mxu0 %v7603
    %9359 = vmatpush1.bf16.msra.mxu0 %v7602
    %9360 = vmatprep.subr.bf16.mxu0 %v7611
    %9361 = vmatpush1.bf16.msra.mxu0 %v7610
    %9362 = vmatprep.subr.bf16.mxu0 %v7619
    %9363 = vmatpush1.bf16.msra.mxu0 %v7618
    %9364 = vmatprep.subr.bf16.mxu0 %v7627
    %9365 = vmatpush1.bf16.msra.mxu0 %v7626
    %9366 = vmatprep.subr.bf16.mxu0 %v7635
    %9367 = vmatpush1.bf16.msra.mxu0 %v7634
    %9368 = vmatprep.subr.bf16.mxu0 %v7643
    %9369 = vmatpush1.bf16.msra.mxu0 %v7642
    %9370 = vmatprep.subr.bf16.mxu0 %v7651
    %9371 = vmatpush1.bf16.msra.mxu0 %v7650
    %9372 = vmatprep.subr.bf16.mxu0 %v7659
    %9373 = vmatpush1.bf16.msra.mxu0 %v7658
    %9374 = vmatprep.subr.bf16.mxu0 %v7667
    %9375 = vmatpush1.bf16.msra.mxu0 %v7666
    %9376 = vmatprep.subr.bf16.mxu0 %v7675
    %9377 = vmatpush1.bf16.msra.mxu0 %v7674
    %9378 = vmatprep.subr.bf16.mxu0 %v7683
    %9379 = vmatpush1.bf16.msra.mxu0 %v7682
    %9380 = vmatprep.subr.bf16.mxu0 %v7691
    %9381 = vmatpush1.bf16.msra.mxu0 %v7690
    %9382 = vmatprep.mubr.bf16.mxu0 %v4443
    %9383 = vmatmul.mubr.bf16.gmra.mrb[0].mxu0 %v4442
    %v9384 = vpop.f32.mrb[0].mxu0
    %v9385 = vadd.f32 %v5235, %v9384
    %v9386 = vpop.f32.mrb[0].mxu0
    %v9387 = vadd.f32 %v5239, %v9386
    %v9388 = vpop.f32.mrb[0].mxu0
    %v9389 = vpop.f32.mrb[0].mxu0
    %9390 = vdwg.mxu0
    %9391 = vmatprep.subr.bf16.mxu0 %v7699
    %9392 = vmatpush1.bf16.msra.mxu0 %v7698
    %9393 = vmatprep.subr.bf16.mxu0 %v7707
    %9394 = vmatpush1.bf16.msra.mxu0 %v7706
    %9395 = vmatprep.subr.bf16.mxu0 %v7715
    %9396 = vmatpush1.bf16.msra.mxu0 %v7714
    %9397 = vmatprep.subr.bf16.mxu0 %v7723
    %9398 = vmatpush1.bf16.msra.mxu0 %v7722
    %9399 = vmatprep.subr.bf16.mxu0 %v7731
    %9400 = vmatpush1.bf16.msra.mxu0 %v7730
    %9401 = vmatprep.subr.bf16.mxu0 %v7739
    %9402 = vmatpush1.bf16.msra.mxu0 %v7738
    %9403 = vmatprep.subr.bf16.mxu0 %v7747
    %9404 = vmatpush1.bf16.msra.mxu0 %v7746
    %9405 = vmatprep.subr.bf16.mxu0 %v7755
    %9406 = vmatpush1.bf16.msra.mxu0 %v7754
    %9407 = vmatprep.subr.bf16.mxu0 %v7763
    %9408 = vmatpush1.bf16.msra.mxu0 %v7762
    %9409 = vmatprep.subr.bf16.mxu0 %v7771
    %9410 = vmatpush1.bf16.msra.mxu0 %v7770
    %9411 = vmatprep.subr.bf16.mxu0 %v7779
    %9412 = vmatpush1.bf16.msra.mxu0 %v7778
    %9413 = vmatprep.subr.bf16.mxu0 %v7787
    %9414 = vmatpush1.bf16.msra.mxu0 %v7786
    %9415 = vmatprep.subr.bf16.mxu0 %v7795
    %9416 = vmatpush1.bf16.msra.mxu0 %v7794
    %9417 = vmatprep.subr.bf16.mxu0 %v7803
    %9418 = vmatpush1.bf16.msra.mxu0 %v7802
    %9419 = vmatprep.subr.bf16.mxu0 %v7811
    %9420 = vmatpush1.bf16.msra.mxu0 %v7810
    %9421 = vmatprep.subr.bf16.mxu0 %v7819
    %9422 = vmatpush1.bf16.msra.mxu0 %v7818
    %9423 = vmatprep.mubr.bf16.mxu0 %v4445
    %9424 = vmatmul.mubr.bf16.gmra.mrb[0].mxu0 %v4444
    %v9425 = vpop.f32.mrb[0].mxu0
    %v9426 = vadd.f32 %v9385, %v9425
    %v9427 = vpop.f32.mrb[0].mxu0
    %v9428 = vadd.f32 %v9387, %v9427
    %v9429 = vpop.f32.mrb[0].mxu0
    %v9430 = vpop.f32.mrb[0].mxu0
    %9431 = vdwg.mxu0
    %9432 = vmatprep.subr.bf16.mxu0 %v7827
    %9433 = vmatpush1.bf16.msra.mxu0 %v7826
    %9434 = vmatprep.subr.bf16.mxu0 %v7835
    %9435 = vmatpush1.bf16.msra.mxu0 %v7834
    %9436 = vmatprep.subr.bf16.mxu0 %v7843
    %9437 = vmatpush1.bf16.msra.mxu0 %v7842
    %9438 = vmatprep.subr.bf16.mxu0 %v7851
    %9439 = vmatpush1.bf16.msra.mxu0 %v7850
    %9440 = vmatprep.subr.bf16.mxu0 %v7859
    %9441 = vmatpush1.bf16.msra.mxu0 %v7858
    %9442 = vmatprep.subr.bf16.mxu0 %v7867
    %9443 = vmatpush1.bf16.msra.mxu0 %v7866
    %9444 = vmatprep.subr.bf16.mxu0 %v7875
    %9445 = vmatpush1.bf16.msra.mxu0 %v7874
    %9446 = vmatprep.subr.bf16.mxu0 %v7883
    %9447 = vmatpush1.bf16.msra.mxu0 %v7882
    %9448 = vmatprep.subr.bf16.mxu0 %v7891
    %9449 = vmatpush1.bf16.msra.mxu0 %v7890
    %9450 = vmatprep.subr.bf16.mxu0 %v7899
    %9451 = vmatpush1.bf16.msra.mxu0 %v7898
    %9452 = vmatprep.subr.bf16.mxu0 %v7907
    %9453 = vmatpush1.bf16.msra.mxu0 %v7906
    %9454 = vmatprep.subr.bf16.mxu0 %v7915
    %9455 = vmatpush1.bf16.msra.mxu0 %v7914
    %9456 = vmatprep.subr.bf16.mxu0 %v7923
    %9457 = vmatpush1.bf16.msra.mxu0 %v7922
    %9458 = vmatprep.subr.bf16.mxu0 %v7931
    %9459 = vmatpush1.bf16.msra.mxu0 %v7930
    %9460 = vmatprep.subr.bf16.mxu0 %v7939
    %9461 = vmatpush1.bf16.msra.mxu0 %v7938
    %9462 = vmatprep.subr.bf16.mxu0 %v7947
    %9463 = vmatpush1.bf16.msra.mxu0 %v7946
    %9464 = vmatprep.mubr.bf16.mxu0 %v4447
    %9465 = vmatmul.mubr.bf16.gmra.mrb[0].mxu0 %v4446
    %v9466 = vpop.f32.mrb[0].mxu0
    %v9467 = vadd.f32 %v9426, %v9466
    %v9468 = vpop.f32.mrb[0].mxu0
    %v9469 = vadd.f32 %v9428, %v9468
    %v9470 = vpop.f32.mrb[0].mxu0
    %v9471 = vpop.f32.mrb[0].mxu0
    %9472 = vdwg.mxu0
    %9473 = vmatprep.subr.bf16.mxu0 %v7955
    %9474 = vmatpush1.bf16.msra.mxu0 %v7954
    %9475 = vmatprep.subr.bf16.mxu0 %v7963
    %9476 = vmatpush1.bf16.msra.mxu0 %v7962
    %9477 = vmatprep.subr.bf16.mxu0 %v7971
    %9478 = vmatpush1.bf16.msra.mxu0 %v7970
    %9479 = vmatprep.subr.bf16.mxu0 %v7979
    %9480 = vmatpush1.bf16.msra.mxu0 %v7978
    %9481 = vmatprep.subr.bf16.mxu0 %v7987
    %9482 = vmatpush1.bf16.msra.mxu0 %v7986
    %9483 = vmatprep.subr.bf16.mxu0 %v7995
    %9484 = vmatpush1.bf16.msra.mxu0 %v7994
    %9485 = vmatprep.subr.bf16.mxu0 %v8003
    %9486 = vmatpush1.bf16.msra.mxu0 %v8002
    %9487 = vmatprep.subr.bf16.mxu0 %v8011
    %9488 = vmatpush1.bf16.msra.mxu0 %v8010
    %9489 = vmatprep.subr.bf16.mxu0 %v8019
    %9490 = vmatpush1.bf16.msra.mxu0 %v8018
    %9491 = vmatprep.subr.bf16.mxu0 %v8027
    %9492 = vmatpush1.bf16.msra.mxu0 %v8026
    %9493 = vmatprep.subr.bf16.mxu0 %v8035
    %9494 = vmatpush1.bf16.msra.mxu0 %v8034
    %9495 = vmatprep.subr.bf16.mxu0 %v8043
    %9496 = vmatpush1.bf16.msra.mxu0 %v8042
    %9497 = vmatprep.subr.bf16.mxu0 %v8051
    %9498 = vmatpush1.bf16.msra.mxu0 %v8050
    %9499 = vmatprep.subr.bf16.mxu0 %v8059
    %9500 = vmatpush1.bf16.msra.mxu0 %v8058
    %9501 = vmatprep.subr.bf16.mxu0 %v8067
    %9502 = vmatpush1.bf16.msra.mxu0 %v8066
    %9503 = vmatprep.subr.bf16.mxu0 %v8075
    %9504 = vmatpush1.bf16.msra.mxu0 %v8074
    %9505 = vmatprep.mubr.bf16.mxu0 %v4449
    %9506 = vmatmul.mubr.bf16.gmra.mrb[0].mxu0 %v4448
    %v9507 = vpop.f32.mrb[0].mxu0
    %v9508 = vadd.f32 %v9467, %v9507
    %v9509 = vpop.f32.mrb[0].mxu0
    %v9510 = vadd.f32 %v9469, %v9509
    %v9511 = vpop.f32.mrb[0].mxu0
    %v9512 = vpop.f32.mrb[0].mxu0
    %9513 = vdwg.mxu0
    %9514 = vmatprep.subr.bf16.mxu0 %v8083
    %9515 = vmatpush1.bf16.msra.mxu0 %v8082
    %9516 = vmatprep.subr.bf16.mxu0 %v8091
    %9517 = vmatpush1.bf16.msra.mxu0 %v8090
    %9518 = vmatprep.subr.bf16.mxu0 %v8099
    %9519 = vmatpush1.bf16.msra.mxu0 %v8098
    %9520 = vmatprep.subr.bf16.mxu0 %v8107
    %9521 = vmatpush1.bf16.msra.mxu0 %v8106
    %9522 = vmatprep.subr.bf16.mxu0 %v8115
    %9523 = vmatpush1.bf16.msra.mxu0 %v8114
    %9524 = vmatprep.subr.bf16.mxu0 %v8123
    %9525 = vmatpush1.bf16.msra.mxu0 %v8122
    %9526 = vmatprep.subr.bf16.mxu0 %v8131
    %9527 = vmatpush1.bf16.msra.mxu0 %v8130
    %9528 = vmatprep.subr.bf16.mxu0 %v8139
    %9529 = vmatpush1.bf16.msra.mxu0 %v8138
    %9530 = vmatprep.subr.bf16.mxu0 %v8147
    %9531 = vmatpush1.bf16.msra.mxu0 %v8146
    %9532 = vmatprep.subr.bf16.mxu0 %v8155
    %9533 = vmatpush1.bf16.msra.mxu0 %v8154
    %9534 = vmatprep.subr.bf16.mxu0 %v8163
    %9535 = vmatpush1.bf16.msra.mxu0 %v8162
    %9536 = vmatprep.subr.bf16.mxu0 %v8171
    %9537 = vmatpush1.bf16.msra.mxu0 %v8170
    %9538 = vmatprep.subr.bf16.mxu0 %v8179
    %9539 = vmatpush1.bf16.msra.mxu0 %v8178
    %9540 = vmatprep.subr.bf16.mxu0 %v8187
    %9541 = vmatpush1.bf16.msra.mxu0 %v8186
    %9542 = vmatprep.subr.bf16.mxu0 %v8195
    %9543 = vmatpush1.bf16.msra.mxu0 %v8194
    %9544 = vmatprep.subr.bf16.mxu0 %v8203
    %9545 = vmatpush1.bf16.msra.mxu0 %v8202
    %9546 = vmatprep.mubr.bf16.mxu0 %v4451
    %9547 = vmatmul.mubr.bf16.gmra.mrb[0].mxu0 %v4450
    %v9548 = vpop.f32.mrb[0].mxu0
    %v9549 = vadd.f32 %v9508, %v9548
    %v9550 = vpop.f32.mrb[0].mxu0
    %v9551 = vadd.f32 %v9510, %v9550
    %v9552 = vpop.f32.mrb[0].mxu0
    %v9553 = vpop.f32.mrb[0].mxu0
    %9554 = vdwg.mxu0
    %9555 = vmatprep.subr.bf16.mxu0 %v8211
    %9556 = vmatpush1.bf16.msra.mxu0 %v8210
    %9557 = vmatprep.subr.bf16.mxu0 %v8219
    %9558 = vmatpush1.bf16.msra.mxu0 %v8218
    %9559 = vmatprep.subr.bf16.mxu0 %v8227
    %9560 = vmatpush1.bf16.msra.mxu0 %v8226
    %9561 = vmatprep.subr.bf16.mxu0 %v8235
    %9562 = vmatpush1.bf16.msra.mxu0 %v8234
    %9563 = vmatprep.subr.bf16.mxu0 %v8243
    %9564 = vmatpush1.bf16.msra.mxu0 %v8242
    %9565 = vmatprep.subr.bf16.mxu0 %v8251
    %9566 = vmatpush1.bf16.msra.mxu0 %v8250
    %9567 = vmatprep.subr.bf16.mxu0 %v8259
    %9568 = vmatpush1.bf16.msra.mxu0 %v8258
    %9569 = vmatprep.subr.bf16.mxu0 %v8267
    %9570 = vmatpush1.bf16.msra.mxu0 %v8266
    %9571 = vmatprep.subr.bf16.mxu0 %v8275
    %9572 = vmatpush1.bf16.msra.mxu0 %v8274
    %9573 = vmatprep.subr.bf16.mxu0 %v8283
    %9574 = vmatpush1.bf16.msra.mxu0 %v8282
    %9575 = vmatprep.subr.bf16.mxu0 %v8291
    %9576 = vmatpush1.bf16.msra.mxu0 %v8290
    %9577 = vmatprep.subr.bf16.mxu0 %v8299
    %9578 = vmatpush1.bf16.msra.mxu0 %v8298
    %9579 = vmatprep.subr.bf16.mxu0 %v8307
    %9580 = vmatpush1.bf16.msra.mxu0 %v8306
    %9581 = vmatprep.subr.bf16.mxu0 %v8315
    %9582 = vmatpush1.bf16.msra.mxu0 %v8314
    %9583 = vmatprep.subr.bf16.mxu0 %v8323
    %9584 = vmatpush1.bf16.msra.mxu0 %v8322
    %9585 = vmatprep.subr.bf16.mxu0 %v8331
    %9586 = vmatpush1.bf16.msra.mxu0 %v8330
    %9587 = vmatprep.mubr.bf16.mxu0 %v4453
    %9588 = vmatmul.mubr.bf16.gmra.mrb[0].mxu0 %v4452
    %v9589 = vpop.f32.mrb[0].mxu0
    %v9590 = vadd.f32 %v9549, %v9589
    %v9591 = vpop.f32.mrb[0].mxu0
    %v9592 = vadd.f32 %v9551, %v9591
    %v9593 = vpop.f32.mrb[0].mxu0
    %v9594 = vpop.f32.mrb[0].mxu0
    %9595 = vdwg.mxu0
    %9596 = vmatprep.subr.bf16.mxu0 %v7573
    %9597 = vmatpush1.bf16.msra.mxu0 %v7572
    %9598 = vmatprep.subr.bf16.mxu0 %v7581
    %9599 = vmatpush1.bf16.msra.mxu0 %v7580
    %9600 = vmatprep.subr.bf16.mxu0 %v7589
    %9601 = vmatpush1.bf16.msra.mxu0 %v7588
    %9602 = vmatprep.subr.bf16.mxu0 %v7597
    %9603 = vmatpush1.bf16.msra.mxu0 %v7596
    %9604 = vmatprep.subr.bf16.mxu0 %v7605
    %9605 = vmatpush1.bf16.msra.mxu0 %v7604
    %9606 = vmatprep.subr.bf16.mxu0 %v7613
    %9607 = vmatpush1.bf16.msra.mxu0 %v7612
    %9608 = vmatprep.subr.bf16.mxu0 %v7621
    %9609 = vmatpush1.bf16.msra.mxu0 %v7620
    %9610 = vmatprep.subr.bf16.mxu0 %v7629
    %9611 = vmatpush1.bf16.msra.mxu0 %v7628
    %9612 = vmatprep.subr.bf16.mxu0 %v7637
    %9613 = vmatpush1.bf16.msra.mxu0 %v7636
    %9614 = vmatprep.subr.bf16.mxu0 %v7645
    %9615 = vmatpush1.bf16.msra.mxu0 %v7644
    %9616 = vmatprep.subr.bf16.mxu0 %v7653
    %9617 = vmatpush1.bf16.msra.mxu0 %v7652
    %9618 = vmatprep.subr.bf16.mxu0 %v7661
    %9619 = vmatpush1.bf16.msra.mxu0 %v7660
    %9620 = vmatprep.subr.bf16.mxu0 %v7669
    %9621 = vmatpush1.bf16.msra.mxu0 %v7668
    %9622 = vmatprep.subr.bf16.mxu0 %v7677
    %9623 = vmatpush1.bf16.msra.mxu0 %v7676
    %9624 = vmatprep.subr.bf16.mxu0 %v7685
    %9625 = vmatpush1.bf16.msra.mxu0 %v7684
    %9626 = vmatprep.subr.bf16.mxu0 %v7693
    %9627 = vmatpush1.bf16.msra.mxu0 %v7692
    %9628 = vmatprep.mubr.bf16.mxu0 %v4443
    %9629 = vmatmul.mubr.bf16.gmra.mrb[0].mxu0 %v4442
    %v9630 = vpop.f32.mrb[0].mxu0
    %v9631 = vadd.f32 %v5243, %v9630
    %v9632 = vpop.f32.mrb[0].mxu0
    %v9633 = vadd.f32 %v5247, %v9632
    %v9634 = vpop.f32.mrb[0].mxu0
    %v9635 = vpop.f32.mrb[0].mxu0
    %9636 = vdwg.mxu0
    %9637 = vmatprep.subr.bf16.mxu0 %v7701
    %9638 = vmatpush1.bf16.msra.mxu0 %v7700
    %9639 = vmatprep.subr.bf16.mxu0 %v7709
    %9640 = vmatpush1.bf16.msra.mxu0 %v7708
    %9641 = vmatprep.subr.bf16.mxu0 %v7717
    %9642 = vmatpush1.bf16.msra.mxu0 %v7716
    %9643 = vmatprep.subr.bf16.mxu0 %v7725
    %9644 = vmatpush1.bf16.msra.mxu0 %v7724
    %9645 = vmatprep.subr.bf16.mxu0 %v7733
    %9646 = vmatpush1.bf16.msra.mxu0 %v7732
    %9647 = vmatprep.subr.bf16.mxu0 %v7741
    %9648 = vmatpush1.bf16.msra.mxu0 %v7740
    %9649 = vmatprep.subr.bf16.mxu0 %v7749
    %9650 = vmatpush1.bf16.msra.mxu0 %v7748
    %9651 = vmatprep.subr.bf16.mxu0 %v7757
    %9652 = vmatpush1.bf16.msra.mxu0 %v7756
    %9653 = vmatprep.subr.bf16.mxu0 %v7765
    %9654 = vmatpush1.bf16.msra.mxu0 %v7764
    %9655 = vmatprep.subr.bf16.mxu0 %v7773
    %9656 = vmatpush1.bf16.msra.mxu0 %v7772
    %9657 = vmatprep.subr.bf16.mxu0 %v7781
    %9658 = vmatpush1.bf16.msra.mxu0 %v7780
    %9659 = vmatprep.subr.bf16.mxu0 %v7789
    %9660 = vmatpush1.bf16.msra.mxu0 %v7788
    %9661 = vmatprep.subr.bf16.mxu0 %v7797
    %9662 = vmatpush1.bf16.msra.mxu0 %v7796
    %9663 = vmatprep.subr.bf16.mxu0 %v7805
    %9664 = vmatpush1.bf16.msra.mxu0 %v7804
    %9665 = vmatprep.subr.bf16.mxu0 %v7813
    %9666 = vmatpush1.bf16.msra.mxu0 %v7812
    %9667 = vmatprep.subr.bf16.mxu0 %v7821
    %9668 = vmatpush1.bf16.msra.mxu0 %v7820
    %9669 = vmatprep.mubr.bf16.mxu0 %v4445
    %9670 = vmatmul.mubr.bf16.gmra.mrb[0].mxu0 %v4444
    %v9671 = vpop.f32.mrb[0].mxu0
    %v9672 = vadd.f32 %v9631, %v9671
    %v9673 = vpop.f32.mrb[0].mxu0
    %v9674 = vadd.f32 %v9633, %v9673
    %v9675 = vpop.f32.mrb[0].mxu0
    %v9676 = vpop.f32.mrb[0].mxu0
    %9677 = vdwg.mxu0
    %9678 = vmatprep.subr.bf16.mxu0 %v7829
    %9679 = vmatpush1.bf16.msra.mxu0 %v7828
    %9680 = vmatprep.subr.bf16.mxu0 %v7837
    %9681 = vmatpush1.bf16.msra.mxu0 %v7836
    %9682 = vmatprep.subr.bf16.mxu0 %v7845
    %9683 = vmatpush1.bf16.msra.mxu0 %v7844
    %9684 = vmatprep.subr.bf16.mxu0 %v7853
    %9685 = vmatpush1.bf16.msra.mxu0 %v7852
    %9686 = vmatprep.subr.bf16.mxu0 %v7861
    %9687 = vmatpush1.bf16.msra.mxu0 %v7860
    %9688 = vmatprep.subr.bf16.mxu0 %v7869
    %9689 = vmatpush1.bf16.msra.mxu0 %v7868
    %9690 = vmatprep.subr.bf16.mxu0 %v7877
    %9691 = vmatpush1.bf16.msra.mxu0 %v7876
    %9692 = vmatprep.subr.bf16.mxu0 %v7885
    %9693 = vmatpush1.bf16.msra.mxu0 %v7884
    %9694 = vmatprep.subr.bf16.mxu0 %v7893
    %9695 = vmatpush1.bf16.msra.mxu0 %v7892
    %9696 = vmatprep.subr.bf16.mxu0 %v7901
    %9697 = vmatpush1.bf16.msra.mxu0 %v7900
    %9698 = vmatprep.subr.bf16.mxu0 %v7909
    %9699 = vmatpush1.bf16.msra.mxu0 %v7908
    %9700 = vmatprep.subr.bf16.mxu0 %v7917
    %9701 = vmatpush1.bf16.msra.mxu0 %v7916
    %9702 = vmatprep.subr.bf16.mxu0 %v7925
    %9703 = vmatpush1.bf16.msra.mxu0 %v7924
    %9704 = vmatprep.subr.bf16.mxu0 %v7933
    %9705 = vmatpush1.bf16.msra.mxu0 %v7932
    %9706 = vmatprep.subr.bf16.mxu0 %v7941
    %9707 = vmatpush1.bf16.msra.mxu0 %v7940
    %9708 = vmatprep.subr.bf16.mxu0 %v7949
    %9709 = vmatpush1.bf16.msra.mxu0 %v7948
    %9710 = vmatprep.mubr.bf16.mxu0 %v4447
    %9711 = vmatmul.mubr.bf16.gmra.mrb[0].mxu0 %v4446
    %v9712 = vpop.f32.mrb[0].mxu0
    %v9713 = vadd.f32 %v9672, %v9712
    %v9714 = vpop.f32.mrb[0].mxu0
    %v9715 = vadd.f32 %v9674, %v9714
    %v9716 = vpop.f32.mrb[0].mxu0
    %v9717 = vpop.f32.mrb[0].mxu0
    %9718 = vdwg.mxu0
    %9719 = vmatprep.subr.bf16.mxu0 %v7957
    %9720 = vmatpush1.bf16.msra.mxu0 %v7956
    %9721 = vmatprep.subr.bf16.mxu0 %v7965
    %9722 = vmatpush1.bf16.msra.mxu0 %v7964
    %9723 = vmatprep.subr.bf16.mxu0 %v7973
    %9724 = vmatpush1.bf16.msra.mxu0 %v7972
    %9725 = vmatprep.subr.bf16.mxu0 %v7981
    %9726 = vmatpush1.bf16.msra.mxu0 %v7980
    %9727 = vmatprep.subr.bf16.mxu0 %v7989
    %9728 = vmatpush1.bf16.msra.mxu0 %v7988
    %9729 = vmatprep.subr.bf16.mxu0 %v7997
    %9730 = vmatpush1.bf16.msra.mxu0 %v7996
    %9731 = vmatprep.subr.bf16.mxu0 %v8005
    %9732 = vmatpush1.bf16.msra.mxu0 %v8004
    %9733 = vmatprep.subr.bf16.mxu0 %v8013
    %9734 = vmatpush1.bf16.msra.mxu0 %v8012
    %9735 = vmatprep.subr.bf16.mxu0 %v8021
    %9736 = vmatpush1.bf16.msra.mxu0 %v8020
    %9737 = vmatprep.subr.bf16.mxu0 %v8029
    %9738 = vmatpush1.bf16.msra.mxu0 %v8028
    %9739 = vmatprep.subr.bf16.mxu0 %v8037
    %9740 = vmatpush1.bf16.msra.mxu0 %v8036
    %9741 = vmatprep.subr.bf16.mxu0 %v8045
    %9742 = vmatpush1.bf16.msra.mxu0 %v8044
    %9743 = vmatprep.subr.bf16.mxu0 %v8053
    %9744 = vmatpush1.bf16.msra.mxu0 %v8052
    %9745 = vmatprep.subr.bf16.mxu0 %v8061
    %9746 = vmatpush1.bf16.msra.mxu0 %v8060
    %9747 = vmatprep.subr.bf16.mxu0 %v8069
    %9748 = vmatpush1.bf16.msra.mxu0 %v8068
    %9749 = vmatprep.subr.bf16.mxu0 %v8077
    %9750 = vmatpush1.bf16.msra.mxu0 %v8076
    %9751 = vmatprep.mubr.bf16.mxu0 %v4449
    %9752 = vmatmul.mubr.bf16.gmra.mrb[0].mxu0 %v4448
    %v9753 = vpop.f32.mrb[0].mxu0
    %v9754 = vadd.f32 %v9713, %v9753
    %v9755 = vpop.f32.mrb[0].mxu0
    %v9756 = vadd.f32 %v9715, %v9755
    %v9757 = vpop.f32.mrb[0].mxu0
    %v9758 = vpop.f32.mrb[0].mxu0
    %9759 = vdwg.mxu0
    %9760 = vmatprep.subr.bf16.mxu0 %v8085
    %9761 = vmatpush1.bf16.msra.mxu0 %v8084
    %9762 = vmatprep.subr.bf16.mxu0 %v8093
    %9763 = vmatpush1.bf16.msra.mxu0 %v8092
    %9764 = vmatprep.subr.bf16.mxu0 %v8101
    %9765 = vmatpush1.bf16.msra.mxu0 %v8100
    %9766 = vmatprep.subr.bf16.mxu0 %v8109
    %9767 = vmatpush1.bf16.msra.mxu0 %v8108
    %9768 = vmatprep.subr.bf16.mxu0 %v8117
    %9769 = vmatpush1.bf16.msra.mxu0 %v8116
    %9770 = vmatprep.subr.bf16.mxu0 %v8125
    %9771 = vmatpush1.bf16.msra.mxu0 %v8124
    %9772 = vmatprep.subr.bf16.mxu0 %v8133
    %9773 = vmatpush1.bf16.msra.mxu0 %v8132
    %9774 = vmatprep.subr.bf16.mxu0 %v8141
    %9775 = vmatpush1.bf16.msra.mxu0 %v8140
    %9776 = vmatprep.subr.bf16.mxu0 %v8149
    %9777 = vmatpush1.bf16.msra.mxu0 %v8148
    %9778 = vmatprep.subr.bf16.mxu0 %v8157
    %9779 = vmatpush1.bf16.msra.mxu0 %v8156
    %9780 = vmatprep.subr.bf16.mxu0 %v8165
    %9781 = vmatpush1.bf16.msra.mxu0 %v8164
    %9782 = vmatprep.subr.bf16.mxu0 %v8173
    %9783 = vmatpush1.bf16.msra.mxu0 %v8172
    %9784 = vmatprep.subr.bf16.mxu0 %v8181
    %9785 = vmatpush1.bf16.msra.mxu0 %v8180
    %9786 = vmatprep.subr.bf16.mxu0 %v8189
    %9787 = vmatpush1.bf16.msra.mxu0 %v8188
    %9788 = vmatprep.subr.bf16.mxu0 %v8197
    %9789 = vmatpush1.bf16.msra.mxu0 %v8196
    %9790 = vmatprep.subr.bf16.mxu0 %v8205
    %9791 = vmatpush1.bf16.msra.mxu0 %v8204
    %9792 = vmatprep.mubr.bf16.mxu0 %v4451
    %9793 = vmatmul.mubr.bf16.gmra.mrb[0].mxu0 %v4450
    %v9794 = vpop.f32.mrb[0].mxu0
    %v9795 = vadd.f32 %v9754, %v9794
    %v9796 = vpop.f32.mrb[0].mxu0
    %v9797 = vadd.f32 %v9756, %v9796
    %v9798 = vpop.f32.mrb[0].mxu0
    %v9799 = vpop.f32.mrb[0].mxu0
    %9800 = vdwg.mxu0
    %9801 = vmatprep.subr.bf16.mxu0 %v8213
    %9802 = vmatpush1.bf16.msra.mxu0 %v8212
    %9803 = vmatprep.subr.bf16.mxu0 %v8221
    %9804 = vmatpush1.bf16.msra.mxu0 %v8220
    %9805 = vmatprep.subr.bf16.mxu0 %v8229
    %9806 = vmatpush1.bf16.msra.mxu0 %v8228
    %9807 = vmatprep.subr.bf16.mxu0 %v8237
    %9808 = vmatpush1.bf16.msra.mxu0 %v8236
    %9809 = vmatprep.subr.bf16.mxu0 %v8245
    %9810 = vmatpush1.bf16.msra.mxu0 %v8244
    %9811 = vmatprep.subr.bf16.mxu0 %v8253
    %9812 = vmatpush1.bf16.msra.mxu0 %v8252
    %9813 = vmatprep.subr.bf16.mxu0 %v8261
    %9814 = vmatpush1.bf16.msra.mxu0 %v8260
    %9815 = vmatprep.subr.bf16.mxu0 %v8269
    %9816 = vmatpush1.bf16.msra.mxu0 %v8268
    %9817 = vmatprep.subr.bf16.mxu0 %v8277
    %9818 = vmatpush1.bf16.msra.mxu0 %v8276
    %9819 = vmatprep.subr.bf16.mxu0 %v8285
    %9820 = vmatpush1.bf16.msra.mxu0 %v8284
    %9821 = vmatprep.subr.bf16.mxu0 %v8293
    %9822 = vmatpush1.bf16.msra.mxu0 %v8292
    %9823 = vmatprep.subr.bf16.mxu0 %v8301
    %9824 = vmatpush1.bf16.msra.mxu0 %v8300
    %9825 = vmatprep.subr.bf16.mxu0 %v8309
    %9826 = vmatpush1.bf16.msra.mxu0 %v8308
    %9827 = vmatprep.subr.bf16.mxu0 %v8317
    %9828 = vmatpush1.bf16.msra.mxu0 %v8316
    %9829 = vmatprep.subr.bf16.mxu0 %v8325
    %9830 = vmatpush1.bf16.msra.mxu0 %v8324
    %9831 = vmatprep.subr.bf16.mxu0 %v8333
    %9832 = vmatpush1.bf16.msra.mxu0 %v8332
    %9833 = vmatprep.mubr.bf16.mxu0 %v4453
    %9834 = vmatmul.mubr.bf16.gmra.mrb[0].mxu0 %v4452
    %v9835 = vpop.f32.mrb[0].mxu0
    %v9836 = vadd.f32 %v9795, %v9835
    %v9837 = vpop.f32.mrb[0].mxu0
    %v9838 = vadd.f32 %v9797, %v9837
    %v9839 = vpop.f32.mrb[0].mxu0
    %v9840 = vpop.f32.mrb[0].mxu0
    %9841 = vdwg.mxu0
    %9842 = vmatprep.subr.bf16.mxu0 %v7575
    %9843 = vmatpush1.bf16.msra.mxu0 %v7574
    %9844 = vmatprep.subr.bf16.mxu0 %v7583
    %9845 = vmatpush1.bf16.msra.mxu0 %v7582
    %9846 = vmatprep.subr.bf16.mxu0 %v7591
    %9847 = vmatpush1.bf16.msra.mxu0 %v7590
    %9848 = vmatprep.subr.bf16.mxu0 %v7599
    %9849 = vmatpush1.bf16.msra.mxu0 %v7598
    %9850 = vmatprep.subr.bf16.mxu0 %v7607
    %9851 = vmatpush1.bf16.msra.mxu0 %v7606
    %9852 = vmatprep.subr.bf16.mxu0 %v7615
    %9853 = vmatpush1.bf16.msra.mxu0 %v7614
    %9854 = vmatprep.subr.bf16.mxu0 %v7623
    %9855 = vmatpush1.bf16.msra.mxu0 %v7622
    %9856 = vmatprep.subr.bf16.mxu0 %v7631
    %9857 = vmatpush1.bf16.msra.mxu0 %v7630
    %9858 = vmatprep.subr.bf16.mxu0 %v7639
    %9859 = vmatpush1.bf16.msra.mxu0 %v7638
    %9860 = vmatprep.subr.bf16.mxu0 %v7647
    %9861 = vmatpush1.bf16.msra.mxu0 %v7646
    %9862 = vmatprep.subr.bf16.mxu0 %v7655
    %9863 = vmatpush1.bf16.msra.mxu0 %v7654
    %9864 = vmatprep.subr.bf16.mxu0 %v7663
    %9865 = vmatpush1.bf16.msra.mxu0 %v7662
    %9866 = vmatprep.subr.bf16.mxu0 %v7671
    %9867 = vmatpush1.bf16.msra.mxu0 %v7670
    %9868 = vmatprep.subr.bf16.mxu0 %v7679
    %9869 = vmatpush1.bf16.msra.mxu0 %v7678
    %9870 = vmatprep.subr.bf16.mxu0 %v7687
    %9871 = vmatpush1.bf16.msra.mxu0 %v7686
    %9872 = vmatprep.subr.bf16.mxu0 %v7695
    %9873 = vmatpush1.bf16.msra.mxu0 %v7694
    %9874 = vmatprep.mubr.bf16.mxu0 %v4443
    %9875 = vmatmul.mubr.bf16.gmra.mrb[0].mxu0 %v4442
    %v9876 = vpop.f32.mrb[0].mxu0
    %v9877 = vadd.f32 %v5251, %v9876
    %v9878 = vpop.f32.mrb[0].mxu0
    %v9879 = vadd.f32 %v5255, %v9878
    %v9880 = vpop.f32.mrb[0].mxu0
    %v9881 = vpop.f32.mrb[0].mxu0
    %9882 = vdwg.mxu0
    %9883 = vmatprep.subr.bf16.mxu0 %v7703
    %9884 = vmatpush1.bf16.msra.mxu0 %v7702
    %9885 = vmatprep.subr.bf16.mxu0 %v7711
    %9886 = vmatpush1.bf16.msra.mxu0 %v7710
    %9887 = vmatprep.subr.bf16.mxu0 %v7719
    %9888 = vmatpush1.bf16.msra.mxu0 %v7718
    %9889 = vmatprep.subr.bf16.mxu0 %v7727
    %9890 = vmatpush1.bf16.msra.mxu0 %v7726
    %9891 = vmatprep.subr.bf16.mxu0 %v7735
    %9892 = vmatpush1.bf16.msra.mxu0 %v7734
    %9893 = vmatprep.subr.bf16.mxu0 %v7743
    %9894 = vmatpush1.bf16.msra.mxu0 %v7742
    %9895 = vmatprep.subr.bf16.mxu0 %v7751
    %9896 = vmatpush1.bf16.msra.mxu0 %v7750
    %9897 = vmatprep.subr.bf16.mxu0 %v7759
    %9898 = vmatpush1.bf16.msra.mxu0 %v7758
    %9899 = vmatprep.subr.bf16.mxu0 %v7767
    %9900 = vmatpush1.bf16.msra.mxu0 %v7766
    %9901 = vmatprep.subr.bf16.mxu0 %v7775
    %9902 = vmatpush1.bf16.msra.mxu0 %v7774
    %9903 = vmatprep.subr.bf16.mxu0 %v7783
    %9904 = vmatpush1.bf16.msra.mxu0 %v7782
    %9905 = vmatprep.subr.bf16.mxu0 %v7791
    %9906 = vmatpush1.bf16.msra.mxu0 %v7790
    %9907 = vmatprep.subr.bf16.mxu0 %v7799
    %9908 = vmatpush1.bf16.msra.mxu0 %v7798
    %9909 = vmatprep.subr.bf16.mxu0 %v7807
    %9910 = vmatpush1.bf16.msra.mxu0 %v7806
    %9911 = vmatprep.subr.bf16.mxu0 %v7815
    %9912 = vmatpush1.bf16.msra.mxu0 %v7814
    %9913 = vmatprep.subr.bf16.mxu0 %v7823
    %9914 = vmatpush1.bf16.msra.mxu0 %v7822
    %9915 = vmatprep.mubr.bf16.mxu0 %v4445
    %9916 = vmatmul.mubr.bf16.gmra.mrb[0].mxu0 %v4444
    %v9917 = vpop.f32.mrb[0].mxu0
    %v9918 = vadd.f32 %v9877, %v9917
    %v9919 = vpop.f32.mrb[0].mxu0
    %v9920 = vadd.f32 %v9879, %v9919
    %v9921 = vpop.f32.mrb[0].mxu0
    %v9922 = vpop.f32.mrb[0].mxu0
    %9923 = vdwg.mxu0
    %9924 = vmatprep.subr.bf16.mxu0 %v7831
    %9925 = vmatpush1.bf16.msra.mxu0 %v7830
    %9926 = vmatprep.subr.bf16.mxu0 %v7839
    %9927 = vmatpush1.bf16.msra.mxu0 %v7838
    %9928 = vmatprep.subr.bf16.mxu0 %v7847
    %9929 = vmatpush1.bf16.msra.mxu0 %v7846
    %9930 = vmatprep.subr.bf16.mxu0 %v7855
    %9931 = vmatpush1.bf16.msra.mxu0 %v7854
    %9932 = vmatprep.subr.bf16.mxu0 %v7863
    %9933 = vmatpush1.bf16.msra.mxu0 %v7862
    %9934 = vmatprep.subr.bf16.mxu0 %v7871
    %9935 = vmatpush1.bf16.msra.mxu0 %v7870
    %9936 = vmatprep.subr.bf16.mxu0 %v7879
    %9937 = vmatpush1.bf16.msra.mxu0 %v7878
    %9938 = vmatprep.subr.bf16.mxu0 %v7887
    %9939 = vmatpush1.bf16.msra.mxu0 %v7886
    %9940 = vmatprep.subr.bf16.mxu0 %v7895
    %9941 = vmatpush1.bf16.msra.mxu0 %v7894
    %9942 = vmatprep.subr.bf16.mxu0 %v7903
    %9943 = vmatpush1.bf16.msra.mxu0 %v7902
    %9944 = vmatprep.subr.bf16.mxu0 %v7911
    %9945 = vmatpush1.bf16.msra.mxu0 %v7910
    %9946 = vmatprep.subr.bf16.mxu0 %v7919
    %9947 = vmatpush1.bf16.msra.mxu0 %v7918
    %9948 = vmatprep.subr.bf16.mxu0 %v7927
    %9949 = vmatpush1.bf16.msra.mxu0 %v7926
    %9950 = vmatprep.subr.bf16.mxu0 %v7935
    %9951 = vmatpush1.bf16.msra.mxu0 %v7934
    %9952 = vmatprep.subr.bf16.mxu0 %v7943
    %9953 = vmatpush1.bf16.msra.mxu0 %v7942
    %9954 = vmatprep.subr.bf16.mxu0 %v7951
    %9955 = vmatpush1.bf16.msra.mxu0 %v7950
    %9956 = vmatprep.mubr.bf16.mxu0 %v4447
    %9957 = vmatmul.mubr.bf16.gmra.mrb[0].mxu0 %v4446
    %v9958 = vpop.f32.mrb[0].mxu0
    %v9959 = vadd.f32 %v9918, %v9958
    %v9960 = vpop.f32.mrb[0].mxu0
    %v9961 = vadd.f32 %v9920, %v9960
    %v9962 = vpop.f32.mrb[0].mxu0
    %v9963 = vpop.f32.mrb[0].mxu0
    %9964 = vdwg.mxu0
    %9965 = vmatprep.subr.bf16.mxu0 %v7959
    %9966 = vmatpush1.bf16.msra.mxu0 %v7958
    %9967 = vmatprep.subr.bf16.mxu0 %v7967
    %9968 = vmatpush1.bf16.msra.mxu0 %v7966
    %9969 = vmatprep.subr.bf16.mxu0 %v7975
    %9970 = vmatpush1.bf16.msra.mxu0 %v7974
    %9971 = vmatprep.subr.bf16.mxu0 %v7983
    %9972 = vmatpush1.bf16.msra.mxu0 %v7982
    %9973 = vmatprep.subr.bf16.mxu0 %v7991
    %9974 = vmatpush1.bf16.msra.mxu0 %v7990
    %9975 = vmatprep.subr.bf16.mxu0 %v7999
    %9976 = vmatpush1.bf16.msra.mxu0 %v7998
    %9977 = vmatprep.subr.bf16.mxu0 %v8007
    %9978 = vmatpush1.bf16.msra.mxu0 %v8006
    %9979 = vmatprep.subr.bf16.mxu0 %v8015
    %9980 = vmatpush1.bf16.msra.mxu0 %v8014
    %9981 = vmatprep.subr.bf16.mxu0 %v8023
    %9982 = vmatpush1.bf16.msra.mxu0 %v8022
    %9983 = vmatprep.subr.bf16.mxu0 %v8031
    %9984 = vmatpush1.bf16.msra.mxu0 %v8030
    %9985 = vmatprep.subr.bf16.mxu0 %v8039
    %9986 = vmatpush1.bf16.msra.mxu0 %v8038
    %9987 = vmatprep.subr.bf16.mxu0 %v8047
    %9988 = vmatpush1.bf16.msra.mxu0 %v8046
    %9989 = vmatprep.subr.bf16.mxu0 %v8055
    %9990 = vmatpush1.bf16.msra.mxu0 %v8054
    %9991 = vmatprep.subr.bf16.mxu0 %v8063
    %9992 = vmatpush1.bf16.msra.mxu0 %v8062
    %9993 = vmatprep.subr.bf16.mxu0 %v8071
    %9994 = vmatpush1.bf16.msra.mxu0 %v8070
    %9995 = vmatprep.subr.bf16.mxu0 %v8079
    %9996 = vmatpush1.bf16.msra.mxu0 %v8078
    %9997 = vmatprep.mubr.bf16.mxu0 %v4449
    %9998 = vmatmul.mubr.bf16.gmra.mrb[0].mxu0 %v4448
    %v9999 = vpop.f32.mrb[0].mxu0
    %v10000 = vadd.f32 %v9959, %v9999
    %v10001 = vpop.f32.mrb[0].mxu0
    %v10002 = vadd.f32 %v9961, %v10001
    %v10003 = vpop.f32.mrb[0].mxu0
    %v10004 = vpop.f32.mrb[0].mxu0
    %10005 = vdwg.mxu0
    %10006 = vmatprep.subr.bf16.mxu0 %v8087
    %10007 = vmatpush1.bf16.msra.mxu0 %v8086
    %10008 = vmatprep.subr.bf16.mxu0 %v8095
    %10009 = vmatpush1.bf16.msra.mxu0 %v8094
    %10010 = vmatprep.subr.bf16.mxu0 %v8103
    %10011 = vmatpush1.bf16.msra.mxu0 %v8102
    %10012 = vmatprep.subr.bf16.mxu0 %v8111
    %10013 = vmatpush1.bf16.msra.mxu0 %v8110
    %10014 = vmatprep.subr.bf16.mxu0 %v8119
    %10015 = vmatpush1.bf16.msra.mxu0 %v8118
    %10016 = vmatprep.subr.bf16.mxu0 %v8127
    %10017 = vmatpush1.bf16.msra.mxu0 %v8126
    %10018 = vmatprep.subr.bf16.mxu0 %v8135
    %10019 = vmatpush1.bf16.msra.mxu0 %v8134
    %10020 = vmatprep.subr.bf16.mxu0 %v8143
    %10021 = vmatpush1.bf16.msra.mxu0 %v8142
    %10022 = vmatprep.subr.bf16.mxu0 %v8151
    %10023 = vmatpush1.bf16.msra.mxu0 %v8150
    %10024 = vmatprep.subr.bf16.mxu0 %v8159
    %10025 = vmatpush1.bf16.msra.mxu0 %v8158
    %10026 = vmatprep.subr.bf16.mxu0 %v8167
    %10027 = vmatpush1.bf16.msra.mxu0 %v8166
    %10028 = vmatprep.subr.bf16.mxu0 %v8175
    %10029 = vmatpush1.bf16.msra.mxu0 %v8174
    %10030 = vmatprep.subr.bf16.mxu0 %v8183
    %10031 = vmatpush1.bf16.msra.mxu0 %v8182
    %10032 = vmatprep.subr.bf16.mxu0 %v8191
    %10033 = vmatpush1.bf16.msra.mxu0 %v8190
    %10034 = vmatprep.subr.bf16.mxu0 %v8199
    %10035 = vmatpush1.bf16.msra.mxu0 %v8198
    %10036 = vmatprep.subr.bf16.mxu0 %v8207
    %10037 = vmatpush1.bf16.msra.mxu0 %v8206
    %10038 = vmatprep.mubr.bf16.mxu0 %v4451
    %10039 = vmatmul.mubr.bf16.gmra.mrb[0].mxu0 %v4450
    %v10040 = vpop.f32.mrb[0].mxu0
    %v10041 = vadd.f32 %v10000, %v10040
    %v10042 = vpop.f32.mrb[0].mxu0
    %v10043 = vadd.f32 %v10002, %v10042
    %v10044 = vpop.f32.mrb[0].mxu0
    %v10045 = vpop.f32.mrb[0].mxu0
    %10046 = vdwg.mxu0
    %10047 = vmatprep.subr.bf16.mxu0 %v8215
    %10048 = vmatpush1.bf16.msra.mxu0 %v8214
    %10049 = vmatprep.subr.bf16.mxu0 %v8223
    %10050 = vmatpush1.bf16.msra.mxu0 %v8222
    %10051 = vmatprep.subr.bf16.mxu0 %v8231
    %10052 = vmatpush1.bf16.msra.mxu0 %v8230
    %10053 = vmatprep.subr.bf16.mxu0 %v8239
    %10054 = vmatpush1.bf16.msra.mxu0 %v8238
    %10055 = vmatprep.subr.bf16.mxu0 %v8247
    %10056 = vmatpush1.bf16.msra.mxu0 %v8246
    %10057 = vmatprep.subr.bf16.mxu0 %v8255
    %10058 = vmatpush1.bf16.msra.mxu0 %v8254
    %10059 = vmatprep.subr.bf16.mxu0 %v8263
    %10060 = vmatpush1.bf16.msra.mxu0 %v8262
    %10061 = vmatprep.subr.bf16.mxu0 %v8271
    %10062 = vmatpush1.bf16.msra.mxu0 %v8270
    %10063 = vmatprep.subr.bf16.mxu0 %v8279
    %10064 = vmatpush1.bf16.msra.mxu0 %v8278
    %10065 = vmatprep.subr.bf16.mxu0 %v8287
    %10066 = vmatpush1.bf16.msra.mxu0 %v8286
    %10067 = vmatprep.subr.bf16.mxu0 %v8295
    %10068 = vmatpush1.bf16.msra.mxu0 %v8294
    %10069 = vmatprep.subr.bf16.mxu0 %v8303
    %10070 = vmatpush1.bf16.msra.mxu0 %v8302
    %10071 = vmatprep.subr.bf16.mxu0 %v8311
    %10072 = vmatpush1.bf16.msra.mxu0 %v8310
    %10073 = vmatprep.subr.bf16.mxu0 %v8319
    %10074 = vmatpush1.bf16.msra.mxu0 %v8318
    %10075 = vmatprep.subr.bf16.mxu0 %v8327
    %10076 = vmatpush1.bf16.msra.mxu0 %v8326
    %10077 = vmatprep.subr.bf16.mxu0 %v8335
    %10078 = vmatpush1.bf16.msra.mxu0 %v8334
    %10079 = vmatprep.mubr.bf16.mxu0 %v4453
    %10080 = vmatmul.mubr.bf16.gmra.mrb[0].mxu0 %v4452
    %v10081 = vpop.f32.mrb[0].mxu0
    %v10082 = vadd.f32 %v10041, %v10081
    %v10083 = vpop.f32.mrb[0].mxu0
    %v10084 = vadd.f32 %v10043, %v10083
    %v10085 = vpop.f32.mrb[0].mxu0
    %v10086 = vpop.f32.mrb[0].mxu0
    %10087 = vdwg.mxu0
    %v10088 = vmax.f32 %v9344, 0.0
    %v10089 = vmax.f32 %v9346, 0.0
    %v10090 = vmax.f32 %v9590, 0.0
    %v10091 = vmax.f32 %v9592, 0.0
    %v10092 = vmax.f32 %v9836, 0.0
    %v10093 = vmax.f32 %v9838, 0.0
    %v10094 = vmax.f32 %v10082, 0.0
    %v10095 = vmax.f32 %v10084, 0.0
    %v10096 = vpack.c.bf16 %v10088, %v10088
    %v10097 = vpack.c.bf16 %v10089, %v10089
    %v10098 = vpack.c.bf16 %v10090, %v10090
    %v10099 = vpack.c.bf16 %v10091, %v10091
    %v10100 = vpack.c.bf16 %v10092, %v10092
    %v10101 = vpack.c.bf16 %v10093, %v10093
    %v10102 = vpack.c.bf16 %v10094, %v10094
    %v10103 = vpack.c.bf16 %v10095, %v10095
    %v10104 = vld [vmem:[#allocation17] sm:$0xf]
    %v10105 = vld [vmem:[#allocation17 + $0x4] sm:$0xf]
    %v10106 = vld [vmem:[#allocation17 + $0x8] sm:$0xf]
    %v10107 = vld [vmem:[#allocation17 + $0xc] sm:$0xf]
    %v10108 = vld [vmem:[#allocation17 + $0x10] sm:$0xf]
    %v10109 = vld [vmem:[#allocation17 + $0x14] sm:$0xf]
    %v10110 = vld [vmem:[#allocation17 + $0x18] sm:$0xf]
    %v10111 = vld [vmem:[#allocation17 + $0x1c] sm:$0xf]
    %v10112 = vld [vmem:[#allocation17 + $0x20] sm:$0xf]
    %v10113 = vld [vmem:[#allocation17 + $0x24] sm:$0xf]
    %v10114 = vld [vmem:[#allocation17 + $0x28] sm:$0xf]
    %v10115 = vld [vmem:[#allocation17 + $0x2c] sm:$0xf]
    %v10116 = vld [vmem:[#allocation17 + $0x30] sm:$0xf]
    %v10117 = vld [vmem:[#allocation17 + $0x34] sm:$0xf]
    %v10118 = vld [vmem:[#allocation17 + $0x38] sm:$0xf]
    %v10119 = vld [vmem:[#allocation17 + $0x3c] sm:$0xf]
    %v10120 = vld [vmem:[#allocation17 + $0x40] sm:$0xf]
    %v10121 = vld [vmem:[#allocation17 + $0x44] sm:$0xf]
    %v10122 = vld [vmem:[#allocation17 + $0x48] sm:$0xf]
    %v10123 = vld [vmem:[#allocation17 + $0x4c] sm:$0xf]
    %v10124 = vld [vmem:[#allocation17 + $0x50] sm:$0xf]
    %v10125 = vld [vmem:[#allocation17 + $0x54] sm:$0xf]
    %v10126 = vld [vmem:[#allocation17 + $0x58] sm:$0xf]
    %v10127 = vld [vmem:[#allocation17 + $0x5c] sm:$0xf]
    %v10128 = vld [vmem:[#allocation17 + $0x60] sm:$0xf]
    %v10129 = vld [vmem:[#allocation17 + $0x64] sm:$0xf]
    %v10130 = vld [vmem:[#allocation17 + $0x68] sm:$0xf]
    %v10131 = vld [vmem:[#allocation17 + $0x6c] sm:$0xf]
    %v10132 = vld [vmem:[#allocation17 + $0x70] sm:$0xf]
    %v10133 = vld [vmem:[#allocation17 + $0x74] sm:$0xf]
    %v10134 = vld [vmem:[#allocation17 + $0x78] sm:$0xf]
    %v10135 = vld [vmem:[#allocation17 + $0x7c] sm:$0xf]
    %v10136 = vld [vmem:[#allocation17 + $0x80] sm:$0xf]
    %v10137 = vld [vmem:[#allocation17 + $0x84] sm:$0xf]
    %v10138 = vld [vmem:[#allocation17 + $0x88] sm:$0xf]
    %v10139 = vld [vmem:[#allocation17 + $0x8c] sm:$0xf]
    %v10140 = vld [vmem:[#allocation17 + $0x90] sm:$0xf]
    %v10141 = vld [vmem:[#allocation17 + $0x94] sm:$0xf]
    %v10142 = vld [vmem:[#allocation17 + $0x98] sm:$0xf]
    %v10143 = vld [vmem:[#allocation17 + $0x9c] sm:$0xf]
    %v10144 = vld [vmem:[#allocation17 + $0xa0] sm:$0xf]
    %v10145 = vld [vmem:[#allocation17 + $0xa4] sm:$0xf]
    %v10146 = vld [vmem:[#allocation17 + $0xa8] sm:$0xf]
    %v10147 = vld [vmem:[#allocation17 + $0xac] sm:$0xf]
    %v10148 = vld [vmem:[#allocation17 + $0xb0] sm:$0xf]
    %v10149 = vld [vmem:[#allocation17 + $0xb4] sm:$0xf]
    %v10150 = vld [vmem:[#allocation17 + $0xb8] sm:$0xf]
    %v10151 = vld [vmem:[#allocation17 + $0xbc] sm:$0xf]
    %v10152 = vld [vmem:[#allocation17 + $0xc0] sm:$0xf]
    %v10153 = vld [vmem:[#allocation17 + $0xc4] sm:$0xf]
    %v10154 = vld [vmem:[#allocation17 + $0xc8] sm:$0xf]
    %v10155 = vld [vmem:[#allocation17 + $0xcc] sm:$0xf]
    %v10156 = vld [vmem:[#allocation17 + $0xd0] sm:$0xf]
    %v10157 = vld [vmem:[#allocation17 + $0xd4] sm:$0xf]
    %v10158 = vld [vmem:[#allocation17 + $0xd8] sm:$0xf]
    %v10159 = vld [vmem:[#allocation17 + $0xdc] sm:$0xf]
    %v10160 = vld [vmem:[#allocation17 + $0xe0] sm:$0xf]
    %v10161 = vld [vmem:[#allocation17 + $0xe4] sm:$0xf]
    %v10162 = vld [vmem:[#allocation17 + $0xe8] sm:$0xf]
    %v10163 = vld [vmem:[#allocation17 + $0xec] sm:$0xf]
    %v10164 = vld [vmem:[#allocation17 + $0xf0] sm:$0xf]
    %v10165 = vld [vmem:[#allocation17 + $0xf4] sm:$0xf]
    %v10166 = vld [vmem:[#allocation17 + $0xf8] sm:$0xf]
    %v10167 = vld [vmem:[#allocation17 + $0xfc] sm:$0xf]
    %v10168 = vld [vmem:[#allocation17 + $0x100] sm:$0xf]
    %v10169 = vld [vmem:[#allocation17 + $0x104] sm:$0xf]
    %v10170 = vld [vmem:[#allocation17 + $0x108] sm:$0xf]
    %v10171 = vld [vmem:[#allocation17 + $0x10c] sm:$0xf]
    %v10172 = vld [vmem:[#allocation17 + $0x110] sm:$0xf]
    %v10173 = vld [vmem:[#allocation17 + $0x114] sm:$0xf]
    %v10174 = vld [vmem:[#allocation17 + $0x118] sm:$0xf]
    %v10175 = vld [vmem:[#allocation17 + $0x11c] sm:$0xf]
    %v10176 = vld [vmem:[#allocation17 + $0x120] sm:$0xf]
    %v10177 = vld [vmem:[#allocation17 + $0x124] sm:$0xf]
    %v10178 = vld [vmem:[#allocation17 + $0x128] sm:$0xf]
    %v10179 = vld [vmem:[#allocation17 + $0x12c] sm:$0xf]
    %v10180 = vld [vmem:[#allocation17 + $0x130] sm:$0xf]
    %v10181 = vld [vmem:[#allocation17 + $0x134] sm:$0xf]
    %v10182 = vld [vmem:[#allocation17 + $0x138] sm:$0xf]
    %v10183 = vld [vmem:[#allocation17 + $0x13c] sm:$0xf]
    %v10184 = vld [vmem:[#allocation17 + $0x140] sm:$0xf]
    %v10185 = vld [vmem:[#allocation17 + $0x144] sm:$0xf]
    %v10186 = vld [vmem:[#allocation17 + $0x148] sm:$0xf]
    %v10187 = vld [vmem:[#allocation17 + $0x14c] sm:$0xf]
    %v10188 = vld [vmem:[#allocation17 + $0x150] sm:$0xf]
    %v10189 = vld [vmem:[#allocation17 + $0x154] sm:$0xf]
    %v10190 = vld [vmem:[#allocation17 + $0x158] sm:$0xf]
    %v10191 = vld [vmem:[#allocation17 + $0x15c] sm:$0xf]
    %v10192 = vld [vmem:[#allocation17 + $0x160] sm:$0xf]
    %v10193 = vld [vmem:[#allocation17 + $0x164] sm:$0xf]
    %v10194 = vld [vmem:[#allocation17 + $0x168] sm:$0xf]
    %v10195 = vld [vmem:[#allocation17 + $0x16c] sm:$0xf]
    %v10196 = vld [vmem:[#allocation17 + $0x170] sm:$0xf]
    %v10197 = vld [vmem:[#allocation17 + $0x174] sm:$0xf]
    %v10198 = vld [vmem:[#allocation17 + $0x178] sm:$0xf]
    %v10199 = vld [vmem:[#allocation17 + $0x17c] sm:$0xf]
    %v10200 = vld [vmem:[#allocation17 + $0x180] sm:$0xf]
    %v10201 = vld [vmem:[#allocation17 + $0x184] sm:$0xf]
    %v10202 = vld [vmem:[#allocation17 + $0x188] sm:$0xf]
    %v10203 = vld [vmem:[#allocation17 + $0x18c] sm:$0xf]
    %v10204 = vld [vmem:[#allocation17 + $0x190] sm:$0xf]
    %v10205 = vld [vmem:[#allocation17 + $0x194] sm:$0xf]
    %v10206 = vld [vmem:[#allocation17 + $0x198] sm:$0xf]
    %v10207 = vld [vmem:[#allocation17 + $0x19c] sm:$0xf]
    %v10208 = vld [vmem:[#allocation17 + $0x1a0] sm:$0xf]
    %v10209 = vld [vmem:[#allocation17 + $0x1a4] sm:$0xf]
    %v10210 = vld [vmem:[#allocation17 + $0x1a8] sm:$0xf]
    %v10211 = vld [vmem:[#allocation17 + $0x1ac] sm:$0xf]
    %v10212 = vld [vmem:[#allocation17 + $0x1b0] sm:$0xf]
    %v10213 = vld [vmem:[#allocation17 + $0x1b4] sm:$0xf]
    %v10214 = vld [vmem:[#allocation17 + $0x1b8] sm:$0xf]
    %v10215 = vld [vmem:[#allocation17 + $0x1bc] sm:$0xf]
    %v10216 = vld [vmem:[#allocation17 + $0x1c0] sm:$0xf]
    %v10217 = vld [vmem:[#allocation17 + $0x1c4] sm:$0xf]
    %v10218 = vld [vmem:[#allocation17 + $0x1c8] sm:$0xf]
    %v10219 = vld [vmem:[#allocation17 + $0x1cc] sm:$0xf]
    %v10220 = vld [vmem:[#allocation17 + $0x1d0] sm:$0xf]
    %v10221 = vld [vmem:[#allocation17 + $0x1d4] sm:$0xf]
    %v10222 = vld [vmem:[#allocation17 + $0x1d8] sm:$0xf]
    %v10223 = vld [vmem:[#allocation17 + $0x1dc] sm:$0xf]
    %v10224 = vld [vmem:[#allocation17 + $0x1e0] sm:$0xf]
    %v10225 = vld [vmem:[#allocation17 + $0x1e4] sm:$0xf]
    %v10226 = vld [vmem:[#allocation17 + $0x1e8] sm:$0xf]
    %v10227 = vld [vmem:[#allocation17 + $0x1ec] sm:$0xf]
    %v10228 = vld [vmem:[#allocation17 + $0x1f0] sm:$0xf]
    %v10229 = vld [vmem:[#allocation17 + $0x1f4] sm:$0xf]
    %v10230 = vld [vmem:[#allocation17 + $0x1f8] sm:$0xf]
    %v10231 = vld [vmem:[#allocation17 + $0x1fc] sm:$0xf]
    %v10232 = vld [vmem:[#allocation19] sm:$0x1]
    %v10234 = vlaneseq
    %v10235 = vshrl.u32 %v10234, 7
    %v10236 = vsub.s32 0, %v10235
    %v10237 = vrot.slane %v10232, %v10236
    %v10367 = vunpack.c.l.b16 %v10104
    %v10368 = vunpack.c.l.b16 %v10105
    %v10369 = vunpack.c.l.b16 %v10106
    %v10370 = vunpack.c.l.b16 %v10107
    %v10371 = vunpack.c.l.b16 %v10108
    %v10372 = vunpack.c.l.b16 %v10109
    %v10373 = vunpack.c.l.b16 %v10110
    %v10374 = vunpack.c.l.b16 %v10111
    %v10375 = vunpack.c.l.b16 %v10112
    %v10376 = vunpack.c.l.b16 %v10113
    %v10377 = vunpack.c.l.b16 %v10114
    %v10378 = vunpack.c.l.b16 %v10115
    %v10379 = vunpack.c.l.b16 %v10116
    %v10380 = vunpack.c.l.b16 %v10117
    %v10381 = vunpack.c.l.b16 %v10118
    %v10382 = vunpack.c.l.b16 %v10119
    %v10383 = vunpack.c.l.b16 %v10120
    %v10384 = vunpack.c.l.b16 %v10121
    %v10385 = vunpack.c.l.b16 %v10122
    %v10386 = vunpack.c.l.b16 %v10123
    %v10387 = vunpack.c.l.b16 %v10124
    %v10388 = vunpack.c.l.b16 %v10125
    %v10389 = vunpack.c.l.b16 %v10126
    %v10390 = vunpack.c.l.b16 %v10127
    %v10391 = vunpack.c.l.b16 %v10128
    %v10392 = vunpack.c.l.b16 %v10129
    %v10393 = vunpack.c.l.b16 %v10130
    %v10394 = vunpack.c.l.b16 %v10131
    %v10395 = vunpack.c.l.b16 %v10132
    %v10396 = vunpack.c.l.b16 %v10133
    %v10397 = vunpack.c.l.b16 %v10134
    %v10398 = vunpack.c.l.b16 %v10135
    %v10399 = vunpack.c.l.b16 %v10136
    %v10400 = vunpack.c.l.b16 %v10137
    %v10401 = vunpack.c.l.b16 %v10138
    %v10402 = vunpack.c.l.b16 %v10139
    %v10403 = vunpack.c.l.b16 %v10140
    %v10404 = vunpack.c.l.b16 %v10141
    %v10405 = vunpack.c.l.b16 %v10142
    %v10406 = vunpack.c.l.b16 %v10143
    %v10407 = vunpack.c.l.b16 %v10144
    %v10408 = vunpack.c.l.b16 %v10145
    %v10409 = vunpack.c.l.b16 %v10146
    %v10410 = vunpack.c.l.b16 %v10147
    %v10411 = vunpack.c.l.b16 %v10148
    %v10412 = vunpack.c.l.b16 %v10149
    %v10413 = vunpack.c.l.b16 %v10150
    %v10414 = vunpack.c.l.b16 %v10151
    %v10415 = vunpack.c.l.b16 %v10152
    %v10416 = vunpack.c.l.b16 %v10153
    %v10417 = vunpack.c.l.b16 %v10154
    %v10418 = vunpack.c.l.b16 %v10155
    %v10419 = vunpack.c.l.b16 %v10156
    %v10420 = vunpack.c.l.b16 %v10157
    %v10421 = vunpack.c.l.b16 %v10158
    %v10422 = vunpack.c.l.b16 %v10159
    %v10423 = vunpack.c.l.b16 %v10160
    %v10424 = vunpack.c.l.b16 %v10161
    %v10425 = vunpack.c.l.b16 %v10162
    %v10426 = vunpack.c.l.b16 %v10163
    %v10427 = vunpack.c.l.b16 %v10164
    %v10428 = vunpack.c.l.b16 %v10165
    %v10429 = vunpack.c.l.b16 %v10166
    %v10430 = vunpack.c.l.b16 %v10167
    %v10431 = vunpack.c.l.b16 %v10168
    %v10432 = vunpack.c.l.b16 %v10169
    %v10433 = vunpack.c.l.b16 %v10170
    %v10434 = vunpack.c.l.b16 %v10171
    %v10435 = vunpack.c.l.b16 %v10172
    %v10436 = vunpack.c.l.b16 %v10173
    %v10437 = vunpack.c.l.b16 %v10174
    %v10438 = vunpack.c.l.b16 %v10175
    %v10439 = vunpack.c.l.b16 %v10176
    %v10440 = vunpack.c.l.b16 %v10177
    %v10441 = vunpack.c.l.b16 %v10178
    %v10442 = vunpack.c.l.b16 %v10179
    %v10443 = vunpack.c.l.b16 %v10180
    %v10444 = vunpack.c.l.b16 %v10181
    %v10445 = vunpack.c.l.b16 %v10182
    %v10446 = vunpack.c.l.b16 %v10183
    %v10447 = vunpack.c.l.b16 %v10184
    %v10448 = vunpack.c.l.b16 %v10185
    %v10449 = vunpack.c.l.b16 %v10186
    %v10450 = vunpack.c.l.b16 %v10187
    %v10451 = vunpack.c.l.b16 %v10188
    %v10452 = vunpack.c.l.b16 %v10189
    %v10453 = vunpack.c.l.b16 %v10190
    %v10454 = vunpack.c.l.b16 %v10191
    %v10455 = vunpack.c.l.b16 %v10192
    %v10456 = vunpack.c.l.b16 %v10193
    %v10457 = vunpack.c.l.b16 %v10194
    %v10458 = vunpack.c.l.b16 %v10195
    %v10459 = vunpack.c.l.b16 %v10196
    %v10460 = vunpack.c.l.b16 %v10197
    %v10461 = vunpack.c.l.b16 %v10198
    %v10462 = vunpack.c.l.b16 %v10199
    %v10463 = vunpack.c.l.b16 %v10200
    %v10464 = vunpack.c.l.b16 %v10201
    %v10465 = vunpack.c.l.b16 %v10202
    %v10466 = vunpack.c.l.b16 %v10203
    %v10467 = vunpack.c.l.b16 %v10204
    %v10468 = vunpack.c.l.b16 %v10205
    %v10469 = vunpack.c.l.b16 %v10206
    %v10470 = vunpack.c.l.b16 %v10207
    %v10471 = vunpack.c.l.b16 %v10208
    %v10472 = vunpack.c.l.b16 %v10209
    %v10473 = vunpack.c.l.b16 %v10210
    %v10474 = vunpack.c.l.b16 %v10211
    %v10475 = vunpack.c.l.b16 %v10212
    %v10476 = vunpack.c.l.b16 %v10213
    %v10477 = vunpack.c.l.b16 %v10214
    %v10478 = vunpack.c.l.b16 %v10215
    %v10479 = vunpack.c.l.b16 %v10216
    %v10480 = vunpack.c.l.b16 %v10217
    %v10481 = vunpack.c.l.b16 %v10218
    %v10482 = vunpack.c.l.b16 %v10219
    %v10483 = vunpack.c.l.b16 %v10220
    %v10484 = vunpack.c.l.b16 %v10221
    %v10485 = vunpack.c.l.b16 %v10222
    %v10486 = vunpack.c.l.b16 %v10223
    %v10487 = vunpack.c.l.b16 %v10224
    %v10488 = vunpack.c.l.b16 %v10225
    %v10489 = vunpack.c.l.b16 %v10226
    %v10490 = vunpack.c.l.b16 %v10227
    %v10491 = vunpack.c.l.b16 %v10228
    %v10492 = vunpack.c.l.b16 %v10229
    %v10493 = vunpack.c.l.b16 %v10230
    %v10494 = vunpack.c.l.b16 %v10231
    %v10495 = vpack.c.b16 %v10368, %v10367
    %v10496 = vpack.c.b16 %v10370, %v10369
    %v10497 = vpack.c.b16 %v10372, %v10371
    %v10498 = vpack.c.b16 %v10374, %v10373
    %v10499 = vpack.c.b16 %v10376, %v10375
    %v10500 = vpack.c.b16 %v10378, %v10377
    %v10501 = vpack.c.b16 %v10380, %v10379
    %v10502 = vpack.c.b16 %v10382, %v10381
    %v10503 = vpack.c.b16 %v10384, %v10383
    %v10504 = vpack.c.b16 %v10386, %v10385
    %v10505 = vpack.c.b16 %v10388, %v10387
    %v10506 = vpack.c.b16 %v10390, %v10389
    %v10507 = vpack.c.b16 %v10392, %v10391
    %v10508 = vpack.c.b16 %v10394, %v10393
    %v10509 = vpack.c.b16 %v10396, %v10395
    %v10510 = vpack.c.b16 %v10398, %v10397
    %v10511 = vpack.c.b16 %v10400, %v10399
    %v10512 = vpack.c.b16 %v10402, %v10401
    %v10513 = vpack.c.b16 %v10404, %v10403
    %v10514 = vpack.c.b16 %v10406, %v10405
    %v10515 = vpack.c.b16 %v10408, %v10407
    %v10516 = vpack.c.b16 %v10410, %v10409
    %v10517 = vpack.c.b16 %v10412, %v10411
    %v10518 = vpack.c.b16 %v10414, %v10413
    %v10519 = vpack.c.b16 %v10416, %v10415
    %v10520 = vpack.c.b16 %v10418, %v10417
    %v10521 = vpack.c.b16 %v10420, %v10419
    %v10522 = vpack.c.b16 %v10422, %v10421
    %v10523 = vpack.c.b16 %v10424, %v10423
    %v10524 = vpack.c.b16 %v10426, %v10425
    %v10525 = vpack.c.b16 %v10428, %v10427
    %v10526 = vpack.c.b16 %v10430, %v10429
    %v10527 = vpack.c.b16 %v10432, %v10431
    %v10528 = vpack.c.b16 %v10434, %v10433
    %v10529 = vpack.c.b16 %v10436, %v10435
    %v10530 = vpack.c.b16 %v10438, %v10437
    %v10531 = vpack.c.b16 %v10440, %v10439
    %v10532 = vpack.c.b16 %v10442, %v10441
    %v10533 = vpack.c.b16 %v10444, %v10443
    %v10534 = vpack.c.b16 %v10446, %v10445
    %v10535 = vpack.c.b16 %v10448, %v10447
    %v10536 = vpack.c.b16 %v10450, %v10449
    %v10537 = vpack.c.b16 %v10452, %v10451
    %v10538 = vpack.c.b16 %v10454, %v10453
    %v10539 = vpack.c.b16 %v10456, %v10455
    %v10540 = vpack.c.b16 %v10458, %v10457
    %v10541 = vpack.c.b16 %v10460, %v10459
    %v10542 = vpack.c.b16 %v10462, %v10461
    %v10543 = vpack.c.b16 %v10464, %v10463
    %v10544 = vpack.c.b16 %v10466, %v10465
    %v10545 = vpack.c.b16 %v10468, %v10467
    %v10546 = vpack.c.b16 %v10470, %v10469
    %v10547 = vpack.c.b16 %v10472, %v10471
    %v10548 = vpack.c.b16 %v10474, %v10473
    %v10549 = vpack.c.b16 %v10476, %v10475
    %v10550 = vpack.c.b16 %v10478, %v10477
    %v10551 = vpack.c.b16 %v10480, %v10479
    %v10552 = vpack.c.b16 %v10482, %v10481
    %v10553 = vpack.c.b16 %v10484, %v10483
    %v10554 = vpack.c.b16 %v10486, %v10485
    %v10555 = vpack.c.b16 %v10488, %v10487
    %v10556 = vpack.c.b16 %v10490, %v10489
    %v10557 = vpack.c.b16 %v10492, %v10491
    %v10558 = vpack.c.b16 %v10494, %v10493
    %10623 = vmatprep.subr.bf16.mxu0 0
    %10624 = vmatpush1.bf16.msra.mxu0 %v10495
    %10625 = vmatprep.subr.bf16.mxu0 0
    %10626 = vmatpush1.bf16.msra.mxu0 %v10496
    %10627 = vmatprep.subr.bf16.mxu0 0
    %10628 = vmatpush1.bf16.msra.mxu0 %v10497
    %10629 = vmatprep.subr.bf16.mxu0 0
    %10630 = vmatpush1.bf16.msra.mxu0 %v10498
    %10631 = vmatprep.subr.bf16.mxu0 0
    %10632 = vmatpush1.bf16.msra.mxu0 %v10499
    %10633 = vmatprep.subr.bf16.mxu0 0
    %10634 = vmatpush1.bf16.msra.mxu0 %v10500
    %10635 = vmatprep.subr.bf16.mxu0 0
    %10636 = vmatpush1.bf16.msra.mxu0 %v10501
    %10637 = vmatprep.subr.bf16.mxu0 0
    %10638 = vmatpush1.bf16.msra.mxu0 %v10502
    %10639 = vmatprep.subr.bf16.mxu0 0
    %10640 = vmatpush1.bf16.msra.mxu0 %v10503
    %10641 = vmatprep.subr.bf16.mxu0 0
    %10642 = vmatpush1.bf16.msra.mxu0 %v10504
    %10643 = vmatprep.subr.bf16.mxu0 0
    %10644 = vmatpush1.bf16.msra.mxu0 %v10505
    %10645 = vmatprep.subr.bf16.mxu0 0
    %10646 = vmatpush1.bf16.msra.mxu0 %v10506
    %10647 = vmatprep.subr.bf16.mxu0 0
    %10648 = vmatpush1.bf16.msra.mxu0 %v10507
    %10649 = vmatprep.subr.bf16.mxu0 0
    %10650 = vmatpush1.bf16.msra.mxu0 %v10508
    %10651 = vmatprep.subr.bf16.mxu0 0
    %10652 = vmatpush1.bf16.msra.mxu0 %v10509
    %10653 = vmatprep.subr.bf16.mxu0 0
    %10654 = vmatpush1.bf16.msra.mxu0 %v10510
    %10655 = vmatprep.mubr.bf16.mxu0 %v10097
    %10656 = vmatmul.mubr.bf16.gmra.mrb[0].mxu0 %v10096
    %v10657 = vpop.f32.mrb[0].mxu0
    %v10658 = vadd.f32 %v10237, %v10657
    %v10659 = vpop.f32.mrb[0].mxu0
    %v10660 = vpop.f32.mrb[0].mxu0
    %v10661 = vpop.f32.mrb[0].mxu0
    %10662 = vdwg.mxu0
    %10663 = vmatprep.subr.bf16.mxu0 0
    %10664 = vmatpush1.bf16.msra.mxu0 %v10511
    %10665 = vmatprep.subr.bf16.mxu0 0
    %10666 = vmatpush1.bf16.msra.mxu0 %v10512
    %10667 = vmatprep.subr.bf16.mxu0 0
    %10668 = vmatpush1.bf16.msra.mxu0 %v10513
    %10669 = vmatprep.subr.bf16.mxu0 0
    %10670 = vmatpush1.bf16.msra.mxu0 %v10514
    %10671 = vmatprep.subr.bf16.mxu0 0
    %10672 = vmatpush1.bf16.msra.mxu0 %v10515
    %10673 = vmatprep.subr.bf16.mxu0 0
    %10674 = vmatpush1.bf16.msra.mxu0 %v10516
    %10675 = vmatprep.subr.bf16.mxu0 0
    %10676 = vmatpush1.bf16.msra.mxu0 %v10517
    %10677 = vmatprep.subr.bf16.mxu0 0
    %10678 = vmatpush1.bf16.msra.mxu0 %v10518
    %10679 = vmatprep.subr.bf16.mxu0 0
    %10680 = vmatpush1.bf16.msra.mxu0 %v10519
    %10681 = vmatprep.subr.bf16.mxu0 0
    %10682 = vmatpush1.bf16.msra.mxu0 %v10520
    %10683 = vmatprep.subr.bf16.mxu0 0
    %10684 = vmatpush1.bf16.msra.mxu0 %v10521
    %10685 = vmatprep.subr.bf16.mxu0 0
    %10686 = vmatpush1.bf16.msra.mxu0 %v10522
    %10687 = vmatprep.subr.bf16.mxu0 0
    %10688 = vmatpush1.bf16.msra.mxu0 %v10523
    %10689 = vmatprep.subr.bf16.mxu0 0
    %10690 = vmatpush1.bf16.msra.mxu0 %v10524
    %10691 = vmatprep.subr.bf16.mxu0 0
    %10692 = vmatpush1.bf16.msra.mxu0 %v10525
    %10693 = vmatprep.subr.bf16.mxu0 0
    %10694 = vmatpush1.bf16.msra.mxu0 %v10526
    %10695 = vmatprep.mubr.bf16.mxu0 %v10099
    %10696 = vmatmul.mubr.bf16.gmra.mrb[0].mxu0 %v10098
    %v10697 = vpop.f32.mrb[0].mxu0
    %v10698 = vadd.f32 %v10658, %v10697
    %v10699 = vpop.f32.mrb[0].mxu0
    %v10700 = vpop.f32.mrb[0].mxu0
    %v10701 = vpop.f32.mrb[0].mxu0
    %10702 = vdwg.mxu0
    %10703 = vmatprep.subr.bf16.mxu0 0
    %10704 = vmatpush1.bf16.msra.mxu0 %v10527
    %10705 = vmatprep.subr.bf16.mxu0 0
    %10706 = vmatpush1.bf16.msra.mxu0 %v10528
    %10707 = vmatprep.subr.bf16.mxu0 0
    %10708 = vmatpush1.bf16.msra.mxu0 %v10529
    %10709 = vmatprep.subr.bf16.mxu0 0
    %10710 = vmatpush1.bf16.msra.mxu0 %v10530
    %10711 = vmatprep.subr.bf16.mxu0 0
    %10712 = vmatpush1.bf16.msra.mxu0 %v10531
    %10713 = vmatprep.subr.bf16.mxu0 0
    %10714 = vmatpush1.bf16.msra.mxu0 %v10532
    %10715 = vmatprep.subr.bf16.mxu0 0
    %10716 = vmatpush1.bf16.msra.mxu0 %v10533
    %10717 = vmatprep.subr.bf16.mxu0 0
    %10718 = vmatpush1.bf16.msra.mxu0 %v10534
    %10719 = vmatprep.subr.bf16.mxu0 0
    %10720 = vmatpush1.bf16.msra.mxu0 %v10535
    %10721 = vmatprep.subr.bf16.mxu0 0
    %10722 = vmatpush1.bf16.msra.mxu0 %v10536
    %10723 = vmatprep.subr.bf16.mxu0 0
    %10724 = vmatpush1.bf16.msra.mxu0 %v10537
    %10725 = vmatprep.subr.bf16.mxu0 0
    %10726 = vmatpush1.bf16.msra.mxu0 %v10538
    %10727 = vmatprep.subr.bf16.mxu0 0
    %10728 = vmatpush1.bf16.msra.mxu0 %v10539
    %10729 = vmatprep.subr.bf16.mxu0 0
    %10730 = vmatpush1.bf16.msra.mxu0 %v10540
    %10731 = vmatprep.subr.bf16.mxu0 0
    %10732 = vmatpush1.bf16.msra.mxu0 %v10541
    %10733 = vmatprep.subr.bf16.mxu0 0
    %10734 = vmatpush1.bf16.msra.mxu0 %v10542
    %10735 = vmatprep.mubr.bf16.mxu0 %v10101
    %10736 = vmatmul.mubr.bf16.gmra.mrb[0].mxu0 %v10100
    %v10737 = vpop.f32.mrb[0].mxu0
    %v10738 = vadd.f32 %v10698, %v10737
    %v10739 = vpop.f32.mrb[0].mxu0
    %v10740 = vpop.f32.mrb[0].mxu0
    %v10741 = vpop.f32.mrb[0].mxu0
    %10742 = vdwg.mxu0
    %10743 = vmatprep.subr.bf16.mxu0 0
    %10744 = vmatpush1.bf16.msra.mxu0 %v10543
    %10745 = vmatprep.subr.bf16.mxu0 0
    %10746 = vmatpush1.bf16.msra.mxu0 %v10544
    %10747 = vmatprep.subr.bf16.mxu0 0
    %10748 = vmatpush1.bf16.msra.mxu0 %v10545
    %10749 = vmatprep.subr.bf16.mxu0 0
    %10750 = vmatpush1.bf16.msra.mxu0 %v10546
    %10751 = vmatprep.subr.bf16.mxu0 0
    %10752 = vmatpush1.bf16.msra.mxu0 %v10547
    %10753 = vmatprep.subr.bf16.mxu0 0
    %10754 = vmatpush1.bf16.msra.mxu0 %v10548
    %10755 = vmatprep.subr.bf16.mxu0 0
    %10756 = vmatpush1.bf16.msra.mxu0 %v10549
    %10757 = vmatprep.subr.bf16.mxu0 0
    %10758 = vmatpush1.bf16.msra.mxu0 %v10550
    %10759 = vmatprep.subr.bf16.mxu0 0
    %10760 = vmatpush1.bf16.msra.mxu0 %v10551
    %10761 = vmatprep.subr.bf16.mxu0 0
    %10762 = vmatpush1.bf16.msra.mxu0 %v10552
    %10763 = vmatprep.subr.bf16.mxu0 0
    %10764 = vmatpush1.bf16.msra.mxu0 %v10553
    %10765 = vmatprep.subr.bf16.mxu0 0
    %10766 = vmatpush1.bf16.msra.mxu0 %v10554
    %10767 = vmatprep.subr.bf16.mxu0 0
    %10768 = vmatpush1.bf16.msra.mxu0 %v10555
    %10769 = vmatprep.subr.bf16.mxu0 0
    %10770 = vmatpush1.bf16.msra.mxu0 %v10556
    %10771 = vmatprep.subr.bf16.mxu0 0
    %10772 = vmatpush1.bf16.msra.mxu0 %v10557
    %10773 = vmatprep.subr.bf16.mxu0 0
    %10774 = vmatpush1.bf16.msra.mxu0 %v10558
    %10775 = vmatprep.mubr.bf16.mxu0 %v10103
    %10776 = vmatmul.mubr.bf16.gmra.mrb[0].mxu0 %v10102
    %v10777 = vpop.f32.mrb[0].mxu0
    %v10778 = vadd.f32 %v10738, %v10777
    %v10779 = vpop.f32.mrb[0].mxu0
    %v10780 = vpop.f32.mrb[0].mxu0
    %v10781 = vpop.f32.mrb[0].mxu0
    %10782 = vdwg.mxu0
    %10783 = vst [vmem:[#allocation20] sm:$0xff] %v10778
    // Predicated region
    $region90: #{tpu_custom_call.1} parent=1 // pred_check
      _
    $region91: #{tpu_custom_call.1} parent=1 // pred_check_branch
      %10785 = sbr.rel (0) target = $region93
    $region92: #{tpu_custom_call.1} parent=1 // pred_region
      %s10787 = ssub.s32 128, 128
      %10788 = vsyncadd [#allocation4], %s10787
      %s10790 = sshll.u32 [#allocation20], 4
      %s10791 = int_to_ptr.vmem [resolvable:$true] %s10790
      %10793 = dma.vmem_to_hbm [thread:$0]  %s10791, 128, %s11, [#allocation4]
    $region93: #{tpu_custom_call.1} parent=1 // pred_fallthru
      _
    // Predicated region
    $region94: #{tpu_custom_call.1} parent=1 // pred_check
      _
    $region95: #{tpu_custom_call.1} parent=1 // pred_check_branch
      %10795 = sbr.rel (0) target = $region97
    $region96: #{tpu_custom_call.1} parent=1 // pred_region
      %10796 = dma.done [#allocation4], 128
    $region97: #{tpu_custom_call.1} parent=1 // pred_fallthru
      _
    %10797 = vsyncpa [#allocation3], 1
    %10798 = vsyncpa [#allocation6], 1
    %10799 = vsyncpa [#allocation9], 1
    %10800 = vsyncpa [#allocation12], 1
    %10801 = vsyncpa [#allocation15], 1
    %10802 = vsyncpa [#allocation18], 1
    %10803 = vsyncpa [#allocation4], 1

</llo_original>
